<compile_context>
chip_gen: v6e
topology: v6e:2x2x1
jax: 0.10.0
libtpu: 0.0.40
codegen_flags: <defaults>
</compile_context>

<pallas_src>
import functools

import jax
import jax.numpy as jnp
from jax.experimental import pallas as pl
from jax.experimental.pallas import tpu as pltpu

CFG = dict(
    b=2, t=4, C=3, H=16, W=8, ps=4,       # video batch, frames, image geometry
    D=32, heads=4, depth=2, mlp_ratio=4,  # ViT embed dim / heads / depth (base uses depth-1 blocks)
    mid=16,                               # attention_conv middle dim (256 in the original)
    heads_b2=4,                           # heads of the dim = t*D part block (12 in the original)
    parts=6, shift=5,
)

BF16 = jnp.bfloat16
F32 = jnp.float32
NEG_BIG = -1e30


# ----------------------------------------------------------------------------
# in-kernel math helpers (operate on loaded VMEM values, all f32 elementwise)
# ----------------------------------------------------------------------------
def _layernorm(x, w, b, eps):
    mean = jnp.mean(x, axis=-1, keepdims=True)
    xc = x - mean
    var = jnp.mean(xc * xc, axis=-1, keepdims=True)
    return xc * jax.lax.rsqrt(var + eps) * w + b


def _softmax_last(x):
    m = jnp.max(x, axis=-1, keepdims=True)
    e = jnp.exp(x - m)
    return e * pl.reciprocal(jnp.sum(e, axis=-1, keepdims=True), approx=True)


def _gelu_erf(x):
    # exact (erf) GELU; erf via Abramowitz–Stegun 7.1.26 (|err| < 1.5e-7).
    a1, a2, a3, a4, a5 = 0.254829592, -0.284496736, 1.421413741, -1.453152027, 1.061405429
    p = 0.3275911
    z = x * 0.7071067811865476
    az = jnp.abs(z)
    tt = pl.reciprocal(1.0 + p * az, approx=True)
    poly = ((((a5 * tt + a4) * tt + a3) * tt + a2) * tt + a1) * tt
    erf_abs = 1.0 - poly * jnp.exp(-az * az)
    erf_z = jnp.where(z >= 0, erf_abs, -erf_abs)
    return 0.5 * x * (1.0 + erf_z)


def _seq_mask(nseq, S):
    """(rows, rows) bool mask: True iff query/key rows belong to the same sequence."""
    rows = nseq * S
    r = jax.lax.broadcasted_iota(jnp.int32, (rows, rows), 0)
    c = jax.lax.broadcasted_iota(jnp.int32, (rows, rows), 1)
    mask = jnp.zeros((rows, rows), jnp.bool_)
    for n in range(nseq):                       # small static unroll; avoids int division
        lo, hi = n * S, (n + 1) * S
        mask = mask | (((r >= lo) & (r < hi)) & ((c >= lo) & (c < hi)))
    return mask


def _cls_selector(nseq, S):
    """(nseq, rows) 0/1 matrix that gathers the cls row of every sequence via a matmul."""
    rows = nseq * S
    r = jax.lax.broadcasted_iota(jnp.int32, (nseq, rows), 0) * S
    c = jax.lax.broadcasted_iota(jnp.int32, (nseq, rows), 1)
    return (r == c).astype(F32)


def _block_rows(x, w, *, heads, eps, seq_mask):
    """timm pre-norm Block on row-flattened sequences.

    x        : (rows, D) f32, rows = nseq*S (all sequences of this grid step stacked).
    seq_mask : (rows, rows) bool block-diagonal same-sequence mask.
    w        : (n1w, n1b, qkv_w16, qkv_b, proj_w16, proj_b, n2w, n2b,
                fc1_w16, fc1_b, fc2_w16, fc2_b); matmul weights are pre-cast bf16.
    """
    rows, D = x.shape
    (n1w, n1b, wqkv, bqkv, wproj, bproj, n2w, n2b, wfc1, bfc1, wfc2, bfc2) = w
    dh = D // heads
    scale = dh ** -0.5

    h = _layernorm(x, n1w, n1b, eps)
    qkv = jnp.dot(h.astype(BF16), wqkv, preferred_element_type=F32) + bqkv   # (rows, 3D)
    qkv16 = qkv.astype(BF16)                                                 # cast once

    head_outs = []
    for hd in range(heads):                       # per-head lane slices; matmuls span ALL rows
        q = qkv16[:, hd * dh:(hd + 1) * dh]
        k = qkv16[:, D + hd * dh:D + (hd + 1) * dh]
        v = qkv16[:, 2 * D + hd * dh:2 * D + (hd + 1) * dh]
        s = jax.lax.dot_general(q, k, (((1,), (1,)), ((), ())),
                                preferred_element_type=F32) * scale          # (rows, rows)
        s = jnp.where(seq_mask, s, NEG_BIG)       # block-diagonal -> per-sequence attention
        p_attn = _softmax_last(s)
        head_outs.append(jnp.dot(p_attn.astype(BF16), v, preferred_element_type=F32))
    o = jnp.concatenate(head_outs, axis=-1)                                  # (rows, D)
    x = x + jnp.dot(o.astype(BF16), wproj, preferred_element_type=F32) + bproj

    h2 = _layernorm(x, n2w, n2b, eps)
    f = jnp.dot(h2.astype(BF16), wfc1, preferred_element_type=F32) + bfc1
    f = _gelu_erf(f)
    f = jnp.dot(f.astype(BF16), wfc2, preferred_element_type=F32) + bfc2
    return x + f


# ----------------------------------------------------------------------------
# Kernel A: patch-embed + base blocks + b1 block/LN + temporal pooling + BN (fused)
# ----------------------------------------------------------------------------
def fused_base_b1_temporal(pp16, E, pe_w16, stk, b1nw, b1nb,
                           acw, acb, kflat, tcb, bngs, bngsh,
                           *, t, S, heads, eps=1e-6):
    b = pp16.shape[0]
    rows = t * S
    Cpp = pp16.shape[2]
    D = pe_w16.shape[1]
    nblk = stk["n1w"].shape[0]
    nbase = nblk - 1
    hidden = stk["fc1_w"].shape[2]
    mid = acw.shape[1]

    def c2(r, c):
        return pl.BlockSpec((r, c), lambda i: (0, 0))

    def c3(a, r, c):
        return pl.BlockSpec((a, r, c), lambda i: (0, 0, 0))

    in_specs = [
        pl.BlockSpec((1, rows, Cpp), lambda i: (i, 0, 0)),   # pp16 (per-video patch rows)
        c2(rows, D),                                         # E (cls/pos/bias row table)
        c2(Cpp, D),                                          # patch-embed weight (bf16)
        c3(nblk, 1, D), c3(nblk, 1, D),                      # norm1 w/b (stacked)
        c3(nblk, D, 3 * D), c3(nblk, 1, 3 * D),              # qkv w/b
        c3(nblk, D, D), c3(nblk, 1, D),                      # proj w/b
        c3(nblk, 1, D), c3(nblk, 1, D),                      # norm2 w/b
        c3(nblk, D, hidden), c3(nblk, 1, hidden),            # fc1 w/b
        c3(nblk, hidden, D), c3(nblk, 1, D),                 # fc2 w/b
        c2(1, D), c2(1, D),                                  # b1 final LayerNorm
        c2(D, mid), c2(1, mid),                              # attention_conv (1x1) w/b
        c2(t * mid, t), c2(1, 1),                            # attention_tconv (expanded) w/b
        c2(1, D), c2(1, D),                                  # bottleneck BN(eval) scale/shift
    ]
    inputs = [
        pp16, E, pe_w16,
        stk["n1w"], stk["n1b"], stk["qkv_w"], stk["qkv_b"],
        stk["proj_w"], stk["proj_b"], stk["n2w"], stk["n2b"],
        stk["fc1_w"], stk["fc1_b"], stk["fc2_w"], stk["fc2_b"],
        b1nw, b1nb, acw, acb, kflat, tcb, bngs, bngsh,
    ]

    def kernel(pp_ref, e_ref, pew_ref,
               n1w_ref, n1b_ref, qkvw_ref, qkvb_ref, projw_ref, projb_ref,
               n2w_ref, n2b_ref, f1w_ref, f1b_ref, f2w_ref, f2b_ref,
               b1nw_ref, b1nb_ref, acw_ref, acb_ref, km_ref, tcb_ref,
               bngs_ref, bngsh_ref, feats_ref, featg_ref):
        # ---- patch embed fused with cls/pos add (cls rows are zero pixel rows) ----
        x = jnp.dot(pp_ref[0], pew_ref[...], preferred_element_type=F32) + e_ref[...]

        mask = _seq_mask(t, S)                    # hoisted: reused by every block

        def blkw(bi):
            return (n1w_ref[bi], n1b_ref[bi], qkvw_ref[bi], qkvb_ref[bi],
                    projw_ref[bi], projb_ref[bi], n2w_ref[bi], n2b_ref[bi],
                    f1w_ref[bi], f1b_ref[bi], f2w_ref[bi], f2b_ref[bi])

        for bi in range(nbase):                   # base blocks (depth-1)
            x = _block_rows(x, blkw(bi), heads=heads, eps=eps, seq_mask=mask)
        feats_ref[0] = x                          # base output `features` (for TCSS / b2)

        x = _block_rows(x, blkw(nbase), heads=heads, eps=eps, seq_mask=mask)  # b1 block

        # ---- cls-row gather (selection matmul) + b1 final LayerNorm ----
        sel = _cls_selector(t, S)
        g = jnp.dot(sel, x, preferred_element_type=F32)                       # (t, D)
        g = _layernorm(g, b1nw_ref[...], b1nb_ref[...], eps)

        # ---- temporal attention pooling: 1x1 conv -> Conv1d(k=3,p=1) -> softmax -> pool ----
        a = jnp.dot(g, acw_ref[...], preferred_element_type=F32) + acb_ref[...]
        a = jnp.maximum(a, 0.0)                                               # (t, mid)
        a_flat = jnp.concatenate([a[ti:ti + 1, :] for ti in range(t)], axis=-1)  # (1, t*mid)
        a1 = jnp.dot(a_flat, km_ref[...], preferred_element_type=F32) + tcb_ref[...]
        a1 = jnp.maximum(a1, 0.0)                                             # (1, t)
        wt = _softmax_last(a1)
        pooled = jnp.dot(wt, g, preferred_element_type=F32)                   # (1, D)
        featg_ref[0] = pooled * bngs_ref[...] + bngsh_ref[...]                # bottleneck BN

    feats, featg = pl.pallas_call(
        kernel,
        out_shape=(jax.ShapeDtypeStruct((b, rows, D), F32),
                   jax.ShapeDtypeStruct((b, 1, D), F32)),
        grid=(b,),
        in_specs=in_specs,
        out_specs=(pl.BlockSpec((1, rows, D), lambda i: (i, 0, 0)),
                   pl.BlockSpec((1, 1, D), lambda i: (i, 0, 0))),
        compiler_params=pltpu.CompilerParams(dimension_semantics=("parallel",)),
    )(*inputs)
    return feats, featg


# ----------------------------------------------------------------------------
# Kernel B: all 6 part branches through b2 + LN(1e-5) + per-part BN(eval) + /parts (fused)
# ----------------------------------------------------------------------------
def fused_b2_parts(stacked, p2, b2nw, b2nb, bnps, bnpsh,
                   *, parts, S, heads, eps_block=1e-6, eps_ln=1e-5):
    b, rows, Dp = stacked.shape                    # rows = parts * S
    hidden = p2["fc1_w"].shape[1]
    inv_parts = 1.0 / parts

    def c2(r, c):
        return pl.BlockSpec((r, c), lambda i: (0, 0))

    in_specs = [
        pl.BlockSpec((1, rows, Dp), lambda i: (i, 0, 0)),
        c2(1, Dp), c2(1, Dp),
        c2(Dp, 3 * Dp), c2(1, 3 * Dp),
        c2(Dp, Dp), c2(1, Dp),
        c2(1, Dp), c2(1, Dp),
        c2(Dp, hidden), c2(1, hidden),
        c2(hidden, Dp), c2(1, Dp),
        c2(1, Dp), c2(1, Dp),                      # b2 final LayerNorm (eps 1e-5)
        c2(parts, Dp), c2(parts, Dp),              # per-part BN(eval) scale/shift
    ]
    inputs = [
        stacked,
        p2["norm1_w"], p2["norm1_b"], p2["qkv_w"], p2["qkv_b"],
        p2["proj_w"], p2["proj_b"], p2["norm2_w"], p2["norm2_b"],
        p2["fc1_w"], p2["fc1_b"], p2["fc2_w"], p2["fc2_b"],
        b2nw, b2nb, bnps, bnpsh,
    ]

    def kernel(x_ref, n1w, n1b, qkvw, qkvb, projw, projb, n2w, n2b,
               f1w, f1b, f2w, f2b, lnw, lnb, bns, bnsh, o_ref):
        mask = _seq_mask(parts, S)
        w = (n1w[...], n1b[...], qkvw[...], qkvb[...], projw[...], projb[...],
             n2w[...], n2b[...], f1w[...], f1b[...], f2w[...], f2b[...])
        x = _block_rows(x_ref[0], w, heads=heads, eps=eps_block, seq_mask=mask)
        sel = _cls_selector(parts, S)
        cls = jnp.dot(sel, x, preferred_element_type=F32)                     # (parts, Dp)
        cls = _layernorm(cls, lnw[...], lnb[...], eps_ln)
        o_ref[0] = (cls * bns[...] + bnsh[...]) * inv_parts                   # lane-dense slab

    return pl.pallas_call(
        kernel,
        out_shape=jax.ShapeDtypeStruct((b, parts, Dp), F32),
        grid=(b,),
        in_specs=in_specs,
        out_specs=pl.BlockSpec((1, parts, Dp), lambda i: (i, 0, 0)),
        compiler_params=pltpu.CompilerParams(dimension_semantics=("parallel",)),
    )(*inputs)


# ----------------------------------------------------------------------------
# JAX glue (cheap reshuffles / one-time weight prep)
# ----------------------------------------------------------------------------
def tcss(features_b, shift):
    """features_b: (b, S, t*D) — the raw torch-.view reinterpretation of (b*t, S, D)."""
    token = features_b[:, 0:1]
    feats = jnp.concatenate([features_b[:, shift:], features_b[:, 1:shift]], axis=1)
    if feats.shape[1] % 2 != 0:                    # mirrors the try/except in the reference
        feats = jnp.concatenate([feats, feats[:, -2:-1, :]], axis=1)
    b_, n, dim = feats.shape
    feats = feats.reshape(b_, 2, n // 2, dim)
    feats = jnp.transpose(feats, (0, 2, 1, 3)).reshape(b_, n, dim)
    return feats, token


def build_tconv_matrix(wt, t):
    """Expand Conv1d(mid, 1, kernel=3, padding=1) weight (1, mid, 3) to K:(t*mid, t)."""
    mid = wt.shape[1]
    K = jnp.zeros((t, mid, t), wt.dtype)
    for k in range(3):
        mask = jnp.eye(t, k=1 - k, dtype=wt.dtype)       # mask[ti, to] = 1 iff ti = to + k - 1
        K = K + mask[:, None, :] * wt[0, :, k][None, :, None]
    return K.reshape(t * mid, t)


def bn_fold(bn, eps=1e-5):
    """BatchNorm1d eval -> affine (scale, shift), each (C,)."""
    scale = bn["w"] / jnp.sqrt(bn["rv"] + eps)
    shift = bn["b"] - bn["rm"] * scale
    return scale, shift


def stack_blocks(blocks):
    """Stack (base blocks + b1 block) weights; matmul weights pre-cast to bf16."""
    def s(name, cast=None, bias=False):
        a = jnp.stack([bb[name] for bb in blocks], axis=0)
        if bias:
            a = a[:, None, :]
        if cast is not None:
            a = a.astype(cast)
        return a
    return dict(
        n1w=s("norm1_w", bias=True), n1b=s("norm1_b", bias=True),
        qkv_w=s("qkv_w", cast=BF16), qkv_b=s("qkv_b", bias=True),
        proj_w=s("proj_w", cast=BF16), proj_b=s("proj_b", bias=True),
        n2w=s("norm2_w", bias=True), n2b=s("norm2_b", bias=True),
        fc1_w=s("fc1_w", cast=BF16), fc1_b=s("fc1_b", bias=True),
        fc2_w=s("fc2_w", cast=BF16), fc2_b=s("fc2_b", bias=True),
    )


def prep_block(p):
    """Single block -> kernel-ready dict (bf16 matmul weights, (1, dim) biases/LN params)."""
    return dict(
        norm1_w=p["norm1_w"][None, :], norm1_b=p["norm1_b"][None, :],
        qkv_w=p["qkv_w"].astype(BF16), qkv_b=p["qkv_b"][None, :],
        proj_w=p["proj_w"].astype(BF16), proj_b=p["proj_b"][None, :],
        norm2_w=p["norm2_w"][None, :], norm2_b=p["norm2_b"][None, :],
        fc1_w=p["fc1_w"].astype(BF16), fc1_b=p["fc1_b"][None, :],
        fc2_w=p["fc2_w"].astype(BF16), fc2_b=p["fc2_b"][None, :],
    )


# ----------------------------------------------------------------------------
# Parameters (deterministic synthetic init — shapes follow the module __init__)
# ----------------------------------------------------------------------------
def init_block_params(key, dim, heads, mlp_ratio=4):
    ks = jax.random.split(key, 4)
    hidden = dim * mlp_ratio
    return dict(
        num_heads=heads,
        norm1_w=jnp.ones((dim,)), norm1_b=jnp.zeros((dim,)),
        qkv_w=jax.random.normal(ks[0], (dim, 3 * dim)) * 0.02, qkv_b=jnp.zeros((3 * dim,)),
        proj_w=jax.random.normal(ks[1], (dim, dim)) * 0.02, proj_b=jnp.zeros((dim,)),
        norm2_w=jnp.ones((dim,)), norm2_b=jnp.zeros((dim,)),
        fc1_w=jax.random.normal(ks[2], (dim, hidden)) * 0.02, fc1_b=jnp.zeros((hidden,)),
        fc2_w=jax.random.normal(ks[3], (hidden, dim)) * 0.02, fc2_b=jnp.zeros((dim,)),
    )


def init_params(key):
    c = CFG
    D, t, mid, ps, C = c["D"], c["t"], c["mid"], c["ps"], c["C"]
    Dp = t * D
    P = (c["H"] // ps) * (c["W"] // ps)
    S = P + 1
    ks = jax.random.split(key, 12)

    def bn(dim):  # kaiming init for BN: weight=1, bias=0; fresh running stats
        return dict(w=jnp.ones((dim,)), b=jnp.zeros((dim,)),
                    rm=jnp.zeros((dim,)), rv=jnp.ones((dim,)))

    return dict(
        pe_w=jax.random.normal(ks[0], (C * ps * ps, D)) * 0.02,   # patch_embed.proj (as linear)
        pe_b=jnp.zeros((D,)),
        cls=jax.random.normal(ks[1], (1, 1, D)) * 0.02,
        pos=jax.random.normal(ks[2], (1, S, D)) * 0.02,
        base_blocks=[init_block_params(jax.random.fold_in(ks[3], i), D, c["heads"])
                     for i in range(c["depth"] - 1)],
        b1_block=init_block_params(ks[4], D, c["heads"]),           # copy of base.blocks[-1]
        b1_norm_w=jnp.ones((D,)), b1_norm_b=jnp.zeros((D,)),        # copy of base.norm
        b2_block=init_block_params(ks[5], Dp, c["heads_b2"]),       # Block(dim=t*D)
        b2_ln_w=jnp.ones((Dp,)), b2_ln_b=jnp.zeros((Dp,)),          # nn.LayerNorm(t*D)
        att_conv_w=jax.random.normal(ks[6], (D, mid)) * 0.05,       # Conv2d(D, mid, 1x1)
        att_conv_b=jnp.zeros((mid,)),
        att_tconv_w=jax.random.normal(ks[7], (1, mid, 3)) * 0.05,   # Conv1d(mid, 1, 3, pad=1)
        att_tconv_b=jnp.zeros((1,)),
        bn_g=bn(D),
        bn_parts=[bn(Dp) for _ in range(c["parts"])],
    )


# ----------------------------------------------------------------------------
# Forward (eval-mode branch of KeyRe_ID.forward)
# ----------------------------------------------------------------------------
def keyre_id_forward(params, x, heatmaps):
    c = CFG
    b, t, C, H, W = x.shape
    BT = b * t
    ps = c["ps"]
    ny, nx = H // ps, W // ps
    P = ny * nx
    S = P + 1
    D = c["D"]
    Dp = t * D
    parts = c["parts"]
    mid = c["mid"]
    Cpp = C * ps * ps

    # ---- patch pixel rows, with a zero row inserted at each frame's cls slot ----
    xf = x.reshape(BT, C, ny, ps, nx, ps)
    patches = jnp.transpose(xf, (0, 2, 4, 1, 3, 5)).reshape(b, t, P, Cpp)
    pp = jnp.concatenate([jnp.zeros((b, t, 1, Cpp), x.dtype), patches], axis=2)
    pp16 = pp.reshape(b, t * S, Cpp).astype(BF16)

    # ---- additive row table: cls+pos[0] on cls rows, pe_bias+pos[1:] on patch rows ----
    pos = params["pos"][0]                                            # (S, D)
    frame_e = jnp.concatenate(
        [params["cls"].reshape(1, D) + pos[0:1],
         params["pe_b"][None, :] + pos[1:]], axis=0)                  # (S, D)
    E = jnp.tile(frame_e, (t, 1))                                     # (t*S, D)

    # ---- Kernel A: base ViT + b1 + temporal pooling + bottleneck BN ----
    stk = stack_blocks(list(params["base_blocks"]) + [params["b1_block"]])
    kflat = build_tconv_matrix(params["att_tconv_w"], t)              # (t*mid, t)
    gs, gsh = bn_fold(params["bn_g"])
    features, featg = fused_base_b1_temporal(
        pp16, E, params["pe_w"].astype(BF16), stk,
        params["b1_norm_w"][None, :], params["b1_norm_b"][None, :],
        params["att_conv_w"], params["att_conv_b"][None, :],
        kflat, params["att_tconv_b"].reshape(1, 1),
        gs[None, :], gsh[None, :],
        t=t, S=S, heads=c["heads"], eps=1e-6)
    feat = featg.reshape(b, D)

    # ---- heatmap patch weights (F.unfold(k=ps,s=ps) + mean over kernel elems) ----
    hm = heatmaps.reshape(BT, 6, ny, ps, nx, ps).mean(axis=(3, 5)).reshape(BT, 6, P)
    heatmap_weights = jnp.transpose(hm, (0, 2, 1)).reshape(b, t, P, 6).mean(axis=1)  # (b,P,6)

    # ---- TCSS + all 6 part branches batched into Kernel B ----
    features_b = features.reshape(b, S, Dp)                           # raw torch-.view reinterp
    patch_feats, token = tcss(features_b, c["shift"])                 # (b, Ps, Dp), (b, 1, Dp)
    Ps = patch_feats.shape[1]
    w_t = jnp.transpose(heatmap_weights, (0, 2, 1))                   # (b, parts, P)
    parts_in = patch_feats[:, None, :, :] * w_t[:, :, :, None]        # (b, parts, Ps, Dp)
    tok_in = jnp.broadcast_to(token[:, None, :, :], (b, parts, 1, Dp))
    stacked = jnp.concatenate([tok_in, parts_in], axis=2)             # (b, parts, 1+Ps, Dp)
    stacked = stacked.reshape(b, parts * (1 + Ps), Dp)

    bn_pairs = [bn_fold(bn) for bn in params["bn_parts"]]
    bnps = jnp.stack([s for s, _ in bn_pairs], axis=0)                # (parts, Dp)
    bnpsh = jnp.stack([sh for _, sh in bn_pairs], axis=0)             # (parts, Dp)

    parts_out = fused_b2_parts(
        stacked, prep_block(params["b2_block"]),
        params["b2_ln_w"][None, :], params["b2_ln_b"][None, :],
        bnps, bnpsh,
        parts=parts, S=1 + Ps, heads=c["heads_b2"])                   # (b, parts, Dp)
    parts_out = parts_out.reshape(b, parts * Dp)

    return jnp.concatenate([feat, parts_out], axis=1)                 # (b, D + parts*t*D)


# ----------------------------------------------------------------------------
if __name__ == "__main__":
    key = jax.random.PRNGKey(0)
    kx, kh = jax.random.split(key)
    x = jax.random.normal(kx, (CFG["b"], CFG["t"], CFG["C"], CFG["H"], CFG["W"]),
                          dtype=jnp.float32)
    heatmaps = jax.random.uniform(kh, (CFG["b"], CFG["t"], 6, CFG["H"], CFG["W"]),
                                  dtype=jnp.float32)

    params = init_params(jax.random.PRNGKey(42))
    fwd = jax.jit(functools.partial(keyre_id_forward, params))
    out = fwd(x, heatmaps)
    jax.block_until_ready(out)

    expected = (CFG["b"], CFG["D"] + CFG["parts"] * CFG["t"] * CFG["D"])
    assert out.shape == expected, (out.shape, expected)
    assert bool(jnp.all(jnp.isfinite(out)))
    print("KERNEL_OK")
</pallas_src>

<mosaic_0001>
module attributes {stable_mosaic.version = 11 : i64} {
  func.func @kernel(%arg0: i32, %arg1: memref<1x36x48xbf16, #tpu.memory_space<vmem>>, %arg2: memref<36x32xf32, #tpu.memory_space<vmem>>, %arg3: memref<48x32xbf16, #tpu.memory_space<vmem>>, %arg4: memref<2x1x32xf32, #tpu.memory_space<vmem>>, %arg5: memref<2x1x32xf32, #tpu.memory_space<vmem>>, %arg6: memref<2x32x96xbf16, #tpu.memory_space<vmem>>, %arg7: memref<2x1x96xf32, #tpu.memory_space<vmem>>, %arg8: memref<2x32x32xbf16, #tpu.memory_space<vmem>>, %arg9: memref<2x1x32xf32, #tpu.memory_space<vmem>>, %arg10: memref<2x1x32xf32, #tpu.memory_space<vmem>>, %arg11: memref<2x1x32xf32, #tpu.memory_space<vmem>>, %arg12: memref<2x32x128xbf16, #tpu.memory_space<vmem>>, %arg13: memref<2x1x128xf32, #tpu.memory_space<vmem>>, %arg14: memref<2x128x32xbf16, #tpu.memory_space<vmem>>, %arg15: memref<2x1x32xf32, #tpu.memory_space<vmem>>, %arg16: memref<1x32xf32, #tpu.memory_space<vmem>>, %arg17: memref<1x32xf32, #tpu.memory_space<vmem>>, %arg18: memref<32x16xf32, #tpu.memory_space<vmem>>, %arg19: memref<1x16xf32, #tpu.memory_space<vmem>>, %arg20: memref<64x4xf32, #tpu.memory_space<vmem>>, %arg21: memref<1x1xf32, #tpu.memory_space<vmem>>, %arg22: memref<1x32xf32, #tpu.memory_space<vmem>>, %arg23: memref<1x32xf32, #tpu.memory_space<vmem>>, %arg24: memref<1x36x32xf32, #tpu.memory_space<vmem>>, %arg25: memref<1x1x32xf32, #tpu.memory_space<vmem>>) attributes {dimension_semantics = [#tpu.dimension_semantics<parallel>], iteration_bounds = array<i64: 2>, scalar_prefetch = 0 : i64, scratch_operands = 0 : i64, tpu.core_type = #tpu.core_type<tc>, window_params = [{transform_indices = @transform_0, window_bounds = array<i64: 1, 36, 48>}, {pipeline_mode = #tpu.pipeline_mode<synchronous>, transform_indices = @transform_1, window_bounds = array<i64: 36, 32>}, {pipeline_mode = #tpu.pipeline_mode<synchronous>, transform_indices = @transform_2, window_bounds = array<i64: 48, 32>}, {pipeline_mode = #tpu.pipeline_mode<synchronous>, transform_indices = @transform_3, window_bounds = array<i64: 2, 1, 32>}, {pipeline_mode = #tpu.pipeline_mode<synchronous>, transform_indices = @transform_4, window_bounds = array<i64: 2, 1, 32>}, {pipeline_mode = #tpu.pipeline_mode<synchronous>, transform_indices = @transform_5, window_bounds = array<i64: 2, 32, 96>}, {pipeline_mode = #tpu.pipeline_mode<synchronous>, transform_indices = @transform_6, window_bounds = array<i64: 2, 1, 96>}, {pipeline_mode = #tpu.pipeline_mode<synchronous>, transform_indices = @transform_7, window_bounds = array<i64: 2, 32, 32>}, {pipeline_mode = #tpu.pipeline_mode<synchronous>, transform_indices = @transform_8, window_bounds = array<i64: 2, 1, 32>}, {pipeline_mode = #tpu.pipeline_mode<synchronous>, transform_indices = @transform_9, window_bounds = array<i64: 2, 1, 32>}, {pipeline_mode = #tpu.pipeline_mode<synchronous>, transform_indices = @transform_10, window_bounds = array<i64: 2, 1, 32>}, {pipeline_mode = #tpu.pipeline_mode<synchronous>, transform_indices = @transform_11, window_bounds = array<i64: 2, 32, 128>}, {pipeline_mode = #tpu.pipeline_mode<synchronous>, transform_indices = @transform_12, window_bounds = array<i64: 2, 1, 128>}, {pipeline_mode = #tpu.pipeline_mode<synchronous>, transform_indices = @transform_13, window_bounds = array<i64: 2, 128, 32>}, {pipeline_mode = #tpu.pipeline_mode<synchronous>, transform_indices = @transform_14, window_bounds = array<i64: 2, 1, 32>}, {pipeline_mode = #tpu.pipeline_mode<synchronous>, transform_indices = @transform_15, window_bounds = array<i64: 1, 32>}, {pipeline_mode = #tpu.pipeline_mode<synchronous>, transform_indices = @transform_16, window_bounds = array<i64: 1, 32>}, {pipeline_mode = #tpu.pipeline_mode<synchronous>, transform_indices = @transform_17, window_bounds = array<i64: 32, 16>}, {pipeline_mode = #tpu.pipeline_mode<synchronous>, transform_indices = @transform_18, window_bounds = array<i64: 1, 16>}, {pipeline_mode = #tpu.pipeline_mode<synchronous>, transform_indices = @transform_19, window_bounds = array<i64: 64, 4>}, {pipeline_mode = #tpu.pipeline_mode<synchronous>, transform_indices = @transform_20, window_bounds = array<i64: 1, 1>}, {pipeline_mode = #tpu.pipeline_mode<synchronous>, transform_indices = @transform_21, window_bounds = array<i64: 1, 32>}, {pipeline_mode = #tpu.pipeline_mode<synchronous>, transform_indices = @transform_22, window_bounds = array<i64: 1, 32>}, {transform_indices = @transform_23, window_bounds = array<i64: 1, 36, 32>}, {transform_indices = @transform_24, window_bounds = array<i64: 1, 1, 32>}]} {
    %c0 = arith.constant 0 : index
    %c0_0 = arith.constant 0 : index
    %c0_1 = arith.constant 0 : index
    %0 = vector.load %arg1[%c0, %c0_0, %c0_1] : memref<1x36x48xbf16, #tpu.memory_space<vmem>>, vector<1x36x48xbf16>
    %1 = vector.shape_cast %0 : vector<1x36x48xbf16> to vector<36x48xbf16>
    %c0_2 = arith.constant 0 : index
    %c0_3 = arith.constant 0 : index
    %2 = vector.load %arg3[%c0_2, %c0_3] : memref<48x32xbf16, #tpu.memory_space<vmem>>, vector<48x32xbf16>
    %cst = arith.constant dense<0.000000e+00> : vector<36x32xf32>
    %3 = tpu.matmul %1, %2, %cst {dimension_numbers = #tpu.dot_dimension_numbers<[1], [0], [0], [1], [0, 0, 1, 1], [], []>} : vector<36x48xbf16>, vector<48x32xbf16>, vector<36x32xf32> -> vector<36x32xf32>
    %c0_4 = arith.constant 0 : index
    %c0_5 = arith.constant 0 : index
    %4 = vector.load %arg2[%c0_4, %c0_5] : memref<36x32xf32, #tpu.memory_space<vmem>>, vector<36x32xf32>
    %5 = arith.addf %3, %4 : vector<36x32xf32>
    %6 = tpu.iota {dimensions = array<i32: 0>} : vector<36x36xi32>
    %7 = tpu.iota {dimensions = array<i32: 1>} : vector<36x36xi32>
    %false = arith.constant false
    %8 = vector.broadcast %false : i1 to vector<36x36xi1>
    %c0_i32 = arith.constant 0 : i32
    %9 = vector.broadcast %c0_i32 : i32 to vector<36x36xi32>
    %10 = arith.cmpi sge, %6, %9 : vector<36x36xi32>
    %c9_i32 = arith.constant 9 : i32
    %11 = vector.broadcast %c9_i32 : i32 to vector<36x36xi32>
    %12 = arith.cmpi slt, %6, %11 : vector<36x36xi32>
    %13 = arith.andi %10, %12 : vector<36x36xi1>
    %c0_i32_6 = arith.constant 0 : i32
    %14 = vector.broadcast %c0_i32_6 : i32 to vector<36x36xi32>
    %15 = arith.cmpi sge, %7, %14 : vector<36x36xi32>
    %c9_i32_7 = arith.constant 9 : i32
    %16 = vector.broadcast %c9_i32_7 : i32 to vector<36x36xi32>
    %17 = arith.cmpi slt, %7, %16 : vector<36x36xi32>
    %18 = arith.andi %15, %17 : vector<36x36xi1>
    %19 = arith.andi %13, %18 : vector<36x36xi1>
    %20 = arith.ori %8, %19 : vector<36x36xi1>
    %c9_i32_8 = arith.constant 9 : i32
    %21 = vector.broadcast %c9_i32_8 : i32 to vector<36x36xi32>
    %22 = arith.cmpi sge, %6, %21 : vector<36x36xi32>
    %c18_i32 = arith.constant 18 : i32
    %23 = vector.broadcast %c18_i32 : i32 to vector<36x36xi32>
    %24 = arith.cmpi slt, %6, %23 : vector<36x36xi32>
    %25 = arith.andi %22, %24 : vector<36x36xi1>
    %c9_i32_9 = arith.constant 9 : i32
    %26 = vector.broadcast %c9_i32_9 : i32 to vector<36x36xi32>
    %27 = arith.cmpi sge, %7, %26 : vector<36x36xi32>
    %c18_i32_10 = arith.constant 18 : i32
    %28 = vector.broadcast %c18_i32_10 : i32 to vector<36x36xi32>
    %29 = arith.cmpi slt, %7, %28 : vector<36x36xi32>
    %30 = arith.andi %27, %29 : vector<36x36xi1>
    %31 = arith.andi %25, %30 : vector<36x36xi1>
    %32 = arith.ori %20, %31 : vector<36x36xi1>
    %c18_i32_11 = arith.constant 18 : i32
    %33 = vector.broadcast %c18_i32_11 : i32 to vector<36x36xi32>
    %34 = arith.cmpi sge, %6, %33 : vector<36x36xi32>
    %c27_i32 = arith.constant 27 : i32
    %35 = vector.broadcast %c27_i32 : i32 to vector<36x36xi32>
    %36 = arith.cmpi slt, %6, %35 : vector<36x36xi32>
    %37 = arith.andi %34, %36 : vector<36x36xi1>
    %c18_i32_12 = arith.constant 18 : i32
    %38 = vector.broadcast %c18_i32_12 : i32 to vector<36x36xi32>
    %39 = arith.cmpi sge, %7, %38 : vector<36x36xi32>
    %c27_i32_13 = arith.constant 27 : i32
    %40 = vector.broadcast %c27_i32_13 : i32 to vector<36x36xi32>
    %41 = arith.cmpi slt, %7, %40 : vector<36x36xi32>
    %42 = arith.andi %39, %41 : vector<36x36xi1>
    %43 = arith.andi %37, %42 : vector<36x36xi1>
    %44 = arith.ori %32, %43 : vector<36x36xi1>
    %c27_i32_14 = arith.constant 27 : i32
    %45 = vector.broadcast %c27_i32_14 : i32 to vector<36x36xi32>
    %46 = arith.cmpi sge, %6, %45 : vector<36x36xi32>
    %c36_i32 = arith.constant 36 : i32
    %47 = vector.broadcast %c36_i32 : i32 to vector<36x36xi32>
    %48 = arith.cmpi slt, %6, %47 : vector<36x36xi32>
    %49 = arith.andi %46, %48 : vector<36x36xi1>
    %c27_i32_15 = arith.constant 27 : i32
    %50 = vector.broadcast %c27_i32_15 : i32 to vector<36x36xi32>
    %51 = arith.cmpi sge, %7, %50 : vector<36x36xi32>
    %c36_i32_16 = arith.constant 36 : i32
    %52 = vector.broadcast %c36_i32_16 : i32 to vector<36x36xi32>
    %53 = arith.cmpi slt, %7, %52 : vector<36x36xi32>
    %54 = arith.andi %51, %53 : vector<36x36xi1>
    %55 = arith.andi %49, %54 : vector<36x36xi1>
    %56 = arith.ori %44, %55 : vector<36x36xi1>
    %c0_17 = arith.constant 0 : index
    %c0_18 = arith.constant 0 : index
    %c0_19 = arith.constant 0 : index
    %57 = vector.load %arg4[%c0_17, %c0_18, %c0_19] : memref<2x1x32xf32, #tpu.memory_space<vmem>>, vector<1x1x32xf32>
    %58 = vector.shape_cast %57 : vector<1x1x32xf32> to vector<1x32xf32>
    %c0_20 = arith.constant 0 : index
    %c0_21 = arith.constant 0 : index
    %c0_22 = arith.constant 0 : index
    %59 = vector.load %arg5[%c0_20, %c0_21, %c0_22] : memref<2x1x32xf32, #tpu.memory_space<vmem>>, vector<1x1x32xf32>
    %60 = vector.shape_cast %59 : vector<1x1x32xf32> to vector<1x32xf32>
    %c0_23 = arith.constant 0 : index
    %c0_24 = arith.constant 0 : index
    %c0_25 = arith.constant 0 : index
    %61 = vector.load %arg6[%c0_23, %c0_24, %c0_25] : memref<2x32x96xbf16, #tpu.memory_space<vmem>>, vector<1x32x96xbf16>
    %62 = vector.shape_cast %61 : vector<1x32x96xbf16> to vector<32x96xbf16>
    %c0_26 = arith.constant 0 : index
    %c0_27 = arith.constant 0 : index
    %c0_28 = arith.constant 0 : index
    %63 = vector.load %arg7[%c0_26, %c0_27, %c0_28] : memref<2x1x96xf32, #tpu.memory_space<vmem>>, vector<1x1x96xf32>
    %64 = vector.shape_cast %63 : vector<1x1x96xf32> to vector<1x96xf32>
    %c0_29 = arith.constant 0 : index
    %c0_30 = arith.constant 0 : index
    %c0_31 = arith.constant 0 : index
    %65 = vector.load %arg8[%c0_29, %c0_30, %c0_31] : memref<2x32x32xbf16, #tpu.memory_space<vmem>>, vector<1x32x32xbf16>
    %66 = vector.shape_cast %65 : vector<1x32x32xbf16> to vector<32x32xbf16>
    %c0_32 = arith.constant 0 : index
    %c0_33 = arith.constant 0 : index
    %c0_34 = arith.constant 0 : index
    %67 = vector.load %arg9[%c0_32, %c0_33, %c0_34] : memref<2x1x32xf32, #tpu.memory_space<vmem>>, vector<1x1x32xf32>
    %68 = vector.shape_cast %67 : vector<1x1x32xf32> to vector<1x32xf32>
    %c0_35 = arith.constant 0 : index
    %c0_36 = arith.constant 0 : index
    %c0_37 = arith.constant 0 : index
    %69 = vector.load %arg10[%c0_35, %c0_36, %c0_37] : memref<2x1x32xf32, #tpu.memory_space<vmem>>, vector<1x1x32xf32>
    %70 = vector.shape_cast %69 : vector<1x1x32xf32> to vector<1x32xf32>
    %c0_38 = arith.constant 0 : index
    %c0_39 = arith.constant 0 : index
    %c0_40 = arith.constant 0 : index
    %71 = vector.load %arg11[%c0_38, %c0_39, %c0_40] : memref<2x1x32xf32, #tpu.memory_space<vmem>>, vector<1x1x32xf32>
    %72 = vector.shape_cast %71 : vector<1x1x32xf32> to vector<1x32xf32>
    %c0_41 = arith.constant 0 : index
    %c0_42 = arith.constant 0 : index
    %c0_43 = arith.constant 0 : index
    %73 = vector.load %arg12[%c0_41, %c0_42, %c0_43] : memref<2x32x128xbf16, #tpu.memory_space<vmem>>, vector<1x32x128xbf16>
    %74 = vector.shape_cast %73 : vector<1x32x128xbf16> to vector<32x128xbf16>
    %c0_44 = arith.constant 0 : index
    %c0_45 = arith.constant 0 : index
    %c0_46 = arith.constant 0 : index
    %75 = vector.load %arg13[%c0_44, %c0_45, %c0_46] : memref<2x1x128xf32, #tpu.memory_space<vmem>>, vector<1x1x128xf32>
    %76 = vector.shape_cast %75 : vector<1x1x128xf32> to vector<1x128xf32>
    %c0_47 = arith.constant 0 : index
    %c0_48 = arith.constant 0 : index
    %c0_49 = arith.constant 0 : index
    %77 = vector.load %arg14[%c0_47, %c0_48, %c0_49] : memref<2x128x32xbf16, #tpu.memory_space<vmem>>, vector<1x128x32xbf16>
    %78 = vector.shape_cast %77 : vector<1x128x32xbf16> to vector<128x32xbf16>
    %c0_50 = arith.constant 0 : index
    %c0_51 = arith.constant 0 : index
    %c0_52 = arith.constant 0 : index
    %79 = vector.load %arg15[%c0_50, %c0_51, %c0_52] : memref<2x1x32xf32, #tpu.memory_space<vmem>>, vector<1x1x32xf32>
    %80 = vector.shape_cast %79 : vector<1x1x32xf32> to vector<1x32xf32>
    %cst_53 = arith.constant dense<0.000000e+00> : vector<36xf32>
    %81 = vector.multi_reduction <add>, %5, %cst_53 [1] : vector<36x32xf32> to vector<36xf32>
    %82 = vector.shape_cast %81 : vector<36xf32> to vector<36x1xf32>
    %cst_54 = arith.constant 3.200000e+01 : f32
    %83 = vector.broadcast %cst_54 : f32 to vector<36x1xf32>
    %84 = arith.divf %82, %83 : vector<36x1xf32>
    %85 = vector.broadcast %84 : vector<36x1xf32> to vector<36x32xf32>
    %86 = arith.subf %5, %85 : vector<36x32xf32>
    %87 = arith.mulf %86, %86 : vector<36x32xf32>
    %cst_55 = arith.constant dense<0.000000e+00> : vector<36xf32>
    %88 = vector.multi_reduction <add>, %87, %cst_55 [1] : vector<36x32xf32> to vector<36xf32>
    %89 = vector.shape_cast %88 : vector<36xf32> to vector<36x1xf32>
    %cst_56 = arith.constant 3.200000e+01 : f32
    %90 = vector.broadcast %cst_56 : f32 to vector<36x1xf32>
    %91 = arith.divf %89, %90 : vector<36x1xf32>
    %cst_57 = arith.constant 9.99999997E-7 : f32
    %92 = vector.broadcast %cst_57 : f32 to vector<36x1xf32>
    %93 = arith.addf %91, %92 : vector<36x1xf32>
    %94 = math.rsqrt %93 : vector<36x1xf32>
    %95 = vector.broadcast %94 : vector<36x1xf32> to vector<36x32xf32>
    %96 = arith.mulf %86, %95 : vector<36x32xf32>
    %97 = vector.broadcast %58 : vector<1x32xf32> to vector<36x32xf32>
    %98 = arith.mulf %96, %97 : vector<36x32xf32>
    %99 = vector.broadcast %60 : vector<1x32xf32> to vector<36x32xf32>
    %100 = arith.addf %98, %99 : vector<36x32xf32>
    %101 = arith.truncf %100 : vector<36x32xf32> to vector<36x32xbf16>
    %cst_58 = arith.constant dense<0.000000e+00> : vector<36x96xf32>
    %102 = tpu.matmul %101, %62, %cst_58 {dimension_numbers = #tpu.dot_dimension_numbers<[1], [0], [0], [1], [0, 0, 1, 1], [], []>} : vector<36x32xbf16>, vector<32x96xbf16>, vector<36x96xf32> -> vector<36x96xf32>
    %103 = vector.broadcast %64 : vector<1x96xf32> to vector<36x96xf32>
    %104 = arith.addf %102, %103 : vector<36x96xf32>
    %105 = arith.truncf %104 : vector<36x96xf32> to vector<36x96xbf16>
    %106 = vector.extract_strided_slice %105 {offsets = [0, 0], sizes = [36, 8], strides = [1, 1]} : vector<36x96xbf16> to vector<36x8xbf16>
    %107 = vector.extract_strided_slice %105 {offsets = [0, 32], sizes = [36, 8], strides = [1, 1]} : vector<36x96xbf16> to vector<36x8xbf16>
    %108 = vector.extract_strided_slice %105 {offsets = [0, 64], sizes = [36, 8], strides = [1, 1]} : vector<36x96xbf16> to vector<36x8xbf16>
    %cst_59 = arith.constant dense<0.000000e+00> : vector<36x36xf32>
    %109 = tpu.matmul %106, %107, %cst_59 {dimension_numbers = #tpu.dot_dimension_numbers<[1], [1], [0], [0], [0, 0, 1, 0], [], []>} : vector<36x8xbf16>, vector<36x8xbf16>, vector<36x36xf32> -> vector<36x36xf32>
    %cst_60 = arith.constant 0.353553385 : f32
    %110 = vector.broadcast %cst_60 : f32 to vector<36x36xf32>
    %111 = arith.mulf %109, %110 : vector<36x36xf32>
    %cst_61 = arith.constant -1.000000e+30 : f32
    %112 = vector.broadcast %cst_61 : f32 to vector<36x36xf32>
    %113 = arith.select %56, %111, %112 : vector<36x36xi1>, vector<36x36xf32>
    %cst_62 = arith.constant dense<0xFF800000> : vector<36xf32>
    %114 = vector.multi_reduction <maximumf>, %113, %cst_62 [1] : vector<36x36xf32> to vector<36xf32>
    %115 = vector.shape_cast %114 : vector<36xf32> to vector<36x1xf32>
    %116 = vector.broadcast %115 : vector<36x1xf32> to vector<36x36xf32>
    %117 = arith.subf %113, %116 : vector<36x36xf32>
    %118 = math.exp %117 : vector<36x36xf32>
    %cst_63 = arith.constant dense<0.000000e+00> : vector<36xf32>
    %119 = vector.multi_reduction <add>, %118, %cst_63 [1] : vector<36x36xf32> to vector<36xf32>
    %120 = vector.shape_cast %119 : vector<36xf32> to vector<36x1xf32>
    %121 = tpu.reciprocal %120 {approx = true} : vector<36x1xf32> -> vector<36x1xf32>
    %122 = vector.broadcast %121 : vector<36x1xf32> to vector<36x36xf32>
    %123 = arith.mulf %118, %122 : vector<36x36xf32>
    %124 = arith.truncf %123 : vector<36x36xf32> to vector<36x36xbf16>
    %cst_64 = arith.constant dense<0.000000e+00> : vector<36x8xf32>
    %125 = tpu.matmul %124, %108, %cst_64 {dimension_numbers = #tpu.dot_dimension_numbers<[1], [0], [0], [1], [0, 0, 1, 1], [], []>} : vector<36x36xbf16>, vector<36x8xbf16>, vector<36x8xf32> -> vector<36x8xf32>
    %126 = vector.extract_strided_slice %105 {offsets = [0, 8], sizes = [36, 8], strides = [1, 1]} : vector<36x96xbf16> to vector<36x8xbf16>
    %127 = vector.extract_strided_slice %105 {offsets = [0, 40], sizes = [36, 8], strides = [1, 1]} : vector<36x96xbf16> to vector<36x8xbf16>
    %128 = vector.extract_strided_slice %105 {offsets = [0, 72], sizes = [36, 8], strides = [1, 1]} : vector<36x96xbf16> to vector<36x8xbf16>
    %cst_65 = arith.constant dense<0.000000e+00> : vector<36x36xf32>
    %129 = tpu.matmul %126, %127, %cst_65 {dimension_numbers = #tpu.dot_dimension_numbers<[1], [1], [0], [0], [0, 0, 1, 0], [], []>} : vector<36x8xbf16>, vector<36x8xbf16>, vector<36x36xf32> -> vector<36x36xf32>
    %cst_66 = arith.constant 0.353553385 : f32
    %130 = vector.broadcast %cst_66 : f32 to vector<36x36xf32>
    %131 = arith.mulf %129, %130 : vector<36x36xf32>
    %cst_67 = arith.constant -1.000000e+30 : f32
    %132 = vector.broadcast %cst_67 : f32 to vector<36x36xf32>
    %133 = arith.select %56, %131, %132 : vector<36x36xi1>, vector<36x36xf32>
    %cst_68 = arith.constant dense<0xFF800000> : vector<36xf32>
    %134 = vector.multi_reduction <maximumf>, %133, %cst_68 [1] : vector<36x36xf32> to vector<36xf32>
    %135 = vector.shape_cast %134 : vector<36xf32> to vector<36x1xf32>
    %136 = vector.broadcast %135 : vector<36x1xf32> to vector<36x36xf32>
    %137 = arith.subf %133, %136 : vector<36x36xf32>
    %138 = math.exp %137 : vector<36x36xf32>
    %cst_69 = arith.constant dense<0.000000e+00> : vector<36xf32>
    %139 = vector.multi_reduction <add>, %138, %cst_69 [1] : vector<36x36xf32> to vector<36xf32>
    %140 = vector.shape_cast %139 : vector<36xf32> to vector<36x1xf32>
    %141 = tpu.reciprocal %140 {approx = true} : vector<36x1xf32> -> vector<36x1xf32>
    %142 = vector.broadcast %141 : vector<36x1xf32> to vector<36x36xf32>
    %143 = arith.mulf %138, %142 : vector<36x36xf32>
    %144 = arith.truncf %143 : vector<36x36xf32> to vector<36x36xbf16>
    %cst_70 = arith.constant dense<0.000000e+00> : vector<36x8xf32>
    %145 = tpu.matmul %144, %128, %cst_70 {dimension_numbers = #tpu.dot_dimension_numbers<[1], [0], [0], [1], [0, 0, 1, 1], [], []>} : vector<36x36xbf16>, vector<36x8xbf16>, vector<36x8xf32> -> vector<36x8xf32>
    %146 = vector.extract_strided_slice %105 {offsets = [0, 16], sizes = [36, 8], strides = [1, 1]} : vector<36x96xbf16> to vector<36x8xbf16>
    %147 = vector.extract_strided_slice %105 {offsets = [0, 48], sizes = [36, 8], strides = [1, 1]} : vector<36x96xbf16> to vector<36x8xbf16>
    %148 = vector.extract_strided_slice %105 {offsets = [0, 80], sizes = [36, 8], strides = [1, 1]} : vector<36x96xbf16> to vector<36x8xbf16>
    %cst_71 = arith.constant dense<0.000000e+00> : vector<36x36xf32>
    %149 = tpu.matmul %146, %147, %cst_71 {dimension_numbers = #tpu.dot_dimension_numbers<[1], [1], [0], [0], [0, 0, 1, 0], [], []>} : vector<36x8xbf16>, vector<36x8xbf16>, vector<36x36xf32> -> vector<36x36xf32>
    %cst_72 = arith.constant 0.353553385 : f32
    %150 = vector.broadcast %cst_72 : f32 to vector<36x36xf32>
    %151 = arith.mulf %149, %150 : vector<36x36xf32>
    %cst_73 = arith.constant -1.000000e+30 : f32
    %152 = vector.broadcast %cst_73 : f32 to vector<36x36xf32>
    %153 = arith.select %56, %151, %152 : vector<36x36xi1>, vector<36x36xf32>
    %cst_74 = arith.constant dense<0xFF800000> : vector<36xf32>
    %154 = vector.multi_reduction <maximumf>, %153, %cst_74 [1] : vector<36x36xf32> to vector<36xf32>
    %155 = vector.shape_cast %154 : vector<36xf32> to vector<36x1xf32>
    %156 = vector.broadcast %155 : vector<36x1xf32> to vector<36x36xf32>
    %157 = arith.subf %153, %156 : vector<36x36xf32>
    %158 = math.exp %157 : vector<36x36xf32>
    %cst_75 = arith.constant dense<0.000000e+00> : vector<36xf32>
    %159 = vector.multi_reduction <add>, %158, %cst_75 [1] : vector<36x36xf32> to vector<36xf32>
    %160 = vector.shape_cast %159 : vector<36xf32> to vector<36x1xf32>
    %161 = tpu.reciprocal %160 {approx = true} : vector<36x1xf32> -> vector<36x1xf32>
    %162 = vector.broadcast %161 : vector<36x1xf32> to vector<36x36xf32>
    %163 = arith.mulf %158, %162 : vector<36x36xf32>
    %164 = arith.truncf %163 : vector<36x36xf32> to vector<36x36xbf16>
    %cst_76 = arith.constant dense<0.000000e+00> : vector<36x8xf32>
    %165 = tpu.matmul %164, %148, %cst_76 {dimension_numbers = #tpu.dot_dimension_numbers<[1], [0], [0], [1], [0, 0, 1, 1], [], []>} : vector<36x36xbf16>, vector<36x8xbf16>, vector<36x8xf32> -> vector<36x8xf32>
    %166 = vector.extract_strided_slice %105 {offsets = [0, 24], sizes = [36, 8], strides = [1, 1]} : vector<36x96xbf16> to vector<36x8xbf16>
    %167 = vector.extract_strided_slice %105 {offsets = [0, 56], sizes = [36, 8], strides = [1, 1]} : vector<36x96xbf16> to vector<36x8xbf16>
    %168 = vector.extract_strided_slice %105 {offsets = [0, 88], sizes = [36, 8], strides = [1, 1]} : vector<36x96xbf16> to vector<36x8xbf16>
    %cst_77 = arith.constant dense<0.000000e+00> : vector<36x36xf32>
    %169 = tpu.matmul %166, %167, %cst_77 {dimension_numbers = #tpu.dot_dimension_numbers<[1], [1], [0], [0], [0, 0, 1, 0], [], []>} : vector<36x8xbf16>, vector<36x8xbf16>, vector<36x36xf32> -> vector<36x36xf32>
    %cst_78 = arith.constant 0.353553385 : f32
    %170 = vector.broadcast %cst_78 : f32 to vector<36x36xf32>
    %171 = arith.mulf %169, %170 : vector<36x36xf32>
    %cst_79 = arith.constant -1.000000e+30 : f32
    %172 = vector.broadcast %cst_79 : f32 to vector<36x36xf32>
    %173 = arith.select %56, %171, %172 : vector<36x36xi1>, vector<36x36xf32>
    %cst_80 = arith.constant dense<0xFF800000> : vector<36xf32>
    %174 = vector.multi_reduction <maximumf>, %173, %cst_80 [1] : vector<36x36xf32> to vector<36xf32>
    %175 = vector.shape_cast %174 : vector<36xf32> to vector<36x1xf32>
    %176 = vector.broadcast %175 : vector<36x1xf32> to vector<36x36xf32>
    %177 = arith.subf %173, %176 : vector<36x36xf32>
    %178 = math.exp %177 : vector<36x36xf32>
    %cst_81 = arith.constant dense<0.000000e+00> : vector<36xf32>
    %179 = vector.multi_reduction <add>, %178, %cst_81 [1] : vector<36x36xf32> to vector<36xf32>
    %180 = vector.shape_cast %179 : vector<36xf32> to vector<36x1xf32>
    %181 = tpu.reciprocal %180 {approx = true} : vector<36x1xf32> -> vector<36x1xf32>
    %182 = vector.broadcast %181 : vector<36x1xf32> to vector<36x36xf32>
    %183 = arith.mulf %178, %182 : vector<36x36xf32>
    %184 = arith.truncf %183 : vector<36x36xf32> to vector<36x36xbf16>
    %cst_82 = arith.constant dense<0.000000e+00> : vector<36x8xf32>
    %185 = tpu.matmul %184, %168, %cst_82 {dimension_numbers = #tpu.dot_dimension_numbers<[1], [0], [0], [1], [0, 0, 1, 1], [], []>} : vector<36x36xbf16>, vector<36x8xbf16>, vector<36x8xf32> -> vector<36x8xf32>
    %186 = tpu.concatenate %125, %145, %165, %185 in 1 : vector<36x8xf32>, vector<36x8xf32>, vector<36x8xf32>, vector<36x8xf32> -> vector<36x32xf32>
    %187 = arith.truncf %186 : vector<36x32xf32> to vector<36x32xbf16>
    %cst_83 = arith.constant dense<0.000000e+00> : vector<36x32xf32>
    %188 = tpu.matmul %187, %66, %cst_83 {dimension_numbers = #tpu.dot_dimension_numbers<[1], [0], [0], [1], [0, 0, 1, 1], [], []>} : vector<36x32xbf16>, vector<32x32xbf16>, vector<36x32xf32> -> vector<36x32xf32>
    %189 = arith.addf %5, %188 : vector<36x32xf32>
    %190 = vector.broadcast %68 : vector<1x32xf32> to vector<36x32xf32>
    %191 = arith.addf %189, %190 : vector<36x32xf32>
    %cst_84 = arith.constant dense<0.000000e+00> : vector<36xf32>
    %192 = vector.multi_reduction <add>, %191, %cst_84 [1] : vector<36x32xf32> to vector<36xf32>
    %193 = vector.shape_cast %192 : vector<36xf32> to vector<36x1xf32>
    %cst_85 = arith.constant 3.200000e+01 : f32
    %194 = vector.broadcast %cst_85 : f32 to vector<36x1xf32>
    %195 = arith.divf %193, %194 : vector<36x1xf32>
    %196 = vector.broadcast %195 : vector<36x1xf32> to vector<36x32xf32>
    %197 = arith.subf %191, %196 : vector<36x32xf32>
    %198 = arith.mulf %197, %197 : vector<36x32xf32>
    %cst_86 = arith.constant dense<0.000000e+00> : vector<36xf32>
    %199 = vector.multi_reduction <add>, %198, %cst_86 [1] : vector<36x32xf32> to vector<36xf32>
    %200 = vector.shape_cast %199 : vector<36xf32> to vector<36x1xf32>
    %cst_87 = arith.constant 3.200000e+01 : f32
    %201 = vector.broadcast %cst_87 : f32 to vector<36x1xf32>
    %202 = arith.divf %200, %201 : vector<36x1xf32>
    %cst_88 = arith.constant 9.99999997E-7 : f32
    %203 = vector.broadcast %cst_88 : f32 to vector<36x1xf32>
    %204 = arith.addf %202, %203 : vector<36x1xf32>
    %205 = math.rsqrt %204 : vector<36x1xf32>
    %206 = vector.broadcast %205 : vector<36x1xf32> to vector<36x32xf32>
    %207 = arith.mulf %197, %206 : vector<36x32xf32>
    %208 = vector.broadcast %70 : vector<1x32xf32> to vector<36x32xf32>
    %209 = arith.mulf %207, %208 : vector<36x32xf32>
    %210 = vector.broadcast %72 : vector<1x32xf32> to vector<36x32xf32>
    %211 = arith.addf %209, %210 : vector<36x32xf32>
    %212 = arith.truncf %211 : vector<36x32xf32> to vector<36x32xbf16>
    %cst_89 = arith.constant dense<0.000000e+00> : vector<36x128xf32>
    %213 = tpu.matmul %212, %74, %cst_89 {dimension_numbers = #tpu.dot_dimension_numbers<[1], [0], [0], [1], [0, 0, 1, 1], [], []>} : vector<36x32xbf16>, vector<32x128xbf16>, vector<36x128xf32> -> vector<36x128xf32>
    %214 = vector.broadcast %76 : vector<1x128xf32> to vector<36x128xf32>
    %215 = arith.addf %213, %214 : vector<36x128xf32>
    %cst_90 = arith.constant 0.707106769 : f32
    %216 = vector.broadcast %cst_90 : f32 to vector<36x128xf32>
    %217 = arith.mulf %215, %216 : vector<36x128xf32>
    %218 = math.absf %217 : vector<36x128xf32>
    %cst_91 = arith.constant 0.327591091 : f32
    %219 = vector.broadcast %cst_91 : f32 to vector<36x128xf32>
    %220 = arith.mulf %219, %218 : vector<36x128xf32>
    %cst_92 = arith.constant 1.000000e+00 : f32
    %221 = vector.broadcast %cst_92 : f32 to vector<36x128xf32>
    %222 = arith.addf %221, %220 : vector<36x128xf32>
    %223 = tpu.reciprocal %222 {approx = true} : vector<36x128xf32> -> vector<36x128xf32>
    %cst_93 = arith.constant 1.06140542 : f32
    %224 = vector.broadcast %cst_93 : f32 to vector<36x128xf32>
    %225 = arith.mulf %224, %223 : vector<36x128xf32>
    %cst_94 = arith.constant -1.45315206 : f32
    %226 = vector.broadcast %cst_94 : f32 to vector<36x128xf32>
    %227 = arith.addf %225, %226 : vector<36x128xf32>
    %228 = arith.mulf %227, %223 : vector<36x128xf32>
    %cst_95 = arith.constant 1.42141378 : f32
    %229 = vector.broadcast %cst_95 : f32 to vector<36x128xf32>
    %230 = arith.addf %228, %229 : vector<36x128xf32>
    %231 = arith.mulf %230, %223 : vector<36x128xf32>
    %cst_96 = arith.constant -0.284496725 : f32
    %232 = vector.broadcast %cst_96 : f32 to vector<36x128xf32>
    %233 = arith.addf %231, %232 : vector<36x128xf32>
    %234 = arith.mulf %233, %223 : vector<36x128xf32>
    %cst_97 = arith.constant 0.254829586 : f32
    %235 = vector.broadcast %cst_97 : f32 to vector<36x128xf32>
    %236 = arith.addf %234, %235 : vector<36x128xf32>
    %237 = arith.mulf %236, %223 : vector<36x128xf32>
    %cst_98 = arith.constant 0.000000e+00 : f32
    %238 = vector.broadcast %cst_98 : f32 to vector<36x128xf32>
    %239 = arith.subf %238, %218 : vector<36x128xf32>
    %240 = arith.mulf %239, %218 : vector<36x128xf32>
    %241 = math.exp %240 : vector<36x128xf32>
    %242 = arith.mulf %237, %241 : vector<36x128xf32>
    %cst_99 = arith.constant 1.000000e+00 : f32
    %243 = vector.broadcast %cst_99 : f32 to vector<36x128xf32>
    %244 = arith.subf %243, %242 : vector<36x128xf32>
    %cst_100 = arith.constant 0.000000e+00 : f32
    %245 = vector.broadcast %cst_100 : f32 to vector<36x128xf32>
    %246 = arith.cmpf oge, %217, %245 : vector<36x128xf32>
    %cst_101 = arith.constant 0.000000e+00 : f32
    %247 = vector.broadcast %cst_101 : f32 to vector<36x128xf32>
    %248 = arith.subf %247, %244 : vector<36x128xf32>
    %249 = arith.select %246, %244, %248 : vector<36x128xi1>, vector<36x128xf32>
    %cst_102 = arith.constant 5.000000e-01 : f32
    %250 = vector.broadcast %cst_102 : f32 to vector<36x128xf32>
    %251 = arith.mulf %250, %215 : vector<36x128xf32>
    %cst_103 = arith.constant 1.000000e+00 : f32
    %252 = vector.broadcast %cst_103 : f32 to vector<36x128xf32>
    %253 = arith.addf %252, %249 : vector<36x128xf32>
    %254 = arith.mulf %251, %253 : vector<36x128xf32>
    %255 = arith.truncf %254 : vector<36x128xf32> to vector<36x128xbf16>
    %cst_104 = arith.constant dense<0.000000e+00> : vector<36x32xf32>
    %256 = tpu.matmul %255, %78, %cst_104 {dimension_numbers = #tpu.dot_dimension_numbers<[1], [0], [0], [1], [0, 0, 1, 1], [], []>} : vector<36x128xbf16>, vector<128x32xbf16>, vector<36x32xf32> -> vector<36x32xf32>
    %257 = vector.broadcast %80 : vector<1x32xf32> to vector<36x32xf32>
    %258 = arith.addf %256, %257 : vector<36x32xf32>
    %259 = arith.addf %191, %258 : vector<36x32xf32>
    %c0_105 = arith.constant 0 : index
    %c0_106 = arith.constant 0 : index
    %c0_107 = arith.constant 0 : index
    %260 = vector.load %arg24[%c0_105, %c0_106, %c0_107] : memref<1x36x32xf32, #tpu.memory_space<vmem>>, vector<1x36x32xf32>
    %261 = vector.shape_cast %260 : vector<1x36x32xf32> to vector<36x32xf32>
    %262 = vector.shape_cast %259 : vector<36x32xf32> to vector<1x36x32xf32>
    tpu.vector_store %arg24[%c0_105, %c0_106, %c0_107], %262 {strides = array<i32>} : memref<1x36x32xf32, #tpu.memory_space<vmem>>, vector<1x36x32xf32>,
    %c1 = arith.constant 1 : index
    %c0_108 = arith.constant 0 : index
    %c0_109 = arith.constant 0 : index
    %263 = vector.load %arg4[%c1, %c0_108, %c0_109] : memref<2x1x32xf32, #tpu.memory_space<vmem>>, vector<1x1x32xf32>
    %264 = vector.shape_cast %263 : vector<1x1x32xf32> to vector<1x32xf32>
    %c1_110 = arith.constant 1 : index
    %c0_111 = arith.constant 0 : index
    %c0_112 = arith.constant 0 : index
    %265 = vector.load %arg5[%c1_110, %c0_111, %c0_112] : memref<2x1x32xf32, #tpu.memory_space<vmem>>, vector<1x1x32xf32>
    %266 = vector.shape_cast %265 : vector<1x1x32xf32> to vector<1x32xf32>
    %c1_113 = arith.constant 1 : index
    %c0_114 = arith.constant 0 : index
    %c0_115 = arith.constant 0 : index
    %267 = vector.load %arg6[%c1_113, %c0_114, %c0_115] : memref<2x32x96xbf16, #tpu.memory_space<vmem>>, vector<1x32x96xbf16>
    %268 = vector.shape_cast %267 : vector<1x32x96xbf16> to vector<32x96xbf16>
    %c1_116 = arith.constant 1 : index
    %c0_117 = arith.constant 0 : index
    %c0_118 = arith.constant 0 : index
    %269 = vector.load %arg7[%c1_116, %c0_117, %c0_118] : memref<2x1x96xf32, #tpu.memory_space<vmem>>, vector<1x1x96xf32>
    %270 = vector.shape_cast %269 : vector<1x1x96xf32> to vector<1x96xf32>
    %c1_119 = arith.constant 1 : index
    %c0_120 = arith.constant 0 : index
    %c0_121 = arith.constant 0 : index
    %271 = vector.load %arg8[%c1_119, %c0_120, %c0_121] : memref<2x32x32xbf16, #tpu.memory_space<vmem>>, vector<1x32x32xbf16>
    %272 = vector.shape_cast %271 : vector<1x32x32xbf16> to vector<32x32xbf16>
    %c1_122 = arith.constant 1 : index
    %c0_123 = arith.constant 0 : index
    %c0_124 = arith.constant 0 : index
    %273 = vector.load %arg9[%c1_122, %c0_123, %c0_124] : memref<2x1x32xf32, #tpu.memory_space<vmem>>, vector<1x1x32xf32>
    %274 = vector.shape_cast %273 : vector<1x1x32xf32> to vector<1x32xf32>
    %c1_125 = arith.constant 1 : index
    %c0_126 = arith.constant 0 : index
    %c0_127 = arith.constant 0 : index
    %275 = vector.load %arg10[%c1_125, %c0_126, %c0_127] : memref<2x1x32xf32, #tpu.memory_space<vmem>>, vector<1x1x32xf32>
    %276 = vector.shape_cast %275 : vector<1x1x32xf32> to vector<1x32xf32>
    %c1_128 = arith.constant 1 : index
    %c0_129 = arith.constant 0 : index
    %c0_130 = arith.constant 0 : index
    %277 = vector.load %arg11[%c1_128, %c0_129, %c0_130] : memref<2x1x32xf32, #tpu.memory_space<vmem>>, vector<1x1x32xf32>
    %278 = vector.shape_cast %277 : vector<1x1x32xf32> to vector<1x32xf32>
    %c1_131 = arith.constant 1 : index
    %c0_132 = arith.constant 0 : index
    %c0_133 = arith.constant 0 : index
    %279 = vector.load %arg12[%c1_131, %c0_132, %c0_133] : memref<2x32x128xbf16, #tpu.memory_space<vmem>>, vector<1x32x128xbf16>
    %280 = vector.shape_cast %279 : vector<1x32x128xbf16> to vector<32x128xbf16>
    %c1_134 = arith.constant 1 : index
    %c0_135 = arith.constant 0 : index
    %c0_136 = arith.constant 0 : index
    %281 = vector.load %arg13[%c1_134, %c0_135, %c0_136] : memref<2x1x128xf32, #tpu.memory_space<vmem>>, vector<1x1x128xf32>
    %282 = vector.shape_cast %281 : vector<1x1x128xf32> to vector<1x128xf32>
    %c1_137 = arith.constant 1 : index
    %c0_138 = arith.constant 0 : index
    %c0_139 = arith.constant 0 : index
    %283 = vector.load %arg14[%c1_137, %c0_138, %c0_139] : memref<2x128x32xbf16, #tpu.memory_space<vmem>>, vector<1x128x32xbf16>
    %284 = vector.shape_cast %283 : vector<1x128x32xbf16> to vector<128x32xbf16>
    %c1_140 = arith.constant 1 : index
    %c0_141 = arith.constant 0 : index
    %c0_142 = arith.constant 0 : index
    %285 = vector.load %arg15[%c1_140, %c0_141, %c0_142] : memref<2x1x32xf32, #tpu.memory_space<vmem>>, vector<1x1x32xf32>
    %286 = vector.shape_cast %285 : vector<1x1x32xf32> to vector<1x32xf32>
    %cst_143 = arith.constant dense<0.000000e+00> : vector<36xf32>
    %287 = vector.multi_reduction <add>, %259, %cst_143 [1] : vector<36x32xf32> to vector<36xf32>
    %288 = vector.shape_cast %287 : vector<36xf32> to vector<36x1xf32>
    %cst_144 = arith.constant 3.200000e+01 : f32
    %289 = vector.broadcast %cst_144 : f32 to vector<36x1xf32>
    %290 = arith.divf %288, %289 : vector<36x1xf32>
    %291 = vector.broadcast %290 : vector<36x1xf32> to vector<36x32xf32>
    %292 = arith.subf %259, %291 : vector<36x32xf32>
    %293 = arith.mulf %292, %292 : vector<36x32xf32>
    %cst_145 = arith.constant dense<0.000000e+00> : vector<36xf32>
    %294 = vector.multi_reduction <add>, %293, %cst_145 [1] : vector<36x32xf32> to vector<36xf32>
    %295 = vector.shape_cast %294 : vector<36xf32> to vector<36x1xf32>
    %cst_146 = arith.constant 3.200000e+01 : f32
    %296 = vector.broadcast %cst_146 : f32 to vector<36x1xf32>
    %297 = arith.divf %295, %296 : vector<36x1xf32>
    %cst_147 = arith.constant 9.99999997E-7 : f32
    %298 = vector.broadcast %cst_147 : f32 to vector<36x1xf32>
    %299 = arith.addf %297, %298 : vector<36x1xf32>
    %300 = math.rsqrt %299 : vector<36x1xf32>
    %301 = vector.broadcast %300 : vector<36x1xf32> to vector<36x32xf32>
    %302 = arith.mulf %292, %301 : vector<36x32xf32>
    %303 = vector.broadcast %264 : vector<1x32xf32> to vector<36x32xf32>
    %304 = arith.mulf %302, %303 : vector<36x32xf32>
    %305 = vector.broadcast %266 : vector<1x32xf32> to vector<36x32xf32>
    %306 = arith.addf %304, %305 : vector<36x32xf32>
    %307 = arith.truncf %306 : vector<36x32xf32> to vector<36x32xbf16>
    %cst_148 = arith.constant dense<0.000000e+00> : vector<36x96xf32>
    %308 = tpu.matmul %307, %268, %cst_148 {dimension_numbers = #tpu.dot_dimension_numbers<[1], [0], [0], [1], [0, 0, 1, 1], [], []>} : vector<36x32xbf16>, vector<32x96xbf16>, vector<36x96xf32> -> vector<36x96xf32>
    %309 = vector.broadcast %270 : vector<1x96xf32> to vector<36x96xf32>
    %310 = arith.addf %308, %309 : vector<36x96xf32>
    %311 = arith.truncf %310 : vector<36x96xf32> to vector<36x96xbf16>
    %312 = vector.extract_strided_slice %311 {offsets = [0, 0], sizes = [36, 8], strides = [1, 1]} : vector<36x96xbf16> to vector<36x8xbf16>
    %313 = vector.extract_strided_slice %311 {offsets = [0, 32], sizes = [36, 8], strides = [1, 1]} : vector<36x96xbf16> to vector<36x8xbf16>
    %314 = vector.extract_strided_slice %311 {offsets = [0, 64], sizes = [36, 8], strides = [1, 1]} : vector<36x96xbf16> to vector<36x8xbf16>
    %cst_149 = arith.constant dense<0.000000e+00> : vector<36x36xf32>
    %315 = tpu.matmul %312, %313, %cst_149 {dimension_numbers = #tpu.dot_dimension_numbers<[1], [1], [0], [0], [0, 0, 1, 0], [], []>} : vector<36x8xbf16>, vector<36x8xbf16>, vector<36x36xf32> -> vector<36x36xf32>
    %cst_150 = arith.constant 0.353553385 : f32
    %316 = vector.broadcast %cst_150 : f32 to vector<36x36xf32>
    %317 = arith.mulf %315, %316 : vector<36x36xf32>
    %cst_151 = arith.constant -1.000000e+30 : f32
    %318 = vector.broadcast %cst_151 : f32 to vector<36x36xf32>
    %319 = arith.select %56, %317, %318 : vector<36x36xi1>, vector<36x36xf32>
    %cst_152 = arith.constant dense<0xFF800000> : vector<36xf32>
    %320 = vector.multi_reduction <maximumf>, %319, %cst_152 [1] : vector<36x36xf32> to vector<36xf32>
    %321 = vector.shape_cast %320 : vector<36xf32> to vector<36x1xf32>
    %322 = vector.broadcast %321 : vector<36x1xf32> to vector<36x36xf32>
    %323 = arith.subf %319, %322 : vector<36x36xf32>
    %324 = math.exp %323 : vector<36x36xf32>
    %cst_153 = arith.constant dense<0.000000e+00> : vector<36xf32>
    %325 = vector.multi_reduction <add>, %324, %cst_153 [1] : vector<36x36xf32> to vector<36xf32>
    %326 = vector.shape_cast %325 : vector<36xf32> to vector<36x1xf32>
    %327 = tpu.reciprocal %326 {approx = true} : vector<36x1xf32> -> vector<36x1xf32>
    %328 = vector.broadcast %327 : vector<36x1xf32> to vector<36x36xf32>
    %329 = arith.mulf %324, %328 : vector<36x36xf32>
    %330 = arith.truncf %329 : vector<36x36xf32> to vector<36x36xbf16>
    %cst_154 = arith.constant dense<0.000000e+00> : vector<36x8xf32>
    %331 = tpu.matmul %330, %314, %cst_154 {dimension_numbers = #tpu.dot_dimension_numbers<[1], [0], [0], [1], [0, 0, 1, 1], [], []>} : vector<36x36xbf16>, vector<36x8xbf16>, vector<36x8xf32> -> vector<36x8xf32>
    %332 = vector.extract_strided_slice %311 {offsets = [0, 8], sizes = [36, 8], strides = [1, 1]} : vector<36x96xbf16> to vector<36x8xbf16>
    %333 = vector.extract_strided_slice %311 {offsets = [0, 40], sizes = [36, 8], strides = [1, 1]} : vector<36x96xbf16> to vector<36x8xbf16>
    %334 = vector.extract_strided_slice %311 {offsets = [0, 72], sizes = [36, 8], strides = [1, 1]} : vector<36x96xbf16> to vector<36x8xbf16>
    %cst_155 = arith.constant dense<0.000000e+00> : vector<36x36xf32>
    %335 = tpu.matmul %332, %333, %cst_155 {dimension_numbers = #tpu.dot_dimension_numbers<[1], [1], [0], [0], [0, 0, 1, 0], [], []>} : vector<36x8xbf16>, vector<36x8xbf16>, vector<36x36xf32> -> vector<36x36xf32>
    %cst_156 = arith.constant 0.353553385 : f32
    %336 = vector.broadcast %cst_156 : f32 to vector<36x36xf32>
    %337 = arith.mulf %335, %336 : vector<36x36xf32>
    %cst_157 = arith.constant -1.000000e+30 : f32
    %338 = vector.broadcast %cst_157 : f32 to vector<36x36xf32>
    %339 = arith.select %56, %337, %338 : vector<36x36xi1>, vector<36x36xf32>
    %cst_158 = arith.constant dense<0xFF800000> : vector<36xf32>
    %340 = vector.multi_reduction <maximumf>, %339, %cst_158 [1] : vector<36x36xf32> to vector<36xf32>
    %341 = vector.shape_cast %340 : vector<36xf32> to vector<36x1xf32>
    %342 = vector.broadcast %341 : vector<36x1xf32> to vector<36x36xf32>
    %343 = arith.subf %339, %342 : vector<36x36xf32>
    %344 = math.exp %343 : vector<36x36xf32>
    %cst_159 = arith.constant dense<0.000000e+00> : vector<36xf32>
    %345 = vector.multi_reduction <add>, %344, %cst_159 [1] : vector<36x36xf32> to vector<36xf32>
    %346 = vector.shape_cast %345 : vector<36xf32> to vector<36x1xf32>
    %347 = tpu.reciprocal %346 {approx = true} : vector<36x1xf32> -> vector<36x1xf32>
    %348 = vector.broadcast %347 : vector<36x1xf32> to vector<36x36xf32>
    %349 = arith.mulf %344, %348 : vector<36x36xf32>
    %350 = arith.truncf %349 : vector<36x36xf32> to vector<36x36xbf16>
    %cst_160 = arith.constant dense<0.000000e+00> : vector<36x8xf32>
    %351 = tpu.matmul %350, %334, %cst_160 {dimension_numbers = #tpu.dot_dimension_numbers<[1], [0], [0], [1], [0, 0, 1, 1], [], []>} : vector<36x36xbf16>, vector<36x8xbf16>, vector<36x8xf32> -> vector<36x8xf32>
    %352 = vector.extract_strided_slice %311 {offsets = [0, 16], sizes = [36, 8], strides = [1, 1]} : vector<36x96xbf16> to vector<36x8xbf16>
    %353 = vector.extract_strided_slice %311 {offsets = [0, 48], sizes = [36, 8], strides = [1, 1]} : vector<36x96xbf16> to vector<36x8xbf16>
    %354 = vector.extract_strided_slice %311 {offsets = [0, 80], sizes = [36, 8], strides = [1, 1]} : vector<36x96xbf16> to vector<36x8xbf16>
    %cst_161 = arith.constant dense<0.000000e+00> : vector<36x36xf32>
    %355 = tpu.matmul %352, %353, %cst_161 {dimension_numbers = #tpu.dot_dimension_numbers<[1], [1], [0], [0], [0, 0, 1, 0], [], []>} : vector<36x8xbf16>, vector<36x8xbf16>, vector<36x36xf32> -> vector<36x36xf32>
    %cst_162 = arith.constant 0.353553385 : f32
    %356 = vector.broadcast %cst_162 : f32 to vector<36x36xf32>
    %357 = arith.mulf %355, %356 : vector<36x36xf32>
    %cst_163 = arith.constant -1.000000e+30 : f32
    %358 = vector.broadcast %cst_163 : f32 to vector<36x36xf32>
    %359 = arith.select %56, %357, %358 : vector<36x36xi1>, vector<36x36xf32>
    %cst_164 = arith.constant dense<0xFF800000> : vector<36xf32>
    %360 = vector.multi_reduction <maximumf>, %359, %cst_164 [1] : vector<36x36xf32> to vector<36xf32>
    %361 = vector.shape_cast %360 : vector<36xf32> to vector<36x1xf32>
    %362 = vector.broadcast %361 : vector<36x1xf32> to vector<36x36xf32>
    %363 = arith.subf %359, %362 : vector<36x36xf32>
    %364 = math.exp %363 : vector<36x36xf32>
    %cst_165 = arith.constant dense<0.000000e+00> : vector<36xf32>
    %365 = vector.multi_reduction <add>, %364, %cst_165 [1] : vector<36x36xf32> to vector<36xf32>
    %366 = vector.shape_cast %365 : vector<36xf32> to vector<36x1xf32>
    %367 = tpu.reciprocal %366 {approx = true} : vector<36x1xf32> -> vector<36x1xf32>
    %368 = vector.broadcast %367 : vector<36x1xf32> to vector<36x36xf32>
    %369 = arith.mulf %364, %368 : vector<36x36xf32>
    %370 = arith.truncf %369 : vector<36x36xf32> to vector<36x36xbf16>
    %cst_166 = arith.constant dense<0.000000e+00> : vector<36x8xf32>
    %371 = tpu.matmul %370, %354, %cst_166 {dimension_numbers = #tpu.dot_dimension_numbers<[1], [0], [0], [1], [0, 0, 1, 1], [], []>} : vector<36x36xbf16>, vector<36x8xbf16>, vector<36x8xf32> -> vector<36x8xf32>
    %372 = vector.extract_strided_slice %311 {offsets = [0, 24], sizes = [36, 8], strides = [1, 1]} : vector<36x96xbf16> to vector<36x8xbf16>
    %373 = vector.extract_strided_slice %311 {offsets = [0, 56], sizes = [36, 8], strides = [1, 1]} : vector<36x96xbf16> to vector<36x8xbf16>
    %374 = vector.extract_strided_slice %311 {offsets = [0, 88], sizes = [36, 8], strides = [1, 1]} : vector<36x96xbf16> to vector<36x8xbf16>
    %cst_167 = arith.constant dense<0.000000e+00> : vector<36x36xf32>
    %375 = tpu.matmul %372, %373, %cst_167 {dimension_numbers = #tpu.dot_dimension_numbers<[1], [1], [0], [0], [0, 0, 1, 0], [], []>} : vector<36x8xbf16>, vector<36x8xbf16>, vector<36x36xf32> -> vector<36x36xf32>
    %cst_168 = arith.constant 0.353553385 : f32
    %376 = vector.broadcast %cst_168 : f32 to vector<36x36xf32>
    %377 = arith.mulf %375, %376 : vector<36x36xf32>
    %cst_169 = arith.constant -1.000000e+30 : f32
    %378 = vector.broadcast %cst_169 : f32 to vector<36x36xf32>
    %379 = arith.select %56, %377, %378 : vector<36x36xi1>, vector<36x36xf32>
    %cst_170 = arith.constant dense<0xFF800000> : vector<36xf32>
    %380 = vector.multi_reduction <maximumf>, %379, %cst_170 [1] : vector<36x36xf32> to vector<36xf32>
    %381 = vector.shape_cast %380 : vector<36xf32> to vector<36x1xf32>
    %382 = vector.broadcast %381 : vector<36x1xf32> to vector<36x36xf32>
    %383 = arith.subf %379, %382 : vector<36x36xf32>
    %384 = math.exp %383 : vector<36x36xf32>
    %cst_171 = arith.constant dense<0.000000e+00> : vector<36xf32>
    %385 = vector.multi_reduction <add>, %384, %cst_171 [1] : vector<36x36xf32> to vector<36xf32>
    %386 = vector.shape_cast %385 : vector<36xf32> to vector<36x1xf32>
    %387 = tpu.reciprocal %386 {approx = true} : vector<36x1xf32> -> vector<36x1xf32>
    %388 = vector.broadcast %387 : vector<36x1xf32> to vector<36x36xf32>
    %389 = arith.mulf %384, %388 : vector<36x36xf32>
    %390 = arith.truncf %389 : vector<36x36xf32> to vector<36x36xbf16>
    %cst_172 = arith.constant dense<0.000000e+00> : vector<36x8xf32>
    %391 = tpu.matmul %390, %374, %cst_172 {dimension_numbers = #tpu.dot_dimension_numbers<[1], [0], [0], [1], [0, 0, 1, 1], [], []>} : vector<36x36xbf16>, vector<36x8xbf16>, vector<36x8xf32> -> vector<36x8xf32>
    %392 = tpu.concatenate %331, %351, %371, %391 in 1 : vector<36x8xf32>, vector<36x8xf32>, vector<36x8xf32>, vector<36x8xf32> -> vector<36x32xf32>
    %393 = arith.truncf %392 : vector<36x32xf32> to vector<36x32xbf16>
    %cst_173 = arith.constant dense<0.000000e+00> : vector<36x32xf32>
    %394 = tpu.matmul %393, %272, %cst_173 {dimension_numbers = #tpu.dot_dimension_numbers<[1], [0], [0], [1], [0, 0, 1, 1], [], []>} : vector<36x32xbf16>, vector<32x32xbf16>, vector<36x32xf32> -> vector<36x32xf32>
    %395 = arith.addf %259, %394 : vector<36x32xf32>
    %396 = vector.broadcast %274 : vector<1x32xf32> to vector<36x32xf32>
    %397 = arith.addf %395, %396 : vector<36x32xf32>
    %cst_174 = arith.constant dense<0.000000e+00> : vector<36xf32>
    %398 = vector.multi_reduction <add>, %397, %cst_174 [1] : vector<36x32xf32> to vector<36xf32>
    %399 = vector.shape_cast %398 : vector<36xf32> to vector<36x1xf32>
    %cst_175 = arith.constant 3.200000e+01 : f32
    %400 = vector.broadcast %cst_175 : f32 to vector<36x1xf32>
    %401 = arith.divf %399, %400 : vector<36x1xf32>
    %402 = vector.broadcast %401 : vector<36x1xf32> to vector<36x32xf32>
    %403 = arith.subf %397, %402 : vector<36x32xf32>
    %404 = arith.mulf %403, %403 : vector<36x32xf32>
    %cst_176 = arith.constant dense<0.000000e+00> : vector<36xf32>
    %405 = vector.multi_reduction <add>, %404, %cst_176 [1] : vector<36x32xf32> to vector<36xf32>
    %406 = vector.shape_cast %405 : vector<36xf32> to vector<36x1xf32>
    %cst_177 = arith.constant 3.200000e+01 : f32
    %407 = vector.broadcast %cst_177 : f32 to vector<36x1xf32>
    %408 = arith.divf %406, %407 : vector<36x1xf32>
    %cst_178 = arith.constant 9.99999997E-7 : f32
    %409 = vector.broadcast %cst_178 : f32 to vector<36x1xf32>
    %410 = arith.addf %408, %409 : vector<36x1xf32>
    %411 = math.rsqrt %410 : vector<36x1xf32>
    %412 = vector.broadcast %411 : vector<36x1xf32> to vector<36x32xf32>
    %413 = arith.mulf %403, %412 : vector<36x32xf32>
    %414 = vector.broadcast %276 : vector<1x32xf32> to vector<36x32xf32>
    %415 = arith.mulf %413, %414 : vector<36x32xf32>
    %416 = vector.broadcast %278 : vector<1x32xf32> to vector<36x32xf32>
    %417 = arith.addf %415, %416 : vector<36x32xf32>
    %418 = arith.truncf %417 : vector<36x32xf32> to vector<36x32xbf16>
    %cst_179 = arith.constant dense<0.000000e+00> : vector<36x128xf32>
    %419 = tpu.matmul %418, %280, %cst_179 {dimension_numbers = #tpu.dot_dimension_numbers<[1], [0], [0], [1], [0, 0, 1, 1], [], []>} : vector<36x32xbf16>, vector<32x128xbf16>, vector<36x128xf32> -> vector<36x128xf32>
    %420 = vector.broadcast %282 : vector<1x128xf32> to vector<36x128xf32>
    %421 = arith.addf %419, %420 : vector<36x128xf32>
    %cst_180 = arith.constant 0.707106769 : f32
    %422 = vector.broadcast %cst_180 : f32 to vector<36x128xf32>
    %423 = arith.mulf %421, %422 : vector<36x128xf32>
    %424 = math.absf %423 : vector<36x128xf32>
    %cst_181 = arith.constant 0.327591091 : f32
    %425 = vector.broadcast %cst_181 : f32 to vector<36x128xf32>
    %426 = arith.mulf %425, %424 : vector<36x128xf32>
    %cst_182 = arith.constant 1.000000e+00 : f32
    %427 = vector.broadcast %cst_182 : f32 to vector<36x128xf32>
    %428 = arith.addf %427, %426 : vector<36x128xf32>
    %429 = tpu.reciprocal %428 {approx = true} : vector<36x128xf32> -> vector<36x128xf32>
    %cst_183 = arith.constant 1.06140542 : f32
    %430 = vector.broadcast %cst_183 : f32 to vector<36x128xf32>
    %431 = arith.mulf %430, %429 : vector<36x128xf32>
    %cst_184 = arith.constant -1.45315206 : f32
    %432 = vector.broadcast %cst_184 : f32 to vector<36x128xf32>
    %433 = arith.addf %431, %432 : vector<36x128xf32>
    %434 = arith.mulf %433, %429 : vector<36x128xf32>
    %cst_185 = arith.constant 1.42141378 : f32
    %435 = vector.broadcast %cst_185 : f32 to vector<36x128xf32>
    %436 = arith.addf %434, %435 : vector<36x128xf32>
    %437 = arith.mulf %436, %429 : vector<36x128xf32>
    %cst_186 = arith.constant -0.284496725 : f32
    %438 = vector.broadcast %cst_186 : f32 to vector<36x128xf32>
    %439 = arith.addf %437, %438 : vector<36x128xf32>
    %440 = arith.mulf %439, %429 : vector<36x128xf32>
    %cst_187 = arith.constant 0.254829586 : f32
    %441 = vector.broadcast %cst_187 : f32 to vector<36x128xf32>
    %442 = arith.addf %440, %441 : vector<36x128xf32>
    %443 = arith.mulf %442, %429 : vector<36x128xf32>
    %cst_188 = arith.constant 0.000000e+00 : f32
    %444 = vector.broadcast %cst_188 : f32 to vector<36x128xf32>
    %445 = arith.subf %444, %424 : vector<36x128xf32>
    %446 = arith.mulf %445, %424 : vector<36x128xf32>
    %447 = math.exp %446 : vector<36x128xf32>
    %448 = arith.mulf %443, %447 : vector<36x128xf32>
    %cst_189 = arith.constant 1.000000e+00 : f32
    %449 = vector.broadcast %cst_189 : f32 to vector<36x128xf32>
    %450 = arith.subf %449, %448 : vector<36x128xf32>
    %cst_190 = arith.constant 0.000000e+00 : f32
    %451 = vector.broadcast %cst_190 : f32 to vector<36x128xf32>
    %452 = arith.cmpf oge, %423, %451 : vector<36x128xf32>
    %cst_191 = arith.constant 0.000000e+00 : f32
    %453 = vector.broadcast %cst_191 : f32 to vector<36x128xf32>
    %454 = arith.subf %453, %450 : vector<36x128xf32>
    %455 = arith.select %452, %450, %454 : vector<36x128xi1>, vector<36x128xf32>
    %cst_192 = arith.constant 5.000000e-01 : f32
    %456 = vector.broadcast %cst_192 : f32 to vector<36x128xf32>
    %457 = arith.mulf %456, %421 : vector<36x128xf32>
    %cst_193 = arith.constant 1.000000e+00 : f32
    %458 = vector.broadcast %cst_193 : f32 to vector<36x128xf32>
    %459 = arith.addf %458, %455 : vector<36x128xf32>
    %460 = arith.mulf %457, %459 : vector<36x128xf32>
    %461 = arith.truncf %460 : vector<36x128xf32> to vector<36x128xbf16>
    %cst_194 = arith.constant dense<0.000000e+00> : vector<36x32xf32>
    %462 = tpu.matmul %461, %284, %cst_194 {dimension_numbers = #tpu.dot_dimension_numbers<[1], [0], [0], [1], [0, 0, 1, 1], [], []>} : vector<36x128xbf16>, vector<128x32xbf16>, vector<36x32xf32> -> vector<36x32xf32>
    %463 = vector.broadcast %286 : vector<1x32xf32> to vector<36x32xf32>
    %464 = arith.addf %462, %463 : vector<36x32xf32>
    %465 = arith.addf %397, %464 : vector<36x32xf32>
    %466 = tpu.iota {dimensions = array<i32: 0>} : vector<4x36xi32>
    %c9_i32_195 = arith.constant 9 : i32
    %467 = vector.broadcast %c9_i32_195 : i32 to vector<4x36xi32>
    %468 = arith.muli %466, %467 : vector<4x36xi32>
    %469 = tpu.iota {dimensions = array<i32: 1>} : vector<4x36xi32>
    %470 = arith.cmpi eq, %468, %469 : vector<4x36xi32>
    %471 = arith.extui %470 : vector<4x36xi1> to vector<4x36xi32>
    %472 = arith.sitofp %471 : vector<4x36xi32> to vector<4x36xf32>
    %cst_196 = arith.constant dense<0.000000e+00> : vector<4x32xf32>
    %473 = tpu.matmul %472, %465, %cst_196 {dimension_numbers = #tpu.dot_dimension_numbers<[1], [0], [0], [1], [0, 0, 1, 1], [], []>} : vector<4x36xf32>, vector<36x32xf32>, vector<4x32xf32> -> vector<4x32xf32>
    %c0_197 = arith.constant 0 : index
    %c0_198 = arith.constant 0 : index
    %474 = vector.load %arg16[%c0_197, %c0_198] : memref<1x32xf32, #tpu.memory_space<vmem>>, vector<1x32xf32>
    %c0_199 = arith.constant 0 : index
    %c0_200 = arith.constant 0 : index
    %475 = vector.load %arg17[%c0_199, %c0_200] : memref<1x32xf32, #tpu.memory_space<vmem>>, vector<1x32xf32>
    %cst_201 = arith.constant dense<0.000000e+00> : vector<4xf32>
    %476 = vector.multi_reduction <add>, %473, %cst_201 [1] : vector<4x32xf32> to vector<4xf32>
    %477 = vector.shape_cast %476 : vector<4xf32> to vector<4x1xf32>
    %cst_202 = arith.constant 3.200000e+01 : f32
    %478 = vector.broadcast %cst_202 : f32 to vector<4x1xf32>
    %479 = arith.divf %477, %478 : vector<4x1xf32>
    %480 = vector.broadcast %479 : vector<4x1xf32> to vector<4x32xf32>
    %481 = arith.subf %473, %480 : vector<4x32xf32>
    %482 = arith.mulf %481, %481 : vector<4x32xf32>
    %cst_203 = arith.constant dense<0.000000e+00> : vector<4xf32>
    %483 = vector.multi_reduction <add>, %482, %cst_203 [1] : vector<4x32xf32> to vector<4xf32>
    %484 = vector.shape_cast %483 : vector<4xf32> to vector<4x1xf32>
    %cst_204 = arith.constant 3.200000e+01 : f32
    %485 = vector.broadcast %cst_204 : f32 to vector<4x1xf32>
    %486 = arith.divf %484, %485 : vector<4x1xf32>
    %cst_205 = arith.constant 9.99999997E-7 : f32
    %487 = vector.broadcast %cst_205 : f32 to vector<4x1xf32>
    %488 = arith.addf %486, %487 : vector<4x1xf32>
    %489 = math.rsqrt %488 : vector<4x1xf32>
    %490 = vector.broadcast %489 : vector<4x1xf32> to vector<4x32xf32>
    %491 = arith.mulf %481, %490 : vector<4x32xf32>
    %492 = vector.broadcast %474 : vector<1x32xf32> to vector<4x32xf32>
    %493 = arith.mulf %491, %492 : vector<4x32xf32>
    %494 = vector.broadcast %475 : vector<1x32xf32> to vector<4x32xf32>
    %495 = arith.addf %493, %494 : vector<4x32xf32>
    %c0_206 = arith.constant 0 : index
    %c0_207 = arith.constant 0 : index
    %496 = vector.load %arg18[%c0_206, %c0_207] : memref<32x16xf32, #tpu.memory_space<vmem>>, vector<32x16xf32>
    %cst_208 = arith.constant dense<0.000000e+00> : vector<4x16xf32>
    %497 = tpu.matmul %495, %496, %cst_208 {dimension_numbers = #tpu.dot_dimension_numbers<[1], [0], [0], [1], [0, 0, 1, 1], [], []>} : vector<4x32xf32>, vector<32x16xf32>, vector<4x16xf32> -> vector<4x16xf32>
    %c0_209 = arith.constant 0 : index
    %c0_210 = arith.constant 0 : index
    %498 = vector.load %arg19[%c0_209, %c0_210] : memref<1x16xf32, #tpu.memory_space<vmem>>, vector<1x16xf32>
    %499 = vector.broadcast %498 : vector<1x16xf32> to vector<4x16xf32>
    %500 = arith.addf %497, %499 : vector<4x16xf32>
    %cst_211 = arith.constant 0.000000e+00 : f32
    %501 = vector.broadcast %cst_211 : f32 to vector<4x16xf32>
    %502 = arith.maximumf %500, %501 : vector<4x16xf32>
    %503 = vector.extract_strided_slice %502 {offsets = [0, 0], sizes = [1, 16], strides = [1, 1]} : vector<4x16xf32> to vector<1x16xf32>
    %504 = vector.extract_strided_slice %502 {offsets = [1, 0], sizes = [1, 16], strides = [1, 1]} : vector<4x16xf32> to vector<1x16xf32>
    %505 = vector.extract_strided_slice %502 {offsets = [2, 0], sizes = [1, 16], strides = [1, 1]} : vector<4x16xf32> to vector<1x16xf32>
    %506 = vector.extract_strided_slice %502 {offsets = [3, 0], sizes = [1, 16], strides = [1, 1]} : vector<4x16xf32> to vector<1x16xf32>
    %507 = tpu.concatenate %503, %504, %505, %506 in 1 : vector<1x16xf32>, vector<1x16xf32>, vector<1x16xf32>, vector<1x16xf32> -> vector<1x64xf32>
    %c0_212 = arith.constant 0 : index
    %c0_213 = arith.constant 0 : index
    %508 = vector.load %arg20[%c0_212, %c0_213] : memref<64x4xf32, #tpu.memory_space<vmem>>, vector<64x4xf32>
    %cst_214 = arith.constant dense<0.000000e+00> : vector<1x4xf32>
    %509 = tpu.matmul %507, %508, %cst_214 {dimension_numbers = #tpu.dot_dimension_numbers<[1], [0], [0], [1], [0, 0, 1, 1], [], []>} : vector<1x64xf32>, vector<64x4xf32>, vector<1x4xf32> -> vector<1x4xf32>
    %c0_215 = arith.constant 0 : index
    %c0_216 = arith.constant 0 : index
    %510 = vector.load %arg21[%c0_215, %c0_216] : memref<1x1xf32, #tpu.memory_space<vmem>>, vector<1x1xf32>
    %511 = vector.broadcast %510 : vector<1x1xf32> to vector<1x4xf32>
    %512 = arith.addf %509, %511 : vector<1x4xf32>
    %cst_217 = arith.constant 0.000000e+00 : f32
    %513 = vector.broadcast %cst_217 : f32 to vector<1x4xf32>
    %514 = arith.maximumf %512, %513 : vector<1x4xf32>
    %cst_218 = arith.constant dense<0xFF800000> : vector<1xf32>
    %515 = vector.multi_reduction <maximumf>, %514, %cst_218 [1] : vector<1x4xf32> to vector<1xf32>
    %516 = vector.shape_cast %515 : vector<1xf32> to vector<1x1xf32>
    %517 = vector.broadcast %516 : vector<1x1xf32> to vector<1x4xf32>
    %518 = arith.subf %514, %517 : vector<1x4xf32>
    %519 = math.exp %518 : vector<1x4xf32>
    %cst_219 = arith.constant dense<0.000000e+00> : vector<1xf32>
    %520 = vector.multi_reduction <add>, %519, %cst_219 [1] : vector<1x4xf32> to vector<1xf32>
    %521 = vector.shape_cast %520 : vector<1xf32> to vector<1x1xf32>
    %522 = tpu.reciprocal %521 {approx = true} : vector<1x1xf32> -> vector<1x1xf32>
    %523 = vector.broadcast %522 : vector<1x1xf32> to vector<1x4xf32>
    %524 = arith.mulf %519, %523 : vector<1x4xf32>
    %cst_220 = arith.constant dense<0.000000e+00> : vector<1x32xf32>
    %525 = tpu.matmul %524, %495, %cst_220 {dimension_numbers = #tpu.dot_dimension_numbers<[1], [0], [0], [1], [0, 0, 1, 1], [], []>} : vector<1x4xf32>, vector<4x32xf32>, vector<1x32xf32> -> vector<1x32xf32>
    %c0_221 = arith.constant 0 : index
    %c0_222 = arith.constant 0 : index
    %526 = vector.load %arg22[%c0_221, %c0_222] : memref<1x32xf32, #tpu.memory_space<vmem>>, vector<1x32xf32>
    %527 = arith.mulf %525, %526 : vector<1x32xf32>
    %c0_223 = arith.constant 0 : index
    %c0_224 = arith.constant 0 : index
    %528 = vector.load %arg23[%c0_223, %c0_224] : memref<1x32xf32, #tpu.memory_space<vmem>>, vector<1x32xf32>
    %529 = arith.addf %527, %528 : vector<1x32xf32>
    %c0_225 = arith.constant 0 : index
    %c0_226 = arith.constant 0 : index
    %c0_227 = arith.constant 0 : index
    %530 = vector.load %arg25[%c0_225, %c0_226, %c0_227] : memref<1x1x32xf32, #tpu.memory_space<vmem>>, vector<1x1x32xf32>
    %531 = vector.shape_cast %530 : vector<1x1x32xf32> to vector<1x32xf32>
    %532 = vector.shape_cast %529 : vector<1x32xf32> to vector<1x1x32xf32>
    tpu.vector_store %arg25[%c0_225, %c0_226, %c0_227], %532 {strides = array<i32>} : memref<1x1x32xf32, #tpu.memory_space<vmem>>, vector<1x1x32xf32>,
    return
  }
  func.func @transform_0(%arg0: i32) -> (i32, i32, i32) {
    %c0_i32 = arith.constant 0 : i32
    %c0_i32_0 = arith.constant 0 : i32
    %c0_i32_1 = arith.constant 0 : i32
    return %arg0, %c0_i32, %c0_i32_0 : i32, i32, i32
  }
  func.func @transform_1(%arg0: i32) -> (i32, i32) {
    %c0_i32 = arith.constant 0 : i32
    %c0_i32_0 = arith.constant 0 : i32
    %c0_i32_1 = arith.constant 0 : i32
    return %c0_i32, %c0_i32_0 : i32, i32
  }
  func.func @transform_2(%arg0: i32) -> (i32, i32) {
    %c0_i32 = arith.constant 0 : i32
    %c0_i32_0 = arith.constant 0 : i32
    %c0_i32_1 = arith.constant 0 : i32
    return %c0_i32, %c0_i32_0 : i32, i32
  }
  func.func @transform_3(%arg0: i32) -> (i32, i32, i32) {
    %c0_i32 = arith.constant 0 : i32
    %c0_i32_0 = arith.constant 0 : i32
    %c0_i32_1 = arith.constant 0 : i32
    %c0_i32_2 = arith.constant 0 : i32
    return %c0_i32, %c0_i32_0, %c0_i32_1 : i32, i32, i32
  }
  func.func @transform_4(%arg0: i32) -> (i32, i32, i32) {
    %c0_i32 = arith.constant 0 : i32
    %c0_i32_0 = arith.constant 0 : i32
    %c0_i32_1 = arith.constant 0 : i32
    %c0_i32_2 = arith.constant 0 : i32
    return %c0_i32, %c0_i32_0, %c0_i32_1 : i32, i32, i32
  }
  func.func @transform_5(%arg0: i32) -> (i32, i32, i32) {
    %c0_i32 = arith.constant 0 : i32
    %c0_i32_0 = arith.constant 0 : i32
    %c0_i32_1 = arith.constant 0 : i32
    %c0_i32_2 = arith.constant 0 : i32
    return %c0_i32, %c0_i32_0, %c0_i32_1 : i32, i32, i32
  }
  func.func @transform_6(%arg0: i32) -> (i32, i32, i32) {
    %c0_i32 = arith.constant 0 : i32
    %c0_i32_0 = arith.constant 0 : i32
    %c0_i32_1 = arith.constant 0 : i32
    %c0_i32_2 = arith.constant 0 : i32
    return %c0_i32, %c0_i32_0, %c0_i32_1 : i32, i32, i32
  }
  func.func @transform_7(%arg0: i32) -> (i32, i32, i32) {
    %c0_i32 = arith.constant 0 : i32
    %c0_i32_0 = arith.constant 0 : i32
    %c0_i32_1 = arith.constant 0 : i32
    %c0_i32_2 = arith.constant 0 : i32
    return %c0_i32, %c0_i32_0, %c0_i32_1 : i32, i32, i32
  }
  func.func @transform_8(%arg0: i32) -> (i32, i32, i32) {
    %c0_i32 = arith.constant 0 : i32
    %c0_i32_0 = arith.constant 0 : i32
    %c0_i32_1 = arith.constant 0 : i32
    %c0_i32_2 = arith.constant 0 : i32
    return %c0_i32, %c0_i32_0, %c0_i32_1 : i32, i32, i32
  }
  func.func @transform_9(%arg0: i32) -> (i32, i32, i32) {
    %c0_i32 = arith.constant 0 : i32
    %c0_i32_0 = arith.constant 0 : i32
    %c0_i32_1 = arith.constant 0 : i32
    %c0_i32_2 = arith.constant 0 : i32
    return %c0_i32, %c0_i32_0, %c0_i32_1 : i32, i32, i32
  }
  func.func @transform_10(%arg0: i32) -> (i32, i32, i32) {
    %c0_i32 = arith.constant 0 : i32
    %c0_i32_0 = arith.constant 0 : i32
    %c0_i32_1 = arith.constant 0 : i32
    %c0_i32_2 = arith.constant 0 : i32
    return %c0_i32, %c0_i32_0, %c0_i32_1 : i32, i32, i32
  }
  func.func @transform_11(%arg0: i32) -> (i32, i32, i32) {
    %c0_i32 = arith.constant 0 : i32
    %c0_i32_0 = arith.constant 0 : i32
    %c0_i32_1 = arith.constant 0 : i32
    %c0_i32_2 = arith.constant 0 : i32
    return %c0_i32, %c0_i32_0, %c0_i32_1 : i32, i32, i32
  }
  func.func @transform_12(%arg0: i32) -> (i32, i32, i32) {
    %c0_i32 = arith.constant 0 : i32
    %c0_i32_0 = arith.constant 0 : i32
    %c0_i32_1 = arith.constant 0 : i32
    %c0_i32_2 = arith.constant 0 : i32
    return %c0_i32, %c0_i32_0, %c0_i32_1 : i32, i32, i32
  }
  func.func @transform_13(%arg0: i32) -> (i32, i32, i32) {
    %c0_i32 = arith.constant 0 : i32
    %c0_i32_0 = arith.constant 0 : i32
    %c0_i32_1 = arith.constant 0 : i32
    %c0_i32_2 = arith.constant 0 : i32
    return %c0_i32, %c0_i32_0, %c0_i32_1 : i32, i32, i32
  }
  func.func @transform_14(%arg0: i32) -> (i32, i32, i32) {
    %c0_i32 = arith.constant 0 : i32
    %c0_i32_0 = arith.constant 0 : i32
    %c0_i32_1 = arith.constant 0 : i32
    %c0_i32_2 = arith.constant 0 : i32
    return %c0_i32, %c0_i32_0, %c0_i32_1 : i32, i32, i32
  }
  func.func @transform_15(%arg0: i32) -> (i32, i32) {
    %c0_i32 = arith.constant 0 : i32
    %c0_i32_0 = arith.constant 0 : i32
    %c0_i32_1 = arith.constant 0 : i32
    return %c0_i32, %c0_i32_0 : i32, i32
  }
  func.func @transform_16(%arg0: i32) -> (i32, i32) {
    %c0_i32 = arith.constant 0 : i32
    %c0_i32_0 = arith.constant 0 : i32
    %c0_i32_1 = arith.constant 0 : i32
    return %c0_i32, %c0_i32_0 : i32, i32
  }
  func.func @transform_17(%arg0: i32) -> (i32, i32) {
    %c0_i32 = arith.constant 0 : i32
    %c0_i32_0 = arith.constant 0 : i32
    %c0_i32_1 = arith.constant 0 : i32
    return %c0_i32, %c0_i32_0 : i32, i32
  }
  func.func @transform_18(%arg0: i32) -> (i32, i32) {
    %c0_i32 = arith.constant 0 : i32
    %c0_i32_0 = arith.constant 0 : i32
    %c0_i32_1 = arith.constant 0 : i32
    return %c0_i32, %c0_i32_0 : i32, i32
  }
  func.func @transform_19(%arg0: i32) -> (i32, i32) {
    %c0_i32 = arith.constant 0 : i32
    %c0_i32_0 = arith.constant 0 : i32
    %c0_i32_1 = arith.constant 0 : i32
    return %c0_i32, %c0_i32_0 : i32, i32
  }
  func.func @transform_20(%arg0: i32) -> (i32, i32) {
    %c0_i32 = arith.constant 0 : i32
    %c0_i32_0 = arith.constant 0 : i32
    %c0_i32_1 = arith.constant 0 : i32
    return %c0_i32, %c0_i32_0 : i32, i32
  }
  func.func @transform_21(%arg0: i32) -> (i32, i32) {
    %c0_i32 = arith.constant 0 : i32
    %c0_i32_0 = arith.constant 0 : i32
    %c0_i32_1 = arith.constant 0 : i32
    return %c0_i32, %c0_i32_0 : i32, i32
  }
  func.func @transform_22(%arg0: i32) -> (i32, i32) {
    %c0_i32 = arith.constant 0 : i32
    %c0_i32_0 = arith.constant 0 : i32
    %c0_i32_1 = arith.constant 0 : i32
    return %c0_i32, %c0_i32_0 : i32, i32
  }
  func.func @transform_23(%arg0: i32) -> (i32, i32, i32) {
    %c0_i32 = arith.constant 0 : i32
    %c0_i32_0 = arith.constant 0 : i32
    %c0_i32_1 = arith.constant 0 : i32
    return %arg0, %c0_i32, %c0_i32_0 : i32, i32, i32
  }
  func.func @transform_24(%arg0: i32) -> (i32, i32, i32) {
    %c0_i32 = arith.constant 0 : i32
    %c0_i32_0 = arith.constant 0 : i32
    %c0_i32_1 = arith.constant 0 : i32
    return %arg0, %c0_i32, %c0_i32_0 : i32, i32, i32
  }
}

module attributes {stable_mosaic.version = 11 : i64} {
  func.func @kernel(%arg0: i32, %arg1: memref<1x54x128xf32, #tpu.memory_space<vmem>>, %arg2: memref<1x128xf32, #tpu.memory_space<vmem>>, %arg3: memref<1x128xf32, #tpu.memory_space<vmem>>, %arg4: memref<128x384xbf16, #tpu.memory_space<vmem>>, %arg5: memref<1x384xf32, #tpu.memory_space<vmem>>, %arg6: memref<128x128xbf16, #tpu.memory_space<vmem>>, %arg7: memref<1x128xf32, #tpu.memory_space<vmem>>, %arg8: memref<1x128xf32, #tpu.memory_space<vmem>>, %arg9: memref<1x128xf32, #tpu.memory_space<vmem>>, %arg10: memref<128x512xbf16, #tpu.memory_space<vmem>>, %arg11: memref<1x512xf32, #tpu.memory_space<vmem>>, %arg12: memref<512x128xbf16, #tpu.memory_space<vmem>>, %arg13: memref<1x128xf32, #tpu.memory_space<vmem>>, %arg14: memref<1x128xf32, #tpu.memory_space<vmem>>, %arg15: memref<1x128xf32, #tpu.memory_space<vmem>>, %arg16: memref<6x128xf32, #tpu.memory_space<vmem>>, %arg17: memref<6x128xf32, #tpu.memory_space<vmem>>, %arg18: memref<1x6x128xf32, #tpu.memory_space<vmem>>) attributes {dimension_semantics = [#tpu.dimension_semantics<parallel>], iteration_bounds = array<i64: 2>, scalar_prefetch = 0 : i64, scratch_operands = 0 : i64, tpu.core_type = #tpu.core_type<tc>, window_params = [{transform_indices = @transform_0, window_bounds = array<i64: 1, 54, 128>}, {pipeline_mode = #tpu.pipeline_mode<synchronous>, transform_indices = @transform_1, window_bounds = array<i64: 1, 128>}, {pipeline_mode = #tpu.pipeline_mode<synchronous>, transform_indices = @transform_2, window_bounds = array<i64: 1, 128>}, {pipeline_mode = #tpu.pipeline_mode<synchronous>, transform_indices = @transform_3, window_bounds = array<i64: 128, 384>}, {pipeline_mode = #tpu.pipeline_mode<synchronous>, transform_indices = @transform_4, window_bounds = array<i64: 1, 384>}, {pipeline_mode = #tpu.pipeline_mode<synchronous>, transform_indices = @transform_5, window_bounds = array<i64: 128, 128>}, {pipeline_mode = #tpu.pipeline_mode<synchronous>, transform_indices = @transform_6, window_bounds = array<i64: 1, 128>}, {pipeline_mode = #tpu.pipeline_mode<synchronous>, transform_indices = @transform_7, window_bounds = array<i64: 1, 128>}, {pipeline_mode = #tpu.pipeline_mode<synchronous>, transform_indices = @transform_8, window_bounds = array<i64: 1, 128>}, {pipeline_mode = #tpu.pipeline_mode<synchronous>, transform_indices = @transform_9, window_bounds = array<i64: 128, 512>}, {pipeline_mode = #tpu.pipeline_mode<synchronous>, transform_indices = @transform_10, window_bounds = array<i64: 1, 512>}, {pipeline_mode = #tpu.pipeline_mode<synchronous>, transform_indices = @transform_11, window_bounds = array<i64: 512, 128>}, {pipeline_mode = #tpu.pipeline_mode<synchronous>, transform_indices = @transform_12, window_bounds = array<i64: 1, 128>}, {pipeline_mode = #tpu.pipeline_mode<synchronous>, transform_indices = @transform_13, window_bounds = array<i64: 1, 128>}, {pipeline_mode = #tpu.pipeline_mode<synchronous>, transform_indices = @transform_14, window_bounds = array<i64: 1, 128>}, {pipeline_mode = #tpu.pipeline_mode<synchronous>, transform_indices = @transform_15, window_bounds = array<i64: 6, 128>}, {pipeline_mode = #tpu.pipeline_mode<synchronous>, transform_indices = @transform_16, window_bounds = array<i64: 6, 128>}, {transform_indices = @transform_17, window_bounds = array<i64: 1, 6, 128>}]} {
    %0 = tpu.iota {dimensions = array<i32: 0>} : vector<54x54xi32>
    %1 = tpu.iota {dimensions = array<i32: 1>} : vector<54x54xi32>
    %false = arith.constant false
    %2 = vector.broadcast %false : i1 to vector<54x54xi1>
    %c0_i32 = arith.constant 0 : i32
    %3 = vector.broadcast %c0_i32 : i32 to vector<54x54xi32>
    %4 = arith.cmpi sge, %0, %3 : vector<54x54xi32>
    %c9_i32 = arith.constant 9 : i32
    %5 = vector.broadcast %c9_i32 : i32 to vector<54x54xi32>
    %6 = arith.cmpi slt, %0, %5 : vector<54x54xi32>
    %7 = arith.andi %4, %6 : vector<54x54xi1>
    %c0_i32_0 = arith.constant 0 : i32
    %8 = vector.broadcast %c0_i32_0 : i32 to vector<54x54xi32>
    %9 = arith.cmpi sge, %1, %8 : vector<54x54xi32>
    %c9_i32_1 = arith.constant 9 : i32
    %10 = vector.broadcast %c9_i32_1 : i32 to vector<54x54xi32>
    %11 = arith.cmpi slt, %1, %10 : vector<54x54xi32>
    %12 = arith.andi %9, %11 : vector<54x54xi1>
    %13 = arith.andi %7, %12 : vector<54x54xi1>
    %14 = arith.ori %2, %13 : vector<54x54xi1>
    %c9_i32_2 = arith.constant 9 : i32
    %15 = vector.broadcast %c9_i32_2 : i32 to vector<54x54xi32>
    %16 = arith.cmpi sge, %0, %15 : vector<54x54xi32>
    %c18_i32 = arith.constant 18 : i32
    %17 = vector.broadcast %c18_i32 : i32 to vector<54x54xi32>
    %18 = arith.cmpi slt, %0, %17 : vector<54x54xi32>
    %19 = arith.andi %16, %18 : vector<54x54xi1>
    %c9_i32_3 = arith.constant 9 : i32
    %20 = vector.broadcast %c9_i32_3 : i32 to vector<54x54xi32>
    %21 = arith.cmpi sge, %1, %20 : vector<54x54xi32>
    %c18_i32_4 = arith.constant 18 : i32
    %22 = vector.broadcast %c18_i32_4 : i32 to vector<54x54xi32>
    %23 = arith.cmpi slt, %1, %22 : vector<54x54xi32>
    %24 = arith.andi %21, %23 : vector<54x54xi1>
    %25 = arith.andi %19, %24 : vector<54x54xi1>
    %26 = arith.ori %14, %25 : vector<54x54xi1>
    %c18_i32_5 = arith.constant 18 : i32
    %27 = vector.broadcast %c18_i32_5 : i32 to vector<54x54xi32>
    %28 = arith.cmpi sge, %0, %27 : vector<54x54xi32>
    %c27_i32 = arith.constant 27 : i32
    %29 = vector.broadcast %c27_i32 : i32 to vector<54x54xi32>
    %30 = arith.cmpi slt, %0, %29 : vector<54x54xi32>
    %31 = arith.andi %28, %30 : vector<54x54xi1>
    %c18_i32_6 = arith.constant 18 : i32
    %32 = vector.broadcast %c18_i32_6 : i32 to vector<54x54xi32>
    %33 = arith.cmpi sge, %1, %32 : vector<54x54xi32>
    %c27_i32_7 = arith.constant 27 : i32
    %34 = vector.broadcast %c27_i32_7 : i32 to vector<54x54xi32>
    %35 = arith.cmpi slt, %1, %34 : vector<54x54xi32>
    %36 = arith.andi %33, %35 : vector<54x54xi1>
    %37 = arith.andi %31, %36 : vector<54x54xi1>
    %38 = arith.ori %26, %37 : vector<54x54xi1>
    %c27_i32_8 = arith.constant 27 : i32
    %39 = vector.broadcast %c27_i32_8 : i32 to vector<54x54xi32>
    %40 = arith.cmpi sge, %0, %39 : vector<54x54xi32>
    %c36_i32 = arith.constant 36 : i32
    %41 = vector.broadcast %c36_i32 : i32 to vector<54x54xi32>
    %42 = arith.cmpi slt, %0, %41 : vector<54x54xi32>
    %43 = arith.andi %40, %42 : vector<54x54xi1>
    %c27_i32_9 = arith.constant 27 : i32
    %44 = vector.broadcast %c27_i32_9 : i32 to vector<54x54xi32>
    %45 = arith.cmpi sge, %1, %44 : vector<54x54xi32>
    %c36_i32_10 = arith.constant 36 : i32
    %46 = vector.broadcast %c36_i32_10 : i32 to vector<54x54xi32>
    %47 = arith.cmpi slt, %1, %46 : vector<54x54xi32>
    %48 = arith.andi %45, %47 : vector<54x54xi1>
    %49 = arith.andi %43, %48 : vector<54x54xi1>
    %50 = arith.ori %38, %49 : vector<54x54xi1>
    %c36_i32_11 = arith.constant 36 : i32
    %51 = vector.broadcast %c36_i32_11 : i32 to vector<54x54xi32>
    %52 = arith.cmpi sge, %0, %51 : vector<54x54xi32>
    %c45_i32 = arith.constant 45 : i32
    %53 = vector.broadcast %c45_i32 : i32 to vector<54x54xi32>
    %54 = arith.cmpi slt, %0, %53 : vector<54x54xi32>
    %55 = arith.andi %52, %54 : vector<54x54xi1>
    %c36_i32_12 = arith.constant 36 : i32
    %56 = vector.broadcast %c36_i32_12 : i32 to vector<54x54xi32>
    %57 = arith.cmpi sge, %1, %56 : vector<54x54xi32>
    %c45_i32_13 = arith.constant 45 : i32
    %58 = vector.broadcast %c45_i32_13 : i32 to vector<54x54xi32>
    %59 = arith.cmpi slt, %1, %58 : vector<54x54xi32>
    %60 = arith.andi %57, %59 : vector<54x54xi1>
    %61 = arith.andi %55, %60 : vector<54x54xi1>
    %62 = arith.ori %50, %61 : vector<54x54xi1>
    %c45_i32_14 = arith.constant 45 : i32
    %63 = vector.broadcast %c45_i32_14 : i32 to vector<54x54xi32>
    %64 = arith.cmpi sge, %0, %63 : vector<54x54xi32>
    %c54_i32 = arith.constant 54 : i32
    %65 = vector.broadcast %c54_i32 : i32 to vector<54x54xi32>
    %66 = arith.cmpi slt, %0, %65 : vector<54x54xi32>
    %67 = arith.andi %64, %66 : vector<54x54xi1>
    %c45_i32_15 = arith.constant 45 : i32
    %68 = vector.broadcast %c45_i32_15 : i32 to vector<54x54xi32>
    %69 = arith.cmpi sge, %1, %68 : vector<54x54xi32>
    %c54_i32_16 = arith.constant 54 : i32
    %70 = vector.broadcast %c54_i32_16 : i32 to vector<54x54xi32>
    %71 = arith.cmpi slt, %1, %70 : vector<54x54xi32>
    %72 = arith.andi %69, %71 : vector<54x54xi1>
    %73 = arith.andi %67, %72 : vector<54x54xi1>
    %74 = arith.ori %62, %73 : vector<54x54xi1>
    %c0 = arith.constant 0 : index
    %c0_17 = arith.constant 0 : index
    %75 = vector.load %arg2[%c0, %c0_17] : memref<1x128xf32, #tpu.memory_space<vmem>>, vector<1x128xf32>
    %c0_18 = arith.constant 0 : index
    %c0_19 = arith.constant 0 : index
    %76 = vector.load %arg3[%c0_18, %c0_19] : memref<1x128xf32, #tpu.memory_space<vmem>>, vector<1x128xf32>
    %c0_20 = arith.constant 0 : index
    %c0_21 = arith.constant 0 : index
    %77 = vector.load %arg4[%c0_20, %c0_21] : memref<128x384xbf16, #tpu.memory_space<vmem>>, vector<128x384xbf16>
    %c0_22 = arith.constant 0 : index
    %c0_23 = arith.constant 0 : index
    %78 = vector.load %arg5[%c0_22, %c0_23] : memref<1x384xf32, #tpu.memory_space<vmem>>, vector<1x384xf32>
    %c0_24 = arith.constant 0 : index
    %c0_25 = arith.constant 0 : index
    %79 = vector.load %arg6[%c0_24, %c0_25] : memref<128x128xbf16, #tpu.memory_space<vmem>>, vector<128x128xbf16>
    %c0_26 = arith.constant 0 : index
    %c0_27 = arith.constant 0 : index
    %80 = vector.load %arg7[%c0_26, %c0_27] : memref<1x128xf32, #tpu.memory_space<vmem>>, vector<1x128xf32>
    %c0_28 = arith.constant 0 : index
    %c0_29 = arith.constant 0 : index
    %81 = vector.load %arg8[%c0_28, %c0_29] : memref<1x128xf32, #tpu.memory_space<vmem>>, vector<1x128xf32>
    %c0_30 = arith.constant 0 : index
    %c0_31 = arith.constant 0 : index
    %82 = vector.load %arg9[%c0_30, %c0_31] : memref<1x128xf32, #tpu.memory_space<vmem>>, vector<1x128xf32>
    %c0_32 = arith.constant 0 : index
    %c0_33 = arith.constant 0 : index
    %83 = vector.load %arg10[%c0_32, %c0_33] : memref<128x512xbf16, #tpu.memory_space<vmem>>, vector<128x512xbf16>
    %c0_34 = arith.constant 0 : index
    %c0_35 = arith.constant 0 : index
    %84 = vector.load %arg11[%c0_34, %c0_35] : memref<1x512xf32, #tpu.memory_space<vmem>>, vector<1x512xf32>
    %c0_36 = arith.constant 0 : index
    %c0_37 = arith.constant 0 : index
    %85 = vector.load %arg12[%c0_36, %c0_37] : memref<512x128xbf16, #tpu.memory_space<vmem>>, vector<512x128xbf16>
    %c0_38 = arith.constant 0 : index
    %c0_39 = arith.constant 0 : index
    %86 = vector.load %arg13[%c0_38, %c0_39] : memref<1x128xf32, #tpu.memory_space<vmem>>, vector<1x128xf32>
    %c0_40 = arith.constant 0 : index
    %c0_41 = arith.constant 0 : index
    %c0_42 = arith.constant 0 : index
    %87 = vector.load %arg1[%c0_40, %c0_41, %c0_42] : memref<1x54x128xf32, #tpu.memory_space<vmem>>, vector<1x54x128xf32>
    %88 = vector.shape_cast %87 : vector<1x54x128xf32> to vector<54x128xf32>
    %cst = arith.constant dense<0.000000e+00> : vector<54xf32>
    %89 = vector.multi_reduction <add>, %88, %cst [1] : vector<54x128xf32> to vector<54xf32>
    %90 = vector.shape_cast %89 : vector<54xf32> to vector<54x1xf32>
    %cst_43 = arith.constant 1.280000e+02 : f32
    %91 = vector.broadcast %cst_43 : f32 to vector<54x1xf32>
    %92 = arith.divf %90, %91 : vector<54x1xf32>
    %93 = vector.broadcast %92 : vector<54x1xf32> to vector<54x128xf32>
    %94 = arith.subf %88, %93 : vector<54x128xf32>
    %95 = arith.mulf %94, %94 : vector<54x128xf32>
    %cst_44 = arith.constant dense<0.000000e+00> : vector<54xf32>
    %96 = vector.multi_reduction <add>, %95, %cst_44 [1] : vector<54x128xf32> to vector<54xf32>
    %97 = vector.shape_cast %96 : vector<54xf32> to vector<54x1xf32>
    %cst_45 = arith.constant 1.280000e+02 : f32
    %98 = vector.broadcast %cst_45 : f32 to vector<54x1xf32>
    %99 = arith.divf %97, %98 : vector<54x1xf32>
    %cst_46 = arith.constant 9.99999997E-7 : f32
    %100 = vector.broadcast %cst_46 : f32 to vector<54x1xf32>
    %101 = arith.addf %99, %100 : vector<54x1xf32>
    %102 = math.rsqrt %101 : vector<54x1xf32>
    %103 = vector.broadcast %102 : vector<54x1xf32> to vector<54x128xf32>
    %104 = arith.mulf %94, %103 : vector<54x128xf32>
    %105 = vector.broadcast %75 : vector<1x128xf32> to vector<54x128xf32>
    %106 = arith.mulf %104, %105 : vector<54x128xf32>
    %107 = vector.broadcast %76 : vector<1x128xf32> to vector<54x128xf32>
    %108 = arith.addf %106, %107 : vector<54x128xf32>
    %109 = arith.truncf %108 : vector<54x128xf32> to vector<54x128xbf16>
    %cst_47 = arith.constant dense<0.000000e+00> : vector<54x384xf32>
    %110 = tpu.matmul %109, %77, %cst_47 {dimension_numbers = #tpu.dot_dimension_numbers<[1], [0], [0], [1], [0, 0, 1, 1], [], []>} : vector<54x128xbf16>, vector<128x384xbf16>, vector<54x384xf32> -> vector<54x384xf32>
    %111 = vector.broadcast %78 : vector<1x384xf32> to vector<54x384xf32>
    %112 = arith.addf %110, %111 : vector<54x384xf32>
    %113 = arith.truncf %112 : vector<54x384xf32> to vector<54x384xbf16>
    %114 = vector.extract_strided_slice %113 {offsets = [0, 0], sizes = [54, 32], strides = [1, 1]} : vector<54x384xbf16> to vector<54x32xbf16>
    %115 = vector.extract_strided_slice %113 {offsets = [0, 128], sizes = [54, 32], strides = [1, 1]} : vector<54x384xbf16> to vector<54x32xbf16>
    %116 = vector.extract_strided_slice %113 {offsets = [0, 256], sizes = [54, 32], strides = [1, 1]} : vector<54x384xbf16> to vector<54x32xbf16>
    %cst_48 = arith.constant dense<0.000000e+00> : vector<54x54xf32>
    %117 = tpu.matmul %114, %115, %cst_48 {dimension_numbers = #tpu.dot_dimension_numbers<[1], [1], [0], [0], [0, 0, 1, 0], [], []>} : vector<54x32xbf16>, vector<54x32xbf16>, vector<54x54xf32> -> vector<54x54xf32>
    %cst_49 = arith.constant 0.176776692 : f32
    %118 = vector.broadcast %cst_49 : f32 to vector<54x54xf32>
    %119 = arith.mulf %117, %118 : vector<54x54xf32>
    %cst_50 = arith.constant -1.000000e+30 : f32
    %120 = vector.broadcast %cst_50 : f32 to vector<54x54xf32>
    %121 = arith.select %74, %119, %120 : vector<54x54xi1>, vector<54x54xf32>
    %cst_51 = arith.constant dense<0xFF800000> : vector<54xf32>
    %122 = vector.multi_reduction <maximumf>, %121, %cst_51 [1] : vector<54x54xf32> to vector<54xf32>
    %123 = vector.shape_cast %122 : vector<54xf32> to vector<54x1xf32>
    %124 = vector.broadcast %123 : vector<54x1xf32> to vector<54x54xf32>
    %125 = arith.subf %121, %124 : vector<54x54xf32>
    %126 = math.exp %125 : vector<54x54xf32>
    %cst_52 = arith.constant dense<0.000000e+00> : vector<54xf32>
    %127 = vector.multi_reduction <add>, %126, %cst_52 [1] : vector<54x54xf32> to vector<54xf32>
    %128 = vector.shape_cast %127 : vector<54xf32> to vector<54x1xf32>
    %129 = tpu.reciprocal %128 {approx = true} : vector<54x1xf32> -> vector<54x1xf32>
    %130 = vector.broadcast %129 : vector<54x1xf32> to vector<54x54xf32>
    %131 = arith.mulf %126, %130 : vector<54x54xf32>
    %132 = arith.truncf %131 : vector<54x54xf32> to vector<54x54xbf16>
    %cst_53 = arith.constant dense<0.000000e+00> : vector<54x32xf32>
    %133 = tpu.matmul %132, %116, %cst_53 {dimension_numbers = #tpu.dot_dimension_numbers<[1], [0], [0], [1], [0, 0, 1, 1], [], []>} : vector<54x54xbf16>, vector<54x32xbf16>, vector<54x32xf32> -> vector<54x32xf32>
    %134 = vector.extract_strided_slice %113 {offsets = [0, 32], sizes = [54, 32], strides = [1, 1]} : vector<54x384xbf16> to vector<54x32xbf16>
    %135 = vector.extract_strided_slice %113 {offsets = [0, 160], sizes = [54, 32], strides = [1, 1]} : vector<54x384xbf16> to vector<54x32xbf16>
    %136 = vector.extract_strided_slice %113 {offsets = [0, 288], sizes = [54, 32], strides = [1, 1]} : vector<54x384xbf16> to vector<54x32xbf16>
    %cst_54 = arith.constant dense<0.000000e+00> : vector<54x54xf32>
    %137 = tpu.matmul %134, %135, %cst_54 {dimension_numbers = #tpu.dot_dimension_numbers<[1], [1], [0], [0], [0, 0, 1, 0], [], []>} : vector<54x32xbf16>, vector<54x32xbf16>, vector<54x54xf32> -> vector<54x54xf32>
    %cst_55 = arith.constant 0.176776692 : f32
    %138 = vector.broadcast %cst_55 : f32 to vector<54x54xf32>
    %139 = arith.mulf %137, %138 : vector<54x54xf32>
    %cst_56 = arith.constant -1.000000e+30 : f32
    %140 = vector.broadcast %cst_56 : f32 to vector<54x54xf32>
    %141 = arith.select %74, %139, %140 : vector<54x54xi1>, vector<54x54xf32>
    %cst_57 = arith.constant dense<0xFF800000> : vector<54xf32>
    %142 = vector.multi_reduction <maximumf>, %141, %cst_57 [1] : vector<54x54xf32> to vector<54xf32>
    %143 = vector.shape_cast %142 : vector<54xf32> to vector<54x1xf32>
    %144 = vector.broadcast %143 : vector<54x1xf32> to vector<54x54xf32>
    %145 = arith.subf %141, %144 : vector<54x54xf32>
    %146 = math.exp %145 : vector<54x54xf32>
    %cst_58 = arith.constant dense<0.000000e+00> : vector<54xf32>
    %147 = vector.multi_reduction <add>, %146, %cst_58 [1] : vector<54x54xf32> to vector<54xf32>
    %148 = vector.shape_cast %147 : vector<54xf32> to vector<54x1xf32>
    %149 = tpu.reciprocal %148 {approx = true} : vector<54x1xf32> -> vector<54x1xf32>
    %150 = vector.broadcast %149 : vector<54x1xf32> to vector<54x54xf32>
    %151 = arith.mulf %146, %150 : vector<54x54xf32>
    %152 = arith.truncf %151 : vector<54x54xf32> to vector<54x54xbf16>
    %cst_59 = arith.constant dense<0.000000e+00> : vector<54x32xf32>
    %153 = tpu.matmul %152, %136, %cst_59 {dimension_numbers = #tpu.dot_dimension_numbers<[1], [0], [0], [1], [0, 0, 1, 1], [], []>} : vector<54x54xbf16>, vector<54x32xbf16>, vector<54x32xf32> -> vector<54x32xf32>
    %154 = vector.extract_strided_slice %113 {offsets = [0, 64], sizes = [54, 32], strides = [1, 1]} : vector<54x384xbf16> to vector<54x32xbf16>
    %155 = vector.extract_strided_slice %113 {offsets = [0, 192], sizes = [54, 32], strides = [1, 1]} : vector<54x384xbf16> to vector<54x32xbf16>
    %156 = vector.extract_strided_slice %113 {offsets = [0, 320], sizes = [54, 32], strides = [1, 1]} : vector<54x384xbf16> to vector<54x32xbf16>
    %cst_60 = arith.constant dense<0.000000e+00> : vector<54x54xf32>
    %157 = tpu.matmul %154, %155, %cst_60 {dimension_numbers = #tpu.dot_dimension_numbers<[1], [1], [0], [0], [0, 0, 1, 0], [], []>} : vector<54x32xbf16>, vector<54x32xbf16>, vector<54x54xf32> -> vector<54x54xf32>
    %cst_61 = arith.constant 0.176776692 : f32
    %158 = vector.broadcast %cst_61 : f32 to vector<54x54xf32>
    %159 = arith.mulf %157, %158 : vector<54x54xf32>
    %cst_62 = arith.constant -1.000000e+30 : f32
    %160 = vector.broadcast %cst_62 : f32 to vector<54x54xf32>
    %161 = arith.select %74, %159, %160 : vector<54x54xi1>, vector<54x54xf32>
    %cst_63 = arith.constant dense<0xFF800000> : vector<54xf32>
    %162 = vector.multi_reduction <maximumf>, %161, %cst_63 [1] : vector<54x54xf32> to vector<54xf32>
    %163 = vector.shape_cast %162 : vector<54xf32> to vector<54x1xf32>
    %164 = vector.broadcast %163 : vector<54x1xf32> to vector<54x54xf32>
    %165 = arith.subf %161, %164 : vector<54x54xf32>
    %166 = math.exp %165 : vector<54x54xf32>
    %cst_64 = arith.constant dense<0.000000e+00> : vector<54xf32>
    %167 = vector.multi_reduction <add>, %166, %cst_64 [1] : vector<54x54xf32> to vector<54xf32>
    %168 = vector.shape_cast %167 : vector<54xf32> to vector<54x1xf32>
    %169 = tpu.reciprocal %168 {approx = true} : vector<54x1xf32> -> vector<54x1xf32>
    %170 = vector.broadcast %169 : vector<54x1xf32> to vector<54x54xf32>
    %171 = arith.mulf %166, %170 : vector<54x54xf32>
    %172 = arith.truncf %171 : vector<54x54xf32> to vector<54x54xbf16>
    %cst_65 = arith.constant dense<0.000000e+00> : vector<54x32xf32>
    %173 = tpu.matmul %172, %156, %cst_65 {dimension_numbers = #tpu.dot_dimension_numbers<[1], [0], [0], [1], [0, 0, 1, 1], [], []>} : vector<54x54xbf16>, vector<54x32xbf16>, vector<54x32xf32> -> vector<54x32xf32>
    %174 = vector.extract_strided_slice %113 {offsets = [0, 96], sizes = [54, 32], strides = [1, 1]} : vector<54x384xbf16> to vector<54x32xbf16>
    %175 = vector.extract_strided_slice %113 {offsets = [0, 224], sizes = [54, 32], strides = [1, 1]} : vector<54x384xbf16> to vector<54x32xbf16>
    %176 = vector.extract_strided_slice %113 {offsets = [0, 352], sizes = [54, 32], strides = [1, 1]} : vector<54x384xbf16> to vector<54x32xbf16>
    %cst_66 = arith.constant dense<0.000000e+00> : vector<54x54xf32>
    %177 = tpu.matmul %174, %175, %cst_66 {dimension_numbers = #tpu.dot_dimension_numbers<[1], [1], [0], [0], [0, 0, 1, 0], [], []>} : vector<54x32xbf16>, vector<54x32xbf16>, vector<54x54xf32> -> vector<54x54xf32>
    %cst_67 = arith.constant 0.176776692 : f32
    %178 = vector.broadcast %cst_67 : f32 to vector<54x54xf32>
    %179 = arith.mulf %177, %178 : vector<54x54xf32>
    %cst_68 = arith.constant -1.000000e+30 : f32
    %180 = vector.broadcast %cst_68 : f32 to vector<54x54xf32>
    %181 = arith.select %74, %179, %180 : vector<54x54xi1>, vector<54x54xf32>
    %cst_69 = arith.constant dense<0xFF800000> : vector<54xf32>
    %182 = vector.multi_reduction <maximumf>, %181, %cst_69 [1] : vector<54x54xf32> to vector<54xf32>
    %183 = vector.shape_cast %182 : vector<54xf32> to vector<54x1xf32>
    %184 = vector.broadcast %183 : vector<54x1xf32> to vector<54x54xf32>
    %185 = arith.subf %181, %184 : vector<54x54xf32>
    %186 = math.exp %185 : vector<54x54xf32>
    %cst_70 = arith.constant dense<0.000000e+00> : vector<54xf32>
    %187 = vector.multi_reduction <add>, %186, %cst_70 [1] : vector<54x54xf32> to vector<54xf32>
    %188 = vector.shape_cast %187 : vector<54xf32> to vector<54x1xf32>
    %189 = tpu.reciprocal %188 {approx = true} : vector<54x1xf32> -> vector<54x1xf32>
    %190 = vector.broadcast %189 : vector<54x1xf32> to vector<54x54xf32>
    %191 = arith.mulf %186, %190 : vector<54x54xf32>
    %192 = arith.truncf %191 : vector<54x54xf32> to vector<54x54xbf16>
    %cst_71 = arith.constant dense<0.000000e+00> : vector<54x32xf32>
    %193 = tpu.matmul %192, %176, %cst_71 {dimension_numbers = #tpu.dot_dimension_numbers<[1], [0], [0], [1], [0, 0, 1, 1], [], []>} : vector<54x54xbf16>, vector<54x32xbf16>, vector<54x32xf32> -> vector<54x32xf32>
    %194 = tpu.concatenate %133, %153, %173, %193 in 1 : vector<54x32xf32>, vector<54x32xf32>, vector<54x32xf32>, vector<54x32xf32> -> vector<54x128xf32>
    %195 = arith.truncf %194 : vector<54x128xf32> to vector<54x128xbf16>
    %cst_72 = arith.constant dense<0.000000e+00> : vector<54x128xf32>
    %196 = tpu.matmul %195, %79, %cst_72 {dimension_numbers = #tpu.dot_dimension_numbers<[1], [0], [0], [1], [0, 0, 1, 1], [], []>} : vector<54x128xbf16>, vector<128x128xbf16>, vector<54x128xf32> -> vector<54x128xf32>
    %197 = arith.addf %88, %196 : vector<54x128xf32>
    %198 = vector.broadcast %80 : vector<1x128xf32> to vector<54x128xf32>
    %199 = arith.addf %197, %198 : vector<54x128xf32>
    %cst_73 = arith.constant dense<0.000000e+00> : vector<54xf32>
    %200 = vector.multi_reduction <add>, %199, %cst_73 [1] : vector<54x128xf32> to vector<54xf32>
    %201 = vector.shape_cast %200 : vector<54xf32> to vector<54x1xf32>
    %cst_74 = arith.constant 1.280000e+02 : f32
    %202 = vector.broadcast %cst_74 : f32 to vector<54x1xf32>
    %203 = arith.divf %201, %202 : vector<54x1xf32>
    %204 = vector.broadcast %203 : vector<54x1xf32> to vector<54x128xf32>
    %205 = arith.subf %199, %204 : vector<54x128xf32>
    %206 = arith.mulf %205, %205 : vector<54x128xf32>
    %cst_75 = arith.constant dense<0.000000e+00> : vector<54xf32>
    %207 = vector.multi_reduction <add>, %206, %cst_75 [1] : vector<54x128xf32> to vector<54xf32>
    %208 = vector.shape_cast %207 : vector<54xf32> to vector<54x1xf32>
    %cst_76 = arith.constant 1.280000e+02 : f32
    %209 = vector.broadcast %cst_76 : f32 to vector<54x1xf32>
    %210 = arith.divf %208, %209 : vector<54x1xf32>
    %cst_77 = arith.constant 9.99999997E-7 : f32
    %211 = vector.broadcast %cst_77 : f32 to vector<54x1xf32>
    %212 = arith.addf %210, %211 : vector<54x1xf32>
    %213 = math.rsqrt %212 : vector<54x1xf32>
    %214 = vector.broadcast %213 : vector<54x1xf32> to vector<54x128xf32>
    %215 = arith.mulf %205, %214 : vector<54x128xf32>
    %216 = vector.broadcast %81 : vector<1x128xf32> to vector<54x128xf32>
    %217 = arith.mulf %215, %216 : vector<54x128xf32>
    %218 = vector.broadcast %82 : vector<1x128xf32> to vector<54x128xf32>
    %219 = arith.addf %217, %218 : vector<54x128xf32>
    %220 = arith.truncf %219 : vector<54x128xf32> to vector<54x128xbf16>
    %cst_78 = arith.constant dense<0.000000e+00> : vector<54x512xf32>
    %221 = tpu.matmul %220, %83, %cst_78 {dimension_numbers = #tpu.dot_dimension_numbers<[1], [0], [0], [1], [0, 0, 1, 1], [], []>} : vector<54x128xbf16>, vector<128x512xbf16>, vector<54x512xf32> -> vector<54x512xf32>
    %222 = vector.broadcast %84 : vector<1x512xf32> to vector<54x512xf32>
    %223 = arith.addf %221, %222 : vector<54x512xf32>
    %cst_79 = arith.constant 0.707106769 : f32
    %224 = vector.broadcast %cst_79 : f32 to vector<54x512xf32>
    %225 = arith.mulf %223, %224 : vector<54x512xf32>
    %226 = math.absf %225 : vector<54x512xf32>
    %cst_80 = arith.constant 0.327591091 : f32
    %227 = vector.broadcast %cst_80 : f32 to vector<54x512xf32>
    %228 = arith.mulf %227, %226 : vector<54x512xf32>
    %cst_81 = arith.constant 1.000000e+00 : f32
    %229 = vector.broadcast %cst_81 : f32 to vector<54x512xf32>
    %230 = arith.addf %229, %228 : vector<54x512xf32>
    %231 = tpu.reciprocal %230 {approx = true} : vector<54x512xf32> -> vector<54x512xf32>
    %cst_82 = arith.constant 1.06140542 : f32
    %232 = vector.broadcast %cst_82 : f32 to vector<54x512xf32>
    %233 = arith.mulf %232, %231 : vector<54x512xf32>
    %cst_83 = arith.constant -1.45315206 : f32
    %234 = vector.broadcast %cst_83 : f32 to vector<54x512xf32>
    %235 = arith.addf %233, %234 : vector<54x512xf32>
    %236 = arith.mulf %235, %231 : vector<54x512xf32>
    %cst_84 = arith.constant 1.42141378 : f32
    %237 = vector.broadcast %cst_84 : f32 to vector<54x512xf32>
    %238 = arith.addf %236, %237 : vector<54x512xf32>
    %239 = arith.mulf %238, %231 : vector<54x512xf32>
    %cst_85 = arith.constant -0.284496725 : f32
    %240 = vector.broadcast %cst_85 : f32 to vector<54x512xf32>
    %241 = arith.addf %239, %240 : vector<54x512xf32>
    %242 = arith.mulf %241, %231 : vector<54x512xf32>
    %cst_86 = arith.constant 0.254829586 : f32
    %243 = vector.broadcast %cst_86 : f32 to vector<54x512xf32>
    %244 = arith.addf %242, %243 : vector<54x512xf32>
    %245 = arith.mulf %244, %231 : vector<54x512xf32>
    %cst_87 = arith.constant 0.000000e+00 : f32
    %246 = vector.broadcast %cst_87 : f32 to vector<54x512xf32>
    %247 = arith.subf %246, %226 : vector<54x512xf32>
    %248 = arith.mulf %247, %226 : vector<54x512xf32>
    %249 = math.exp %248 : vector<54x512xf32>
    %250 = arith.mulf %245, %249 : vector<54x512xf32>
    %cst_88 = arith.constant 1.000000e+00 : f32
    %251 = vector.broadcast %cst_88 : f32 to vector<54x512xf32>
    %252 = arith.subf %251, %250 : vector<54x512xf32>
    %cst_89 = arith.constant 0.000000e+00 : f32
    %253 = vector.broadcast %cst_89 : f32 to vector<54x512xf32>
    %254 = arith.cmpf oge, %225, %253 : vector<54x512xf32>
    %cst_90 = arith.constant 0.000000e+00 : f32
    %255 = vector.broadcast %cst_90 : f32 to vector<54x512xf32>
    %256 = arith.subf %255, %252 : vector<54x512xf32>
    %257 = arith.select %254, %252, %256 : vector<54x512xi1>, vector<54x512xf32>
    %cst_91 = arith.constant 5.000000e-01 : f32
    %258 = vector.broadcast %cst_91 : f32 to vector<54x512xf32>
    %259 = arith.mulf %258, %223 : vector<54x512xf32>
    %cst_92 = arith.constant 1.000000e+00 : f32
    %260 = vector.broadcast %cst_92 : f32 to vector<54x512xf32>
    %261 = arith.addf %260, %257 : vector<54x512xf32>
    %262 = arith.mulf %259, %261 : vector<54x512xf32>
    %263 = arith.truncf %262 : vector<54x512xf32> to vector<54x512xbf16>
    %cst_93 = arith.constant dense<0.000000e+00> : vector<54x128xf32>
    %264 = tpu.matmul %263, %85, %cst_93 {dimension_numbers = #tpu.dot_dimension_numbers<[1], [0], [0], [1], [0, 0, 1, 1], [], []>} : vector<54x512xbf16>, vector<512x128xbf16>, vector<54x128xf32> -> vector<54x128xf32>
    %265 = vector.broadcast %86 : vector<1x128xf32> to vector<54x128xf32>
    %266 = arith.addf %264, %265 : vector<54x128xf32>
    %267 = arith.addf %199, %266 : vector<54x128xf32>
    %268 = tpu.iota {dimensions = array<i32: 0>} : vector<6x54xi32>
    %c9_i32_94 = arith.constant 9 : i32
    %269 = vector.broadcast %c9_i32_94 : i32 to vector<6x54xi32>
    %270 = arith.muli %268, %269 : vector<6x54xi32>
    %271 = tpu.iota {dimensions = array<i32: 1>} : vector<6x54xi32>
    %272 = arith.cmpi eq, %270, %271 : vector<6x54xi32>
    %273 = arith.extui %272 : vector<6x54xi1> to vector<6x54xi32>
    %274 = arith.sitofp %273 : vector<6x54xi32> to vector<6x54xf32>
    %cst_95 = arith.constant dense<0.000000e+00> : vector<6x128xf32>
    %275 = tpu.matmul %274, %267, %cst_95 {dimension_numbers = #tpu.dot_dimension_numbers<[1], [0], [0], [1], [0, 0, 1, 1], [], []>} : vector<6x54xf32>, vector<54x128xf32>, vector<6x128xf32> -> vector<6x128xf32>
    %c0_96 = arith.constant 0 : index
    %c0_97 = arith.constant 0 : index
    %276 = vector.load %arg14[%c0_96, %c0_97] : memref<1x128xf32, #tpu.memory_space<vmem>>, vector<1x128xf32>
    %c0_98 = arith.constant 0 : index
    %c0_99 = arith.constant 0 : index
    %277 = vector.load %arg15[%c0_98, %c0_99] : memref<1x128xf32, #tpu.memory_space<vmem>>, vector<1x128xf32>
    %cst_100 = arith.constant dense<0.000000e+00> : vector<6xf32>
    %278 = vector.multi_reduction <add>, %275, %cst_100 [1] : vector<6x128xf32> to vector<6xf32>
    %279 = vector.shape_cast %278 : vector<6xf32> to vector<6x1xf32>
    %cst_101 = arith.constant 1.280000e+02 : f32
    %280 = vector.broadcast %cst_101 : f32 to vector<6x1xf32>
    %281 = arith.divf %279, %280 : vector<6x1xf32>
    %282 = vector.broadcast %281 : vector<6x1xf32> to vector<6x128xf32>
    %283 = arith.subf %275, %282 : vector<6x128xf32>
    %284 = arith.mulf %283, %283 : vector<6x128xf32>
    %cst_102 = arith.constant dense<0.000000e+00> : vector<6xf32>
    %285 = vector.multi_reduction <add>, %284, %cst_102 [1] : vector<6x128xf32> to vector<6xf32>
    %286 = vector.shape_cast %285 : vector<6xf32> to vector<6x1xf32>
    %cst_103 = arith.constant 1.280000e+02 : f32
    %287 = vector.broadcast %cst_103 : f32 to vector<6x1xf32>
    %288 = arith.divf %286, %287 : vector<6x1xf32>
    %cst_104 = arith.constant 9.99999974E-6 : f32
    %289 = vector.broadcast %cst_104 : f32 to vector<6x1xf32>
    %290 = arith.addf %288, %289 : vector<6x1xf32>
    %291 = math.rsqrt %290 : vector<6x1xf32>
    %292 = vector.broadcast %291 : vector<6x1xf32> to vector<6x128xf32>
    %293 = arith.mulf %283, %292 : vector<6x128xf32>
    %294 = vector.broadcast %276 : vector<1x128xf32> to vector<6x128xf32>
    %295 = arith.mulf %293, %294 : vector<6x128xf32>
    %296 = vector.broadcast %277 : vector<1x128xf32> to vector<6x128xf32>
    %297 = arith.addf %295, %296 : vector<6x128xf32>
    %c0_105 = arith.constant 0 : index
    %c0_106 = arith.constant 0 : index
    %298 = vector.load %arg16[%c0_105, %c0_106] : memref<6x128xf32, #tpu.memory_space<vmem>>, vector<6x128xf32>
    %299 = arith.mulf %297, %298 : vector<6x128xf32>
    %c0_107 = arith.constant 0 : index
    %c0_108 = arith.constant 0 : index
    %300 = vector.load %arg17[%c0_107, %c0_108] : memref<6x128xf32, #tpu.memory_space<vmem>>, vector<6x128xf32>
    %301 = arith.addf %299, %300 : vector<6x128xf32>
    %cst_109 = arith.constant 0.166666672 : f32
    %302 = vector.broadcast %cst_109 : f32 to vector<6x128xf32>
    %303 = arith.mulf %301, %302 : vector<6x128xf32>
    %c0_110 = arith.constant 0 : index
    %c0_111 = arith.constant 0 : index
    %c0_112 = arith.constant 0 : index
    %304 = vector.load %arg18[%c0_110, %c0_111, %c0_112] : memref<1x6x128xf32, #tpu.memory_space<vmem>>, vector<1x6x128xf32>
    %305 = vector.shape_cast %304 : vector<1x6x128xf32> to vector<6x128xf32>
    %306 = vector.shape_cast %303 : vector<6x128xf32> to vector<1x6x128xf32>
    tpu.vector_store %arg18[%c0_110, %c0_111, %c0_112], %306 {strides = array<i32>} : memref<1x6x128xf32, #tpu.memory_space<vmem>>, vector<1x6x128xf32>,
    return
  }
  func.func @transform_0(%arg0: i32) -> (i32, i32, i32) {
    %c0_i32 = arith.constant 0 : i32
    %c0_i32_0 = arith.constant 0 : i32
    %c0_i32_1 = arith.constant 0 : i32
    return %arg0, %c0_i32, %c0_i32_0 : i32, i32, i32
  }
  func.func @transform_1(%arg0: i32) -> (i32, i32) {
    %c0_i32 = arith.constant 0 : i32
    %c0_i32_0 = arith.constant 0 : i32
    %c0_i32_1 = arith.constant 0 : i32
    return %c0_i32, %c0_i32_0 : i32, i32
  }
  func.func @transform_2(%arg0: i32) -> (i32, i32) {
    %c0_i32 = arith.constant 0 : i32
    %c0_i32_0 = arith.constant 0 : i32
    %c0_i32_1 = arith.constant 0 : i32
    return %c0_i32, %c0_i32_0 : i32, i32
  }
  func.func @transform_3(%arg0: i32) -> (i32, i32) {
    %c0_i32 = arith.constant 0 : i32
    %c0_i32_0 = arith.constant 0 : i32
    %c0_i32_1 = arith.constant 0 : i32
    return %c0_i32, %c0_i32_0 : i32, i32
  }
  func.func @transform_4(%arg0: i32) -> (i32, i32) {
    %c0_i32 = arith.constant 0 : i32
    %c0_i32_0 = arith.constant 0 : i32
    %c0_i32_1 = arith.constant 0 : i32
    return %c0_i32, %c0_i32_0 : i32, i32
  }
  func.func @transform_5(%arg0: i32) -> (i32, i32) {
    %c0_i32 = arith.constant 0 : i32
    %c0_i32_0 = arith.constant 0 : i32
    %c0_i32_1 = arith.constant 0 : i32
    return %c0_i32, %c0_i32_0 : i32, i32
  }
  func.func @transform_6(%arg0: i32) -> (i32, i32) {
    %c0_i32 = arith.constant 0 : i32
    %c0_i32_0 = arith.constant 0 : i32
    %c0_i32_1 = arith.constant 0 : i32
    return %c0_i32, %c0_i32_0 : i32, i32
  }
  func.func @transform_7(%arg0: i32) -> (i32, i32) {
    %c0_i32 = arith.constant 0 : i32
    %c0_i32_0 = arith.constant 0 : i32
    %c0_i32_1 = arith.constant 0 : i32
    return %c0_i32, %c0_i32_0 : i32, i32
  }
  func.func @transform_8(%arg0: i32) -> (i32, i32) {
    %c0_i32 = arith.constant 0 : i32
    %c0_i32_0 = arith.constant 0 : i32
    %c0_i32_1 = arith.constant 0 : i32
    return %c0_i32, %c0_i32_0 : i32, i32
  }
  func.func @transform_9(%arg0: i32) -> (i32, i32) {
    %c0_i32 = arith.constant 0 : i32
    %c0_i32_0 = arith.constant 0 : i32
    %c0_i32_1 = arith.constant 0 : i32
    return %c0_i32, %c0_i32_0 : i32, i32
  }
  func.func @transform_10(%arg0: i32) -> (i32, i32) {
    %c0_i32 = arith.constant 0 : i32
    %c0_i32_0 = arith.constant 0 : i32
    %c0_i32_1 = arith.constant 0 : i32
    return %c0_i32, %c0_i32_0 : i32, i32
  }
  func.func @transform_11(%arg0: i32) -> (i32, i32) {
    %c0_i32 = arith.constant 0 : i32
    %c0_i32_0 = arith.constant 0 : i32
    %c0_i32_1 = arith.constant 0 : i32
    return %c0_i32, %c0_i32_0 : i32, i32
  }
  func.func @transform_12(%arg0: i32) -> (i32, i32) {
    %c0_i32 = arith.constant 0 : i32
    %c0_i32_0 = arith.constant 0 : i32
    %c0_i32_1 = arith.constant 0 : i32
    return %c0_i32, %c0_i32_0 : i32, i32
  }
  func.func @transform_13(%arg0: i32) -> (i32, i32) {
    %c0_i32 = arith.constant 0 : i32
    %c0_i32_0 = arith.constant 0 : i32
    %c0_i32_1 = arith.constant 0 : i32
    return %c0_i32, %c0_i32_0 : i32, i32
  }
  func.func @transform_14(%arg0: i32) -> (i32, i32) {
    %c0_i32 = arith.constant 0 : i32
    %c0_i32_0 = arith.constant 0 : i32
    %c0_i32_1 = arith.constant 0 : i32
    return %c0_i32, %c0_i32_0 : i32, i32
  }
  func.func @transform_15(%arg0: i32) -> (i32, i32) {
    %c0_i32 = arith.constant 0 : i32
    %c0_i32_0 = arith.constant 0 : i32
    %c0_i32_1 = arith.constant 0 : i32
    return %c0_i32, %c0_i32_0 : i32, i32
  }
  func.func @transform_16(%arg0: i32) -> (i32, i32) {
    %c0_i32 = arith.constant 0 : i32
    %c0_i32_0 = arith.constant 0 : i32
    %c0_i32_1 = arith.constant 0 : i32
    return %c0_i32, %c0_i32_0 : i32, i32
  }
  func.func @transform_17(%arg0: i32) -> (i32, i32, i32) {
    %c0_i32 = arith.constant 0 : i32
    %c0_i32_0 = arith.constant 0 : i32
    %c0_i32_1 = arith.constant 0 : i32
    return %arg0, %c0_i32, %c0_i32_0 : i32, i32, i32
  }
}

</mosaic_0001>

<llo_original>
// kernel: tile.7
$region0: #{tile.7}
  %s0 = inlined_call_operand.vmem [shape: f32[4,9,32], index: 0, kind: input, shape index: {}]
  %s1 = inlined_call_operand.vmem [shape: f32[36,32], index: 1, kind: output, shape index: {}]
  %v2 = vld [vmem:[%s0] sm:$0xff]
  %vm3 = vcmask 261120
  %4 = vst.msk [vmem:[%s1] sm:$0xff] %vm3, %v2
  %s5 = scalar_lea.vmem %s0, 8
  %s6 = smov 3
  %v7 = vld [vmem:[%s5] ss:$8 sm:%s6]
  %vm8 = vcmask 261120
  %s9 = scalar_lea.vmem %s1, 8
  %10 = vst.msk [vmem:[%s9] sm:$0x3] %vm8, %v7
  %s11 = scalar_lea.vmem %s0, 17
  %v12 = vld [vmem:[%s11] sm:$0xff]
  %vm13 = vcmask 261120
  %s14 = scalar_lea.vmem %s1, 10
  %15 = vst.msk [vmem:[%s14] sm:$0xff] %vm13, %v12
  %s16 = scalar_lea.vmem %s0, 32
  %v17 = vld [vmem:[%s16] sm:$0xff]
  %vm18 = vcmask 261120
  %s19 = scalar_lea.vmem %s1, 18
  %20 = vst.msk [vmem:[%s19] sm:$0xff] %vm18, %v17
  %s21 = scalar_lea.vmem %s0, 40
  %s22 = smov 3
  %v23 = vld [vmem:[%s21] ss:$8 sm:%s22]
  %vm24 = vcmask 261120
  %s25 = scalar_lea.vmem %s1, 26
  %26 = vst.msk [vmem:[%s25] sm:$0x3] %vm24, %v23
  %s27 = scalar_lea.vmem %s0, 49
  %v28 = vld [vmem:[%s27] sm:$0xff]
  %vm29 = vcmask 261120
  %s30 = scalar_lea.vmem %s1, 28
  %31 = vst.msk [vmem:[%s30] sm:$0xff] %vm29, %v28

// kernel: keyre_id_forward.3
$region0: #{keyre_id_forward.3}
  #allocation0 [shape = 'u32[]', space=smem, size = 0x4, offset = 0x4, fixed_abs, tag = 'smem constant byte address 0x4 - core index']
  #allocation1 [shape = 'u32[144,128]{1,0:T(1,128)}', space=vmem, size = 0x12000, scoped, tag = 'internal scratch']
  %s0 = inlined_call_operand.vmem [shape: f32[2,54,128], index: 0, kind: input, shape index: {}]
  %s1 = inlined_call_operand.vmem [shape: f32[1,128], index: 1, kind: input, shape index: {}, may-alias: {1,7,13}]
  %s2 = inlined_call_operand.vmem [shape: f32[1,128], index: 2, kind: input, shape index: {}, may-alias: {2,6,8,12,14}]
  %s3 = inlined_call_operand.vmem [shape: bf16[128,384], index: 3, kind: input, shape index: {}]
  %s4 = inlined_call_operand.vmem [shape: f32[1,384], index: 4, kind: input, shape index: {}]
  %s5 = inlined_call_operand.vmem [shape: bf16[128,128], index: 5, kind: input, shape index: {}]
  %s6 = inlined_call_operand.vmem [shape: f32[1,128], index: 6, kind: input, shape index: {}, may-alias: {2,6,8,12,14}]
  %s7 = inlined_call_operand.vmem [shape: f32[1,128], index: 7, kind: input, shape index: {}, may-alias: {1,7,13}]
  %s8 = inlined_call_operand.vmem [shape: f32[1,128], index: 8, kind: input, shape index: {}, may-alias: {2,6,8,12,14}]
  %s9 = inlined_call_operand.vmem [shape: bf16[128,512], index: 9, kind: input, shape index: {}]
  %s10 = inlined_call_operand.vmem [shape: f32[1,512], index: 10, kind: input, shape index: {}]
  %s11 = inlined_call_operand.vmem [shape: bf16[512,128], index: 11, kind: input, shape index: {}]
  %s12 = inlined_call_operand.vmem [shape: f32[1,128], index: 12, kind: input, shape index: {}, may-alias: {2,6,8,12,14}]
  %s13 = inlined_call_operand.vmem [shape: f32[1,128], index: 13, kind: input, shape index: {}, may-alias: {1,7,13}]
  %s14 = inlined_call_operand.vmem [shape: f32[1,128], index: 14, kind: input, shape index: {}, may-alias: {2,6,8,12,14}]
  %s15 = inlined_call_operand.vmem [shape: f32[6,128], index: 15, kind: input, shape index: {}]
  %s16 = inlined_call_operand.vmem [shape: f32[6,128], index: 16, kind: input, shape index: {}]
  %s17 = inlined_call_operand.vmem [shape: f32[2,6,128], index: 17, kind: output, shape index: {}]
  %s18 = sld [smem:[#allocation0]]
  $region101: #{keyre_id_forward.3} parent=0
    _
  %s20 = ssub.s32 1, %s18
  %s21 = scalar_select 0, %s20, %s18
  loop: start=0, step=1, limit=4
  $region2: #{keyre_id_forward.3} parent=0 // loop_pre_header
    _
  $region3: #{keyre_id_forward.3} parent=0 // loop_header
    %s23 = sphi 0, %s27
    %p24 = scmp.ge.s32.totalorder %s23, 4
    %s33 = sphi 0, %s35
    %s36 = sphi 0, %s33
    %s37 = sphi 0, %s36
    %s53 = sphi 0, %s37
    %s57 = sphi 0, %s57
    %s59 = sphi 0, %s57
    %s60 = sphi 0, %s59
    %s74 = sphi 0, %s60
    %s78 = sphi 0, %s78
    %s80 = sphi 0, %s78
    %s81 = sphi 0, %s80
    %s95 = sphi 0, %s81
    %s99 = sphi 0, %s99
    %s101 = sphi 0, %s99
    %s102 = sphi 0, %s101
    %s116 = sphi 0, %s102
    %s120 = sphi 0, %s120
    %s122 = sphi 0, %s120
    %s123 = sphi 0, %s122
    %s137 = sphi 0, %s123
    %s141 = sphi 0, %s141
    %s143 = sphi 0, %s141
    %s144 = sphi 0, %s143
    %s158 = sphi 0, %s144
    %s162 = sphi 0, %s162
    %s164 = sphi 0, %s162
    %s165 = sphi 0, %s164
    %s179 = sphi 0, %s165
    %s183 = sphi 0, %s183
    %s185 = sphi 0, %s183
    %s186 = sphi 0, %s185
    %s200 = sphi 0, %s186
    %s204 = sphi 0, %s204
    %s206 = sphi 0, %s204
    %s207 = sphi 0, %s206
    %s221 = sphi 0, %s207
    %s225 = sphi 0, %s225
    %s227 = sphi 0, %s225
    %s228 = sphi 0, %s227
    %s242 = sphi 0, %s228
    %s246 = sphi 0, %s246
    %s248 = sphi 0, %s246
    %s249 = sphi 0, %s248
    %s263 = sphi 0, %s249
    %s267 = sphi 0, %s267
    %s269 = sphi 0, %s267
    %s270 = sphi 0, %s269
    %s284 = sphi 0, %s270
    %s288 = sphi 0, %s288
    %s290 = sphi 0, %s288
    %s291 = sphi 0, %s290
    %s305 = sphi 0, %s291
    %s309 = sphi 0, %s309
    %s311 = sphi 0, %s309
    %s312 = sphi 0, %s311
    %s326 = sphi 0, %s312
    %s330 = sphi 0, %s330
    %s332 = sphi 0, %s330
    %s333 = sphi 0, %s332
    %s347 = sphi 0, %s333
    %s351 = sphi 0, %s351
    %s353 = sphi 0, %s351
    %s354 = sphi 0, %s353
    %s368 = sphi 0, %s354
    %s372 = sphi 0, %s372
    %s374 = sphi 0, %s372
    %s375 = sphi 0, %s374
    %s389 = sphi 0, %s375
    %s395 = sphi 0, %s397
    %s398 = sphi 0, %s395
    %s399 = sphi 0, %s398
    %s415 = sphi 0, %s399
  $region4: #{keyre_id_forward.3} parent=0 // loop_header_branch
    %26 = sbr.rel (%p24) target = $region8
  $region5: #{keyre_id_forward.3} parent=0 // loop_body
    %s28 = ssub.s32 %s23, 1
    %s29 = ssub.s32 %s23, 2
    %s30 = sadd.s32 %s23, 1
    %s31 = ssub.s32 %s23, %s30
    %p32 = scmp.eq.s32.totalorder %s31, 0
    %s34 = sadd.s32 %s33, 1
    %s35 = scalar_select %p32, %s33, %s34
    %p38 = pneg %p32
    %p39 = scmp.eq.s32.totalorder %s23, 1
    %p40 = por %p38, %p39
    %p41 = scmp.ne.s32.totalorder %s33, %s36
    %p42 = scmp.eq.s32.totalorder %s23, 0
    %p43 = por %p41, %p42
    %p44 = scmp.ne.s32.totalorder %s33, %s36
    %p45 = scmp.eq.s32.totalorder %s28, 1
    %p46 = por %p44, %p45
    %p47 = scmp.ne.s32.totalorder %s36, %s37
    %p48 = scmp.eq.s32.totalorder %s28, 0
    %p49 = por %p47, %p48
    %p50 = scmp.ne.s32.totalorder %s36, %s37
    %p51 = scmp.eq.s32.totalorder %s29, 1
    %p52 = por %p50, %p51
    %p54 = scmp.ne.s32.totalorder %s37, %s53
    %p55 = scmp.eq.s32.totalorder %s29, 0
    %p56 = por %p54, %p55
    %s58 = sadd.s32 %s57, 1
    %p61 = scmp.eq.s32.totalorder %s23, 1
    %p62 = scmp.ne.s32.totalorder %s57, %s59
    %p63 = scmp.eq.s32.totalorder %s23, 0
    %p64 = por %p62, %p63
    %p65 = scmp.ne.s32.totalorder %s57, %s59
    %p66 = scmp.eq.s32.totalorder %s28, 1
    %p67 = por %p65, %p66
    %p68 = scmp.ne.s32.totalorder %s59, %s60
    %p69 = scmp.eq.s32.totalorder %s28, 0
    %p70 = por %p68, %p69
    %p71 = scmp.ne.s32.totalorder %s59, %s60
    %p72 = scmp.eq.s32.totalorder %s29, 1
    %p73 = por %p71, %p72
    %p75 = scmp.ne.s32.totalorder %s60, %s74
    %p76 = scmp.eq.s32.totalorder %s29, 0
    %p77 = por %p75, %p76
    %s79 = sadd.s32 %s78, 1
    %p82 = scmp.eq.s32.totalorder %s23, 1
    %p83 = scmp.ne.s32.totalorder %s78, %s80
    %p84 = scmp.eq.s32.totalorder %s23, 0
    %p85 = por %p83, %p84
    %p86 = scmp.ne.s32.totalorder %s78, %s80
    %p87 = scmp.eq.s32.totalorder %s28, 1
    %p88 = por %p86, %p87
    %p89 = scmp.ne.s32.totalorder %s80, %s81
    %p90 = scmp.eq.s32.totalorder %s28, 0
    %p91 = por %p89, %p90
    %p92 = scmp.ne.s32.totalorder %s80, %s81
    %p93 = scmp.eq.s32.totalorder %s29, 1
    %p94 = por %p92, %p93
    %p96 = scmp.ne.s32.totalorder %s81, %s95
    %p97 = scmp.eq.s32.totalorder %s29, 0
    %p98 = por %p96, %p97
    %s100 = sadd.s32 %s99, 1
    %p103 = scmp.eq.s32.totalorder %s23, 1
    %p104 = scmp.ne.s32.totalorder %s99, %s101
    %p105 = scmp.eq.s32.totalorder %s23, 0
    %p106 = por %p104, %p105
    %p107 = scmp.ne.s32.totalorder %s99, %s101
    %p108 = scmp.eq.s32.totalorder %s28, 1
    %p109 = por %p107, %p108
    %p110 = scmp.ne.s32.totalorder %s101, %s102
    %p111 = scmp.eq.s32.totalorder %s28, 0
    %p112 = por %p110, %p111
    %p113 = scmp.ne.s32.totalorder %s101, %s102
    %p114 = scmp.eq.s32.totalorder %s29, 1
    %p115 = por %p113, %p114
    %p117 = scmp.ne.s32.totalorder %s102, %s116
    %p118 = scmp.eq.s32.totalorder %s29, 0
    %p119 = por %p117, %p118
    %s121 = sadd.s32 %s120, 1
    %p124 = scmp.eq.s32.totalorder %s23, 1
    %p125 = scmp.ne.s32.totalorder %s120, %s122
    %p126 = scmp.eq.s32.totalorder %s23, 0
    %p127 = por %p125, %p126
    %p128 = scmp.ne.s32.totalorder %s120, %s122
    %p129 = scmp.eq.s32.totalorder %s28, 1
    %p130 = por %p128, %p129
    %p131 = scmp.ne.s32.totalorder %s122, %s123
    %p132 = scmp.eq.s32.totalorder %s28, 0
    %p133 = por %p131, %p132
    %p134 = scmp.ne.s32.totalorder %s122, %s123
    %p135 = scmp.eq.s32.totalorder %s29, 1
    %p136 = por %p134, %p135
    %p138 = scmp.ne.s32.totalorder %s123, %s137
    %p139 = scmp.eq.s32.totalorder %s29, 0
    %p140 = por %p138, %p139
    %s142 = sadd.s32 %s141, 1
    %p145 = scmp.eq.s32.totalorder %s23, 1
    %p146 = scmp.ne.s32.totalorder %s141, %s143
    %p147 = scmp.eq.s32.totalorder %s23, 0
    %p148 = por %p146, %p147
    %p149 = scmp.ne.s32.totalorder %s141, %s143
    %p150 = scmp.eq.s32.totalorder %s28, 1
    %p151 = por %p149, %p150
    %p152 = scmp.ne.s32.totalorder %s143, %s144
    %p153 = scmp.eq.s32.totalorder %s28, 0
    %p154 = por %p152, %p153
    %p155 = scmp.ne.s32.totalorder %s143, %s144
    %p156 = scmp.eq.s32.totalorder %s29, 1
    %p157 = por %p155, %p156
    %p159 = scmp.ne.s32.totalorder %s144, %s158
    %p160 = scmp.eq.s32.totalorder %s29, 0
    %p161 = por %p159, %p160
    %s163 = sadd.s32 %s162, 1
    %p166 = scmp.eq.s32.totalorder %s23, 1
    %p167 = scmp.ne.s32.totalorder %s162, %s164
    %p168 = scmp.eq.s32.totalorder %s23, 0
    %p169 = por %p167, %p168
    %p170 = scmp.ne.s32.totalorder %s162, %s164
    %p171 = scmp.eq.s32.totalorder %s28, 1
    %p172 = por %p170, %p171
    %p173 = scmp.ne.s32.totalorder %s164, %s165
    %p174 = scmp.eq.s32.totalorder %s28, 0
    %p175 = por %p173, %p174
    %p176 = scmp.ne.s32.totalorder %s164, %s165
    %p177 = scmp.eq.s32.totalorder %s29, 1
    %p178 = por %p176, %p177
    %p180 = scmp.ne.s32.totalorder %s165, %s179
    %p181 = scmp.eq.s32.totalorder %s29, 0
    %p182 = por %p180, %p181
    %s184 = sadd.s32 %s183, 1
    %p187 = scmp.eq.s32.totalorder %s23, 1
    %p188 = scmp.ne.s32.totalorder %s183, %s185
    %p189 = scmp.eq.s32.totalorder %s23, 0
    %p190 = por %p188, %p189
    %p191 = scmp.ne.s32.totalorder %s183, %s185
    %p192 = scmp.eq.s32.totalorder %s28, 1
    %p193 = por %p191, %p192
    %p194 = scmp.ne.s32.totalorder %s185, %s186
    %p195 = scmp.eq.s32.totalorder %s28, 0
    %p196 = por %p194, %p195
    %p197 = scmp.ne.s32.totalorder %s185, %s186
    %p198 = scmp.eq.s32.totalorder %s29, 1
    %p199 = por %p197, %p198
    %p201 = scmp.ne.s32.totalorder %s186, %s200
    %p202 = scmp.eq.s32.totalorder %s29, 0
    %p203 = por %p201, %p202
    %s205 = sadd.s32 %s204, 1
    %p208 = scmp.eq.s32.totalorder %s23, 1
    %p209 = scmp.ne.s32.totalorder %s204, %s206
    %p210 = scmp.eq.s32.totalorder %s23, 0
    %p211 = por %p209, %p210
    %p212 = scmp.ne.s32.totalorder %s204, %s206
    %p213 = scmp.eq.s32.totalorder %s28, 1
    %p214 = por %p212, %p213
    %p215 = scmp.ne.s32.totalorder %s206, %s207
    %p216 = scmp.eq.s32.totalorder %s28, 0
    %p217 = por %p215, %p216
    %p218 = scmp.ne.s32.totalorder %s206, %s207
    %p219 = scmp.eq.s32.totalorder %s29, 1
    %p220 = por %p218, %p219
    %p222 = scmp.ne.s32.totalorder %s207, %s221
    %p223 = scmp.eq.s32.totalorder %s29, 0
    %p224 = por %p222, %p223
    %s226 = sadd.s32 %s225, 1
    %p229 = scmp.eq.s32.totalorder %s23, 1
    %p230 = scmp.ne.s32.totalorder %s225, %s227
    %p231 = scmp.eq.s32.totalorder %s23, 0
    %p232 = por %p230, %p231
    %p233 = scmp.ne.s32.totalorder %s225, %s227
    %p234 = scmp.eq.s32.totalorder %s28, 1
    %p235 = por %p233, %p234
    %p236 = scmp.ne.s32.totalorder %s227, %s228
    %p237 = scmp.eq.s32.totalorder %s28, 0
    %p238 = por %p236, %p237
    %p239 = scmp.ne.s32.totalorder %s227, %s228
    %p240 = scmp.eq.s32.totalorder %s29, 1
    %p241 = por %p239, %p240
    %p243 = scmp.ne.s32.totalorder %s228, %s242
    %p244 = scmp.eq.s32.totalorder %s29, 0
    %p245 = por %p243, %p244
    %s247 = sadd.s32 %s246, 1
    %p250 = scmp.eq.s32.totalorder %s23, 1
    %p251 = scmp.ne.s32.totalorder %s246, %s248
    %p252 = scmp.eq.s32.totalorder %s23, 0
    %p253 = por %p251, %p252
    %p254 = scmp.ne.s32.totalorder %s246, %s248
    %p255 = scmp.eq.s32.totalorder %s28, 1
    %p256 = por %p254, %p255
    %p257 = scmp.ne.s32.totalorder %s248, %s249
    %p258 = scmp.eq.s32.totalorder %s28, 0
    %p259 = por %p257, %p258
    %p260 = scmp.ne.s32.totalorder %s248, %s249
    %p261 = scmp.eq.s32.totalorder %s29, 1
    %p262 = por %p260, %p261
    %p264 = scmp.ne.s32.totalorder %s249, %s263
    %p265 = scmp.eq.s32.totalorder %s29, 0
    %p266 = por %p264, %p265
    %s268 = sadd.s32 %s267, 1
    %p271 = scmp.eq.s32.totalorder %s23, 1
    %p272 = scmp.ne.s32.totalorder %s267, %s269
    %p273 = scmp.eq.s32.totalorder %s23, 0
    %p274 = por %p272, %p273
    %p275 = scmp.ne.s32.totalorder %s267, %s269
    %p276 = scmp.eq.s32.totalorder %s28, 1
    %p277 = por %p275, %p276
    %p278 = scmp.ne.s32.totalorder %s269, %s270
    %p279 = scmp.eq.s32.totalorder %s28, 0
    %p280 = por %p278, %p279
    %p281 = scmp.ne.s32.totalorder %s269, %s270
    %p282 = scmp.eq.s32.totalorder %s29, 1
    %p283 = por %p281, %p282
    %p285 = scmp.ne.s32.totalorder %s270, %s284
    %p286 = scmp.eq.s32.totalorder %s29, 0
    %p287 = por %p285, %p286
    %s289 = sadd.s32 %s288, 1
    %p292 = scmp.eq.s32.totalorder %s23, 1
    %p293 = scmp.ne.s32.totalorder %s288, %s290
    %p294 = scmp.eq.s32.totalorder %s23, 0
    %p295 = por %p293, %p294
    %p296 = scmp.ne.s32.totalorder %s288, %s290
    %p297 = scmp.eq.s32.totalorder %s28, 1
    %p298 = por %p296, %p297
    %p299 = scmp.ne.s32.totalorder %s290, %s291
    %p300 = scmp.eq.s32.totalorder %s28, 0
    %p301 = por %p299, %p300
    %p302 = scmp.ne.s32.totalorder %s290, %s291
    %p303 = scmp.eq.s32.totalorder %s29, 1
    %p304 = por %p302, %p303
    %p306 = scmp.ne.s32.totalorder %s291, %s305
    %p307 = scmp.eq.s32.totalorder %s29, 0
    %p308 = por %p306, %p307
    %s310 = sadd.s32 %s309, 1
    %p313 = scmp.eq.s32.totalorder %s23, 1
    %p314 = scmp.ne.s32.totalorder %s309, %s311
    %p315 = scmp.eq.s32.totalorder %s23, 0
    %p316 = por %p314, %p315
    %p317 = scmp.ne.s32.totalorder %s309, %s311
    %p318 = scmp.eq.s32.totalorder %s28, 1
    %p319 = por %p317, %p318
    %p320 = scmp.ne.s32.totalorder %s311, %s312
    %p321 = scmp.eq.s32.totalorder %s28, 0
    %p322 = por %p320, %p321
    %p323 = scmp.ne.s32.totalorder %s311, %s312
    %p324 = scmp.eq.s32.totalorder %s29, 1
    %p325 = por %p323, %p324
    %p327 = scmp.ne.s32.totalorder %s312, %s326
    %p328 = scmp.eq.s32.totalorder %s29, 0
    %p329 = por %p327, %p328
    %s331 = sadd.s32 %s330, 1
    %p334 = scmp.eq.s32.totalorder %s23, 1
    %p335 = scmp.ne.s32.totalorder %s330, %s332
    %p336 = scmp.eq.s32.totalorder %s23, 0
    %p337 = por %p335, %p336
    %p338 = scmp.ne.s32.totalorder %s330, %s332
    %p339 = scmp.eq.s32.totalorder %s28, 1
    %p340 = por %p338, %p339
    %p341 = scmp.ne.s32.totalorder %s332, %s333
    %p342 = scmp.eq.s32.totalorder %s28, 0
    %p343 = por %p341, %p342
    %p344 = scmp.ne.s32.totalorder %s332, %s333
    %p345 = scmp.eq.s32.totalorder %s29, 1
    %p346 = por %p344, %p345
    %p348 = scmp.ne.s32.totalorder %s333, %s347
    %p349 = scmp.eq.s32.totalorder %s29, 0
    %p350 = por %p348, %p349
    %s352 = sadd.s32 %s351, 1
    %p355 = scmp.eq.s32.totalorder %s23, 1
    %p356 = scmp.ne.s32.totalorder %s351, %s353
    %p357 = scmp.eq.s32.totalorder %s23, 0
    %p358 = por %p356, %p357
    %p359 = scmp.ne.s32.totalorder %s351, %s353
    %p360 = scmp.eq.s32.totalorder %s28, 1
    %p361 = por %p359, %p360
    %p362 = scmp.ne.s32.totalorder %s353, %s354
    %p363 = scmp.eq.s32.totalorder %s28, 0
    %p364 = por %p362, %p363
    %p365 = scmp.ne.s32.totalorder %s353, %s354
    %p366 = scmp.eq.s32.totalorder %s29, 1
    %p367 = por %p365, %p366
    %p369 = scmp.ne.s32.totalorder %s354, %s368
    %p370 = scmp.eq.s32.totalorder %s29, 0
    %p371 = por %p369, %p370
    %s373 = sadd.s32 %s372, 1
    %p376 = scmp.eq.s32.totalorder %s23, 1
    %p377 = scmp.ne.s32.totalorder %s372, %s374
    %p378 = scmp.eq.s32.totalorder %s23, 0
    %p379 = por %p377, %p378
    %p380 = scmp.ne.s32.totalorder %s372, %s374
    %p381 = scmp.eq.s32.totalorder %s28, 1
    %p382 = por %p380, %p381
    %p383 = scmp.ne.s32.totalorder %s374, %s375
    %p384 = scmp.eq.s32.totalorder %s28, 0
    %p385 = por %p383, %p384
    %p386 = scmp.ne.s32.totalorder %s374, %s375
    %p387 = scmp.eq.s32.totalorder %s29, 1
    %p388 = por %p386, %p387
    %p390 = scmp.ne.s32.totalorder %s375, %s389
    %p391 = scmp.eq.s32.totalorder %s29, 0
    %p392 = por %p390, %p391
    %s393 = ssub.s32 %s23, %s30
    %p394 = scmp.eq.s32.totalorder %s393, 0
    %s396 = sadd.s32 %s395, 1
    %s397 = scalar_select %p394, %s395, %s396
    %p400 = pneg %p394
    %p401 = scmp.eq.s32.totalorder %s23, 1
    %p402 = por %p400, %p401
    %p403 = scmp.ne.s32.totalorder %s395, %s398
    %p404 = scmp.eq.s32.totalorder %s23, 0
    %p405 = por %p403, %p404
    %p406 = scmp.ne.s32.totalorder %s395, %s398
    %p407 = scmp.eq.s32.totalorder %s28, 1
    %p408 = por %p406, %p407
    %p409 = scmp.ne.s32.totalorder %s398, %s399
    %p410 = scmp.eq.s32.totalorder %s28, 0
    %p411 = por %p409, %p410
    %p412 = scmp.ne.s32.totalorder %s398, %s399
    %p413 = scmp.eq.s32.totalorder %s29, 1
    %p414 = por %p412, %p413
    %p416 = scmp.ne.s32.totalorder %s399, %s415
    %p417 = scmp.eq.s32.totalorder %s29, 0
    %p418 = por %p416, %p417
    %p419 = scmp.le.s32.totalorder 1, %s23
    %p420 = scmp.lt.s32.totalorder %s23, 3
    %p421 = pnand %p419, %p420
    %p422 = pneg %p421
    // Predicated region
    $region9: #{keyre_id_forward.3} parent=5 // pred_check
      _
    $region10: #{keyre_id_forward.3} parent=5 // pred_check_branch
      %424 = sbr.rel (%p421) target = $region12
    $region11: #{keyre_id_forward.3} parent=5 // pred_region
      %s425 = ssub.s32 %s23, 1
      // Predicated region
      $region13: #{keyre_id_forward.3} parent=11 // pred_check
        %p426 = pneg %p70
      $region14: #{keyre_id_forward.3} parent=11 // pred_check_branch
        %428 = sbr.rel (%p426) target = $region16
      $region15: #{keyre_id_forward.3} parent=11 // pred_region
        _
      $region16: #{keyre_id_forward.3} parent=11 // pred_fallthru
        _
      // Predicated region
      $region17: #{keyre_id_forward.3} parent=11 // pred_check
        %p429 = pneg %p91
      $region18: #{keyre_id_forward.3} parent=11 // pred_check_branch
        %431 = sbr.rel (%p429) target = $region20
      $region19: #{keyre_id_forward.3} parent=11 // pred_region
        _
      $region20: #{keyre_id_forward.3} parent=11 // pred_fallthru
        _
      // Predicated region
      $region21: #{keyre_id_forward.3} parent=11 // pred_check
        %p432 = pneg %p112
      $region22: #{keyre_id_forward.3} parent=11 // pred_check_branch
        %434 = sbr.rel (%p432) target = $region24
      $region23: #{keyre_id_forward.3} parent=11 // pred_region
        _
      $region24: #{keyre_id_forward.3} parent=11 // pred_fallthru
        _
      // Predicated region
      $region25: #{keyre_id_forward.3} parent=11 // pred_check
        %p435 = pneg %p133
      $region26: #{keyre_id_forward.3} parent=11 // pred_check_branch
        %437 = sbr.rel (%p435) target = $region28
      $region27: #{keyre_id_forward.3} parent=11 // pred_region
        _
      $region28: #{keyre_id_forward.3} parent=11 // pred_fallthru
        _
      // Predicated region
      $region29: #{keyre_id_forward.3} parent=11 // pred_check
        %p438 = pneg %p154
      $region30: #{keyre_id_forward.3} parent=11 // pred_check_branch
        %440 = sbr.rel (%p438) target = $region32
      $region31: #{keyre_id_forward.3} parent=11 // pred_region
        _
      $region32: #{keyre_id_forward.3} parent=11 // pred_fallthru
        _
      // Predicated region
      $region33: #{keyre_id_forward.3} parent=11 // pred_check
        %p441 = pneg %p175
      $region34: #{keyre_id_forward.3} parent=11 // pred_check_branch
        %443 = sbr.rel (%p441) target = $region36
      $region35: #{keyre_id_forward.3} parent=11 // pred_region
        _
      $region36: #{keyre_id_forward.3} parent=11 // pred_fallthru
        _
      // Predicated region
      $region37: #{keyre_id_forward.3} parent=11 // pred_check
        %p444 = pneg %p196
      $region38: #{keyre_id_forward.3} parent=11 // pred_check_branch
        %446 = sbr.rel (%p444) target = $region40
      $region39: #{keyre_id_forward.3} parent=11 // pred_region
        _
      $region40: #{keyre_id_forward.3} parent=11 // pred_fallthru
        _
      // Predicated region
      $region41: #{keyre_id_forward.3} parent=11 // pred_check
        %p447 = pneg %p217
      $region42: #{keyre_id_forward.3} parent=11 // pred_check_branch
        %449 = sbr.rel (%p447) target = $region44
      $region43: #{keyre_id_forward.3} parent=11 // pred_region
        _
      $region44: #{keyre_id_forward.3} parent=11 // pred_fallthru
        _
      // Predicated region
      $region45: #{keyre_id_forward.3} parent=11 // pred_check
        %p450 = pneg %p238
      $region46: #{keyre_id_forward.3} parent=11 // pred_check_branch
        %452 = sbr.rel (%p450) target = $region48
      $region47: #{keyre_id_forward.3} parent=11 // pred_region
        _
      $region48: #{keyre_id_forward.3} parent=11 // pred_fallthru
        _
      // Predicated region
      $region49: #{keyre_id_forward.3} parent=11 // pred_check
        %p453 = pneg %p259
      $region50: #{keyre_id_forward.3} parent=11 // pred_check_branch
        %455 = sbr.rel (%p453) target = $region52
      $region51: #{keyre_id_forward.3} parent=11 // pred_region
        _
      $region52: #{keyre_id_forward.3} parent=11 // pred_fallthru
        _
      // Predicated region
      $region53: #{keyre_id_forward.3} parent=11 // pred_check
        %p456 = pneg %p280
      $region54: #{keyre_id_forward.3} parent=11 // pred_check_branch
        %458 = sbr.rel (%p456) target = $region56
      $region55: #{keyre_id_forward.3} parent=11 // pred_region
        _
      $region56: #{keyre_id_forward.3} parent=11 // pred_fallthru
        _
      // Predicated region
      $region57: #{keyre_id_forward.3} parent=11 // pred_check
        %p459 = pneg %p301
      $region58: #{keyre_id_forward.3} parent=11 // pred_check_branch
        %461 = sbr.rel (%p459) target = $region60
      $region59: #{keyre_id_forward.3} parent=11 // pred_region
        _
      $region60: #{keyre_id_forward.3} parent=11 // pred_fallthru
        _
      // Predicated region
      $region61: #{keyre_id_forward.3} parent=11 // pred_check
        %p462 = pneg %p322
      $region62: #{keyre_id_forward.3} parent=11 // pred_check_branch
        %464 = sbr.rel (%p462) target = $region64
      $region63: #{keyre_id_forward.3} parent=11 // pred_region
        _
      $region64: #{keyre_id_forward.3} parent=11 // pred_fallthru
        _
      // Predicated region
      $region65: #{keyre_id_forward.3} parent=11 // pred_check
        %p465 = pneg %p343
      $region66: #{keyre_id_forward.3} parent=11 // pred_check_branch
        %467 = sbr.rel (%p465) target = $region68
      $region67: #{keyre_id_forward.3} parent=11 // pred_region
        _
      $region68: #{keyre_id_forward.3} parent=11 // pred_fallthru
        _
      // Predicated region
      $region69: #{keyre_id_forward.3} parent=11 // pred_check
        %p468 = pneg %p364
      $region70: #{keyre_id_forward.3} parent=11 // pred_check_branch
        %470 = sbr.rel (%p468) target = $region72
      $region71: #{keyre_id_forward.3} parent=11 // pred_region
        _
      $region72: #{keyre_id_forward.3} parent=11 // pred_fallthru
        _
      // Predicated region
      $region73: #{keyre_id_forward.3} parent=11 // pred_check
        %p471 = pneg %p385
      $region74: #{keyre_id_forward.3} parent=11 // pred_check_branch
        %473 = sbr.rel (%p471) target = $region76
      $region75: #{keyre_id_forward.3} parent=11 // pred_region
        _
      $region76: #{keyre_id_forward.3} parent=11 // pred_fallthru
        _
    $region12: #{keyre_id_forward.3} parent=5 // pred_fallthru
      _
    %p474 = scmp.lt.s32.totalorder %s23, 2
    // Predicated region
    $region77: #{keyre_id_forward.3} parent=5 // pred_check
      %p475 = pneg %p474
    $region78: #{keyre_id_forward.3} parent=5 // pred_check_branch
      %477 = sbr.rel (%p475) target = $region80
    $region79: #{keyre_id_forward.3} parent=5 // pred_region
      // Predicated region
      $region81: #{keyre_id_forward.3} parent=79 // pred_check
        %p478 = pneg %p43
      $region82: #{keyre_id_forward.3} parent=79 // pred_check_branch
        %480 = sbr.rel (%p478) target = $region84
      $region83: #{keyre_id_forward.3} parent=79 // pred_region
        %p481 = scmp.lt.s32.totalorder %s23, 1
        %s482 = scalar_select %p481, %s23, 1
        %s483 = smul.addr %s482, 7
        %s484 = smul.addr %s483, 8
        %s485 = scalar_lea.vmem %s0, %s484
      $region84: #{keyre_id_forward.3} parent=79 // pred_fallthru
        _
    $region80: #{keyre_id_forward.3} parent=5 // pred_fallthru
      _
    %p486 = scmp.le.s32.totalorder 1, %s23
    %p487 = scmp.lt.s32.totalorder %s23, 3
    %p488 = pnand %p486, %p487
    %p489 = pneg %p488
    // Predicated region
    $region85: #{keyre_id_forward.3} parent=5 // pred_check
      _
    $region86: #{keyre_id_forward.3} parent=5 // pred_check_branch
      %491 = sbr.rel (%p488) target = $region88
    $region87: #{keyre_id_forward.3} parent=5 // pred_region
      %s492 = ssub.s32 %s23, 1
      %p493 = scmp.lt.s32.totalorder %s28, 1
      %s494 = scalar_select %p493, %s28, 1
      %s495 = smul.addr %s494, 7
      %s496 = smul.addr %s495, 8
      %s497 = scalar_lea.vmem %s0, %s496
      %p498 = pneg %p49
      %p499 = pneg %p46
      %p500 = pneg %p70
      %p501 = pneg %p67
      %p502 = pneg %p91
      %p503 = pneg %p88
      %p504 = pneg %p112
      %p505 = pneg %p109
      %p506 = pneg %p133
      %p507 = pneg %p130
      %p508 = pneg %p154
      %p509 = pneg %p151
      %p510 = pneg %p175
      %p511 = pneg %p172
      %p512 = pneg %p196
      %p513 = pneg %p193
      %p514 = pneg %p217
      %p515 = pneg %p214
      %p516 = pneg %p238
      %p517 = pneg %p235
      %p518 = pneg %p259
      %p519 = pneg %p256
      %p520 = pneg %p280
      %p521 = pneg %p277
      %p522 = pneg %p301
      %p523 = pneg %p298
      %p524 = pneg %p322
      %p525 = pneg %p319
      %p526 = pneg %p343
      %p527 = pneg %p340
      %p528 = pneg %p364
      %p529 = pneg %p361
      %p530 = pneg %p385
      %p531 = pneg %p382
      %p532 = pneg %p411
      %p533 = pneg %p408
      %p534 = scmp.lt.s32.totalorder %s28, 1
      %s535 = scalar_select %p534, %s28, 1
      %s536 = smul.addr %s535, 8
      %s537 = scalar_lea.vmem %s17, %s536
      %p538 = scmp.lt.s32.totalorder %s28, 1
      %s539 = scalar_select %p538, %s28, 1
      %s540 = smul.addr %s539, 7
      %s541 = smul.addr %s540, 8
      %s542 = scalar_lea.vmem %s0, %s541
      %p543 = scmp.lt.s32.totalorder %s28, 1
      %s544 = scalar_select %p543, %s28, 1
      %s545 = smul.addr %s544, 8
      %s546 = scalar_lea.vmem %s17, %s545
      %v548 = vlaneseq
      %v549 = vshrl.u32 %v548, 7
      %v550 = vadd.s32 %v549, 8
      %v551 = vadd.s32 %v549, 16
      %v552 = vadd.s32 %v549, 24
      %v553 = vadd.s32 %v549, 32
      %v554 = vadd.s32 %v549, 40
      %v555 = vadd.s32 %v549, 48
      %v556 = vlaneseq
      %v557 = vand.u32 %v556, 127
      %vm558 = vcmp.ge.s32.totalorder %v549, 0
      %vm559 = vcmp.ge.s32.totalorder %v550, 0
      %vm560 = vcmp.ge.s32.totalorder %v551, 0
      %vm561 = vcmp.ge.s32.totalorder %v552, 0
      %vm562 = vcmp.ge.s32.totalorder %v553, 0
      %vm563 = vcmp.ge.s32.totalorder %v554, 0
      %vm564 = vcmp.ge.s32.totalorder %v555, 0
      %vm565 = vcmp.lt.s32.totalorder %v549, 9
      %vm566 = vcmp.lt.s32.totalorder %v550, 9
      %vm567 = vcmp.lt.s32.totalorder %v551, 9
      %vm568 = vcmp.lt.s32.totalorder %v552, 9
      %vm569 = vcmp.lt.s32.totalorder %v553, 9
      %vm570 = vcmp.lt.s32.totalorder %v554, 9
      %vm571 = vcmp.lt.s32.totalorder %v555, 9
      %vm572 = vmand %vm558, %vm565
      %vm573 = vmand %vm559, %vm566
      %vm574 = vmand %vm560, %vm567
      %vm575 = vmand %vm561, %vm568
      %vm576 = vmand %vm562, %vm569
      %vm577 = vmand %vm563, %vm570
      %vm578 = vmand %vm564, %vm571
      %vm579 = vcmp.ge.s32.totalorder %v557, 0
      %vm580 = vcmp.lt.s32.totalorder %v557, 9
      %vm581 = vmand %vm579, %vm580
      %vm582 = vmand %vm572, %vm581
      %vm583 = vmand %vm573, %vm581
      %vm584 = vmand %vm574, %vm581
      %vm585 = vmand %vm575, %vm581
      %vm586 = vmand %vm576, %vm581
      %vm587 = vmand %vm577, %vm581
      %vm588 = vmand %vm578, %vm581
      %vm589 = vcmp.ge.s32.totalorder %v549, 9
      %vm590 = vcmp.ge.s32.totalorder %v550, 9
      %vm591 = vcmp.ge.s32.totalorder %v551, 9
      %vm592 = vcmp.ge.s32.totalorder %v552, 9
      %vm593 = vcmp.ge.s32.totalorder %v553, 9
      %vm594 = vcmp.ge.s32.totalorder %v554, 9
      %vm595 = vcmp.ge.s32.totalorder %v555, 9
      %vm596 = vcmp.lt.s32.totalorder %v549, 18
      %vm597 = vcmp.lt.s32.totalorder %v550, 18
      %vm598 = vcmp.lt.s32.totalorder %v551, 18
      %vm599 = vcmp.lt.s32.totalorder %v552, 18
      %vm600 = vcmp.lt.s32.totalorder %v553, 18
      %vm601 = vcmp.lt.s32.totalorder %v554, 18
      %vm602 = vcmp.lt.s32.totalorder %v555, 18
      %vm603 = vmand %vm589, %vm596
      %vm604 = vmand %vm590, %vm597
      %vm605 = vmand %vm591, %vm598
      %vm606 = vmand %vm592, %vm599
      %vm607 = vmand %vm593, %vm600
      %vm608 = vmand %vm594, %vm601
      %vm609 = vmand %vm595, %vm602
      %vm610 = vcmp.ge.s32.totalorder %v557, 9
      %vm611 = vcmp.lt.s32.totalorder %v557, 18
      %vm612 = vmand %vm610, %vm611
      %vm613 = vmand %vm603, %vm612
      %vm614 = vmand %vm604, %vm612
      %vm615 = vmand %vm605, %vm612
      %vm616 = vmand %vm606, %vm612
      %vm617 = vmand %vm607, %vm612
      %vm618 = vmand %vm608, %vm612
      %vm619 = vmand %vm609, %vm612
      %vm620 = vmor %vm582, %vm613
      %vm621 = vmor %vm583, %vm614
      %vm622 = vmor %vm584, %vm615
      %vm623 = vmor %vm585, %vm616
      %vm624 = vmor %vm586, %vm617
      %vm625 = vmor %vm587, %vm618
      %vm626 = vmor %vm588, %vm619
      %vm627 = vcmp.ge.s32.totalorder %v549, 18
      %vm628 = vcmp.ge.s32.totalorder %v550, 18
      %vm629 = vcmp.ge.s32.totalorder %v551, 18
      %vm630 = vcmp.ge.s32.totalorder %v552, 18
      %vm631 = vcmp.ge.s32.totalorder %v553, 18
      %vm632 = vcmp.ge.s32.totalorder %v554, 18
      %vm633 = vcmp.ge.s32.totalorder %v555, 18
      %vm634 = vcmp.lt.s32.totalorder %v549, 27
      %vm635 = vcmp.lt.s32.totalorder %v550, 27
      %vm636 = vcmp.lt.s32.totalorder %v551, 27
      %vm637 = vcmp.lt.s32.totalorder %v552, 27
      %vm638 = vcmp.lt.s32.totalorder %v553, 27
      %vm639 = vcmp.lt.s32.totalorder %v554, 27
      %vm640 = vcmp.lt.s32.totalorder %v555, 27
      %vm641 = vmand %vm627, %vm634
      %vm642 = vmand %vm628, %vm635
      %vm643 = vmand %vm629, %vm636
      %vm644 = vmand %vm630, %vm637
      %vm645 = vmand %vm631, %vm638
      %vm646 = vmand %vm632, %vm639
      %vm647 = vmand %vm633, %vm640
      %vm648 = vcmp.ge.s32.totalorder %v557, 18
      %vm649 = vcmp.lt.s32.totalorder %v557, 27
      %vm650 = vmand %vm648, %vm649
      %vm651 = vmand %vm641, %vm650
      %vm652 = vmand %vm642, %vm650
      %vm653 = vmand %vm643, %vm650
      %vm654 = vmand %vm644, %vm650
      %vm655 = vmand %vm645, %vm650
      %vm656 = vmand %vm646, %vm650
      %vm657 = vmand %vm647, %vm650
      %vm658 = vmor %vm620, %vm651
      %vm659 = vmor %vm621, %vm652
      %vm660 = vmor %vm622, %vm653
      %vm661 = vmor %vm623, %vm654
      %vm662 = vmor %vm624, %vm655
      %vm663 = vmor %vm625, %vm656
      %vm664 = vmor %vm626, %vm657
      %vm665 = vcmp.ge.s32.totalorder %v549, 27
      %vm666 = vcmp.ge.s32.totalorder %v550, 27
      %vm667 = vcmp.ge.s32.totalorder %v551, 27
      %vm668 = vcmp.ge.s32.totalorder %v552, 27
      %vm669 = vcmp.ge.s32.totalorder %v553, 27
      %vm670 = vcmp.ge.s32.totalorder %v554, 27
      %vm671 = vcmp.ge.s32.totalorder %v555, 27
      %vm672 = vcmp.lt.s32.totalorder %v549, 36
      %vm673 = vcmp.lt.s32.totalorder %v550, 36
      %vm674 = vcmp.lt.s32.totalorder %v551, 36
      %vm675 = vcmp.lt.s32.totalorder %v552, 36
      %vm676 = vcmp.lt.s32.totalorder %v553, 36
      %vm677 = vcmp.lt.s32.totalorder %v554, 36
      %vm678 = vcmp.lt.s32.totalorder %v555, 36
      %vm679 = vmand %vm665, %vm672
      %vm680 = vmand %vm666, %vm673
      %vm681 = vmand %vm667, %vm674
      %vm682 = vmand %vm668, %vm675
      %vm683 = vmand %vm669, %vm676
      %vm684 = vmand %vm670, %vm677
      %vm685 = vmand %vm671, %vm678
      %vm686 = vcmp.ge.s32.totalorder %v557, 27
      %vm687 = vcmp.lt.s32.totalorder %v557, 36
      %vm688 = vmand %vm686, %vm687
      %vm689 = vmand %vm679, %vm688
      %vm690 = vmand %vm680, %vm688
      %vm691 = vmand %vm681, %vm688
      %vm692 = vmand %vm682, %vm688
      %vm693 = vmand %vm683, %vm688
      %vm694 = vmand %vm684, %vm688
      %vm695 = vmand %vm685, %vm688
      %vm696 = vmor %vm658, %vm689
      %vm697 = vmor %vm659, %vm690
      %vm698 = vmor %vm660, %vm691
      %vm699 = vmor %vm661, %vm692
      %vm700 = vmor %vm662, %vm693
      %vm701 = vmor %vm663, %vm694
      %vm702 = vmor %vm664, %vm695
      %vm703 = vcmp.ge.s32.totalorder %v549, 36
      %vm704 = vcmp.ge.s32.totalorder %v550, 36
      %vm705 = vcmp.ge.s32.totalorder %v551, 36
      %vm706 = vcmp.ge.s32.totalorder %v552, 36
      %vm707 = vcmp.ge.s32.totalorder %v553, 36
      %vm708 = vcmp.ge.s32.totalorder %v554, 36
      %vm709 = vcmp.ge.s32.totalorder %v555, 36
      %vm710 = vcmp.lt.s32.totalorder %v549, 45
      %vm711 = vcmp.lt.s32.totalorder %v550, 45
      %vm712 = vcmp.lt.s32.totalorder %v551, 45
      %vm713 = vcmp.lt.s32.totalorder %v552, 45
      %vm714 = vcmp.lt.s32.totalorder %v553, 45
      %vm715 = vcmp.lt.s32.totalorder %v554, 45
      %vm716 = vcmp.lt.s32.totalorder %v555, 45
      %vm717 = vmand %vm703, %vm710
      %vm718 = vmand %vm704, %vm711
      %vm719 = vmand %vm705, %vm712
      %vm720 = vmand %vm706, %vm713
      %vm721 = vmand %vm707, %vm714
      %vm722 = vmand %vm708, %vm715
      %vm723 = vmand %vm709, %vm716
      %vm724 = vcmp.ge.s32.totalorder %v557, 36
      %vm725 = vcmp.lt.s32.totalorder %v557, 45
      %vm726 = vmand %vm724, %vm725
      %vm727 = vmand %vm717, %vm726
      %vm728 = vmand %vm718, %vm726
      %vm729 = vmand %vm719, %vm726
      %vm730 = vmand %vm720, %vm726
      %vm731 = vmand %vm721, %vm726
      %vm732 = vmand %vm722, %vm726
      %vm733 = vmand %vm723, %vm726
      %vm734 = vmor %vm696, %vm727
      %vm735 = vmor %vm697, %vm728
      %vm736 = vmor %vm698, %vm729
      %vm737 = vmor %vm699, %vm730
      %vm738 = vmor %vm700, %vm731
      %vm739 = vmor %vm701, %vm732
      %vm740 = vmor %vm702, %vm733
      %vm741 = vcmp.ge.s32.totalorder %v549, 45
      %vm742 = vcmp.ge.s32.totalorder %v550, 45
      %vm743 = vcmp.ge.s32.totalorder %v551, 45
      %vm744 = vcmp.ge.s32.totalorder %v552, 45
      %vm745 = vcmp.ge.s32.totalorder %v553, 45
      %vm746 = vcmp.ge.s32.totalorder %v554, 45
      %vm747 = vcmp.ge.s32.totalorder %v555, 45
      %vm748 = vcmp.lt.s32.totalorder %v549, 54
      %vm749 = vcmp.lt.s32.totalorder %v550, 54
      %vm750 = vcmp.lt.s32.totalorder %v551, 54
      %vm751 = vcmp.lt.s32.totalorder %v552, 54
      %vm752 = vcmp.lt.s32.totalorder %v553, 54
      %vm753 = vcmp.lt.s32.totalorder %v554, 54
      %vm754 = vcmp.lt.s32.totalorder %v555, 54
      %vm755 = vmand %vm741, %vm748
      %vm756 = vmand %vm742, %vm749
      %vm757 = vmand %vm743, %vm750
      %vm758 = vmand %vm744, %vm751
      %vm759 = vmand %vm745, %vm752
      %vm760 = vmand %vm746, %vm753
      %vm761 = vmand %vm747, %vm754
      %vm762 = vcmp.ge.s32.totalorder %v557, 45
      %vm763 = vcmp.lt.s32.totalorder %v557, 54
      %vm764 = vmand %vm762, %vm763
      %vm765 = vmand %vm755, %vm764
      %vm766 = vmand %vm756, %vm764
      %vm767 = vmand %vm757, %vm764
      %vm768 = vmand %vm758, %vm764
      %vm769 = vmand %vm759, %vm764
      %vm770 = vmand %vm760, %vm764
      %vm771 = vmand %vm761, %vm764
      %vm772 = vmor %vm734, %vm765
      %vm773 = vmor %vm735, %vm766
      %vm774 = vmor %vm736, %vm767
      %vm775 = vmor %vm737, %vm768
      %vm776 = vmor %vm738, %vm769
      %vm777 = vmor %vm739, %vm770
      %vm778 = vmor %vm740, %vm771
      %v779 = vld [vmem:[%s1] sm:$0x1]
      %v780 = vld [vmem:[%s2] sm:$0x1]
      %v781 = vld [vmem:[%s3] sm:$0xff]
      %v782 = vld [vmem:[%s3 + $0x8] sm:$0xf]
      %v783 = vld [vmem:[%s3 + $0xc] sm:$0xff]
      %v784 = vld [vmem:[%s3 + $0x14] sm:$0xf]
      %v785 = vld [vmem:[%s3 + $0x18] sm:$0xff]
      %v786 = vld [vmem:[%s3 + $0x20] sm:$0xf]
      %v787 = vld [vmem:[%s3 + $0x24] sm:$0xff]
      %v788 = vld [vmem:[%s3 + $0x2c] sm:$0xf]
      %v789 = vld [vmem:[%s3 + $0x30] sm:$0xff]
      %v790 = vld [vmem:[%s3 + $0x38] sm:$0xf]
      %v791 = vld [vmem:[%s3 + $0x3c] sm:$0xff]
      %v792 = vld [vmem:[%s3 + $0x44] sm:$0xf]
      %v793 = vld [vmem:[%s3 + $0x48] sm:$0xff]
      %v794 = vld [vmem:[%s3 + $0x50] sm:$0xf]
      %v795 = vld [vmem:[%s3 + $0x54] sm:$0xff]
      %v796 = vld [vmem:[%s3 + $0x5c] sm:$0xf]
      %v797 = vld [vmem:[%s3 + $0x60] sm:$0xff]
      %v798 = vld [vmem:[%s3 + $0x68] sm:$0xf]
      %v799 = vld [vmem:[%s3 + $0x6c] sm:$0xff]
      %v800 = vld [vmem:[%s3 + $0x74] sm:$0xf]
      %v801 = vld [vmem:[%s3 + $0x78] sm:$0xff]
      %v802 = vld [vmem:[%s3 + $0x80] sm:$0xf]
      %v803 = vld [vmem:[%s3 + $0x84] sm:$0xff]
      %v804 = vld [vmem:[%s3 + $0x8c] sm:$0xf]
      %v805 = vld [vmem:[%s3 + $0x90] sm:$0xff]
      %v806 = vld [vmem:[%s3 + $0x98] sm:$0xf]
      %v807 = vld [vmem:[%s3 + $0x9c] sm:$0xff]
      %v808 = vld [vmem:[%s3 + $0xa4] sm:$0xf]
      %v809 = vld [vmem:[%s3 + $0xa8] sm:$0xff]
      %v810 = vld [vmem:[%s3 + $0xb0] sm:$0xf]
      %v811 = vld [vmem:[%s3 + $0xb4] sm:$0xff]
      %v812 = vld [vmem:[%s3 + $0xbc] sm:$0xf]
      %v813 = vld [vmem:[%s4] sm:$0x7]
      %v814 = vld [vmem:[%s5] sm:$0xf]
      %v815 = vld [vmem:[%s5 + $0x4] sm:$0xf]
      %v816 = vld [vmem:[%s5 + $0x8] sm:$0xf]
      %v817 = vld [vmem:[%s5 + $0xc] sm:$0xf]
      %v818 = vld [vmem:[%s5 + $0x10] sm:$0xf]
      %v819 = vld [vmem:[%s5 + $0x14] sm:$0xf]
      %v820 = vld [vmem:[%s5 + $0x18] sm:$0xf]
      %v821 = vld [vmem:[%s5 + $0x1c] sm:$0xf]
      %v822 = vld [vmem:[%s5 + $0x20] sm:$0xf]
      %v823 = vld [vmem:[%s5 + $0x24] sm:$0xf]
      %v824 = vld [vmem:[%s5 + $0x28] sm:$0xf]
      %v825 = vld [vmem:[%s5 + $0x2c] sm:$0xf]
      %v826 = vld [vmem:[%s5 + $0x30] sm:$0xf]
      %v827 = vld [vmem:[%s5 + $0x34] sm:$0xf]
      %v828 = vld [vmem:[%s5 + $0x38] sm:$0xf]
      %v829 = vld [vmem:[%s5 + $0x3c] sm:$0xf]
      %v830 = vld [vmem:[%s6] sm:$0x1]
      %v831 = vld [vmem:[%s7] sm:$0x1]
      %v832 = vld [vmem:[%s8] sm:$0x1]
      %v833 = vld [vmem:[%s9] sm:$0xff]
      %v834 = vld [vmem:[%s9 + $0x8] sm:$0xff]
      %v835 = vld [vmem:[%s9 + $0x10] sm:$0xff]
      %v836 = vld [vmem:[%s9 + $0x18] sm:$0xff]
      %v837 = vld [vmem:[%s9 + $0x20] sm:$0xff]
      %v838 = vld [vmem:[%s9 + $0x28] sm:$0xff]
      %v839 = vld [vmem:[%s9 + $0x30] sm:$0xff]
      %v840 = vld [vmem:[%s9 + $0x38] sm:$0xff]
      %v841 = vld [vmem:[%s9 + $0x40] sm:$0xff]
      %v842 = vld [vmem:[%s9 + $0x48] sm:$0xff]
      %v843 = vld [vmem:[%s9 + $0x50] sm:$0xff]
      %v844 = vld [vmem:[%s9 + $0x58] sm:$0xff]
      %v845 = vld [vmem:[%s9 + $0x60] sm:$0xff]
      %v846 = vld [vmem:[%s9 + $0x68] sm:$0xff]
      %v847 = vld [vmem:[%s9 + $0x70] sm:$0xff]
      %v848 = vld [vmem:[%s9 + $0x78] sm:$0xff]
      %v849 = vld [vmem:[%s9 + $0x80] sm:$0xff]
      %v850 = vld [vmem:[%s9 + $0x88] sm:$0xff]
      %v851 = vld [vmem:[%s9 + $0x90] sm:$0xff]
      %v852 = vld [vmem:[%s9 + $0x98] sm:$0xff]
      %v853 = vld [vmem:[%s9 + $0xa0] sm:$0xff]
      %v854 = vld [vmem:[%s9 + $0xa8] sm:$0xff]
      %v855 = vld [vmem:[%s9 + $0xb0] sm:$0xff]
      %v856 = vld [vmem:[%s9 + $0xb8] sm:$0xff]
      %v857 = vld [vmem:[%s9 + $0xc0] sm:$0xff]
      %v858 = vld [vmem:[%s9 + $0xc8] sm:$0xff]
      %v859 = vld [vmem:[%s9 + $0xd0] sm:$0xff]
      %v860 = vld [vmem:[%s9 + $0xd8] sm:$0xff]
      %v861 = vld [vmem:[%s9 + $0xe0] sm:$0xff]
      %v862 = vld [vmem:[%s9 + $0xe8] sm:$0xff]
      %v863 = vld [vmem:[%s9 + $0xf0] sm:$0xff]
      %v864 = vld [vmem:[%s9 + $0xf8] sm:$0xff]
      %v865 = vld [vmem:[%s10] sm:$0xf]
      %v866 = vld [vmem:[%s11] sm:$0xf]
      %v867 = vld [vmem:[%s11 + $0x4] sm:$0xf]
      %v868 = vld [vmem:[%s11 + $0x8] sm:$0xf]
      %v869 = vld [vmem:[%s11 + $0xc] sm:$0xf]
      %v870 = vld [vmem:[%s11 + $0x10] sm:$0xf]
      %v871 = vld [vmem:[%s11 + $0x14] sm:$0xf]
      %v872 = vld [vmem:[%s11 + $0x18] sm:$0xf]
      %v873 = vld [vmem:[%s11 + $0x1c] sm:$0xf]
      %v874 = vld [vmem:[%s11 + $0x20] sm:$0xf]
      %v875 = vld [vmem:[%s11 + $0x24] sm:$0xf]
      %v876 = vld [vmem:[%s11 + $0x28] sm:$0xf]
      %v877 = vld [vmem:[%s11 + $0x2c] sm:$0xf]
      %v878 = vld [vmem:[%s11 + $0x30] sm:$0xf]
      %v879 = vld [vmem:[%s11 + $0x34] sm:$0xf]
      %v880 = vld [vmem:[%s11 + $0x38] sm:$0xf]
      %v881 = vld [vmem:[%s11 + $0x3c] sm:$0xf]
      %v882 = vld [vmem:[%s11 + $0x40] sm:$0xf]
      %v883 = vld [vmem:[%s11 + $0x44] sm:$0xf]
      %v884 = vld [vmem:[%s11 + $0x48] sm:$0xf]
      %v885 = vld [vmem:[%s11 + $0x4c] sm:$0xf]
      %v886 = vld [vmem:[%s11 + $0x50] sm:$0xf]
      %v887 = vld [vmem:[%s11 + $0x54] sm:$0xf]
      %v888 = vld [vmem:[%s11 + $0x58] sm:$0xf]
      %v889 = vld [vmem:[%s11 + $0x5c] sm:$0xf]
      %v890 = vld [vmem:[%s11 + $0x60] sm:$0xf]
      %v891 = vld [vmem:[%s11 + $0x64] sm:$0xf]
      %v892 = vld [vmem:[%s11 + $0x68] sm:$0xf]
      %v893 = vld [vmem:[%s11 + $0x6c] sm:$0xf]
      %v894 = vld [vmem:[%s11 + $0x70] sm:$0xf]
      %v895 = vld [vmem:[%s11 + $0x74] sm:$0xf]
      %v896 = vld [vmem:[%s11 + $0x78] sm:$0xf]
      %v897 = vld [vmem:[%s11 + $0x7c] sm:$0xf]
      %v898 = vld [vmem:[%s11 + $0x80] sm:$0xf]
      %v899 = vld [vmem:[%s11 + $0x84] sm:$0xf]
      %v900 = vld [vmem:[%s11 + $0x88] sm:$0xf]
      %v901 = vld [vmem:[%s11 + $0x8c] sm:$0xf]
      %v902 = vld [vmem:[%s11 + $0x90] sm:$0xf]
      %v903 = vld [vmem:[%s11 + $0x94] sm:$0xf]
      %v904 = vld [vmem:[%s11 + $0x98] sm:$0xf]
      %v905 = vld [vmem:[%s11 + $0x9c] sm:$0xf]
      %v906 = vld [vmem:[%s11 + $0xa0] sm:$0xf]
      %v907 = vld [vmem:[%s11 + $0xa4] sm:$0xf]
      %v908 = vld [vmem:[%s11 + $0xa8] sm:$0xf]
      %v909 = vld [vmem:[%s11 + $0xac] sm:$0xf]
      %v910 = vld [vmem:[%s11 + $0xb0] sm:$0xf]
      %v911 = vld [vmem:[%s11 + $0xb4] sm:$0xf]
      %v912 = vld [vmem:[%s11 + $0xb8] sm:$0xf]
      %v913 = vld [vmem:[%s11 + $0xbc] sm:$0xf]
      %v914 = vld [vmem:[%s11 + $0xc0] sm:$0xf]
      %v915 = vld [vmem:[%s11 + $0xc4] sm:$0xf]
      %v916 = vld [vmem:[%s11 + $0xc8] sm:$0xf]
      %v917 = vld [vmem:[%s11 + $0xcc] sm:$0xf]
      %v918 = vld [vmem:[%s11 + $0xd0] sm:$0xf]
      %v919 = vld [vmem:[%s11 + $0xd4] sm:$0xf]
      %v920 = vld [vmem:[%s11 + $0xd8] sm:$0xf]
      %v921 = vld [vmem:[%s11 + $0xdc] sm:$0xf]
      %v922 = vld [vmem:[%s11 + $0xe0] sm:$0xf]
      %v923 = vld [vmem:[%s11 + $0xe4] sm:$0xf]
      %v924 = vld [vmem:[%s11 + $0xe8] sm:$0xf]
      %v925 = vld [vmem:[%s11 + $0xec] sm:$0xf]
      %v926 = vld [vmem:[%s11 + $0xf0] sm:$0xf]
      %v927 = vld [vmem:[%s11 + $0xf4] sm:$0xf]
      %v928 = vld [vmem:[%s11 + $0xf8] sm:$0xf]
      %v929 = vld [vmem:[%s11 + $0xfc] sm:$0xf]
      %v930 = vld [vmem:[%s12] sm:$0x1]
      %v931 = vld [vmem:[%s542] sm:$0xff]
      %v932 = vld [vmem:[%s542 + $0x8] sm:$0xff]
      %v933 = vld [vmem:[%s542 + $0x10] sm:$0xff]
      %v934 = vld [vmem:[%s542 + $0x18] sm:$0xff]
      %v935 = vld [vmem:[%s542 + $0x20] sm:$0xff]
      %v936 = vld [vmem:[%s542 + $0x28] sm:$0xff]
      %v937 = vld [vmem:[%s542 + $0x30] sm:$0x3f]
      %938 = vadd.xlane.f32.xlu0 %v931
      %v939 = vpop.xlane.xlu0 %938
      %940 = vadd.xlane.f32.xlu0 %v932
      %v941 = vpop.xlane.xlu0 %940
      %942 = vadd.xlane.f32.xlu0 %v933
      %v943 = vpop.xlane.xlu0 %942
      %944 = vadd.xlane.f32.xlu0 %v934
      %v945 = vpop.xlane.xlu0 %944
      %946 = vadd.xlane.f32.xlu0 %v935
      %v947 = vpop.xlane.xlu0 %946
      %948 = vadd.xlane.f32.xlu0 %v936
      %v949 = vpop.xlane.xlu0 %948
      %vm950 = vcmask 1045504
      %v951 = vsel %vm950, %v937, 0.0
      %952 = vadd.xlane.f32.xlu0 %v951
      %v953 = vpop.xlane.xlu0 %952
      %v954 = vrcp.pop 128.0
      %v955 = vmul.f32 %v939, %v954
      %v956 = vmul.f32 %v941, %v954
      %v957 = vmul.f32 %v943, %v954
      %v958 = vmul.f32 %v945, %v954
      %v959 = vmul.f32 %v947, %v954
      %v960 = vmul.f32 %v949, %v954
      %v961 = vmul.f32 %v953, %v954
      %v962 = vsub.f32 %v931, %v955
      %v963 = vsub.f32 %v932, %v956
      %v964 = vsub.f32 %v933, %v957
      %v965 = vsub.f32 %v934, %v958
      %v966 = vsub.f32 %v935, %v959
      %v967 = vsub.f32 %v936, %v960
      %v968 = vsub.f32 %v937, %v961
      %v969 = vmul.f32 %v962, %v962
      %v970 = vmul.f32 %v963, %v963
      %v971 = vmul.f32 %v964, %v964
      %v972 = vmul.f32 %v965, %v965
      %v973 = vmul.f32 %v966, %v966
      %v974 = vmul.f32 %v967, %v967
      %v975 = vmul.f32 %v968, %v968
      %976 = vadd.xlane.f32.xlu0 %v969
      %v977 = vpop.xlane.xlu0 %976
      %978 = vadd.xlane.f32.xlu0 %v970
      %v979 = vpop.xlane.xlu0 %978
      %980 = vadd.xlane.f32.xlu0 %v971
      %v981 = vpop.xlane.xlu0 %980
      %982 = vadd.xlane.f32.xlu0 %v972
      %v983 = vpop.xlane.xlu0 %982
      %984 = vadd.xlane.f32.xlu0 %v973
      %v985 = vpop.xlane.xlu0 %984
      %986 = vadd.xlane.f32.xlu0 %v974
      %v987 = vpop.xlane.xlu0 %986
      %v988 = vsel %vm950, %v975, 0.0
      %989 = vadd.xlane.f32.xlu0 %v988
      %v990 = vpop.xlane.xlu0 %989
      %v991 = vmul.f32 %v977, %v954
      %v992 = vmul.f32 %v979, %v954
      %v993 = vmul.f32 %v981, %v954
      %v994 = vmul.f32 %v983, %v954
      %v995 = vmul.f32 %v985, %v954
      %v996 = vmul.f32 %v987, %v954
      %v997 = vmul.f32 %v990, %v954
      %v998 = vadd.f32 %v991, 1e-06
      %v999 = vadd.f32 %v992, 1e-06
      %v1000 = vadd.f32 %v993, 1e-06
      %v1001 = vadd.f32 %v994, 1e-06
      %v1002 = vadd.f32 %v995, 1e-06
      %v1003 = vadd.f32 %v996, 1e-06
      %v1004 = vadd.f32 %v997, 1e-06
      %v1005 = vrsqrt.pop %v998
      %v1006 = vrsqrt.pop %v999
      %v1007 = vrsqrt.pop %v1000
      %v1008 = vrsqrt.pop %v1001
      %v1009 = vrsqrt.pop %v1002
      %v1010 = vrsqrt.pop %v1003
      %v1011 = vrsqrt.pop %v1004
      %v1012 = vmul.f32 %v962, %v1005
      %v1013 = vmul.f32 %v963, %v1006
      %v1014 = vmul.f32 %v964, %v1007
      %v1015 = vmul.f32 %v965, %v1008
      %v1016 = vmul.f32 %v966, %v1009
      %v1017 = vmul.f32 %v967, %v1010
      %v1018 = vmul.f32 %v968, %v1011
      %v1020 = vlaneseq
      %v1021 = vshrl.u32 %v1020, 7
      %v1022 = vsub.s32 0, %v1021
      %v1023 = vrot.slane %v779, %v1022
      %v1025 = vmul.f32 %v1012, %v1023
      %v1026 = vmul.f32 %v1013, %v1023
      %v1027 = vmul.f32 %v1014, %v1023
      %v1028 = vmul.f32 %v1015, %v1023
      %v1029 = vmul.f32 %v1016, %v1023
      %v1030 = vmul.f32 %v1017, %v1023
      %v1031 = vmul.f32 %v1018, %v1023
      %v1033 = vlaneseq
      %v1034 = vshrl.u32 %v1033, 7
      %v1035 = vsub.s32 0, %v1034
      %v1036 = vrot.slane %v780, %v1035
      %v1038 = vadd.f32 %v1025, %v1036
      %v1039 = vadd.f32 %v1026, %v1036
      %v1040 = vadd.f32 %v1027, %v1036
      %v1041 = vadd.f32 %v1028, %v1036
      %v1042 = vadd.f32 %v1029, %v1036
      %v1043 = vadd.f32 %v1030, %v1036
      %v1044 = vadd.f32 %v1031, %v1036
      %v1045 = vpack.c.bf16 %v1039, %v1038
      %v1046 = vpack.c.bf16 %v1041, %v1040
      %v1047 = vpack.c.bf16 %v1043, %v1042
      %v1048 = vpack.c.bf16 %v1044, %v1044
      %v1050 = vlaneseq
      %v1051 = vshrl.u32 %v1050, 7
      %v1052 = vsub.s32 0, %v1051
      %v1053 = vrot.slane %v813, %v1052
      %v1054 = vlaneseq
      %v1055 = vshrl.u32 %v1054, 7
      %v1056 = vsub.s32 1, %v1055
      %v1057 = vrot.slane %v813, %v1056
      %v1058 = vlaneseq
      %v1059 = vshrl.u32 %v1058, 7
      %v1060 = vsub.s32 2, %v1059
      %v1061 = vrot.slane %v813, %v1060
      %v1097 = vunpack.c.l.b16 %v781
      %v1098 = vunpack.c.h.b16 %v781
      %v1099 = vunpack.c.l.b16 %v782
      %v1100 = vunpack.c.l.b16 %v783
      %v1101 = vunpack.c.h.b16 %v783
      %v1102 = vunpack.c.l.b16 %v784
      %v1103 = vunpack.c.l.b16 %v785
      %v1104 = vunpack.c.h.b16 %v785
      %v1105 = vunpack.c.l.b16 %v786
      %v1106 = vunpack.c.l.b16 %v787
      %v1107 = vunpack.c.h.b16 %v787
      %v1108 = vunpack.c.l.b16 %v788
      %v1109 = vunpack.c.l.b16 %v789
      %v1110 = vunpack.c.h.b16 %v789
      %v1111 = vunpack.c.l.b16 %v790
      %v1112 = vunpack.c.l.b16 %v791
      %v1113 = vunpack.c.h.b16 %v791
      %v1114 = vunpack.c.l.b16 %v792
      %v1115 = vunpack.c.l.b16 %v793
      %v1116 = vunpack.c.h.b16 %v793
      %v1117 = vunpack.c.l.b16 %v794
      %v1118 = vunpack.c.l.b16 %v795
      %v1119 = vunpack.c.h.b16 %v795
      %v1120 = vunpack.c.l.b16 %v796
      %v1121 = vunpack.c.l.b16 %v797
      %v1122 = vunpack.c.h.b16 %v797
      %v1123 = vunpack.c.l.b16 %v798
      %v1124 = vunpack.c.l.b16 %v799
      %v1125 = vunpack.c.h.b16 %v799
      %v1126 = vunpack.c.l.b16 %v800
      %v1127 = vunpack.c.l.b16 %v801
      %v1128 = vunpack.c.h.b16 %v801
      %v1129 = vunpack.c.l.b16 %v802
      %v1130 = vunpack.c.l.b16 %v803
      %v1131 = vunpack.c.h.b16 %v803
      %v1132 = vunpack.c.l.b16 %v804
      %v1133 = vunpack.c.l.b16 %v805
      %v1134 = vunpack.c.h.b16 %v805
      %v1135 = vunpack.c.l.b16 %v806
      %v1136 = vunpack.c.l.b16 %v807
      %v1137 = vunpack.c.h.b16 %v807
      %v1138 = vunpack.c.l.b16 %v808
      %v1139 = vunpack.c.l.b16 %v809
      %v1140 = vunpack.c.h.b16 %v809
      %v1141 = vunpack.c.l.b16 %v810
      %v1142 = vunpack.c.l.b16 %v811
      %v1143 = vunpack.c.h.b16 %v811
      %v1144 = vunpack.c.l.b16 %v812
      %v1145 = vpack.c.b16 %v1100, %v1097
      %v1146 = vpack.c.b16 %v1101, %v1098
      %v1147 = vpack.c.b16 %v1102, %v1099
      %v1148 = vpack.c.b16 %v1106, %v1103
      %v1149 = vpack.c.b16 %v1107, %v1104
      %v1150 = vpack.c.b16 %v1108, %v1105
      %v1151 = vpack.c.b16 %v1112, %v1109
      %v1152 = vpack.c.b16 %v1113, %v1110
      %v1153 = vpack.c.b16 %v1114, %v1111
      %v1154 = vpack.c.b16 %v1118, %v1115
      %v1155 = vpack.c.b16 %v1119, %v1116
      %v1156 = vpack.c.b16 %v1120, %v1117
      %v1157 = vpack.c.b16 %v1124, %v1121
      %v1158 = vpack.c.b16 %v1125, %v1122
      %v1159 = vpack.c.b16 %v1126, %v1123
      %v1160 = vpack.c.b16 %v1130, %v1127
      %v1161 = vpack.c.b16 %v1131, %v1128
      %v1162 = vpack.c.b16 %v1132, %v1129
      %v1163 = vpack.c.b16 %v1136, %v1133
      %v1164 = vpack.c.b16 %v1137, %v1134
      %v1165 = vpack.c.b16 %v1138, %v1135
      %v1166 = vpack.c.b16 %v1142, %v1139
      %v1167 = vpack.c.b16 %v1143, %v1140
      %v1168 = vpack.c.b16 %v1144, %v1141
      %1193 = vmatprep.subr.bf16.mxu0 %v1167
      %1194 = vmatpush1.bf16.msra.mxu0 %v1166
      %1195 = vmatprep.subr.bf16.mxu0 %v1164
      %1196 = vmatpush1.bf16.msra.mxu0 %v1163
      %1197 = vmatprep.subr.bf16.mxu0 %v1161
      %1198 = vmatpush1.bf16.msra.mxu0 %v1160
      %1199 = vmatprep.subr.bf16.mxu0 %v1158
      %1200 = vmatpush1.bf16.msra.mxu0 %v1157
      %1201 = vmatprep.subr.bf16.mxu0 %v1155
      %1202 = vmatpush1.bf16.msra.mxu0 %v1154
      %1203 = vmatprep.subr.bf16.mxu0 %v1152
      %1204 = vmatpush1.bf16.msra.mxu0 %v1151
      %1205 = vmatprep.subr.bf16.mxu0 %v1149
      %1206 = vmatpush1.bf16.msra.mxu0 %v1148
      %1207 = vmatprep.subr.bf16.mxu0 %v1146
      %1208 = vmatpush1.bf16.msra.mxu0 %v1145
      %1209 = vmatprep.subr.bf16.mxu0 0
      %1210 = vmatpush2.bf16.msra.mxu0 0
      %1211 = vmatprep.subr.bf16.mxu0 0
      %1212 = vmatpush2.bf16.msra.mxu0 0
      %1213 = vmatprep.subr.bf16.mxu0 0
      %1214 = vmatpush2.bf16.msra.mxu0 0
      %1215 = vmatprep.subr.bf16.mxu0 0
      %1216 = vmatpush2.bf16.msra.mxu0 0
      %1217 = vmatprep.subr.bf16.mxu0 0
      %1218 = vmatpush2.bf16.msra.mxu0 0
      %1219 = vmatprep.subr.bf16.mxu0 0
      %1220 = vmatpush2.bf16.msra.mxu0 0
      %1221 = vmatprep.subr.bf16.mxu0 0
      %1222 = vmatpush2.bf16.msra.mxu0 0
      %1223 = vmatprep.subr.bf16.mxu0 0
      %1224 = vmatpush2.bf16.msra.mxu0 0
      %1225 = vmatprep.mubr.bf16.mxu0 0
      %1226 = vmatmul.mubr.bf16.gmra.mxu0 %v1045
      %v1227 = vpop.f32.mrf.mxu0
      %v1228 = vadd.f32 %v1053, %v1227
      %v1229 = vpop.f32.mrf.mxu0
      %v1230 = vadd.f32 %v1057, %v1229
      %v1231 = vpop.f32.mrf.mxu0
      %v1232 = vadd.f32 %v1053, %v1231
      %v1233 = vpop.f32.mrf.mxu0
      %v1234 = vadd.f32 %v1057, %v1233
      %1235 = vmatprep.mubr.bf16.mxu0 0
      %1236 = vmatmul.mubr.bf16.gmra.mxu0 %v1046
      %v1237 = vpop.f32.mrf.mxu0
      %v1238 = vadd.f32 %v1053, %v1237
      %v1239 = vpop.f32.mrf.mxu0
      %v1240 = vadd.f32 %v1057, %v1239
      %v1241 = vpop.f32.mrf.mxu0
      %v1242 = vadd.f32 %v1053, %v1241
      %v1243 = vpop.f32.mrf.mxu0
      %v1244 = vadd.f32 %v1057, %v1243
      %1245 = vmatprep.mubr.bf16.mxu0 0
      %1246 = vmatmul.mubr.bf16.gmra.mxu0 %v1047
      %v1247 = vpop.f32.mrf.mxu0
      %v1248 = vadd.f32 %v1053, %v1247
      %v1249 = vpop.f32.mrf.mxu0
      %v1250 = vadd.f32 %v1057, %v1249
      %v1251 = vpop.f32.mrf.mxu0
      %v1252 = vadd.f32 %v1053, %v1251
      %v1253 = vpop.f32.mrf.mxu0
      %v1254 = vadd.f32 %v1057, %v1253
      %1255 = vmatprep.mubr.bf16.mxu0 0
      %1256 = vmatmul.mubr.bf16.gmra.mxu0 %v1048
      %v1257 = vpop.f32.mrf.mxu0
      %v1258 = vadd.f32 %v1053, %v1257
      %v1259 = vpop.f32.mrf.mxu0
      %v1260 = vadd.f32 %v1057, %v1259
      %v1261 = vpop.f32.mrf.mxu0
      %v1262 = vpop.f32.mrf.mxu0
      %1263 = vdwg.mxu0
      %1264 = vmatprep.subr.bf16.mxu0 0
      %1265 = vmatpush1.bf16.msra.mxu0 %v1168
      %1266 = vmatprep.subr.bf16.mxu0 0
      %1267 = vmatpush1.bf16.msra.mxu0 %v1165
      %1268 = vmatprep.subr.bf16.mxu0 0
      %1269 = vmatpush1.bf16.msra.mxu0 %v1162
      %1270 = vmatprep.subr.bf16.mxu0 0
      %1271 = vmatpush1.bf16.msra.mxu0 %v1159
      %1272 = vmatprep.subr.bf16.mxu0 0
      %1273 = vmatpush1.bf16.msra.mxu0 %v1156
      %1274 = vmatprep.subr.bf16.mxu0 0
      %1275 = vmatpush1.bf16.msra.mxu0 %v1153
      %1276 = vmatprep.subr.bf16.mxu0 0
      %1277 = vmatpush1.bf16.msra.mxu0 %v1150
      %1278 = vmatprep.subr.bf16.mxu0 0
      %1279 = vmatpush1.bf16.msra.mxu0 %v1147
      %1280 = vmatprep.subr.bf16.mxu0 0
      %1281 = vmatpush2.bf16.msra.mxu0 0
      %1282 = vmatprep.subr.bf16.mxu0 0
      %1283 = vmatpush2.bf16.msra.mxu0 0
      %1284 = vmatprep.subr.bf16.mxu0 0
      %1285 = vmatpush2.bf16.msra.mxu0 0
      %1286 = vmatprep.subr.bf16.mxu0 0
      %1287 = vmatpush2.bf16.msra.mxu0 0
      %1288 = vmatprep.subr.bf16.mxu0 0
      %1289 = vmatpush2.bf16.msra.mxu0 0
      %1290 = vmatprep.subr.bf16.mxu0 0
      %1291 = vmatpush2.bf16.msra.mxu0 0
      %1292 = vmatprep.subr.bf16.mxu0 0
      %1293 = vmatpush2.bf16.msra.mxu0 0
      %1294 = vmatprep.subr.bf16.mxu0 0
      %1295 = vmatpush2.bf16.msra.mxu0 0
      %1296 = vmatprep.mubr.bf16.mxu0 0
      %1297 = vmatmul.mubr.bf16.gmra.mxu0 %v1045
      %v1298 = vpop.f32.mrf.mxu0
      %v1299 = vadd.f32 %v1061, %v1298
      %v1300 = vpop.f32.mrf.mxu0
      %v1301 = vpop.f32.mrf.mxu0
      %v1302 = vadd.f32 %v1061, %v1301
      %v1303 = vpop.f32.mrf.mxu0
      %1304 = vmatprep.mubr.bf16.mxu0 0
      %1305 = vmatmul.mubr.bf16.gmra.mxu0 %v1046
      %v1306 = vpop.f32.mrf.mxu0
      %v1307 = vadd.f32 %v1061, %v1306
      %v1308 = vpop.f32.mrf.mxu0
      %v1309 = vpop.f32.mrf.mxu0
      %v1310 = vadd.f32 %v1061, %v1309
      %v1311 = vpop.f32.mrf.mxu0
      %1312 = vmatprep.mubr.bf16.mxu0 0
      %1313 = vmatmul.mubr.bf16.gmra.mxu0 %v1047
      %v1314 = vpop.f32.mrf.mxu0
      %v1315 = vadd.f32 %v1061, %v1314
      %v1316 = vpop.f32.mrf.mxu0
      %v1317 = vpop.f32.mrf.mxu0
      %v1318 = vadd.f32 %v1061, %v1317
      %v1319 = vpop.f32.mrf.mxu0
      %1320 = vmatprep.mubr.bf16.mxu0 0
      %1321 = vmatmul.mubr.bf16.gmra.mxu0 %v1048
      %v1322 = vpop.f32.mrf.mxu0
      %v1323 = vadd.f32 %v1061, %v1322
      %v1324 = vpop.f32.mrf.mxu0
      %v1325 = vpop.f32.mrf.mxu0
      %v1326 = vpop.f32.mrf.mxu0
      %1327 = vdwg.mxu0
      %v1328 = vpack.c.bf16 %v1232, %v1228
      %v1329 = vpack.c.bf16 %v1234, %v1230
      %v1330 = vpack.c.bf16 %v1302, %v1299
      %v1331 = vpack.c.bf16 %v1242, %v1238
      %v1332 = vpack.c.bf16 %v1244, %v1240
      %v1333 = vpack.c.bf16 %v1310, %v1307
      %v1334 = vpack.c.bf16 %v1252, %v1248
      %v1335 = vpack.c.bf16 %v1254, %v1250
      %v1336 = vpack.c.bf16 %v1318, %v1315
      %v1337 = vpack.c.bf16 %v1258, %v1258
      %v1338 = vpack.c.bf16 %v1260, %v1260
      %v1339 = vpack.c.bf16 %v1323, %v1323
      %vm1340 = vcmask 261120
      %v1342 = vsel %vm1340, %v1328, 0
      %v1345 = vsel %vm1340, %v1331, 0
      %v1348 = vsel %vm1340, %v1334, 0
      %v1351 = vsel %vm1340, %v1337, 0
      %v1354 = vsel %vm1340, %v1329, 0
      %v1357 = vsel %vm1340, %v1332, 0
      %v1360 = vsel %vm1340, %v1335, 0
      %v1363 = vsel %vm1340, %v1338, 0
      %1365 = vmatprep.subr.bf16.mxu0 0
      %1366 = vmatpush1.bf16.xpose.msra.mxu0 0
      %1367 = vmatprep.subr.bf16.mxu0 0
      %1368 = vmatpush1.bf16.xpose.msra.mxu0 0
      %1369 = vmatprep.subr.bf16.mxu0 0
      %1370 = vmatpush1.bf16.xpose.msra.mxu0 0
      %1371 = vmatprep.subr.bf16.mxu0 0
      %1372 = vmatpush1.bf16.xpose.msra.mxu0 0
      %1373 = vmatprep.subr.bf16.mxu0 0
      %1374 = vmatpush1.bf16.xpose.msra.mxu0 %v1363
      %1375 = vmatprep.subr.bf16.mxu0 0
      %1376 = vmatpush1.bf16.xpose.msra.mxu0 %v1360
      %1377 = vmatprep.subr.bf16.mxu0 0
      %1378 = vmatpush1.bf16.xpose.msra.mxu0 %v1357
      %1379 = vmatprep.subr.bf16.mxu0 0
      %1380 = vmatpush1.bf16.xpose.msra.mxu0 %v1354
      %1381 = vmatprep.subr.bf16.mxu0 0
      %1382 = vmatpush2.bf16.xpose.msra.mxu0 0
      %1383 = vmatprep.subr.bf16.mxu0 0
      %1384 = vmatpush2.bf16.xpose.msra.mxu0 0
      %1385 = vmatprep.subr.bf16.mxu0 0
      %1386 = vmatpush2.bf16.xpose.msra.mxu0 0
      %1387 = vmatprep.subr.bf16.mxu0 0
      %1388 = vmatpush2.bf16.xpose.msra.mxu0 0
      %1389 = vmatprep.subr.bf16.mxu0 0
      %1390 = vmatpush2.bf16.xpose.msra.mxu0 0
      %1391 = vmatprep.subr.bf16.mxu0 0
      %1392 = vmatpush2.bf16.xpose.msra.mxu0 0
      %1393 = vmatprep.subr.bf16.mxu0 0
      %1394 = vmatpush2.bf16.xpose.msra.mxu0 0
      %1395 = vmatprep.subr.bf16.mxu0 0
      %1396 = vmatpush2.bf16.xpose.msra.mxu0 0
      %1397 = vmatprep.mubr.bf16.mxu0 0
      %1398 = vmatmul.mubr.bf16.gmra.mxu0 %v1342
      %v1399 = vpop.f32.mrf.mxu0
      %v1400 = vadd.f32 0.0, %v1399
      %v1401 = vpop.f32.mrf.mxu0
      %v1402 = vpop.f32.mrf.mxu0
      %v1403 = vadd.f32 0.0, %v1402
      %v1404 = vpop.f32.mrf.mxu0
      %1405 = vmatprep.mubr.bf16.mxu0 0
      %1406 = vmatmul.mubr.bf16.gmra.mxu0 %v1345
      %v1407 = vpop.f32.mrf.mxu0
      %v1408 = vadd.f32 0.0, %v1407
      %v1409 = vpop.f32.mrf.mxu0
      %v1410 = vpop.f32.mrf.mxu0
      %v1411 = vadd.f32 0.0, %v1410
      %v1412 = vpop.f32.mrf.mxu0
      %1413 = vmatprep.mubr.bf16.mxu0 0
      %1414 = vmatmul.mubr.bf16.gmra.mxu0 %v1348
      %v1415 = vpop.f32.mrf.mxu0
      %v1416 = vadd.f32 0.0, %v1415
      %v1417 = vpop.f32.mrf.mxu0
      %v1418 = vpop.f32.mrf.mxu0
      %v1419 = vadd.f32 0.0, %v1418
      %v1420 = vpop.f32.mrf.mxu0
      %1421 = vmatprep.mubr.bf16.mxu0 0
      %1422 = vmatmul.mubr.bf16.gmra.mxu0 %v1351
      %v1423 = vpop.f32.mrf.mxu0
      %v1424 = vadd.f32 0.0, %v1423
      %v1425 = vpop.f32.mrf.mxu0
      %v1426 = vpop.f32.mrf.mxu0
      %v1427 = vpop.f32.mrf.mxu0
      %1428 = vdwg.mxu0
      %v1429 = vmul.f32 %v1400, 0.17677669
      %v1430 = vmul.f32 %v1403, 0.17677669
      %v1431 = vmul.f32 %v1408, 0.17677669
      %v1432 = vmul.f32 %v1411, 0.17677669
      %v1433 = vmul.f32 %v1416, 0.17677669
      %v1434 = vmul.f32 %v1419, 0.17677669
      %v1435 = vmul.f32 %v1424, 0.17677669
      %v1436 = vsel %vm772, %v1429, -1e+30
      %v1437 = vsel %vm773, %v1430, -1e+30
      %v1438 = vsel %vm774, %v1431, -1e+30
      %v1439 = vsel %vm775, %v1432, -1e+30
      %v1440 = vsel %vm776, %v1433, -1e+30
      %v1441 = vsel %vm777, %v1434, -1e+30
      %v1442 = vsel %vm778, %v1435, -1e+30
      %vm1443 = vcmask 441344
      %v1444 = vsel %vm1443, %v1436, -inf
      %1445 = vmax.xlane.f32.xlu0 %v1444
      %v1446 = vpop.xlane.xlu0 %1445
      %v1447 = vsel %vm1443, %v1437, -inf
      %1448 = vmax.xlane.f32.xlu0 %v1447
      %v1449 = vpop.xlane.xlu0 %1448
      %v1450 = vsel %vm1443, %v1438, -inf
      %1451 = vmax.xlane.f32.xlu0 %v1450
      %v1452 = vpop.xlane.xlu0 %1451
      %v1453 = vsel %vm1443, %v1439, -inf
      %1454 = vmax.xlane.f32.xlu0 %v1453
      %v1455 = vpop.xlane.xlu0 %1454
      %v1456 = vsel %vm1443, %v1440, -inf
      %1457 = vmax.xlane.f32.xlu0 %v1456
      %v1458 = vpop.xlane.xlu0 %1457
      %v1459 = vsel %vm1443, %v1441, -inf
      %1460 = vmax.xlane.f32.xlu0 %v1459
      %v1461 = vpop.xlane.xlu0 %1460
      %vm1462 = vcmask 439296
      %v1463 = vsel %vm1462, %v1442, -inf
      %1464 = vmax.xlane.f32.xlu0 %v1463
      %v1465 = vpop.xlane.xlu0 %1464
      %v1466 = vsub.f32 %v1436, %v1446
      %v1467 = vsub.f32 %v1437, %v1449
      %v1468 = vsub.f32 %v1438, %v1452
      %v1469 = vsub.f32 %v1439, %v1455
      %v1470 = vsub.f32 %v1440, %v1458
      %v1471 = vsub.f32 %v1441, %v1461
      %v1472 = vsub.f32 %v1442, %v1465
      %v1473 = vmul.f32 %v1466, 1.442695
      %v1474 = vpow.pop %v1473
      %v1475 = vmul.f32 %v1467, 1.442695
      %v1476 = vpow.pop %v1475
      %v1477 = vmul.f32 %v1468, 1.442695
      %v1478 = vpow.pop %v1477
      %v1479 = vmul.f32 %v1469, 1.442695
      %v1480 = vpow.pop %v1479
      %v1481 = vmul.f32 %v1470, 1.442695
      %v1482 = vpow.pop %v1481
      %v1483 = vmul.f32 %v1471, 1.442695
      %v1484 = vpow.pop %v1483
      %v1485 = vmul.f32 %v1472, 1.442695
      %v1486 = vpow.pop %v1485
      %v1487 = vsel %vm1443, %v1474, 0.0
      %1488 = vadd.xlane.f32.xlu0 %v1487
      %v1489 = vpop.xlane.xlu0 %1488
      %v1490 = vsel %vm1443, %v1476, 0.0
      %1491 = vadd.xlane.f32.xlu0 %v1490
      %v1492 = vpop.xlane.xlu0 %1491
      %v1493 = vsel %vm1443, %v1478, 0.0
      %1494 = vadd.xlane.f32.xlu0 %v1493
      %v1495 = vpop.xlane.xlu0 %1494
      %v1496 = vsel %vm1443, %v1480, 0.0
      %1497 = vadd.xlane.f32.xlu0 %v1496
      %v1498 = vpop.xlane.xlu0 %1497
      %v1499 = vsel %vm1443, %v1482, 0.0
      %1500 = vadd.xlane.f32.xlu0 %v1499
      %v1501 = vpop.xlane.xlu0 %1500
      %v1502 = vsel %vm1443, %v1484, 0.0
      %1503 = vadd.xlane.f32.xlu0 %v1502
      %v1504 = vpop.xlane.xlu0 %1503
      %v1505 = vsel %vm1462, %v1486, 0.0
      %1506 = vadd.xlane.f32.xlu0 %v1505
      %v1507 = vpop.xlane.xlu0 %1506
      %v1508 = vrcp.pop %v1489
      %v1509 = vrcp.pop %v1492
      %v1510 = vrcp.pop %v1495
      %v1511 = vrcp.pop %v1498
      %v1512 = vrcp.pop %v1501
      %v1513 = vrcp.pop %v1504
      %v1514 = vrcp.pop %v1507
      %v1515 = vmul.f32 %v1474, %v1508
      %v1516 = vmul.f32 %v1476, %v1509
      %v1517 = vmul.f32 %v1478, %v1510
      %v1518 = vmul.f32 %v1480, %v1511
      %v1519 = vmul.f32 %v1482, %v1512
      %v1520 = vmul.f32 %v1484, %v1513
      %v1521 = vmul.f32 %v1486, %v1514
      %v1522 = vpack.c.bf16 %v1516, %v1515
      %v1523 = vpack.c.bf16 %v1518, %v1517
      %v1524 = vpack.c.bf16 %v1520, %v1519
      %v1525 = vpack.c.bf16 %v1521, %v1521
      %v1527 = vsel %vm1443, %v1522, 0
      %v1530 = vsel %vm1443, %v1523, 0
      %v1533 = vsel %vm1443, %v1524, 0
      %v1536 = vsel %vm1443, %v1525, 0
      %vm1538 = vcmask 1042432
      %v1540 = vsel %vm1538, %v1339, 0
      %1542 = vmatprep.subr.bf16.mxu0 0
      %1543 = vmatpush1.bf16.msra.mxu0 0
      %1544 = vmatprep.subr.bf16.mxu0 0
      %1545 = vmatpush1.bf16.msra.mxu0 0
      %1546 = vmatprep.subr.bf16.mxu0 0
      %1547 = vmatpush1.bf16.msra.mxu0 0
      %1548 = vmatprep.subr.bf16.mxu0 0
      %1549 = vmatpush1.bf16.msra.mxu0 0
      %1550 = vmatprep.subr.bf16.mxu0 0
      %1551 = vmatpush1.bf16.msra.mxu0 %v1540
      %1552 = vmatprep.subr.bf16.mxu0 0
      %1553 = vmatpush1.bf16.msra.mxu0 %v1336
      %1554 = vmatprep.subr.bf16.mxu0 0
      %1555 = vmatpush1.bf16.msra.mxu0 %v1333
      %1556 = vmatprep.subr.bf16.mxu0 0
      %1557 = vmatpush1.bf16.msra.mxu0 %v1330
      %1558 = vmatprep.subr.bf16.mxu0 0
      %1559 = vmatpush2.bf16.msra.mxu0 0
      %1560 = vmatprep.subr.bf16.mxu0 0
      %1561 = vmatpush2.bf16.msra.mxu0 0
      %1562 = vmatprep.subr.bf16.mxu0 0
      %1563 = vmatpush2.bf16.msra.mxu0 0
      %1564 = vmatprep.subr.bf16.mxu0 0
      %1565 = vmatpush2.bf16.msra.mxu0 0
      %1566 = vmatprep.subr.bf16.mxu0 0
      %1567 = vmatpush2.bf16.msra.mxu0 0
      %1568 = vmatprep.subr.bf16.mxu0 0
      %1569 = vmatpush2.bf16.msra.mxu0 0
      %1570 = vmatprep.subr.bf16.mxu0 0
      %1571 = vmatpush2.bf16.msra.mxu0 0
      %1572 = vmatprep.subr.bf16.mxu0 0
      %1573 = vmatpush2.bf16.msra.mxu0 0
      %1574 = vmatprep.mubr.bf16.mxu0 0
      %1575 = vmatmul.mubr.bf16.gmra.mxu0 %v1527
      %v1576 = vpop.f32.mrf.mxu0
      %v1577 = vadd.f32 0.0, %v1576
      %v1578 = vpop.f32.mrf.mxu0
      %v1579 = vpop.f32.mrf.mxu0
      %v1580 = vadd.f32 0.0, %v1579
      %v1581 = vpop.f32.mrf.mxu0
      %1582 = vmatprep.mubr.bf16.mxu0 0
      %1583 = vmatmul.mubr.bf16.gmra.mxu0 %v1530
      %v1584 = vpop.f32.mrf.mxu0
      %v1585 = vadd.f32 0.0, %v1584
      %v1586 = vpop.f32.mrf.mxu0
      %v1587 = vpop.f32.mrf.mxu0
      %v1588 = vadd.f32 0.0, %v1587
      %v1589 = vpop.f32.mrf.mxu0
      %1590 = vmatprep.mubr.bf16.mxu0 0
      %1591 = vmatmul.mubr.bf16.gmra.mxu0 %v1533
      %v1592 = vpop.f32.mrf.mxu0
      %v1593 = vadd.f32 0.0, %v1592
      %v1594 = vpop.f32.mrf.mxu0
      %v1595 = vpop.f32.mrf.mxu0
      %v1596 = vadd.f32 0.0, %v1595
      %v1597 = vpop.f32.mrf.mxu0
      %1598 = vmatprep.mubr.bf16.mxu0 0
      %1599 = vmatmul.mubr.bf16.gmra.mxu0 %v1536
      %v1600 = vpop.f32.mrf.mxu0
      %v1601 = vadd.f32 0.0, %v1600
      %v1602 = vpop.f32.mrf.mxu0
      %v1603 = vpop.f32.mrf.mxu0
      %v1604 = vpop.f32.mrf.mxu0
      %1605 = vdwg.mxu0
      %1610 = vrot.lane.b32.xlu0 %v1328, 96
      %v1611 = vpop.permute.xlu0 %1610
      %1612 = vrot.lane.b32.xlu0 %v1331, 96
      %v1613 = vpop.permute.xlu0 %1612
      %1614 = vrot.lane.b32.xlu0 %v1334, 96
      %v1615 = vpop.permute.xlu0 %1614
      %1616 = vrot.lane.b32.xlu0 %v1337, 96
      %v1617 = vpop.permute.xlu0 %1616
      %1622 = vrot.lane.b32.xlu0 %v1329, 96
      %v1623 = vpop.permute.xlu0 %1622
      %1624 = vrot.lane.b32.xlu0 %v1332, 96
      %v1625 = vpop.permute.xlu0 %1624
      %1626 = vrot.lane.b32.xlu0 %v1335, 96
      %v1627 = vpop.permute.xlu0 %1626
      %1628 = vrot.lane.b32.xlu0 %v1338, 96
      %v1629 = vpop.permute.xlu0 %1628
      %v1631 = vsel %vm1340, %v1611, 0
      %v1634 = vsel %vm1340, %v1613, 0
      %v1637 = vsel %vm1340, %v1615, 0
      %v1640 = vsel %vm1340, %v1617, 0
      %v1643 = vsel %vm1340, %v1623, 0
      %v1646 = vsel %vm1340, %v1625, 0
      %v1649 = vsel %vm1340, %v1627, 0
      %v1652 = vsel %vm1340, %v1629, 0
      %1654 = vmatprep.subr.bf16.mxu0 0
      %1655 = vmatpush1.bf16.xpose.msra.mxu0 0
      %1656 = vmatprep.subr.bf16.mxu0 0
      %1657 = vmatpush1.bf16.xpose.msra.mxu0 0
      %1658 = vmatprep.subr.bf16.mxu0 0
      %1659 = vmatpush1.bf16.xpose.msra.mxu0 0
      %1660 = vmatprep.subr.bf16.mxu0 0
      %1661 = vmatpush1.bf16.xpose.msra.mxu0 0
      %1662 = vmatprep.subr.bf16.mxu0 0
      %1663 = vmatpush1.bf16.xpose.msra.mxu0 %v1652
      %1664 = vmatprep.subr.bf16.mxu0 0
      %1665 = vmatpush1.bf16.xpose.msra.mxu0 %v1649
      %1666 = vmatprep.subr.bf16.mxu0 0
      %1667 = vmatpush1.bf16.xpose.msra.mxu0 %v1646
      %1668 = vmatprep.subr.bf16.mxu0 0
      %1669 = vmatpush1.bf16.xpose.msra.mxu0 %v1643
      %1670 = vmatprep.subr.bf16.mxu0 0
      %1671 = vmatpush2.bf16.xpose.msra.mxu0 0
      %1672 = vmatprep.subr.bf16.mxu0 0
      %1673 = vmatpush2.bf16.xpose.msra.mxu0 0
      %1674 = vmatprep.subr.bf16.mxu0 0
      %1675 = vmatpush2.bf16.xpose.msra.mxu0 0
      %1676 = vmatprep.subr.bf16.mxu0 0
      %1677 = vmatpush2.bf16.xpose.msra.mxu0 0
      %1678 = vmatprep.subr.bf16.mxu0 0
      %1679 = vmatpush2.bf16.xpose.msra.mxu0 0
      %1680 = vmatprep.subr.bf16.mxu0 0
      %1681 = vmatpush2.bf16.xpose.msra.mxu0 0
      %1682 = vmatprep.subr.bf16.mxu0 0
      %1683 = vmatpush2.bf16.xpose.msra.mxu0 0
      %1684 = vmatprep.subr.bf16.mxu0 0
      %1685 = vmatpush2.bf16.xpose.msra.mxu0 0
      %1686 = vmatprep.mubr.bf16.mxu0 0
      %1687 = vmatmul.mubr.bf16.gmra.mxu0 %v1631
      %v1688 = vpop.f32.mrf.mxu0
      %v1689 = vadd.f32 0.0, %v1688
      %v1690 = vpop.f32.mrf.mxu0
      %v1691 = vpop.f32.mrf.mxu0
      %v1692 = vadd.f32 0.0, %v1691
      %v1693 = vpop.f32.mrf.mxu0
      %1694 = vmatprep.mubr.bf16.mxu0 0
      %1695 = vmatmul.mubr.bf16.gmra.mxu0 %v1634
      %v1696 = vpop.f32.mrf.mxu0
      %v1697 = vadd.f32 0.0, %v1696
      %v1698 = vpop.f32.mrf.mxu0
      %v1699 = vpop.f32.mrf.mxu0
      %v1700 = vadd.f32 0.0, %v1699
      %v1701 = vpop.f32.mrf.mxu0
      %1702 = vmatprep.mubr.bf16.mxu0 0
      %1703 = vmatmul.mubr.bf16.gmra.mxu0 %v1637
      %v1704 = vpop.f32.mrf.mxu0
      %v1705 = vadd.f32 0.0, %v1704
      %v1706 = vpop.f32.mrf.mxu0
      %v1707 = vpop.f32.mrf.mxu0
      %v1708 = vadd.f32 0.0, %v1707
      %v1709 = vpop.f32.mrf.mxu0
      %1710 = vmatprep.mubr.bf16.mxu0 0
      %1711 = vmatmul.mubr.bf16.gmra.mxu0 %v1640
      %v1712 = vpop.f32.mrf.mxu0
      %v1713 = vadd.f32 0.0, %v1712
      %v1714 = vpop.f32.mrf.mxu0
      %v1715 = vpop.f32.mrf.mxu0
      %v1716 = vpop.f32.mrf.mxu0
      %1717 = vdwg.mxu0
      %v1718 = vmul.f32 %v1689, 0.17677669
      %v1719 = vmul.f32 %v1692, 0.17677669
      %v1720 = vmul.f32 %v1697, 0.17677669
      %v1721 = vmul.f32 %v1700, 0.17677669
      %v1722 = vmul.f32 %v1705, 0.17677669
      %v1723 = vmul.f32 %v1708, 0.17677669
      %v1724 = vmul.f32 %v1713, 0.17677669
      %v1725 = vsel %vm772, %v1718, -1e+30
      %v1726 = vsel %vm773, %v1719, -1e+30
      %v1727 = vsel %vm774, %v1720, -1e+30
      %v1728 = vsel %vm775, %v1721, -1e+30
      %v1729 = vsel %vm776, %v1722, -1e+30
      %v1730 = vsel %vm777, %v1723, -1e+30
      %v1731 = vsel %vm778, %v1724, -1e+30
      %v1732 = vsel %vm1443, %v1725, -inf
      %1733 = vmax.xlane.f32.xlu0 %v1732
      %v1734 = vpop.xlane.xlu0 %1733
      %v1735 = vsel %vm1443, %v1726, -inf
      %1736 = vmax.xlane.f32.xlu0 %v1735
      %v1737 = vpop.xlane.xlu0 %1736
      %v1738 = vsel %vm1443, %v1727, -inf
      %1739 = vmax.xlane.f32.xlu0 %v1738
      %v1740 = vpop.xlane.xlu0 %1739
      %v1741 = vsel %vm1443, %v1728, -inf
      %1742 = vmax.xlane.f32.xlu0 %v1741
      %v1743 = vpop.xlane.xlu0 %1742
      %v1744 = vsel %vm1443, %v1729, -inf
      %1745 = vmax.xlane.f32.xlu0 %v1744
      %v1746 = vpop.xlane.xlu0 %1745
      %v1747 = vsel %vm1443, %v1730, -inf
      %1748 = vmax.xlane.f32.xlu0 %v1747
      %v1749 = vpop.xlane.xlu0 %1748
      %v1750 = vsel %vm1462, %v1731, -inf
      %1751 = vmax.xlane.f32.xlu0 %v1750
      %v1752 = vpop.xlane.xlu0 %1751
      %v1753 = vsub.f32 %v1725, %v1734
      %v1754 = vsub.f32 %v1726, %v1737
      %v1755 = vsub.f32 %v1727, %v1740
      %v1756 = vsub.f32 %v1728, %v1743
      %v1757 = vsub.f32 %v1729, %v1746
      %v1758 = vsub.f32 %v1730, %v1749
      %v1759 = vsub.f32 %v1731, %v1752
      %v1760 = vmul.f32 %v1753, 1.442695
      %v1761 = vpow.pop %v1760
      %v1762 = vmul.f32 %v1754, 1.442695
      %v1763 = vpow.pop %v1762
      %v1764 = vmul.f32 %v1755, 1.442695
      %v1765 = vpow.pop %v1764
      %v1766 = vmul.f32 %v1756, 1.442695
      %v1767 = vpow.pop %v1766
      %v1768 = vmul.f32 %v1757, 1.442695
      %v1769 = vpow.pop %v1768
      %v1770 = vmul.f32 %v1758, 1.442695
      %v1771 = vpow.pop %v1770
      %v1772 = vmul.f32 %v1759, 1.442695
      %v1773 = vpow.pop %v1772
      %v1774 = vsel %vm1443, %v1761, 0.0
      %1775 = vadd.xlane.f32.xlu0 %v1774
      %v1776 = vpop.xlane.xlu0 %1775
      %v1777 = vsel %vm1443, %v1763, 0.0
      %1778 = vadd.xlane.f32.xlu0 %v1777
      %v1779 = vpop.xlane.xlu0 %1778
      %v1780 = vsel %vm1443, %v1765, 0.0
      %1781 = vadd.xlane.f32.xlu0 %v1780
      %v1782 = vpop.xlane.xlu0 %1781
      %v1783 = vsel %vm1443, %v1767, 0.0
      %1784 = vadd.xlane.f32.xlu0 %v1783
      %v1785 = vpop.xlane.xlu0 %1784
      %v1786 = vsel %vm1443, %v1769, 0.0
      %1787 = vadd.xlane.f32.xlu0 %v1786
      %v1788 = vpop.xlane.xlu0 %1787
      %v1789 = vsel %vm1443, %v1771, 0.0
      %1790 = vadd.xlane.f32.xlu0 %v1789
      %v1791 = vpop.xlane.xlu0 %1790
      %v1792 = vsel %vm1462, %v1773, 0.0
      %1793 = vadd.xlane.f32.xlu0 %v1792
      %v1794 = vpop.xlane.xlu0 %1793
      %v1795 = vrcp.pop %v1776
      %v1796 = vrcp.pop %v1779
      %v1797 = vrcp.pop %v1782
      %v1798 = vrcp.pop %v1785
      %v1799 = vrcp.pop %v1788
      %v1800 = vrcp.pop %v1791
      %v1801 = vrcp.pop %v1794
      %v1802 = vmul.f32 %v1761, %v1795
      %v1803 = vmul.f32 %v1763, %v1796
      %v1804 = vmul.f32 %v1765, %v1797
      %v1805 = vmul.f32 %v1767, %v1798
      %v1806 = vmul.f32 %v1769, %v1799
      %v1807 = vmul.f32 %v1771, %v1800
      %v1808 = vmul.f32 %v1773, %v1801
      %v1809 = vpack.c.bf16 %v1803, %v1802
      %v1810 = vpack.c.bf16 %v1805, %v1804
      %v1811 = vpack.c.bf16 %v1807, %v1806
      %v1812 = vpack.c.bf16 %v1808, %v1808
      %1817 = vrot.lane.b32.xlu0 %v1330, 96
      %v1818 = vpop.permute.xlu0 %1817
      %1819 = vrot.lane.b32.xlu0 %v1333, 96
      %v1820 = vpop.permute.xlu0 %1819
      %1821 = vrot.lane.b32.xlu0 %v1336, 96
      %v1822 = vpop.permute.xlu0 %1821
      %1823 = vrot.lane.b32.xlu0 %v1339, 96
      %v1824 = vpop.permute.xlu0 %1823
      %v1829 = vsel %vm1443, %v1809, 0
      %v1832 = vsel %vm1443, %v1810, 0
      %v1835 = vsel %vm1443, %v1811, 0
      %v1838 = vsel %vm1443, %v1812, 0
      %v1841 = vsel %vm1538, %v1824, 0
      %1843 = vmatprep.subr.bf16.mxu0 0
      %1844 = vmatpush1.bf16.msra.mxu0 0
      %1845 = vmatprep.subr.bf16.mxu0 0
      %1846 = vmatpush1.bf16.msra.mxu0 0
      %1847 = vmatprep.subr.bf16.mxu0 0
      %1848 = vmatpush1.bf16.msra.mxu0 0
      %1849 = vmatprep.subr.bf16.mxu0 0
      %1850 = vmatpush1.bf16.msra.mxu0 0
      %1851 = vmatprep.subr.bf16.mxu0 0
      %1852 = vmatpush1.bf16.msra.mxu0 %v1841
      %1853 = vmatprep.subr.bf16.mxu0 0
      %1854 = vmatpush1.bf16.msra.mxu0 %v1822
      %1855 = vmatprep.subr.bf16.mxu0 0
      %1856 = vmatpush1.bf16.msra.mxu0 %v1820
      %1857 = vmatprep.subr.bf16.mxu0 0
      %1858 = vmatpush1.bf16.msra.mxu0 %v1818
      %1859 = vmatprep.subr.bf16.mxu0 0
      %1860 = vmatpush2.bf16.msra.mxu0 0
      %1861 = vmatprep.subr.bf16.mxu0 0
      %1862 = vmatpush2.bf16.msra.mxu0 0
      %1863 = vmatprep.subr.bf16.mxu0 0
      %1864 = vmatpush2.bf16.msra.mxu0 0
      %1865 = vmatprep.subr.bf16.mxu0 0
      %1866 = vmatpush2.bf16.msra.mxu0 0
      %1867 = vmatprep.subr.bf16.mxu0 0
      %1868 = vmatpush2.bf16.msra.mxu0 0
      %1869 = vmatprep.subr.bf16.mxu0 0
      %1870 = vmatpush2.bf16.msra.mxu0 0
      %1871 = vmatprep.subr.bf16.mxu0 0
      %1872 = vmatpush2.bf16.msra.mxu0 0
      %1873 = vmatprep.subr.bf16.mxu0 0
      %1874 = vmatpush2.bf16.msra.mxu0 0
      %1875 = vmatprep.mubr.bf16.mxu0 0
      %1876 = vmatmul.mubr.bf16.gmra.mxu0 %v1829
      %v1877 = vpop.f32.mrf.mxu0
      %v1878 = vadd.f32 0.0, %v1877
      %v1879 = vpop.f32.mrf.mxu0
      %v1880 = vpop.f32.mrf.mxu0
      %v1881 = vadd.f32 0.0, %v1880
      %v1882 = vpop.f32.mrf.mxu0
      %1883 = vmatprep.mubr.bf16.mxu0 0
      %1884 = vmatmul.mubr.bf16.gmra.mxu0 %v1832
      %v1885 = vpop.f32.mrf.mxu0
      %v1886 = vadd.f32 0.0, %v1885
      %v1887 = vpop.f32.mrf.mxu0
      %v1888 = vpop.f32.mrf.mxu0
      %v1889 = vadd.f32 0.0, %v1888
      %v1890 = vpop.f32.mrf.mxu0
      %1891 = vmatprep.mubr.bf16.mxu0 0
      %1892 = vmatmul.mubr.bf16.gmra.mxu0 %v1835
      %v1893 = vpop.f32.mrf.mxu0
      %v1894 = vadd.f32 0.0, %v1893
      %v1895 = vpop.f32.mrf.mxu0
      %v1896 = vpop.f32.mrf.mxu0
      %v1897 = vadd.f32 0.0, %v1896
      %v1898 = vpop.f32.mrf.mxu0
      %1899 = vmatprep.mubr.bf16.mxu0 0
      %1900 = vmatmul.mubr.bf16.gmra.mxu0 %v1838
      %v1901 = vpop.f32.mrf.mxu0
      %v1902 = vadd.f32 0.0, %v1901
      %v1903 = vpop.f32.mrf.mxu0
      %v1904 = vpop.f32.mrf.mxu0
      %v1905 = vpop.f32.mrf.mxu0
      %1906 = vdwg.mxu0
      %1907 = vrot.lane.b32.xlu0 %v1328, 64
      %v1908 = vpop.permute.xlu0 %1907
      %1909 = vrot.lane.b32.xlu0 %v1331, 64
      %v1910 = vpop.permute.xlu0 %1909
      %1911 = vrot.lane.b32.xlu0 %v1334, 64
      %v1912 = vpop.permute.xlu0 %1911
      %1913 = vrot.lane.b32.xlu0 %v1337, 64
      %v1914 = vpop.permute.xlu0 %1913
      %1915 = vrot.lane.b32.xlu0 %v1329, 64
      %v1916 = vpop.permute.xlu0 %1915
      %1917 = vrot.lane.b32.xlu0 %v1332, 64
      %v1918 = vpop.permute.xlu0 %1917
      %1919 = vrot.lane.b32.xlu0 %v1335, 64
      %v1920 = vpop.permute.xlu0 %1919
      %1921 = vrot.lane.b32.xlu0 %v1338, 64
      %v1922 = vpop.permute.xlu0 %1921
      %v1924 = vsel %vm1340, %v1908, 0
      %v1927 = vsel %vm1340, %v1910, 0
      %v1930 = vsel %vm1340, %v1912, 0
      %v1933 = vsel %vm1340, %v1914, 0
      %v1936 = vsel %vm1340, %v1916, 0
      %v1939 = vsel %vm1340, %v1918, 0
      %v1942 = vsel %vm1340, %v1920, 0
      %v1945 = vsel %vm1340, %v1922, 0
      %1947 = vmatprep.subr.bf16.mxu0 0
      %1948 = vmatpush1.bf16.xpose.msra.mxu0 0
      %1949 = vmatprep.subr.bf16.mxu0 0
      %1950 = vmatpush1.bf16.xpose.msra.mxu0 0
      %1951 = vmatprep.subr.bf16.mxu0 0
      %1952 = vmatpush1.bf16.xpose.msra.mxu0 0
      %1953 = vmatprep.subr.bf16.mxu0 0
      %1954 = vmatpush1.bf16.xpose.msra.mxu0 0
      %1955 = vmatprep.subr.bf16.mxu0 0
      %1956 = vmatpush1.bf16.xpose.msra.mxu0 %v1945
      %1957 = vmatprep.subr.bf16.mxu0 0
      %1958 = vmatpush1.bf16.xpose.msra.mxu0 %v1942
      %1959 = vmatprep.subr.bf16.mxu0 0
      %1960 = vmatpush1.bf16.xpose.msra.mxu0 %v1939
      %1961 = vmatprep.subr.bf16.mxu0 0
      %1962 = vmatpush1.bf16.xpose.msra.mxu0 %v1936
      %1963 = vmatprep.subr.bf16.mxu0 0
      %1964 = vmatpush2.bf16.xpose.msra.mxu0 0
      %1965 = vmatprep.subr.bf16.mxu0 0
      %1966 = vmatpush2.bf16.xpose.msra.mxu0 0
      %1967 = vmatprep.subr.bf16.mxu0 0
      %1968 = vmatpush2.bf16.xpose.msra.mxu0 0
      %1969 = vmatprep.subr.bf16.mxu0 0
      %1970 = vmatpush2.bf16.xpose.msra.mxu0 0
      %1971 = vmatprep.subr.bf16.mxu0 0
      %1972 = vmatpush2.bf16.xpose.msra.mxu0 0
      %1973 = vmatprep.subr.bf16.mxu0 0
      %1974 = vmatpush2.bf16.xpose.msra.mxu0 0
      %1975 = vmatprep.subr.bf16.mxu0 0
      %1976 = vmatpush2.bf16.xpose.msra.mxu0 0
      %1977 = vmatprep.subr.bf16.mxu0 0
      %1978 = vmatpush2.bf16.xpose.msra.mxu0 0
      %1979 = vmatprep.mubr.bf16.mxu0 0
      %1980 = vmatmul.mubr.bf16.gmra.mxu0 %v1924
      %v1981 = vpop.f32.mrf.mxu0
      %v1982 = vadd.f32 0.0, %v1981
      %v1983 = vpop.f32.mrf.mxu0
      %v1984 = vpop.f32.mrf.mxu0
      %v1985 = vadd.f32 0.0, %v1984
      %v1986 = vpop.f32.mrf.mxu0
      %1987 = vmatprep.mubr.bf16.mxu0 0
      %1988 = vmatmul.mubr.bf16.gmra.mxu0 %v1927
      %v1989 = vpop.f32.mrf.mxu0
      %v1990 = vadd.f32 0.0, %v1989
      %v1991 = vpop.f32.mrf.mxu0
      %v1992 = vpop.f32.mrf.mxu0
      %v1993 = vadd.f32 0.0, %v1992
      %v1994 = vpop.f32.mrf.mxu0
      %1995 = vmatprep.mubr.bf16.mxu0 0
      %1996 = vmatmul.mubr.bf16.gmra.mxu0 %v1930
      %v1997 = vpop.f32.mrf.mxu0
      %v1998 = vadd.f32 0.0, %v1997
      %v1999 = vpop.f32.mrf.mxu0
      %v2000 = vpop.f32.mrf.mxu0
      %v2001 = vadd.f32 0.0, %v2000
      %v2002 = vpop.f32.mrf.mxu0
      %2003 = vmatprep.mubr.bf16.mxu0 0
      %2004 = vmatmul.mubr.bf16.gmra.mxu0 %v1933
      %v2005 = vpop.f32.mrf.mxu0
      %v2006 = vadd.f32 0.0, %v2005
      %v2007 = vpop.f32.mrf.mxu0
      %v2008 = vpop.f32.mrf.mxu0
      %v2009 = vpop.f32.mrf.mxu0
      %2010 = vdwg.mxu0
      %v2011 = vmul.f32 %v1982, 0.17677669
      %v2012 = vmul.f32 %v1985, 0.17677669
      %v2013 = vmul.f32 %v1990, 0.17677669
      %v2014 = vmul.f32 %v1993, 0.17677669
      %v2015 = vmul.f32 %v1998, 0.17677669
      %v2016 = vmul.f32 %v2001, 0.17677669
      %v2017 = vmul.f32 %v2006, 0.17677669
      %v2018 = vsel %vm772, %v2011, -1e+30
      %v2019 = vsel %vm773, %v2012, -1e+30
      %v2020 = vsel %vm774, %v2013, -1e+30
      %v2021 = vsel %vm775, %v2014, -1e+30
      %v2022 = vsel %vm776, %v2015, -1e+30
      %v2023 = vsel %vm777, %v2016, -1e+30
      %v2024 = vsel %vm778, %v2017, -1e+30
      %v2025 = vsel %vm1443, %v2018, -inf
      %2026 = vmax.xlane.f32.xlu0 %v2025
      %v2027 = vpop.xlane.xlu0 %2026
      %v2028 = vsel %vm1443, %v2019, -inf
      %2029 = vmax.xlane.f32.xlu0 %v2028
      %v2030 = vpop.xlane.xlu0 %2029
      %v2031 = vsel %vm1443, %v2020, -inf
      %2032 = vmax.xlane.f32.xlu0 %v2031
      %v2033 = vpop.xlane.xlu0 %2032
      %v2034 = vsel %vm1443, %v2021, -inf
      %2035 = vmax.xlane.f32.xlu0 %v2034
      %v2036 = vpop.xlane.xlu0 %2035
      %v2037 = vsel %vm1443, %v2022, -inf
      %2038 = vmax.xlane.f32.xlu0 %v2037
      %v2039 = vpop.xlane.xlu0 %2038
      %v2040 = vsel %vm1443, %v2023, -inf
      %2041 = vmax.xlane.f32.xlu0 %v2040
      %v2042 = vpop.xlane.xlu0 %2041
      %v2043 = vsel %vm1462, %v2024, -inf
      %2044 = vmax.xlane.f32.xlu0 %v2043
      %v2045 = vpop.xlane.xlu0 %2044
      %v2046 = vsub.f32 %v2018, %v2027
      %v2047 = vsub.f32 %v2019, %v2030
      %v2048 = vsub.f32 %v2020, %v2033
      %v2049 = vsub.f32 %v2021, %v2036
      %v2050 = vsub.f32 %v2022, %v2039
      %v2051 = vsub.f32 %v2023, %v2042
      %v2052 = vsub.f32 %v2024, %v2045
      %v2053 = vmul.f32 %v2046, 1.442695
      %v2054 = vpow.pop %v2053
      %v2055 = vmul.f32 %v2047, 1.442695
      %v2056 = vpow.pop %v2055
      %v2057 = vmul.f32 %v2048, 1.442695
      %v2058 = vpow.pop %v2057
      %v2059 = vmul.f32 %v2049, 1.442695
      %v2060 = vpow.pop %v2059
      %v2061 = vmul.f32 %v2050, 1.442695
      %v2062 = vpow.pop %v2061
      %v2063 = vmul.f32 %v2051, 1.442695
      %v2064 = vpow.pop %v2063
      %v2065 = vmul.f32 %v2052, 1.442695
      %v2066 = vpow.pop %v2065
      %v2067 = vsel %vm1443, %v2054, 0.0
      %2068 = vadd.xlane.f32.xlu0 %v2067
      %v2069 = vpop.xlane.xlu0 %2068
      %v2070 = vsel %vm1443, %v2056, 0.0
      %2071 = vadd.xlane.f32.xlu0 %v2070
      %v2072 = vpop.xlane.xlu0 %2071
      %v2073 = vsel %vm1443, %v2058, 0.0
      %2074 = vadd.xlane.f32.xlu0 %v2073
      %v2075 = vpop.xlane.xlu0 %2074
      %v2076 = vsel %vm1443, %v2060, 0.0
      %2077 = vadd.xlane.f32.xlu0 %v2076
      %v2078 = vpop.xlane.xlu0 %2077
      %v2079 = vsel %vm1443, %v2062, 0.0
      %2080 = vadd.xlane.f32.xlu0 %v2079
      %v2081 = vpop.xlane.xlu0 %2080
      %v2082 = vsel %vm1443, %v2064, 0.0
      %2083 = vadd.xlane.f32.xlu0 %v2082
      %v2084 = vpop.xlane.xlu0 %2083
      %v2085 = vsel %vm1462, %v2066, 0.0
      %2086 = vadd.xlane.f32.xlu0 %v2085
      %v2087 = vpop.xlane.xlu0 %2086
      %v2088 = vrcp.pop %v2069
      %v2089 = vrcp.pop %v2072
      %v2090 = vrcp.pop %v2075
      %v2091 = vrcp.pop %v2078
      %v2092 = vrcp.pop %v2081
      %v2093 = vrcp.pop %v2084
      %v2094 = vrcp.pop %v2087
      %v2095 = vmul.f32 %v2054, %v2088
      %v2096 = vmul.f32 %v2056, %v2089
      %v2097 = vmul.f32 %v2058, %v2090
      %v2098 = vmul.f32 %v2060, %v2091
      %v2099 = vmul.f32 %v2062, %v2092
      %v2100 = vmul.f32 %v2064, %v2093
      %v2101 = vmul.f32 %v2066, %v2094
      %v2102 = vpack.c.bf16 %v2096, %v2095
      %v2103 = vpack.c.bf16 %v2098, %v2097
      %v2104 = vpack.c.bf16 %v2100, %v2099
      %v2105 = vpack.c.bf16 %v2101, %v2101
      %2106 = vrot.lane.b32.xlu0 %v1330, 64
      %v2107 = vpop.permute.xlu0 %2106
      %2108 = vrot.lane.b32.xlu0 %v1333, 64
      %v2109 = vpop.permute.xlu0 %2108
      %2110 = vrot.lane.b32.xlu0 %v1336, 64
      %v2111 = vpop.permute.xlu0 %2110
      %2112 = vrot.lane.b32.xlu0 %v1339, 64
      %v2113 = vpop.permute.xlu0 %2112
      %v2118 = vsel %vm1443, %v2102, 0
      %v2121 = vsel %vm1443, %v2103, 0
      %v2124 = vsel %vm1443, %v2104, 0
      %v2127 = vsel %vm1443, %v2105, 0
      %v2130 = vsel %vm1538, %v2113, 0
      %2132 = vmatprep.subr.bf16.mxu0 0
      %2133 = vmatpush1.bf16.msra.mxu0 0
      %2134 = vmatprep.subr.bf16.mxu0 0
      %2135 = vmatpush1.bf16.msra.mxu0 0
      %2136 = vmatprep.subr.bf16.mxu0 0
      %2137 = vmatpush1.bf16.msra.mxu0 0
      %2138 = vmatprep.subr.bf16.mxu0 0
      %2139 = vmatpush1.bf16.msra.mxu0 0
      %2140 = vmatprep.subr.bf16.mxu0 0
      %2141 = vmatpush1.bf16.msra.mxu0 %v2130
      %2142 = vmatprep.subr.bf16.mxu0 0
      %2143 = vmatpush1.bf16.msra.mxu0 %v2111
      %2144 = vmatprep.subr.bf16.mxu0 0
      %2145 = vmatpush1.bf16.msra.mxu0 %v2109
      %2146 = vmatprep.subr.bf16.mxu0 0
      %2147 = vmatpush1.bf16.msra.mxu0 %v2107
      %2148 = vmatprep.subr.bf16.mxu0 0
      %2149 = vmatpush2.bf16.msra.mxu0 0
      %2150 = vmatprep.subr.bf16.mxu0 0
      %2151 = vmatpush2.bf16.msra.mxu0 0
      %2152 = vmatprep.subr.bf16.mxu0 0
      %2153 = vmatpush2.bf16.msra.mxu0 0
      %2154 = vmatprep.subr.bf16.mxu0 0
      %2155 = vmatpush2.bf16.msra.mxu0 0
      %2156 = vmatprep.subr.bf16.mxu0 0
      %2157 = vmatpush2.bf16.msra.mxu0 0
      %2158 = vmatprep.subr.bf16.mxu0 0
      %2159 = vmatpush2.bf16.msra.mxu0 0
      %2160 = vmatprep.subr.bf16.mxu0 0
      %2161 = vmatpush2.bf16.msra.mxu0 0
      %2162 = vmatprep.subr.bf16.mxu0 0
      %2163 = vmatpush2.bf16.msra.mxu0 0
      %2164 = vmatprep.mubr.bf16.mxu0 0
      %2165 = vmatmul.mubr.bf16.gmra.mxu0 %v2118
      %v2166 = vpop.f32.mrf.mxu0
      %v2167 = vadd.f32 0.0, %v2166
      %v2168 = vpop.f32.mrf.mxu0
      %v2169 = vpop.f32.mrf.mxu0
      %v2170 = vadd.f32 0.0, %v2169
      %v2171 = vpop.f32.mrf.mxu0
      %2172 = vmatprep.mubr.bf16.mxu0 0
      %2173 = vmatmul.mubr.bf16.gmra.mxu0 %v2121
      %v2174 = vpop.f32.mrf.mxu0
      %v2175 = vadd.f32 0.0, %v2174
      %v2176 = vpop.f32.mrf.mxu0
      %v2177 = vpop.f32.mrf.mxu0
      %v2178 = vadd.f32 0.0, %v2177
      %v2179 = vpop.f32.mrf.mxu0
      %2180 = vmatprep.mubr.bf16.mxu0 0
      %2181 = vmatmul.mubr.bf16.gmra.mxu0 %v2124
      %v2182 = vpop.f32.mrf.mxu0
      %v2183 = vadd.f32 0.0, %v2182
      %v2184 = vpop.f32.mrf.mxu0
      %v2185 = vpop.f32.mrf.mxu0
      %v2186 = vadd.f32 0.0, %v2185
      %v2187 = vpop.f32.mrf.mxu0
      %2188 = vmatprep.mubr.bf16.mxu0 0
      %2189 = vmatmul.mubr.bf16.gmra.mxu0 %v2127
      %v2190 = vpop.f32.mrf.mxu0
      %v2191 = vadd.f32 0.0, %v2190
      %v2192 = vpop.f32.mrf.mxu0
      %v2193 = vpop.f32.mrf.mxu0
      %v2194 = vpop.f32.mrf.mxu0
      %2195 = vdwg.mxu0
      %2196 = vrot.lane.b32.xlu0 %v1328, 32
      %v2197 = vpop.permute.xlu0 %2196
      %2198 = vrot.lane.b32.xlu0 %v1331, 32
      %v2199 = vpop.permute.xlu0 %2198
      %2200 = vrot.lane.b32.xlu0 %v1334, 32
      %v2201 = vpop.permute.xlu0 %2200
      %2202 = vrot.lane.b32.xlu0 %v1337, 32
      %v2203 = vpop.permute.xlu0 %2202
      %2204 = vrot.lane.b32.xlu0 %v1329, 32
      %v2205 = vpop.permute.xlu0 %2204
      %2206 = vrot.lane.b32.xlu0 %v1332, 32
      %v2207 = vpop.permute.xlu0 %2206
      %2208 = vrot.lane.b32.xlu0 %v1335, 32
      %v2209 = vpop.permute.xlu0 %2208
      %2210 = vrot.lane.b32.xlu0 %v1338, 32
      %v2211 = vpop.permute.xlu0 %2210
      %v2213 = vsel %vm1340, %v2197, 0
      %v2216 = vsel %vm1340, %v2199, 0
      %v2219 = vsel %vm1340, %v2201, 0
      %v2222 = vsel %vm1340, %v2203, 0
      %v2225 = vsel %vm1340, %v2205, 0
      %v2228 = vsel %vm1340, %v2207, 0
      %v2231 = vsel %vm1340, %v2209, 0
      %v2234 = vsel %vm1340, %v2211, 0
      %2236 = vmatprep.subr.bf16.mxu0 0
      %2237 = vmatpush1.bf16.xpose.msra.mxu0 0
      %2238 = vmatprep.subr.bf16.mxu0 0
      %2239 = vmatpush1.bf16.xpose.msra.mxu0 0
      %2240 = vmatprep.subr.bf16.mxu0 0
      %2241 = vmatpush1.bf16.xpose.msra.mxu0 0
      %2242 = vmatprep.subr.bf16.mxu0 0
      %2243 = vmatpush1.bf16.xpose.msra.mxu0 0
      %2244 = vmatprep.subr.bf16.mxu0 0
      %2245 = vmatpush1.bf16.xpose.msra.mxu0 %v2234
      %2246 = vmatprep.subr.bf16.mxu0 0
      %2247 = vmatpush1.bf16.xpose.msra.mxu0 %v2231
      %2248 = vmatprep.subr.bf16.mxu0 0
      %2249 = vmatpush1.bf16.xpose.msra.mxu0 %v2228
      %2250 = vmatprep.subr.bf16.mxu0 0
      %2251 = vmatpush1.bf16.xpose.msra.mxu0 %v2225
      %2252 = vmatprep.subr.bf16.mxu0 0
      %2253 = vmatpush2.bf16.xpose.msra.mxu0 0
      %2254 = vmatprep.subr.bf16.mxu0 0
      %2255 = vmatpush2.bf16.xpose.msra.mxu0 0
      %2256 = vmatprep.subr.bf16.mxu0 0
      %2257 = vmatpush2.bf16.xpose.msra.mxu0 0
      %2258 = vmatprep.subr.bf16.mxu0 0
      %2259 = vmatpush2.bf16.xpose.msra.mxu0 0
      %2260 = vmatprep.subr.bf16.mxu0 0
      %2261 = vmatpush2.bf16.xpose.msra.mxu0 0
      %2262 = vmatprep.subr.bf16.mxu0 0
      %2263 = vmatpush2.bf16.xpose.msra.mxu0 0
      %2264 = vmatprep.subr.bf16.mxu0 0
      %2265 = vmatpush2.bf16.xpose.msra.mxu0 0
      %2266 = vmatprep.subr.bf16.mxu0 0
      %2267 = vmatpush2.bf16.xpose.msra.mxu0 0
      %2268 = vmatprep.mubr.bf16.mxu0 0
      %2269 = vmatmul.mubr.bf16.gmra.mxu0 %v2213
      %v2270 = vpop.f32.mrf.mxu0
      %v2271 = vadd.f32 0.0, %v2270
      %v2272 = vpop.f32.mrf.mxu0
      %v2273 = vpop.f32.mrf.mxu0
      %v2274 = vadd.f32 0.0, %v2273
      %v2275 = vpop.f32.mrf.mxu0
      %2276 = vmatprep.mubr.bf16.mxu0 0
      %2277 = vmatmul.mubr.bf16.gmra.mxu0 %v2216
      %v2278 = vpop.f32.mrf.mxu0
      %v2279 = vadd.f32 0.0, %v2278
      %v2280 = vpop.f32.mrf.mxu0
      %v2281 = vpop.f32.mrf.mxu0
      %v2282 = vadd.f32 0.0, %v2281
      %v2283 = vpop.f32.mrf.mxu0
      %2284 = vmatprep.mubr.bf16.mxu0 0
      %2285 = vmatmul.mubr.bf16.gmra.mxu0 %v2219
      %v2286 = vpop.f32.mrf.mxu0
      %v2287 = vadd.f32 0.0, %v2286
      %v2288 = vpop.f32.mrf.mxu0
      %v2289 = vpop.f32.mrf.mxu0
      %v2290 = vadd.f32 0.0, %v2289
      %v2291 = vpop.f32.mrf.mxu0
      %2292 = vmatprep.mubr.bf16.mxu0 0
      %2293 = vmatmul.mubr.bf16.gmra.mxu0 %v2222
      %v2294 = vpop.f32.mrf.mxu0
      %v2295 = vadd.f32 0.0, %v2294
      %v2296 = vpop.f32.mrf.mxu0
      %v2297 = vpop.f32.mrf.mxu0
      %v2298 = vpop.f32.mrf.mxu0
      %2299 = vdwg.mxu0
      %v2300 = vmul.f32 %v2271, 0.17677669
      %v2301 = vmul.f32 %v2274, 0.17677669
      %v2302 = vmul.f32 %v2279, 0.17677669
      %v2303 = vmul.f32 %v2282, 0.17677669
      %v2304 = vmul.f32 %v2287, 0.17677669
      %v2305 = vmul.f32 %v2290, 0.17677669
      %v2306 = vmul.f32 %v2295, 0.17677669
      %v2307 = vsel %vm772, %v2300, -1e+30
      %v2308 = vsel %vm773, %v2301, -1e+30
      %v2309 = vsel %vm774, %v2302, -1e+30
      %v2310 = vsel %vm775, %v2303, -1e+30
      %v2311 = vsel %vm776, %v2304, -1e+30
      %v2312 = vsel %vm777, %v2305, -1e+30
      %v2313 = vsel %vm778, %v2306, -1e+30
      %v2314 = vsel %vm1443, %v2307, -inf
      %2315 = vmax.xlane.f32.xlu0 %v2314
      %v2316 = vpop.xlane.xlu0 %2315
      %v2317 = vsel %vm1443, %v2308, -inf
      %2318 = vmax.xlane.f32.xlu0 %v2317
      %v2319 = vpop.xlane.xlu0 %2318
      %v2320 = vsel %vm1443, %v2309, -inf
      %2321 = vmax.xlane.f32.xlu0 %v2320
      %v2322 = vpop.xlane.xlu0 %2321
      %v2323 = vsel %vm1443, %v2310, -inf
      %2324 = vmax.xlane.f32.xlu0 %v2323
      %v2325 = vpop.xlane.xlu0 %2324
      %v2326 = vsel %vm1443, %v2311, -inf
      %2327 = vmax.xlane.f32.xlu0 %v2326
      %v2328 = vpop.xlane.xlu0 %2327
      %v2329 = vsel %vm1443, %v2312, -inf
      %2330 = vmax.xlane.f32.xlu0 %v2329
      %v2331 = vpop.xlane.xlu0 %2330
      %v2332 = vsel %vm1462, %v2313, -inf
      %2333 = vmax.xlane.f32.xlu0 %v2332
      %v2334 = vpop.xlane.xlu0 %2333
      %v2335 = vsub.f32 %v2307, %v2316
      %v2336 = vsub.f32 %v2308, %v2319
      %v2337 = vsub.f32 %v2309, %v2322
      %v2338 = vsub.f32 %v2310, %v2325
      %v2339 = vsub.f32 %v2311, %v2328
      %v2340 = vsub.f32 %v2312, %v2331
      %v2341 = vsub.f32 %v2313, %v2334
      %v2342 = vmul.f32 %v2335, 1.442695
      %v2343 = vpow.pop %v2342
      %v2344 = vmul.f32 %v2336, 1.442695
      %v2345 = vpow.pop %v2344
      %v2346 = vmul.f32 %v2337, 1.442695
      %v2347 = vpow.pop %v2346
      %v2348 = vmul.f32 %v2338, 1.442695
      %v2349 = vpow.pop %v2348
      %v2350 = vmul.f32 %v2339, 1.442695
      %v2351 = vpow.pop %v2350
      %v2352 = vmul.f32 %v2340, 1.442695
      %v2353 = vpow.pop %v2352
      %v2354 = vmul.f32 %v2341, 1.442695
      %v2355 = vpow.pop %v2354
      %v2356 = vsel %vm1443, %v2343, 0.0
      %2357 = vadd.xlane.f32.xlu0 %v2356
      %v2358 = vpop.xlane.xlu0 %2357
      %v2359 = vsel %vm1443, %v2345, 0.0
      %2360 = vadd.xlane.f32.xlu0 %v2359
      %v2361 = vpop.xlane.xlu0 %2360
      %v2362 = vsel %vm1443, %v2347, 0.0
      %2363 = vadd.xlane.f32.xlu0 %v2362
      %v2364 = vpop.xlane.xlu0 %2363
      %v2365 = vsel %vm1443, %v2349, 0.0
      %2366 = vadd.xlane.f32.xlu0 %v2365
      %v2367 = vpop.xlane.xlu0 %2366
      %v2368 = vsel %vm1443, %v2351, 0.0
      %2369 = vadd.xlane.f32.xlu0 %v2368
      %v2370 = vpop.xlane.xlu0 %2369
      %v2371 = vsel %vm1443, %v2353, 0.0
      %2372 = vadd.xlane.f32.xlu0 %v2371
      %v2373 = vpop.xlane.xlu0 %2372
      %v2374 = vsel %vm1462, %v2355, 0.0
      %2375 = vadd.xlane.f32.xlu0 %v2374
      %v2376 = vpop.xlane.xlu0 %2375
      %v2377 = vrcp.pop %v2358
      %v2378 = vrcp.pop %v2361
      %v2379 = vrcp.pop %v2364
      %v2380 = vrcp.pop %v2367
      %v2381 = vrcp.pop %v2370
      %v2382 = vrcp.pop %v2373
      %v2383 = vrcp.pop %v2376
      %v2384 = vmul.f32 %v2343, %v2377
      %v2385 = vmul.f32 %v2345, %v2378
      %v2386 = vmul.f32 %v2347, %v2379
      %v2387 = vmul.f32 %v2349, %v2380
      %v2388 = vmul.f32 %v2351, %v2381
      %v2389 = vmul.f32 %v2353, %v2382
      %v2390 = vmul.f32 %v2355, %v2383
      %v2391 = vpack.c.bf16 %v2385, %v2384
      %v2392 = vpack.c.bf16 %v2387, %v2386
      %v2393 = vpack.c.bf16 %v2389, %v2388
      %v2394 = vpack.c.bf16 %v2390, %v2390
      %2395 = vrot.lane.b32.xlu0 %v1330, 32
      %v2396 = vpop.permute.xlu0 %2395
      %2397 = vrot.lane.b32.xlu0 %v1333, 32
      %v2398 = vpop.permute.xlu0 %2397
      %2399 = vrot.lane.b32.xlu0 %v1336, 32
      %v2400 = vpop.permute.xlu0 %2399
      %2401 = vrot.lane.b32.xlu0 %v1339, 32
      %v2402 = vpop.permute.xlu0 %2401
      %v2407 = vsel %vm1443, %v2391, 0
      %v2410 = vsel %vm1443, %v2392, 0
      %v2413 = vsel %vm1443, %v2393, 0
      %v2416 = vsel %vm1443, %v2394, 0
      %v2419 = vsel %vm1538, %v2402, 0
      %2421 = vmatprep.subr.bf16.mxu0 0
      %2422 = vmatpush1.bf16.msra.mxu0 0
      %2423 = vmatprep.subr.bf16.mxu0 0
      %2424 = vmatpush1.bf16.msra.mxu0 0
      %2425 = vmatprep.subr.bf16.mxu0 0
      %2426 = vmatpush1.bf16.msra.mxu0 0
      %2427 = vmatprep.subr.bf16.mxu0 0
      %2428 = vmatpush1.bf16.msra.mxu0 0
      %2429 = vmatprep.subr.bf16.mxu0 0
      %2430 = vmatpush1.bf16.msra.mxu0 %v2419
      %2431 = vmatprep.subr.bf16.mxu0 0
      %2432 = vmatpush1.bf16.msra.mxu0 %v2400
      %2433 = vmatprep.subr.bf16.mxu0 0
      %2434 = vmatpush1.bf16.msra.mxu0 %v2398
      %2435 = vmatprep.subr.bf16.mxu0 0
      %2436 = vmatpush1.bf16.msra.mxu0 %v2396
      %2437 = vmatprep.subr.bf16.mxu0 0
      %2438 = vmatpush2.bf16.msra.mxu0 0
      %2439 = vmatprep.subr.bf16.mxu0 0
      %2440 = vmatpush2.bf16.msra.mxu0 0
      %2441 = vmatprep.subr.bf16.mxu0 0
      %2442 = vmatpush2.bf16.msra.mxu0 0
      %2443 = vmatprep.subr.bf16.mxu0 0
      %2444 = vmatpush2.bf16.msra.mxu0 0
      %2445 = vmatprep.subr.bf16.mxu0 0
      %2446 = vmatpush2.bf16.msra.mxu0 0
      %2447 = vmatprep.subr.bf16.mxu0 0
      %2448 = vmatpush2.bf16.msra.mxu0 0
      %2449 = vmatprep.subr.bf16.mxu0 0
      %2450 = vmatpush2.bf16.msra.mxu0 0
      %2451 = vmatprep.subr.bf16.mxu0 0
      %2452 = vmatpush2.bf16.msra.mxu0 0
      %2453 = vmatprep.mubr.bf16.mxu0 0
      %2454 = vmatmul.mubr.bf16.gmra.mxu0 %v2407
      %v2455 = vpop.f32.mrf.mxu0
      %v2456 = vadd.f32 0.0, %v2455
      %v2457 = vpop.f32.mrf.mxu0
      %v2458 = vpop.f32.mrf.mxu0
      %v2459 = vadd.f32 0.0, %v2458
      %v2460 = vpop.f32.mrf.mxu0
      %2461 = vmatprep.mubr.bf16.mxu0 0
      %2462 = vmatmul.mubr.bf16.gmra.mxu0 %v2410
      %v2463 = vpop.f32.mrf.mxu0
      %v2464 = vadd.f32 0.0, %v2463
      %v2465 = vpop.f32.mrf.mxu0
      %v2466 = vpop.f32.mrf.mxu0
      %v2467 = vadd.f32 0.0, %v2466
      %v2468 = vpop.f32.mrf.mxu0
      %2469 = vmatprep.mubr.bf16.mxu0 0
      %2470 = vmatmul.mubr.bf16.gmra.mxu0 %v2413
      %v2471 = vpop.f32.mrf.mxu0
      %v2472 = vadd.f32 0.0, %v2471
      %v2473 = vpop.f32.mrf.mxu0
      %v2474 = vpop.f32.mrf.mxu0
      %v2475 = vadd.f32 0.0, %v2474
      %v2476 = vpop.f32.mrf.mxu0
      %2477 = vmatprep.mubr.bf16.mxu0 0
      %2478 = vmatmul.mubr.bf16.gmra.mxu0 %v2416
      %v2479 = vpop.f32.mrf.mxu0
      %v2480 = vadd.f32 0.0, %v2479
      %v2481 = vpop.f32.mrf.mxu0
      %v2482 = vpop.f32.mrf.mxu0
      %v2483 = vpop.f32.mrf.mxu0
      %2484 = vdwg.mxu0
      %2492 = vrot.lane.b32.xlu0 %v1878, 32
      %v2493 = vpop.permute.xlu0 %2492
      %2494 = vrot.lane.b32.xlu0 %v1881, 32
      %v2495 = vpop.permute.xlu0 %2494
      %2496 = vrot.lane.b32.xlu0 %v1886, 32
      %v2497 = vpop.permute.xlu0 %2496
      %2498 = vrot.lane.b32.xlu0 %v1889, 32
      %v2499 = vpop.permute.xlu0 %2498
      %2500 = vrot.lane.b32.xlu0 %v1894, 32
      %v2501 = vpop.permute.xlu0 %2500
      %2502 = vrot.lane.b32.xlu0 %v1897, 32
      %v2503 = vpop.permute.xlu0 %2502
      %2504 = vrot.lane.b32.xlu0 %v1902, 32
      %v2505 = vpop.permute.xlu0 %2504
      %2520 = vrot.lane.b32.xlu0 %v2167, 64
      %v2521 = vpop.permute.xlu0 %2520
      %2522 = vrot.lane.b32.xlu0 %v2170, 64
      %v2523 = vpop.permute.xlu0 %2522
      %2524 = vrot.lane.b32.xlu0 %v2175, 64
      %v2525 = vpop.permute.xlu0 %2524
      %2526 = vrot.lane.b32.xlu0 %v2178, 64
      %v2527 = vpop.permute.xlu0 %2526
      %2528 = vrot.lane.b32.xlu0 %v2183, 64
      %v2529 = vpop.permute.xlu0 %2528
      %2530 = vrot.lane.b32.xlu0 %v2186, 64
      %v2531 = vpop.permute.xlu0 %2530
      %2532 = vrot.lane.b32.xlu0 %v2191, 64
      %v2533 = vpop.permute.xlu0 %2532
      %2548 = vrot.lane.b32.xlu0 %v2456, 96
      %v2549 = vpop.permute.xlu0 %2548
      %2550 = vrot.lane.b32.xlu0 %v2459, 96
      %v2551 = vpop.permute.xlu0 %2550
      %2552 = vrot.lane.b32.xlu0 %v2464, 96
      %v2553 = vpop.permute.xlu0 %2552
      %2554 = vrot.lane.b32.xlu0 %v2467, 96
      %v2555 = vpop.permute.xlu0 %2554
      %2556 = vrot.lane.b32.xlu0 %v2472, 96
      %v2557 = vpop.permute.xlu0 %2556
      %2558 = vrot.lane.b32.xlu0 %v2475, 96
      %v2559 = vpop.permute.xlu0 %2558
      %2560 = vrot.lane.b32.xlu0 %v2480, 96
      %v2561 = vpop.permute.xlu0 %2560
      %v2569 = vsel %vm1340, %v1577, %v2493
      %v2570 = vsel %vm1340, %v1580, %v2495
      %v2571 = vsel %vm1340, %v1585, %v2497
      %v2572 = vsel %vm1340, %v1588, %v2499
      %v2573 = vsel %vm1340, %v1593, %v2501
      %v2574 = vsel %vm1340, %v1596, %v2503
      %v2575 = vsel %vm1340, %v1601, %v2505
      %vm2576 = vcmask 523264
      %v2577 = vsel %vm2576, %v2569, %v2521
      %v2578 = vsel %vm2576, %v2570, %v2523
      %v2579 = vsel %vm2576, %v2571, %v2525
      %v2580 = vsel %vm2576, %v2572, %v2527
      %v2581 = vsel %vm2576, %v2573, %v2529
      %v2582 = vsel %vm2576, %v2574, %v2531
      %v2583 = vsel %vm2576, %v2575, %v2533
      %vm2584 = vcmask 785408
      %v2585 = vsel %vm2584, %v2577, %v2549
      %v2586 = vsel %vm2584, %v2578, %v2551
      %v2587 = vsel %vm2584, %v2579, %v2553
      %v2588 = vsel %vm2584, %v2580, %v2555
      %v2589 = vsel %vm2584, %v2581, %v2557
      %v2590 = vsel %vm2584, %v2582, %v2559
      %v2591 = vsel %vm2584, %v2583, %v2561
      %v2592 = vpack.c.bf16 %v2586, %v2585
      %v2593 = vpack.c.bf16 %v2588, %v2587
      %v2594 = vpack.c.bf16 %v2590, %v2589
      %v2595 = vpack.c.bf16 %v2591, %v2591
      %v2612 = vunpack.c.l.b16 %v814
      %v2613 = vunpack.c.l.b16 %v815
      %v2614 = vunpack.c.l.b16 %v816
      %v2615 = vunpack.c.l.b16 %v817
      %v2616 = vunpack.c.l.b16 %v818
      %v2617 = vunpack.c.l.b16 %v819
      %v2618 = vunpack.c.l.b16 %v820
      %v2619 = vunpack.c.l.b16 %v821
      %v2620 = vunpack.c.l.b16 %v822
      %v2621 = vunpack.c.l.b16 %v823
      %v2622 = vunpack.c.l.b16 %v824
      %v2623 = vunpack.c.l.b16 %v825
      %v2624 = vunpack.c.l.b16 %v826
      %v2625 = vunpack.c.l.b16 %v827
      %v2626 = vunpack.c.l.b16 %v828
      %v2627 = vunpack.c.l.b16 %v829
      %v2628 = vpack.c.b16 %v2613, %v2612
      %v2629 = vpack.c.b16 %v2615, %v2614
      %v2630 = vpack.c.b16 %v2617, %v2616
      %v2631 = vpack.c.b16 %v2619, %v2618
      %v2632 = vpack.c.b16 %v2621, %v2620
      %v2633 = vpack.c.b16 %v2623, %v2622
      %v2634 = vpack.c.b16 %v2625, %v2624
      %v2635 = vpack.c.b16 %v2627, %v2626
      %2644 = vmatprep.subr.bf16.mxu0 0
      %2645 = vmatpush1.bf16.msra.mxu0 %v2635
      %2646 = vmatprep.subr.bf16.mxu0 0
      %2647 = vmatpush1.bf16.msra.mxu0 %v2634
      %2648 = vmatprep.subr.bf16.mxu0 0
      %2649 = vmatpush1.bf16.msra.mxu0 %v2633
      %2650 = vmatprep.subr.bf16.mxu0 0
      %2651 = vmatpush1.bf16.msra.mxu0 %v2632
      %2652 = vmatprep.subr.bf16.mxu0 0
      %2653 = vmatpush1.bf16.msra.mxu0 %v2631
      %2654 = vmatprep.subr.bf16.mxu0 0
      %2655 = vmatpush1.bf16.msra.mxu0 %v2630
      %2656 = vmatprep.subr.bf16.mxu0 0
      %2657 = vmatpush1.bf16.msra.mxu0 %v2629
      %2658 = vmatprep.subr.bf16.mxu0 0
      %2659 = vmatpush1.bf16.msra.mxu0 %v2628
      %2660 = vmatprep.subr.bf16.mxu0 0
      %2661 = vmatpush2.bf16.msra.mxu0 0
      %2662 = vmatprep.subr.bf16.mxu0 0
      %2663 = vmatpush2.bf16.msra.mxu0 0
      %2664 = vmatprep.subr.bf16.mxu0 0
      %2665 = vmatpush2.bf16.msra.mxu0 0
      %2666 = vmatprep.subr.bf16.mxu0 0
      %2667 = vmatpush2.bf16.msra.mxu0 0
      %2668 = vmatprep.subr.bf16.mxu0 0
      %2669 = vmatpush2.bf16.msra.mxu0 0
      %2670 = vmatprep.subr.bf16.mxu0 0
      %2671 = vmatpush2.bf16.msra.mxu0 0
      %2672 = vmatprep.subr.bf16.mxu0 0
      %2673 = vmatpush2.bf16.msra.mxu0 0
      %2674 = vmatprep.subr.bf16.mxu0 0
      %2675 = vmatpush2.bf16.msra.mxu0 0
      %2676 = vmatprep.mubr.bf16.mxu0 0
      %2677 = vmatmul.mubr.bf16.gmra.mxu0 %v2592
      %v2678 = vpop.f32.mrf.mxu0
      %v2679 = vadd.f32 0.0, %v2678
      %v2680 = vpop.f32.mrf.mxu0
      %v2681 = vpop.f32.mrf.mxu0
      %v2682 = vadd.f32 0.0, %v2681
      %v2683 = vpop.f32.mrf.mxu0
      %2684 = vmatprep.mubr.bf16.mxu0 0
      %2685 = vmatmul.mubr.bf16.gmra.mxu0 %v2593
      %v2686 = vpop.f32.mrf.mxu0
      %v2687 = vadd.f32 0.0, %v2686
      %v2688 = vpop.f32.mrf.mxu0
      %v2689 = vpop.f32.mrf.mxu0
      %v2690 = vadd.f32 0.0, %v2689
      %v2691 = vpop.f32.mrf.mxu0
      %2692 = vmatprep.mubr.bf16.mxu0 0
      %2693 = vmatmul.mubr.bf16.gmra.mxu0 %v2594
      %v2694 = vpop.f32.mrf.mxu0
      %v2695 = vadd.f32 0.0, %v2694
      %v2696 = vpop.f32.mrf.mxu0
      %v2697 = vpop.f32.mrf.mxu0
      %v2698 = vadd.f32 0.0, %v2697
      %v2699 = vpop.f32.mrf.mxu0
      %2700 = vmatprep.mubr.bf16.mxu0 0
      %2701 = vmatmul.mubr.bf16.gmra.mxu0 %v2595
      %v2702 = vpop.f32.mrf.mxu0
      %v2703 = vadd.f32 0.0, %v2702
      %v2704 = vpop.f32.mrf.mxu0
      %v2705 = vpop.f32.mrf.mxu0
      %v2706 = vpop.f32.mrf.mxu0
      %2707 = vdwg.mxu0
      %v2708 = vadd.f32 %v931, %v2679
      %v2709 = vadd.f32 %v932, %v2682
      %v2710 = vadd.f32 %v933, %v2687
      %v2711 = vadd.f32 %v934, %v2690
      %v2712 = vadd.f32 %v935, %v2695
      %v2713 = vadd.f32 %v936, %v2698
      %v2714 = vadd.f32 %v937, %v2703
      %v2716 = vlaneseq
      %v2717 = vshrl.u32 %v2716, 7
      %v2718 = vsub.s32 0, %v2717
      %v2719 = vrot.slane %v830, %v2718
      %v2721 = vadd.f32 %v2708, %v2719
      %v2722 = vadd.f32 %v2709, %v2719
      %v2723 = vadd.f32 %v2710, %v2719
      %v2724 = vadd.f32 %v2711, %v2719
      %v2725 = vadd.f32 %v2712, %v2719
      %v2726 = vadd.f32 %v2713, %v2719
      %v2727 = vadd.f32 %v2714, %v2719
      %2728 = vadd.xlane.f32.xlu0 %v2721
      %v2729 = vpop.xlane.xlu0 %2728
      %2730 = vadd.xlane.f32.xlu0 %v2722
      %v2731 = vpop.xlane.xlu0 %2730
      %2732 = vadd.xlane.f32.xlu0 %v2723
      %v2733 = vpop.xlane.xlu0 %2732
      %2734 = vadd.xlane.f32.xlu0 %v2724
      %v2735 = vpop.xlane.xlu0 %2734
      %2736 = vadd.xlane.f32.xlu0 %v2725
      %v2737 = vpop.xlane.xlu0 %2736
      %2738 = vadd.xlane.f32.xlu0 %v2726
      %v2739 = vpop.xlane.xlu0 %2738
      %v2740 = vsel %vm950, %v2727, 0.0
      %2741 = vadd.xlane.f32.xlu0 %v2740
      %v2742 = vpop.xlane.xlu0 %2741
      %v2743 = vmul.f32 %v2729, %v954
      %v2744 = vmul.f32 %v2731, %v954
      %v2745 = vmul.f32 %v2733, %v954
      %v2746 = vmul.f32 %v2735, %v954
      %v2747 = vmul.f32 %v2737, %v954
      %v2748 = vmul.f32 %v2739, %v954
      %v2749 = vmul.f32 %v2742, %v954
      %v2750 = vsub.f32 %v2721, %v2743
      %v2751 = vsub.f32 %v2722, %v2744
      %v2752 = vsub.f32 %v2723, %v2745
      %v2753 = vsub.f32 %v2724, %v2746
      %v2754 = vsub.f32 %v2725, %v2747
      %v2755 = vsub.f32 %v2726, %v2748
      %v2756 = vsub.f32 %v2727, %v2749
      %v2757 = vmul.f32 %v2750, %v2750
      %v2758 = vmul.f32 %v2751, %v2751
      %v2759 = vmul.f32 %v2752, %v2752
      %v2760 = vmul.f32 %v2753, %v2753
      %v2761 = vmul.f32 %v2754, %v2754
      %v2762 = vmul.f32 %v2755, %v2755
      %v2763 = vmul.f32 %v2756, %v2756
      %2764 = vadd.xlane.f32.xlu0 %v2757
      %v2765 = vpop.xlane.xlu0 %2764
      %2766 = vadd.xlane.f32.xlu0 %v2758
      %v2767 = vpop.xlane.xlu0 %2766
      %2768 = vadd.xlane.f32.xlu0 %v2759
      %v2769 = vpop.xlane.xlu0 %2768
      %2770 = vadd.xlane.f32.xlu0 %v2760
      %v2771 = vpop.xlane.xlu0 %2770
      %2772 = vadd.xlane.f32.xlu0 %v2761
      %v2773 = vpop.xlane.xlu0 %2772
      %2774 = vadd.xlane.f32.xlu0 %v2762
      %v2775 = vpop.xlane.xlu0 %2774
      %v2776 = vsel %vm950, %v2763, 0.0
      %2777 = vadd.xlane.f32.xlu0 %v2776
      %v2778 = vpop.xlane.xlu0 %2777
      %v2779 = vmul.f32 %v2765, %v954
      %v2780 = vmul.f32 %v2767, %v954
      %v2781 = vmul.f32 %v2769, %v954
      %v2782 = vmul.f32 %v2771, %v954
      %v2783 = vmul.f32 %v2773, %v954
      %v2784 = vmul.f32 %v2775, %v954
      %v2785 = vmul.f32 %v2778, %v954
      %v2786 = vadd.f32 %v2779, 1e-06
      %v2787 = vadd.f32 %v2780, 1e-06
      %v2788 = vadd.f32 %v2781, 1e-06
      %v2789 = vadd.f32 %v2782, 1e-06
      %v2790 = vadd.f32 %v2783, 1e-06
      %v2791 = vadd.f32 %v2784, 1e-06
      %v2792 = vadd.f32 %v2785, 1e-06
      %v2793 = vrsqrt.pop %v2786
      %v2794 = vrsqrt.pop %v2787
      %v2795 = vrsqrt.pop %v2788
      %v2796 = vrsqrt.pop %v2789
      %v2797 = vrsqrt.pop %v2790
      %v2798 = vrsqrt.pop %v2791
      %v2799 = vrsqrt.pop %v2792
      %v2800 = vmul.f32 %v2750, %v2793
      %v2801 = vmul.f32 %v2751, %v2794
      %v2802 = vmul.f32 %v2752, %v2795
      %v2803 = vmul.f32 %v2753, %v2796
      %v2804 = vmul.f32 %v2754, %v2797
      %v2805 = vmul.f32 %v2755, %v2798
      %v2806 = vmul.f32 %v2756, %v2799
      %v2808 = vlaneseq
      %v2809 = vshrl.u32 %v2808, 7
      %v2810 = vsub.s32 0, %v2809
      %v2811 = vrot.slane %v831, %v2810
      %v2813 = vmul.f32 %v2800, %v2811
      %v2814 = vmul.f32 %v2801, %v2811
      %v2815 = vmul.f32 %v2802, %v2811
      %v2816 = vmul.f32 %v2803, %v2811
      %v2817 = vmul.f32 %v2804, %v2811
      %v2818 = vmul.f32 %v2805, %v2811
      %v2819 = vmul.f32 %v2806, %v2811
      %v2821 = vlaneseq
      %v2822 = vshrl.u32 %v2821, 7
      %v2823 = vsub.s32 0, %v2822
      %v2824 = vrot.slane %v832, %v2823
      %v2826 = vadd.f32 %v2813, %v2824
      %v2827 = vadd.f32 %v2814, %v2824
      %v2828 = vadd.f32 %v2815, %v2824
      %v2829 = vadd.f32 %v2816, %v2824
      %v2830 = vadd.f32 %v2817, %v2824
      %v2831 = vadd.f32 %v2818, %v2824
      %v2832 = vadd.f32 %v2819, %v2824
      %v2833 = vpack.c.bf16 %v2827, %v2826
      %v2834 = vpack.c.bf16 %v2829, %v2828
      %v2835 = vpack.c.bf16 %v2831, %v2830
      %v2836 = vpack.c.bf16 %v2832, %v2832
      %v2838 = vlaneseq
      %v2839 = vshrl.u32 %v2838, 7
      %v2840 = vsub.s32 0, %v2839
      %v2841 = vrot.slane %v865, %v2840
      %v2842 = vlaneseq
      %v2843 = vshrl.u32 %v2842, 7
      %v2844 = vsub.s32 1, %v2843
      %v2845 = vrot.slane %v865, %v2844
      %v2846 = vlaneseq
      %v2847 = vshrl.u32 %v2846, 7
      %v2848 = vsub.s32 2, %v2847
      %v2849 = vrot.slane %v865, %v2848
      %v2850 = vlaneseq
      %v2851 = vshrl.u32 %v2850, 7
      %v2852 = vsub.s32 3, %v2851
      %v2853 = vrot.slane %v865, %v2852
      %v2890 = vunpack.c.l.b16 %v833
      %v2891 = vunpack.c.h.b16 %v833
      %v2892 = vunpack.c.l.b16 %v834
      %v2893 = vunpack.c.h.b16 %v834
      %v2894 = vunpack.c.l.b16 %v835
      %v2895 = vunpack.c.h.b16 %v835
      %v2896 = vunpack.c.l.b16 %v836
      %v2897 = vunpack.c.h.b16 %v836
      %v2898 = vunpack.c.l.b16 %v837
      %v2899 = vunpack.c.h.b16 %v837
      %v2900 = vunpack.c.l.b16 %v838
      %v2901 = vunpack.c.h.b16 %v838
      %v2902 = vunpack.c.l.b16 %v839
      %v2903 = vunpack.c.h.b16 %v839
      %v2904 = vunpack.c.l.b16 %v840
      %v2905 = vunpack.c.h.b16 %v840
      %v2906 = vunpack.c.l.b16 %v841
      %v2907 = vunpack.c.h.b16 %v841
      %v2908 = vunpack.c.l.b16 %v842
      %v2909 = vunpack.c.h.b16 %v842
      %v2910 = vunpack.c.l.b16 %v843
      %v2911 = vunpack.c.h.b16 %v843
      %v2912 = vunpack.c.l.b16 %v844
      %v2913 = vunpack.c.h.b16 %v844
      %v2914 = vunpack.c.l.b16 %v845
      %v2915 = vunpack.c.h.b16 %v845
      %v2916 = vunpack.c.l.b16 %v846
      %v2917 = vunpack.c.h.b16 %v846
      %v2918 = vunpack.c.l.b16 %v847
      %v2919 = vunpack.c.h.b16 %v847
      %v2920 = vunpack.c.l.b16 %v848
      %v2921 = vunpack.c.h.b16 %v848
      %v2922 = vunpack.c.l.b16 %v849
      %v2923 = vunpack.c.h.b16 %v849
      %v2924 = vunpack.c.l.b16 %v850
      %v2925 = vunpack.c.h.b16 %v850
      %v2926 = vunpack.c.l.b16 %v851
      %v2927 = vunpack.c.h.b16 %v851
      %v2928 = vunpack.c.l.b16 %v852
      %v2929 = vunpack.c.h.b16 %v852
      %v2930 = vunpack.c.l.b16 %v853
      %v2931 = vunpack.c.h.b16 %v853
      %v2932 = vunpack.c.l.b16 %v854
      %v2933 = vunpack.c.h.b16 %v854
      %v2934 = vunpack.c.l.b16 %v855
      %v2935 = vunpack.c.h.b16 %v855
      %v2936 = vunpack.c.l.b16 %v856
      %v2937 = vunpack.c.h.b16 %v856
      %v2938 = vunpack.c.l.b16 %v857
      %v2939 = vunpack.c.h.b16 %v857
      %v2940 = vunpack.c.l.b16 %v858
      %v2941 = vunpack.c.h.b16 %v858
      %v2942 = vunpack.c.l.b16 %v859
      %v2943 = vunpack.c.h.b16 %v859
      %v2944 = vunpack.c.l.b16 %v860
      %v2945 = vunpack.c.h.b16 %v860
      %v2946 = vunpack.c.l.b16 %v861
      %v2947 = vunpack.c.h.b16 %v861
      %v2948 = vunpack.c.l.b16 %v862
      %v2949 = vunpack.c.h.b16 %v862
      %v2950 = vunpack.c.l.b16 %v863
      %v2951 = vunpack.c.h.b16 %v863
      %v2952 = vunpack.c.l.b16 %v864
      %v2953 = vunpack.c.h.b16 %v864
      %v2954 = vpack.c.b16 %v2894, %v2890
      %v2955 = vpack.c.b16 %v2895, %v2891
      %v2956 = vpack.c.b16 %v2896, %v2892
      %v2957 = vpack.c.b16 %v2897, %v2893
      %v2958 = vpack.c.b16 %v2902, %v2898
      %v2959 = vpack.c.b16 %v2903, %v2899
      %v2960 = vpack.c.b16 %v2904, %v2900
      %v2961 = vpack.c.b16 %v2905, %v2901
      %v2962 = vpack.c.b16 %v2910, %v2906
      %v2963 = vpack.c.b16 %v2911, %v2907
      %v2964 = vpack.c.b16 %v2912, %v2908
      %v2965 = vpack.c.b16 %v2913, %v2909
      %v2966 = vpack.c.b16 %v2918, %v2914
      %v2967 = vpack.c.b16 %v2919, %v2915
      %v2968 = vpack.c.b16 %v2920, %v2916
      %v2969 = vpack.c.b16 %v2921, %v2917
      %v2970 = vpack.c.b16 %v2926, %v2922
      %v2971 = vpack.c.b16 %v2927, %v2923
      %v2972 = vpack.c.b16 %v2928, %v2924
      %v2973 = vpack.c.b16 %v2929, %v2925
      %v2974 = vpack.c.b16 %v2934, %v2930
      %v2975 = vpack.c.b16 %v2935, %v2931
      %v2976 = vpack.c.b16 %v2936, %v2932
      %v2977 = vpack.c.b16 %v2937, %v2933
      %v2978 = vpack.c.b16 %v2942, %v2938
      %v2979 = vpack.c.b16 %v2943, %v2939
      %v2980 = vpack.c.b16 %v2944, %v2940
      %v2981 = vpack.c.b16 %v2945, %v2941
      %v2982 = vpack.c.b16 %v2950, %v2946
      %v2983 = vpack.c.b16 %v2951, %v2947
      %v2984 = vpack.c.b16 %v2952, %v2948
      %v2985 = vpack.c.b16 %v2953, %v2949
      %3018 = vmatprep.subr.bf16.mxu0 %v2983
      %3019 = vmatpush1.bf16.msra.mxu0 %v2982
      %3020 = vmatprep.subr.bf16.mxu0 %v2979
      %3021 = vmatpush1.bf16.msra.mxu0 %v2978
      %3022 = vmatprep.subr.bf16.mxu0 %v2975
      %3023 = vmatpush1.bf16.msra.mxu0 %v2974
      %3024 = vmatprep.subr.bf16.mxu0 %v2971
      %3025 = vmatpush1.bf16.msra.mxu0 %v2970
      %3026 = vmatprep.subr.bf16.mxu0 %v2967
      %3027 = vmatpush1.bf16.msra.mxu0 %v2966
      %3028 = vmatprep.subr.bf16.mxu0 %v2963
      %3029 = vmatpush1.bf16.msra.mxu0 %v2962
      %3030 = vmatprep.subr.bf16.mxu0 %v2959
      %3031 = vmatpush1.bf16.msra.mxu0 %v2958
      %3032 = vmatprep.subr.bf16.mxu0 %v2955
      %3033 = vmatpush1.bf16.msra.mxu0 %v2954
      %3034 = vmatprep.subr.bf16.mxu0 0
      %3035 = vmatpush2.bf16.msra.mxu0 0
      %3036 = vmatprep.subr.bf16.mxu0 0
      %3037 = vmatpush2.bf16.msra.mxu0 0
      %3038 = vmatprep.subr.bf16.mxu0 0
      %3039 = vmatpush2.bf16.msra.mxu0 0
      %3040 = vmatprep.subr.bf16.mxu0 0
      %3041 = vmatpush2.bf16.msra.mxu0 0
      %3042 = vmatprep.subr.bf16.mxu0 0
      %3043 = vmatpush2.bf16.msra.mxu0 0
      %3044 = vmatprep.subr.bf16.mxu0 0
      %3045 = vmatpush2.bf16.msra.mxu0 0
      %3046 = vmatprep.subr.bf16.mxu0 0
      %3047 = vmatpush2.bf16.msra.mxu0 0
      %3048 = vmatprep.subr.bf16.mxu0 0
      %3049 = vmatpush2.bf16.msra.mxu0 0
      %3050 = vmatprep.mubr.bf16.mxu0 0
      %3051 = vmatmul.mubr.bf16.gmra.mxu0 %v2833
      %v3052 = vpop.f32.mrf.mxu0
      %v3053 = vadd.f32 %v2841, %v3052
      %v3054 = vpop.f32.mrf.mxu0
      %v3055 = vadd.f32 %v2845, %v3054
      %v3056 = vpop.f32.mrf.mxu0
      %v3057 = vadd.f32 %v2841, %v3056
      %v3058 = vpop.f32.mrf.mxu0
      %v3059 = vadd.f32 %v2845, %v3058
      %3060 = vmatprep.mubr.bf16.mxu0 0
      %3061 = vmatmul.mubr.bf16.gmra.mxu0 %v2834
      %v3062 = vpop.f32.mrf.mxu0
      %v3063 = vadd.f32 %v2841, %v3062
      %v3064 = vpop.f32.mrf.mxu0
      %v3065 = vadd.f32 %v2845, %v3064
      %v3066 = vpop.f32.mrf.mxu0
      %v3067 = vadd.f32 %v2841, %v3066
      %v3068 = vpop.f32.mrf.mxu0
      %v3069 = vadd.f32 %v2845, %v3068
      %3070 = vmatprep.mubr.bf16.mxu0 0
      %3071 = vmatmul.mubr.bf16.gmra.mxu0 %v2835
      %v3072 = vpop.f32.mrf.mxu0
      %v3073 = vadd.f32 %v2841, %v3072
      %v3074 = vpop.f32.mrf.mxu0
      %v3075 = vadd.f32 %v2845, %v3074
      %v3076 = vpop.f32.mrf.mxu0
      %v3077 = vadd.f32 %v2841, %v3076
      %v3078 = vpop.f32.mrf.mxu0
      %v3079 = vadd.f32 %v2845, %v3078
      %3080 = vmatprep.mubr.bf16.mxu0 0
      %3081 = vmatmul.mubr.bf16.gmra.mxu0 %v2836
      %v3082 = vpop.f32.mrf.mxu0
      %v3083 = vadd.f32 %v2841, %v3082
      %v3084 = vpop.f32.mrf.mxu0
      %v3085 = vadd.f32 %v2845, %v3084
      %v3086 = vpop.f32.mrf.mxu0
      %v3087 = vpop.f32.mrf.mxu0
      %3088 = vdwg.mxu0
      %3089 = vmatprep.subr.bf16.mxu0 %v2985
      %3090 = vmatpush1.bf16.msra.mxu0 %v2984
      %3091 = vmatprep.subr.bf16.mxu0 %v2981
      %3092 = vmatpush1.bf16.msra.mxu0 %v2980
      %3093 = vmatprep.subr.bf16.mxu0 %v2977
      %3094 = vmatpush1.bf16.msra.mxu0 %v2976
      %3095 = vmatprep.subr.bf16.mxu0 %v2973
      %3096 = vmatpush1.bf16.msra.mxu0 %v2972
      %3097 = vmatprep.subr.bf16.mxu0 %v2969
      %3098 = vmatpush1.bf16.msra.mxu0 %v2968
      %3099 = vmatprep.subr.bf16.mxu0 %v2965
      %3100 = vmatpush1.bf16.msra.mxu0 %v2964
      %3101 = vmatprep.subr.bf16.mxu0 %v2961
      %3102 = vmatpush1.bf16.msra.mxu0 %v2960
      %3103 = vmatprep.subr.bf16.mxu0 %v2957
      %3104 = vmatpush1.bf16.msra.mxu0 %v2956
      %3105 = vmatprep.subr.bf16.mxu0 0
      %3106 = vmatpush2.bf16.msra.mxu0 0
      %3107 = vmatprep.subr.bf16.mxu0 0
      %3108 = vmatpush2.bf16.msra.mxu0 0
      %3109 = vmatprep.subr.bf16.mxu0 0
      %3110 = vmatpush2.bf16.msra.mxu0 0
      %3111 = vmatprep.subr.bf16.mxu0 0
      %3112 = vmatpush2.bf16.msra.mxu0 0
      %3113 = vmatprep.subr.bf16.mxu0 0
      %3114 = vmatpush2.bf16.msra.mxu0 0
      %3115 = vmatprep.subr.bf16.mxu0 0
      %3116 = vmatpush2.bf16.msra.mxu0 0
      %3117 = vmatprep.subr.bf16.mxu0 0
      %3118 = vmatpush2.bf16.msra.mxu0 0
      %3119 = vmatprep.subr.bf16.mxu0 0
      %3120 = vmatpush2.bf16.msra.mxu0 0
      %3121 = vmatprep.mubr.bf16.mxu0 0
      %3122 = vmatmul.mubr.bf16.gmra.mxu0 %v2833
      %v3123 = vpop.f32.mrf.mxu0
      %v3124 = vadd.f32 %v2849, %v3123
      %v3125 = vpop.f32.mrf.mxu0
      %v3126 = vadd.f32 %v2853, %v3125
      %v3127 = vpop.f32.mrf.mxu0
      %v3128 = vadd.f32 %v2849, %v3127
      %v3129 = vpop.f32.mrf.mxu0
      %v3130 = vadd.f32 %v2853, %v3129
      %3131 = vmatprep.mubr.bf16.mxu0 0
      %3132 = vmatmul.mubr.bf16.gmra.mxu0 %v2834
      %v3133 = vpop.f32.mrf.mxu0
      %v3134 = vadd.f32 %v2849, %v3133
      %v3135 = vpop.f32.mrf.mxu0
      %v3136 = vadd.f32 %v2853, %v3135
      %v3137 = vpop.f32.mrf.mxu0
      %v3138 = vadd.f32 %v2849, %v3137
      %v3139 = vpop.f32.mrf.mxu0
      %v3140 = vadd.f32 %v2853, %v3139
      %3141 = vmatprep.mubr.bf16.mxu0 0
      %3142 = vmatmul.mubr.bf16.gmra.mxu0 %v2835
      %v3143 = vpop.f32.mrf.mxu0
      %v3144 = vadd.f32 %v2849, %v3143
      %v3145 = vpop.f32.mrf.mxu0
      %v3146 = vadd.f32 %v2853, %v3145
      %v3147 = vpop.f32.mrf.mxu0
      %v3148 = vadd.f32 %v2849, %v3147
      %v3149 = vpop.f32.mrf.mxu0
      %v3150 = vadd.f32 %v2853, %v3149
      %3151 = vmatprep.mubr.bf16.mxu0 0
      %3152 = vmatmul.mubr.bf16.gmra.mxu0 %v2836
      %v3153 = vpop.f32.mrf.mxu0
      %v3154 = vadd.f32 %v2849, %v3153
      %v3155 = vpop.f32.mrf.mxu0
      %v3156 = vadd.f32 %v2853, %v3155
      %v3157 = vpop.f32.mrf.mxu0
      %v3158 = vpop.f32.mrf.mxu0
      %3159 = vdwg.mxu0
      %v3160 = vmul.f32 %v3053, 0.70710677
      %v3161 = vmul.f32 %v3055, 0.70710677
      %v3162 = vmul.f32 %v3124, 0.70710677
      %v3163 = vmul.f32 %v3126, 0.70710677
      %v3164 = vmul.f32 %v3057, 0.70710677
      %v3165 = vmul.f32 %v3059, 0.70710677
      %v3166 = vmul.f32 %v3128, 0.70710677
      %v3167 = vmul.f32 %v3130, 0.70710677
      %v3168 = vmul.f32 %v3063, 0.70710677
      %v3169 = vmul.f32 %v3065, 0.70710677
      %v3170 = vmul.f32 %v3134, 0.70710677
      %v3171 = vmul.f32 %v3136, 0.70710677
      %v3172 = vmul.f32 %v3067, 0.70710677
      %v3173 = vmul.f32 %v3069, 0.70710677
      %v3174 = vmul.f32 %v3138, 0.70710677
      %v3175 = vmul.f32 %v3140, 0.70710677
      %v3176 = vmul.f32 %v3073, 0.70710677
      %v3177 = vmul.f32 %v3075, 0.70710677
      %v3178 = vmul.f32 %v3144, 0.70710677
      %v3179 = vmul.f32 %v3146, 0.70710677
      %v3180 = vmul.f32 %v3077, 0.70710677
      %v3181 = vmul.f32 %v3079, 0.70710677
      %v3182 = vmul.f32 %v3148, 0.70710677
      %v3183 = vmul.f32 %v3150, 0.70710677
      %v3184 = vmul.f32 %v3083, 0.70710677
      %v3185 = vmul.f32 %v3085, 0.70710677
      %v3186 = vmul.f32 %v3154, 0.70710677
      %v3187 = vmul.f32 %v3156, 0.70710677
      %v3188 = vand.u32 2147483647, %v3160
      %v3189 = vand.u32 2147483647, %v3161
      %v3190 = vand.u32 2147483647, %v3162
      %v3191 = vand.u32 2147483647, %v3163
      %v3192 = vand.u32 2147483647, %v3164
      %v3193 = vand.u32 2147483647, %v3165
      %v3194 = vand.u32 2147483647, %v3166
      %v3195 = vand.u32 2147483647, %v3167
      %v3196 = vand.u32 2147483647, %v3168
      %v3197 = vand.u32 2147483647, %v3169
      %v3198 = vand.u32 2147483647, %v3170
      %v3199 = vand.u32 2147483647, %v3171
      %v3200 = vand.u32 2147483647, %v3172
      %v3201 = vand.u32 2147483647, %v3173
      %v3202 = vand.u32 2147483647, %v3174
      %v3203 = vand.u32 2147483647, %v3175
      %v3204 = vand.u32 2147483647, %v3176
      %v3205 = vand.u32 2147483647, %v3177
      %v3206 = vand.u32 2147483647, %v3178
      %v3207 = vand.u32 2147483647, %v3179
      %v3208 = vand.u32 2147483647, %v3180
      %v3209 = vand.u32 2147483647, %v3181
      %v3210 = vand.u32 2147483647, %v3182
      %v3211 = vand.u32 2147483647, %v3183
      %v3212 = vand.u32 2147483647, %v3184
      %v3213 = vand.u32 2147483647, %v3185
      %v3214 = vand.u32 2147483647, %v3186
      %v3215 = vand.u32 2147483647, %v3187
      %v3216 = vmul.f32 %v3188, 0.3275911
      %v3217 = vmul.f32 %v3189, 0.3275911
      %v3218 = vmul.f32 %v3190, 0.3275911
      %v3219 = vmul.f32 %v3191, 0.3275911
      %v3220 = vmul.f32 %v3192, 0.3275911
      %v3221 = vmul.f32 %v3193, 0.3275911
      %v3222 = vmul.f32 %v3194, 0.3275911
      %v3223 = vmul.f32 %v3195, 0.3275911
      %v3224 = vmul.f32 %v3196, 0.3275911
      %v3225 = vmul.f32 %v3197, 0.3275911
      %v3226 = vmul.f32 %v3198, 0.3275911
      %v3227 = vmul.f32 %v3199, 0.3275911
      %v3228 = vmul.f32 %v3200, 0.3275911
      %v3229 = vmul.f32 %v3201, 0.3275911
      %v3230 = vmul.f32 %v3202, 0.3275911
      %v3231 = vmul.f32 %v3203, 0.3275911
      %v3232 = vmul.f32 %v3204, 0.3275911
      %v3233 = vmul.f32 %v3205, 0.3275911
      %v3234 = vmul.f32 %v3206, 0.3275911
      %v3235 = vmul.f32 %v3207, 0.3275911
      %v3236 = vmul.f32 %v3208, 0.3275911
      %v3237 = vmul.f32 %v3209, 0.3275911
      %v3238 = vmul.f32 %v3210, 0.3275911
      %v3239 = vmul.f32 %v3211, 0.3275911
      %v3240 = vmul.f32 %v3212, 0.3275911
      %v3241 = vmul.f32 %v3213, 0.3275911
      %v3242 = vmul.f32 %v3214, 0.3275911
      %v3243 = vmul.f32 %v3215, 0.3275911
      %v3244 = vadd.f32 %v3216, 1.0
      %v3245 = vadd.f32 %v3217, 1.0
      %v3246 = vadd.f32 %v3218, 1.0
      %v3247 = vadd.f32 %v3219, 1.0
      %v3248 = vadd.f32 %v3220, 1.0
      %v3249 = vadd.f32 %v3221, 1.0
      %v3250 = vadd.f32 %v3222, 1.0
      %v3251 = vadd.f32 %v3223, 1.0
      %v3252 = vadd.f32 %v3224, 1.0
      %v3253 = vadd.f32 %v3225, 1.0
      %v3254 = vadd.f32 %v3226, 1.0
      %v3255 = vadd.f32 %v3227, 1.0
      %v3256 = vadd.f32 %v3228, 1.0
      %v3257 = vadd.f32 %v3229, 1.0
      %v3258 = vadd.f32 %v3230, 1.0
      %v3259 = vadd.f32 %v3231, 1.0
      %v3260 = vadd.f32 %v3232, 1.0
      %v3261 = vadd.f32 %v3233, 1.0
      %v3262 = vadd.f32 %v3234, 1.0
      %v3263 = vadd.f32 %v3235, 1.0
      %v3264 = vadd.f32 %v3236, 1.0
      %v3265 = vadd.f32 %v3237, 1.0
      %v3266 = vadd.f32 %v3238, 1.0
      %v3267 = vadd.f32 %v3239, 1.0
      %v3268 = vadd.f32 %v3240, 1.0
      %v3269 = vadd.f32 %v3241, 1.0
      %v3270 = vadd.f32 %v3242, 1.0
      %v3271 = vadd.f32 %v3243, 1.0
      %v3272 = vrcp.pop %v3244
      %v3273 = vrcp.pop %v3245
      %v3274 = vrcp.pop %v3246
      %v3275 = vrcp.pop %v3247
      %v3276 = vrcp.pop %v3248
      %v3277 = vrcp.pop %v3249
      %v3278 = vrcp.pop %v3250
      %v3279 = vrcp.pop %v3251
      %v3280 = vrcp.pop %v3252
      %v3281 = vrcp.pop %v3253
      %v3282 = vrcp.pop %v3254
      %v3283 = vrcp.pop %v3255
      %v3284 = vrcp.pop %v3256
      %v3285 = vrcp.pop %v3257
      %v3286 = vrcp.pop %v3258
      %v3287 = vrcp.pop %v3259
      %v3288 = vrcp.pop %v3260
      %v3289 = vrcp.pop %v3261
      %v3290 = vrcp.pop %v3262
      %v3291 = vrcp.pop %v3263
      %v3292 = vrcp.pop %v3264
      %v3293 = vrcp.pop %v3265
      %v3294 = vrcp.pop %v3266
      %v3295 = vrcp.pop %v3267
      %v3296 = vrcp.pop %v3268
      %v3297 = vrcp.pop %v3269
      %v3298 = vrcp.pop %v3270
      %v3299 = vrcp.pop %v3271
      %v3300 = vmul.f32 %v3272, 1.0614054
      %v3301 = vmul.f32 %v3273, 1.0614054
      %v3302 = vmul.f32 %v3274, 1.0614054
      %v3303 = vmul.f32 %v3275, 1.0614054
      %v3304 = vmul.f32 %v3276, 1.0614054
      %v3305 = vmul.f32 %v3277, 1.0614054
      %v3306 = vmul.f32 %v3278, 1.0614054
      %v3307 = vmul.f32 %v3279, 1.0614054
      %v3308 = vmul.f32 %v3280, 1.0614054
      %v3309 = vmul.f32 %v3281, 1.0614054
      %v3310 = vmul.f32 %v3282, 1.0614054
      %v3311 = vmul.f32 %v3283, 1.0614054
      %v3312 = vmul.f32 %v3284, 1.0614054
      %v3313 = vmul.f32 %v3285, 1.0614054
      %v3314 = vmul.f32 %v3286, 1.0614054
      %v3315 = vmul.f32 %v3287, 1.0614054
      %v3316 = vmul.f32 %v3288, 1.0614054
      %v3317 = vmul.f32 %v3289, 1.0614054
      %v3318 = vmul.f32 %v3290, 1.0614054
      %v3319 = vmul.f32 %v3291, 1.0614054
      %v3320 = vmul.f32 %v3292, 1.0614054
      %v3321 = vmul.f32 %v3293, 1.0614054
      %v3322 = vmul.f32 %v3294, 1.0614054
      %v3323 = vmul.f32 %v3295, 1.0614054
      %v3324 = vmul.f32 %v3296, 1.0614054
      %v3325 = vmul.f32 %v3297, 1.0614054
      %v3326 = vmul.f32 %v3298, 1.0614054
      %v3327 = vmul.f32 %v3299, 1.0614054
      %v3328 = vadd.f32 %v3300, -1.4531521
      %v3329 = vadd.f32 %v3301, -1.4531521
      %v3330 = vadd.f32 %v3302, -1.4531521
      %v3331 = vadd.f32 %v3303, -1.4531521
      %v3332 = vadd.f32 %v3304, -1.4531521
      %v3333 = vadd.f32 %v3305, -1.4531521
      %v3334 = vadd.f32 %v3306, -1.4531521
      %v3335 = vadd.f32 %v3307, -1.4531521
      %v3336 = vadd.f32 %v3308, -1.4531521
      %v3337 = vadd.f32 %v3309, -1.4531521
      %v3338 = vadd.f32 %v3310, -1.4531521
      %v3339 = vadd.f32 %v3311, -1.4531521
      %v3340 = vadd.f32 %v3312, -1.4531521
      %v3341 = vadd.f32 %v3313, -1.4531521
      %v3342 = vadd.f32 %v3314, -1.4531521
      %v3343 = vadd.f32 %v3315, -1.4531521
      %v3344 = vadd.f32 %v3316, -1.4531521
      %v3345 = vadd.f32 %v3317, -1.4531521
      %v3346 = vadd.f32 %v3318, -1.4531521
      %v3347 = vadd.f32 %v3319, -1.4531521
      %v3348 = vadd.f32 %v3320, -1.4531521
      %v3349 = vadd.f32 %v3321, -1.4531521
      %v3350 = vadd.f32 %v3322, -1.4531521
      %v3351 = vadd.f32 %v3323, -1.4531521
      %v3352 = vadd.f32 %v3324, -1.4531521
      %v3353 = vadd.f32 %v3325, -1.4531521
      %v3354 = vadd.f32 %v3326, -1.4531521
      %v3355 = vadd.f32 %v3327, -1.4531521
      %v3356 = vmul.f32 %v3328, %v3272
      %v3357 = vmul.f32 %v3329, %v3273
      %v3358 = vmul.f32 %v3330, %v3274
      %v3359 = vmul.f32 %v3331, %v3275
      %v3360 = vmul.f32 %v3332, %v3276
      %v3361 = vmul.f32 %v3333, %v3277
      %v3362 = vmul.f32 %v3334, %v3278
      %v3363 = vmul.f32 %v3335, %v3279
      %v3364 = vmul.f32 %v3336, %v3280
      %v3365 = vmul.f32 %v3337, %v3281
      %v3366 = vmul.f32 %v3338, %v3282
      %v3367 = vmul.f32 %v3339, %v3283
      %v3368 = vmul.f32 %v3340, %v3284
      %v3369 = vmul.f32 %v3341, %v3285
      %v3370 = vmul.f32 %v3342, %v3286
      %v3371 = vmul.f32 %v3343, %v3287
      %v3372 = vmul.f32 %v3344, %v3288
      %v3373 = vmul.f32 %v3345, %v3289
      %v3374 = vmul.f32 %v3346, %v3290
      %v3375 = vmul.f32 %v3347, %v3291
      %v3376 = vmul.f32 %v3348, %v3292
      %v3377 = vmul.f32 %v3349, %v3293
      %v3378 = vmul.f32 %v3350, %v3294
      %v3379 = vmul.f32 %v3351, %v3295
      %v3380 = vmul.f32 %v3352, %v3296
      %v3381 = vmul.f32 %v3353, %v3297
      %v3382 = vmul.f32 %v3354, %v3298
      %v3383 = vmul.f32 %v3355, %v3299
      %v3384 = vadd.f32 %v3356, 1.4214138
      %v3385 = vadd.f32 %v3357, 1.4214138
      %v3386 = vadd.f32 %v3358, 1.4214138
      %v3387 = vadd.f32 %v3359, 1.4214138
      %v3388 = vadd.f32 %v3360, 1.4214138
      %v3389 = vadd.f32 %v3361, 1.4214138
      %v3390 = vadd.f32 %v3362, 1.4214138
      %v3391 = vadd.f32 %v3363, 1.4214138
      %v3392 = vadd.f32 %v3364, 1.4214138
      %v3393 = vadd.f32 %v3365, 1.4214138
      %v3394 = vadd.f32 %v3366, 1.4214138
      %v3395 = vadd.f32 %v3367, 1.4214138
      %v3396 = vadd.f32 %v3368, 1.4214138
      %v3397 = vadd.f32 %v3369, 1.4214138
      %v3398 = vadd.f32 %v3370, 1.4214138
      %v3399 = vadd.f32 %v3371, 1.4214138
      %v3400 = vadd.f32 %v3372, 1.4214138
      %v3401 = vadd.f32 %v3373, 1.4214138
      %v3402 = vadd.f32 %v3374, 1.4214138
      %v3403 = vadd.f32 %v3375, 1.4214138
      %v3404 = vadd.f32 %v3376, 1.4214138
      %v3405 = vadd.f32 %v3377, 1.4214138
      %v3406 = vadd.f32 %v3378, 1.4214138
      %v3407 = vadd.f32 %v3379, 1.4214138
      %v3408 = vadd.f32 %v3380, 1.4214138
      %v3409 = vadd.f32 %v3381, 1.4214138
      %v3410 = vadd.f32 %v3382, 1.4214138
      %v3411 = vadd.f32 %v3383, 1.4214138
      %v3412 = vmul.f32 %v3384, %v3272
      %v3413 = vmul.f32 %v3385, %v3273
      %v3414 = vmul.f32 %v3386, %v3274
      %v3415 = vmul.f32 %v3387, %v3275
      %v3416 = vmul.f32 %v3388, %v3276
      %v3417 = vmul.f32 %v3389, %v3277
      %v3418 = vmul.f32 %v3390, %v3278
      %v3419 = vmul.f32 %v3391, %v3279
      %v3420 = vmul.f32 %v3392, %v3280
      %v3421 = vmul.f32 %v3393, %v3281
      %v3422 = vmul.f32 %v3394, %v3282
      %v3423 = vmul.f32 %v3395, %v3283
      %v3424 = vmul.f32 %v3396, %v3284
      %v3425 = vmul.f32 %v3397, %v3285
      %v3426 = vmul.f32 %v3398, %v3286
      %v3427 = vmul.f32 %v3399, %v3287
      %v3428 = vmul.f32 %v3400, %v3288
      %v3429 = vmul.f32 %v3401, %v3289
      %v3430 = vmul.f32 %v3402, %v3290
      %v3431 = vmul.f32 %v3403, %v3291
      %v3432 = vmul.f32 %v3404, %v3292
      %v3433 = vmul.f32 %v3405, %v3293
      %v3434 = vmul.f32 %v3406, %v3294
      %v3435 = vmul.f32 %v3407, %v3295
      %v3436 = vmul.f32 %v3408, %v3296
      %v3437 = vmul.f32 %v3409, %v3297
      %v3438 = vmul.f32 %v3410, %v3298
      %v3439 = vmul.f32 %v3411, %v3299
      %v3440 = vadd.f32 %v3412, -0.28449672
      %v3441 = vadd.f32 %v3413, -0.28449672
      %v3442 = vadd.f32 %v3414, -0.28449672
      %v3443 = vadd.f32 %v3415, -0.28449672
      %v3444 = vadd.f32 %v3416, -0.28449672
      %v3445 = vadd.f32 %v3417, -0.28449672
      %v3446 = vadd.f32 %v3418, -0.28449672
      %v3447 = vadd.f32 %v3419, -0.28449672
      %v3448 = vadd.f32 %v3420, -0.28449672
      %v3449 = vadd.f32 %v3421, -0.28449672
      %v3450 = vadd.f32 %v3422, -0.28449672
      %v3451 = vadd.f32 %v3423, -0.28449672
      %v3452 = vadd.f32 %v3424, -0.28449672
      %v3453 = vadd.f32 %v3425, -0.28449672
      %v3454 = vadd.f32 %v3426, -0.28449672
      %v3455 = vadd.f32 %v3427, -0.28449672
      %v3456 = vadd.f32 %v3428, -0.28449672
      %v3457 = vadd.f32 %v3429, -0.28449672
      %v3458 = vadd.f32 %v3430, -0.28449672
      %v3459 = vadd.f32 %v3431, -0.28449672
      %v3460 = vadd.f32 %v3432, -0.28449672
      %v3461 = vadd.f32 %v3433, -0.28449672
      %v3462 = vadd.f32 %v3434, -0.28449672
      %v3463 = vadd.f32 %v3435, -0.28449672
      %v3464 = vadd.f32 %v3436, -0.28449672
      %v3465 = vadd.f32 %v3437, -0.28449672
      %v3466 = vadd.f32 %v3438, -0.28449672
      %v3467 = vadd.f32 %v3439, -0.28449672
      %v3468 = vmul.f32 %v3440, %v3272
      %v3469 = vmul.f32 %v3441, %v3273
      %v3470 = vmul.f32 %v3442, %v3274
      %v3471 = vmul.f32 %v3443, %v3275
      %v3472 = vmul.f32 %v3444, %v3276
      %v3473 = vmul.f32 %v3445, %v3277
      %v3474 = vmul.f32 %v3446, %v3278
      %v3475 = vmul.f32 %v3447, %v3279
      %v3476 = vmul.f32 %v3448, %v3280
      %v3477 = vmul.f32 %v3449, %v3281
      %v3478 = vmul.f32 %v3450, %v3282
      %v3479 = vmul.f32 %v3451, %v3283
      %v3480 = vmul.f32 %v3452, %v3284
      %v3481 = vmul.f32 %v3453, %v3285
      %v3482 = vmul.f32 %v3454, %v3286
      %v3483 = vmul.f32 %v3455, %v3287
      %v3484 = vmul.f32 %v3456, %v3288
      %v3485 = vmul.f32 %v3457, %v3289
      %v3486 = vmul.f32 %v3458, %v3290
      %v3487 = vmul.f32 %v3459, %v3291
      %v3488 = vmul.f32 %v3460, %v3292
      %v3489 = vmul.f32 %v3461, %v3293
      %v3490 = vmul.f32 %v3462, %v3294
      %v3491 = vmul.f32 %v3463, %v3295
      %v3492 = vmul.f32 %v3464, %v3296
      %v3493 = vmul.f32 %v3465, %v3297
      %v3494 = vmul.f32 %v3466, %v3298
      %v3495 = vmul.f32 %v3467, %v3299
      %v3496 = vadd.f32 %v3468, 0.2548296
      %v3497 = vadd.f32 %v3469, 0.2548296
      %v3498 = vadd.f32 %v3470, 0.2548296
      %v3499 = vadd.f32 %v3471, 0.2548296
      %v3500 = vadd.f32 %v3472, 0.2548296
      %v3501 = vadd.f32 %v3473, 0.2548296
      %v3502 = vadd.f32 %v3474, 0.2548296
      %v3503 = vadd.f32 %v3475, 0.2548296
      %v3504 = vadd.f32 %v3476, 0.2548296
      %v3505 = vadd.f32 %v3477, 0.2548296
      %v3506 = vadd.f32 %v3478, 0.2548296
      %v3507 = vadd.f32 %v3479, 0.2548296
      %v3508 = vadd.f32 %v3480, 0.2548296
      %v3509 = vadd.f32 %v3481, 0.2548296
      %v3510 = vadd.f32 %v3482, 0.2548296
      %v3511 = vadd.f32 %v3483, 0.2548296
      %v3512 = vadd.f32 %v3484, 0.2548296
      %v3513 = vadd.f32 %v3485, 0.2548296
      %v3514 = vadd.f32 %v3486, 0.2548296
      %v3515 = vadd.f32 %v3487, 0.2548296
      %v3516 = vadd.f32 %v3488, 0.2548296
      %v3517 = vadd.f32 %v3489, 0.2548296
      %v3518 = vadd.f32 %v3490, 0.2548296
      %v3519 = vadd.f32 %v3491, 0.2548296
      %v3520 = vadd.f32 %v3492, 0.2548296
      %v3521 = vadd.f32 %v3493, 0.2548296
      %v3522 = vadd.f32 %v3494, 0.2548296
      %v3523 = vadd.f32 %v3495, 0.2548296
      %v3524 = vmul.f32 %v3496, %v3272
      %v3525 = vmul.f32 %v3497, %v3273
      %v3526 = vmul.f32 %v3498, %v3274
      %v3527 = vmul.f32 %v3499, %v3275
      %v3528 = vmul.f32 %v3500, %v3276
      %v3529 = vmul.f32 %v3501, %v3277
      %v3530 = vmul.f32 %v3502, %v3278
      %v3531 = vmul.f32 %v3503, %v3279
      %v3532 = vmul.f32 %v3504, %v3280
      %v3533 = vmul.f32 %v3505, %v3281
      %v3534 = vmul.f32 %v3506, %v3282
      %v3535 = vmul.f32 %v3507, %v3283
      %v3536 = vmul.f32 %v3508, %v3284
      %v3537 = vmul.f32 %v3509, %v3285
      %v3538 = vmul.f32 %v3510, %v3286
      %v3539 = vmul.f32 %v3511, %v3287
      %v3540 = vmul.f32 %v3512, %v3288
      %v3541 = vmul.f32 %v3513, %v3289
      %v3542 = vmul.f32 %v3514, %v3290
      %v3543 = vmul.f32 %v3515, %v3291
      %v3544 = vmul.f32 %v3516, %v3292
      %v3545 = vmul.f32 %v3517, %v3293
      %v3546 = vmul.f32 %v3518, %v3294
      %v3547 = vmul.f32 %v3519, %v3295
      %v3548 = vmul.f32 %v3520, %v3296
      %v3549 = vmul.f32 %v3521, %v3297
      %v3550 = vmul.f32 %v3522, %v3298
      %v3551 = vmul.f32 %v3523, %v3299
      %v3552 = vsub.f32 0.0, %v3188
      %v3553 = vsub.f32 0.0, %v3189
      %v3554 = vsub.f32 0.0, %v3190
      %v3555 = vsub.f32 0.0, %v3191
      %v3556 = vsub.f32 0.0, %v3192
      %v3557 = vsub.f32 0.0, %v3193
      %v3558 = vsub.f32 0.0, %v3194
      %v3559 = vsub.f32 0.0, %v3195
      %v3560 = vsub.f32 0.0, %v3196
      %v3561 = vsub.f32 0.0, %v3197
      %v3562 = vsub.f32 0.0, %v3198
      %v3563 = vsub.f32 0.0, %v3199
      %v3564 = vsub.f32 0.0, %v3200
      %v3565 = vsub.f32 0.0, %v3201
      %v3566 = vsub.f32 0.0, %v3202
      %v3567 = vsub.f32 0.0, %v3203
      %v3568 = vsub.f32 0.0, %v3204
      %v3569 = vsub.f32 0.0, %v3205
      %v3570 = vsub.f32 0.0, %v3206
      %v3571 = vsub.f32 0.0, %v3207
      %v3572 = vsub.f32 0.0, %v3208
      %v3573 = vsub.f32 0.0, %v3209
      %v3574 = vsub.f32 0.0, %v3210
      %v3575 = vsub.f32 0.0, %v3211
      %v3576 = vsub.f32 0.0, %v3212
      %v3577 = vsub.f32 0.0, %v3213
      %v3578 = vsub.f32 0.0, %v3214
      %v3579 = vsub.f32 0.0, %v3215
      %v3580 = vmul.f32 %v3552, %v3188
      %v3581 = vmul.f32 %v3553, %v3189
      %v3582 = vmul.f32 %v3554, %v3190
      %v3583 = vmul.f32 %v3555, %v3191
      %v3584 = vmul.f32 %v3556, %v3192
      %v3585 = vmul.f32 %v3557, %v3193
      %v3586 = vmul.f32 %v3558, %v3194
      %v3587 = vmul.f32 %v3559, %v3195
      %v3588 = vmul.f32 %v3560, %v3196
      %v3589 = vmul.f32 %v3561, %v3197
      %v3590 = vmul.f32 %v3562, %v3198
      %v3591 = vmul.f32 %v3563, %v3199
      %v3592 = vmul.f32 %v3564, %v3200
      %v3593 = vmul.f32 %v3565, %v3201
      %v3594 = vmul.f32 %v3566, %v3202
      %v3595 = vmul.f32 %v3567, %v3203
      %v3596 = vmul.f32 %v3568, %v3204
      %v3597 = vmul.f32 %v3569, %v3205
      %v3598 = vmul.f32 %v3570, %v3206
      %v3599 = vmul.f32 %v3571, %v3207
      %v3600 = vmul.f32 %v3572, %v3208
      %v3601 = vmul.f32 %v3573, %v3209
      %v3602 = vmul.f32 %v3574, %v3210
      %v3603 = vmul.f32 %v3575, %v3211
      %v3604 = vmul.f32 %v3576, %v3212
      %v3605 = vmul.f32 %v3577, %v3213
      %v3606 = vmul.f32 %v3578, %v3214
      %v3607 = vmul.f32 %v3579, %v3215
      %v3608 = vmul.f32 %v3580, 1.442695
      %v3609 = vpow.pop %v3608
      %v3610 = vmul.f32 %v3581, 1.442695
      %v3611 = vpow.pop %v3610
      %v3612 = vmul.f32 %v3582, 1.442695
      %v3613 = vpow.pop %v3612
      %v3614 = vmul.f32 %v3583, 1.442695
      %v3615 = vpow.pop %v3614
      %v3616 = vmul.f32 %v3584, 1.442695
      %v3617 = vpow.pop %v3616
      %v3618 = vmul.f32 %v3585, 1.442695
      %v3619 = vpow.pop %v3618
      %v3620 = vmul.f32 %v3586, 1.442695
      %v3621 = vpow.pop %v3620
      %v3622 = vmul.f32 %v3587, 1.442695
      %v3623 = vpow.pop %v3622
      %v3624 = vmul.f32 %v3588, 1.442695
      %v3625 = vpow.pop %v3624
      %v3626 = vmul.f32 %v3589, 1.442695
      %v3627 = vpow.pop %v3626
      %v3628 = vmul.f32 %v3590, 1.442695
      %v3629 = vpow.pop %v3628
      %v3630 = vmul.f32 %v3591, 1.442695
      %v3631 = vpow.pop %v3630
      %v3632 = vmul.f32 %v3592, 1.442695
      %v3633 = vpow.pop %v3632
      %v3634 = vmul.f32 %v3593, 1.442695
      %v3635 = vpow.pop %v3634
      %v3636 = vmul.f32 %v3594, 1.442695
      %v3637 = vpow.pop %v3636
      %v3638 = vmul.f32 %v3595, 1.442695
      %v3639 = vpow.pop %v3638
      %v3640 = vmul.f32 %v3596, 1.442695
      %v3641 = vpow.pop %v3640
      %v3642 = vmul.f32 %v3597, 1.442695
      %v3643 = vpow.pop %v3642
      %v3644 = vmul.f32 %v3598, 1.442695
      %v3645 = vpow.pop %v3644
      %v3646 = vmul.f32 %v3599, 1.442695
      %v3647 = vpow.pop %v3646
      %v3648 = vmul.f32 %v3600, 1.442695
      %v3649 = vpow.pop %v3648
      %v3650 = vmul.f32 %v3601, 1.442695
      %v3651 = vpow.pop %v3650
      %v3652 = vmul.f32 %v3602, 1.442695
      %v3653 = vpow.pop %v3652
      %v3654 = vmul.f32 %v3603, 1.442695
      %v3655 = vpow.pop %v3654
      %v3656 = vmul.f32 %v3604, 1.442695
      %v3657 = vpow.pop %v3656
      %v3658 = vmul.f32 %v3605, 1.442695
      %v3659 = vpow.pop %v3658
      %v3660 = vmul.f32 %v3606, 1.442695
      %v3661 = vpow.pop %v3660
      %v3662 = vmul.f32 %v3607, 1.442695
      %v3663 = vpow.pop %v3662
      %v3664 = vmul.f32 %v3524, %v3609
      %v3665 = vmul.f32 %v3525, %v3611
      %v3666 = vmul.f32 %v3526, %v3613
      %v3667 = vmul.f32 %v3527, %v3615
      %v3668 = vmul.f32 %v3528, %v3617
      %v3669 = vmul.f32 %v3529, %v3619
      %v3670 = vmul.f32 %v3530, %v3621
      %v3671 = vmul.f32 %v3531, %v3623
      %v3672 = vmul.f32 %v3532, %v3625
      %v3673 = vmul.f32 %v3533, %v3627
      %v3674 = vmul.f32 %v3534, %v3629
      %v3675 = vmul.f32 %v3535, %v3631
      %v3676 = vmul.f32 %v3536, %v3633
      %v3677 = vmul.f32 %v3537, %v3635
      %v3678 = vmul.f32 %v3538, %v3637
      %v3679 = vmul.f32 %v3539, %v3639
      %v3680 = vmul.f32 %v3540, %v3641
      %v3681 = vmul.f32 %v3541, %v3643
      %v3682 = vmul.f32 %v3542, %v3645
      %v3683 = vmul.f32 %v3543, %v3647
      %v3684 = vmul.f32 %v3544, %v3649
      %v3685 = vmul.f32 %v3545, %v3651
      %v3686 = vmul.f32 %v3546, %v3653
      %v3687 = vmul.f32 %v3547, %v3655
      %v3688 = vmul.f32 %v3548, %v3657
      %v3689 = vmul.f32 %v3549, %v3659
      %v3690 = vmul.f32 %v3550, %v3661
      %v3691 = vmul.f32 %v3551, %v3663
      %v3692 = vsub.f32 1.0, %v3664
      %v3693 = vsub.f32 1.0, %v3665
      %v3694 = vsub.f32 1.0, %v3666
      %v3695 = vsub.f32 1.0, %v3667
      %v3696 = vsub.f32 1.0, %v3668
      %v3697 = vsub.f32 1.0, %v3669
      %v3698 = vsub.f32 1.0, %v3670
      %v3699 = vsub.f32 1.0, %v3671
      %v3700 = vsub.f32 1.0, %v3672
      %v3701 = vsub.f32 1.0, %v3673
      %v3702 = vsub.f32 1.0, %v3674
      %v3703 = vsub.f32 1.0, %v3675
      %v3704 = vsub.f32 1.0, %v3676
      %v3705 = vsub.f32 1.0, %v3677
      %v3706 = vsub.f32 1.0, %v3678
      %v3707 = vsub.f32 1.0, %v3679
      %v3708 = vsub.f32 1.0, %v3680
      %v3709 = vsub.f32 1.0, %v3681
      %v3710 = vsub.f32 1.0, %v3682
      %v3711 = vsub.f32 1.0, %v3683
      %v3712 = vsub.f32 1.0, %v3684
      %v3713 = vsub.f32 1.0, %v3685
      %v3714 = vsub.f32 1.0, %v3686
      %v3715 = vsub.f32 1.0, %v3687
      %v3716 = vsub.f32 1.0, %v3688
      %v3717 = vsub.f32 1.0, %v3689
      %v3718 = vsub.f32 1.0, %v3690
      %v3719 = vsub.f32 1.0, %v3691
      %vm3720 = vcmp.ge.f32.partialorder %v3160, 0.0
      %vm3721 = vcmp.ge.f32.partialorder %v3161, 0.0
      %vm3722 = vcmp.ge.f32.partialorder %v3162, 0.0
      %vm3723 = vcmp.ge.f32.partialorder %v3163, 0.0
      %vm3724 = vcmp.ge.f32.partialorder %v3164, 0.0
      %vm3725 = vcmp.ge.f32.partialorder %v3165, 0.0
      %vm3726 = vcmp.ge.f32.partialorder %v3166, 0.0
      %vm3727 = vcmp.ge.f32.partialorder %v3167, 0.0
      %vm3728 = vcmp.ge.f32.partialorder %v3168, 0.0
      %vm3729 = vcmp.ge.f32.partialorder %v3169, 0.0
      %vm3730 = vcmp.ge.f32.partialorder %v3170, 0.0
      %vm3731 = vcmp.ge.f32.partialorder %v3171, 0.0
      %vm3732 = vcmp.ge.f32.partialorder %v3172, 0.0
      %vm3733 = vcmp.ge.f32.partialorder %v3173, 0.0
      %vm3734 = vcmp.ge.f32.partialorder %v3174, 0.0
      %vm3735 = vcmp.ge.f32.partialorder %v3175, 0.0
      %vm3736 = vcmp.ge.f32.partialorder %v3176, 0.0
      %vm3737 = vcmp.ge.f32.partialorder %v3177, 0.0
      %vm3738 = vcmp.ge.f32.partialorder %v3178, 0.0
      %vm3739 = vcmp.ge.f32.partialorder %v3179, 0.0
      %vm3740 = vcmp.ge.f32.partialorder %v3180, 0.0
      %vm3741 = vcmp.ge.f32.partialorder %v3181, 0.0
      %vm3742 = vcmp.ge.f32.partialorder %v3182, 0.0
      %vm3743 = vcmp.ge.f32.partialorder %v3183, 0.0
      %vm3744 = vcmp.ge.f32.partialorder %v3184, 0.0
      %vm3745 = vcmp.ge.f32.partialorder %v3185, 0.0
      %vm3746 = vcmp.ge.f32.partialorder %v3186, 0.0
      %vm3747 = vcmp.ge.f32.partialorder %v3187, 0.0
      %v3748 = vsub.f32 0.0, %v3692
      %v3749 = vsub.f32 0.0, %v3693
      %v3750 = vsub.f32 0.0, %v3694
      %v3751 = vsub.f32 0.0, %v3695
      %v3752 = vsub.f32 0.0, %v3696
      %v3753 = vsub.f32 0.0, %v3697
      %v3754 = vsub.f32 0.0, %v3698
      %v3755 = vsub.f32 0.0, %v3699
      %v3756 = vsub.f32 0.0, %v3700
      %v3757 = vsub.f32 0.0, %v3701
      %v3758 = vsub.f32 0.0, %v3702
      %v3759 = vsub.f32 0.0, %v3703
      %v3760 = vsub.f32 0.0, %v3704
      %v3761 = vsub.f32 0.0, %v3705
      %v3762 = vsub.f32 0.0, %v3706
      %v3763 = vsub.f32 0.0, %v3707
      %v3764 = vsub.f32 0.0, %v3708
      %v3765 = vsub.f32 0.0, %v3709
      %v3766 = vsub.f32 0.0, %v3710
      %v3767 = vsub.f32 0.0, %v3711
      %v3768 = vsub.f32 0.0, %v3712
      %v3769 = vsub.f32 0.0, %v3713
      %v3770 = vsub.f32 0.0, %v3714
      %v3771 = vsub.f32 0.0, %v3715
      %v3772 = vsub.f32 0.0, %v3716
      %v3773 = vsub.f32 0.0, %v3717
      %v3774 = vsub.f32 0.0, %v3718
      %v3775 = vsub.f32 0.0, %v3719
      %v3776 = vsel %vm3720, %v3692, %v3748
      %v3777 = vsel %vm3721, %v3693, %v3749
      %v3778 = vsel %vm3722, %v3694, %v3750
      %v3779 = vsel %vm3723, %v3695, %v3751
      %v3780 = vsel %vm3724, %v3696, %v3752
      %v3781 = vsel %vm3725, %v3697, %v3753
      %v3782 = vsel %vm3726, %v3698, %v3754
      %v3783 = vsel %vm3727, %v3699, %v3755
      %v3784 = vsel %vm3728, %v3700, %v3756
      %v3785 = vsel %vm3729, %v3701, %v3757
      %v3786 = vsel %vm3730, %v3702, %v3758
      %v3787 = vsel %vm3731, %v3703, %v3759
      %v3788 = vsel %vm3732, %v3704, %v3760
      %v3789 = vsel %vm3733, %v3705, %v3761
      %v3790 = vsel %vm3734, %v3706, %v3762
      %v3791 = vsel %vm3735, %v3707, %v3763
      %v3792 = vsel %vm3736, %v3708, %v3764
      %v3793 = vsel %vm3737, %v3709, %v3765
      %v3794 = vsel %vm3738, %v3710, %v3766
      %v3795 = vsel %vm3739, %v3711, %v3767
      %v3796 = vsel %vm3740, %v3712, %v3768
      %v3797 = vsel %vm3741, %v3713, %v3769
      %v3798 = vsel %vm3742, %v3714, %v3770
      %v3799 = vsel %vm3743, %v3715, %v3771
      %v3800 = vsel %vm3744, %v3716, %v3772
      %v3801 = vsel %vm3745, %v3717, %v3773
      %v3802 = vsel %vm3746, %v3718, %v3774
      %v3803 = vsel %vm3747, %v3719, %v3775
      %v3804 = vmul.f32 %v3053, 0.5
      %v3805 = vmul.f32 %v3055, 0.5
      %v3806 = vmul.f32 %v3124, 0.5
      %v3807 = vmul.f32 %v3126, 0.5
      %v3808 = vmul.f32 %v3057, 0.5
      %v3809 = vmul.f32 %v3059, 0.5
      %v3810 = vmul.f32 %v3128, 0.5
      %v3811 = vmul.f32 %v3130, 0.5
      %v3812 = vmul.f32 %v3063, 0.5
      %v3813 = vmul.f32 %v3065, 0.5
      %v3814 = vmul.f32 %v3134, 0.5
      %v3815 = vmul.f32 %v3136, 0.5
      %v3816 = vmul.f32 %v3067, 0.5
      %v3817 = vmul.f32 %v3069, 0.5
      %v3818 = vmul.f32 %v3138, 0.5
      %v3819 = vmul.f32 %v3140, 0.5
      %v3820 = vmul.f32 %v3073, 0.5
      %v3821 = vmul.f32 %v3075, 0.5
      %v3822 = vmul.f32 %v3144, 0.5
      %v3823 = vmul.f32 %v3146, 0.5
      %v3824 = vmul.f32 %v3077, 0.5
      %v3825 = vmul.f32 %v3079, 0.5
      %v3826 = vmul.f32 %v3148, 0.5
      %v3827 = vmul.f32 %v3150, 0.5
      %v3828 = vmul.f32 %v3083, 0.5
      %v3829 = vmul.f32 %v3085, 0.5
      %v3830 = vmul.f32 %v3154, 0.5
      %v3831 = vmul.f32 %v3156, 0.5
      %v3832 = vadd.f32 %v3776, 1.0
      %v3833 = vadd.f32 %v3777, 1.0
      %v3834 = vadd.f32 %v3778, 1.0
      %v3835 = vadd.f32 %v3779, 1.0
      %v3836 = vadd.f32 %v3780, 1.0
      %v3837 = vadd.f32 %v3781, 1.0
      %v3838 = vadd.f32 %v3782, 1.0
      %v3839 = vadd.f32 %v3783, 1.0
      %v3840 = vadd.f32 %v3784, 1.0
      %v3841 = vadd.f32 %v3785, 1.0
      %v3842 = vadd.f32 %v3786, 1.0
      %v3843 = vadd.f32 %v3787, 1.0
      %v3844 = vadd.f32 %v3788, 1.0
      %v3845 = vadd.f32 %v3789, 1.0
      %v3846 = vadd.f32 %v3790, 1.0
      %v3847 = vadd.f32 %v3791, 1.0
      %v3848 = vadd.f32 %v3792, 1.0
      %v3849 = vadd.f32 %v3793, 1.0
      %v3850 = vadd.f32 %v3794, 1.0
      %v3851 = vadd.f32 %v3795, 1.0
      %v3852 = vadd.f32 %v3796, 1.0
      %v3853 = vadd.f32 %v3797, 1.0
      %v3854 = vadd.f32 %v3798, 1.0
      %v3855 = vadd.f32 %v3799, 1.0
      %v3856 = vadd.f32 %v3800, 1.0
      %v3857 = vadd.f32 %v3801, 1.0
      %v3858 = vadd.f32 %v3802, 1.0
      %v3859 = vadd.f32 %v3803, 1.0
      %v3860 = vmul.f32 %v3804, %v3832
      %v3861 = vmul.f32 %v3805, %v3833
      %v3862 = vmul.f32 %v3806, %v3834
      %v3863 = vmul.f32 %v3807, %v3835
      %v3864 = vmul.f32 %v3808, %v3836
      %v3865 = vmul.f32 %v3809, %v3837
      %v3866 = vmul.f32 %v3810, %v3838
      %v3867 = vmul.f32 %v3811, %v3839
      %v3868 = vmul.f32 %v3812, %v3840
      %v3869 = vmul.f32 %v3813, %v3841
      %v3870 = vmul.f32 %v3814, %v3842
      %v3871 = vmul.f32 %v3815, %v3843
      %v3872 = vmul.f32 %v3816, %v3844
      %v3873 = vmul.f32 %v3817, %v3845
      %v3874 = vmul.f32 %v3818, %v3846
      %v3875 = vmul.f32 %v3819, %v3847
      %v3876 = vmul.f32 %v3820, %v3848
      %v3877 = vmul.f32 %v3821, %v3849
      %v3878 = vmul.f32 %v3822, %v3850
      %v3879 = vmul.f32 %v3823, %v3851
      %v3880 = vmul.f32 %v3824, %v3852
      %v3881 = vmul.f32 %v3825, %v3853
      %v3882 = vmul.f32 %v3826, %v3854
      %v3883 = vmul.f32 %v3827, %v3855
      %v3884 = vmul.f32 %v3828, %v3856
      %v3885 = vmul.f32 %v3829, %v3857
      %v3886 = vmul.f32 %v3830, %v3858
      %v3887 = vmul.f32 %v3831, %v3859
      %v3888 = vpack.c.bf16 %v3864, %v3860
      %v3889 = vpack.c.bf16 %v3865, %v3861
      %v3890 = vpack.c.bf16 %v3866, %v3862
      %v3891 = vpack.c.bf16 %v3867, %v3863
      %v3892 = vpack.c.bf16 %v3872, %v3868
      %v3893 = vpack.c.bf16 %v3873, %v3869
      %v3894 = vpack.c.bf16 %v3874, %v3870
      %v3895 = vpack.c.bf16 %v3875, %v3871
      %v3896 = vpack.c.bf16 %v3880, %v3876
      %v3897 = vpack.c.bf16 %v3881, %v3877
      %v3898 = vpack.c.bf16 %v3882, %v3878
      %v3899 = vpack.c.bf16 %v3883, %v3879
      %v3900 = vpack.c.bf16 %v3884, %v3884
      %v3901 = vpack.c.bf16 %v3885, %v3885
      %v3902 = vpack.c.bf16 %v3886, %v3886
      %v3903 = vpack.c.bf16 %v3887, %v3887
      %v3905 = vlaneseq
      %v3906 = vshrl.u32 %v3905, 7
      %v3907 = vsub.s32 0, %v3906
      %v3908 = vrot.slane %v930, %v3907
      %v3974 = vunpack.c.l.b16 %v866
      %v3975 = vunpack.c.l.b16 %v867
      %v3976 = vunpack.c.l.b16 %v868
      %v3977 = vunpack.c.l.b16 %v869
      %v3978 = vunpack.c.l.b16 %v870
      %v3979 = vunpack.c.l.b16 %v871
      %v3980 = vunpack.c.l.b16 %v872
      %v3981 = vunpack.c.l.b16 %v873
      %v3982 = vunpack.c.l.b16 %v874
      %v3983 = vunpack.c.l.b16 %v875
      %v3984 = vunpack.c.l.b16 %v876
      %v3985 = vunpack.c.l.b16 %v877
      %v3986 = vunpack.c.l.b16 %v878
      %v3987 = vunpack.c.l.b16 %v879
      %v3988 = vunpack.c.l.b16 %v880
      %v3989 = vunpack.c.l.b16 %v881
      %v3990 = vunpack.c.l.b16 %v882
      %v3991 = vunpack.c.l.b16 %v883
      %v3992 = vunpack.c.l.b16 %v884
      %v3993 = vunpack.c.l.b16 %v885
      %v3994 = vunpack.c.l.b16 %v886
      %v3995 = vunpack.c.l.b16 %v887
      %v3996 = vunpack.c.l.b16 %v888
      %v3997 = vunpack.c.l.b16 %v889
      %v3998 = vunpack.c.l.b16 %v890
      %v3999 = vunpack.c.l.b16 %v891
      %v4000 = vunpack.c.l.b16 %v892
      %v4001 = vunpack.c.l.b16 %v893
      %v4002 = vunpack.c.l.b16 %v894
      %v4003 = vunpack.c.l.b16 %v895
      %v4004 = vunpack.c.l.b16 %v896
      %v4005 = vunpack.c.l.b16 %v897
      %v4006 = vunpack.c.l.b16 %v898
      %v4007 = vunpack.c.l.b16 %v899
      %v4008 = vunpack.c.l.b16 %v900
      %v4009 = vunpack.c.l.b16 %v901
      %v4010 = vunpack.c.l.b16 %v902
      %v4011 = vunpack.c.l.b16 %v903
      %v4012 = vunpack.c.l.b16 %v904
      %v4013 = vunpack.c.l.b16 %v905
      %v4014 = vunpack.c.l.b16 %v906
      %v4015 = vunpack.c.l.b16 %v907
      %v4016 = vunpack.c.l.b16 %v908
      %v4017 = vunpack.c.l.b16 %v909
      %v4018 = vunpack.c.l.b16 %v910
      %v4019 = vunpack.c.l.b16 %v911
      %v4020 = vunpack.c.l.b16 %v912
      %v4021 = vunpack.c.l.b16 %v913
      %v4022 = vunpack.c.l.b16 %v914
      %v4023 = vunpack.c.l.b16 %v915
      %v4024 = vunpack.c.l.b16 %v916
      %v4025 = vunpack.c.l.b16 %v917
      %v4026 = vunpack.c.l.b16 %v918
      %v4027 = vunpack.c.l.b16 %v919
      %v4028 = vunpack.c.l.b16 %v920
      %v4029 = vunpack.c.l.b16 %v921
      %v4030 = vunpack.c.l.b16 %v922
      %v4031 = vunpack.c.l.b16 %v923
      %v4032 = vunpack.c.l.b16 %v924
      %v4033 = vunpack.c.l.b16 %v925
      %v4034 = vunpack.c.l.b16 %v926
      %v4035 = vunpack.c.l.b16 %v927
      %v4036 = vunpack.c.l.b16 %v928
      %v4037 = vunpack.c.l.b16 %v929
      %v4038 = vpack.c.b16 %v3975, %v3974
      %v4039 = vpack.c.b16 %v3977, %v3976
      %v4040 = vpack.c.b16 %v3979, %v3978
      %v4041 = vpack.c.b16 %v3981, %v3980
      %v4042 = vpack.c.b16 %v3983, %v3982
      %v4043 = vpack.c.b16 %v3985, %v3984
      %v4044 = vpack.c.b16 %v3987, %v3986
      %v4045 = vpack.c.b16 %v3989, %v3988
      %v4046 = vpack.c.b16 %v3991, %v3990
      %v4047 = vpack.c.b16 %v3993, %v3992
      %v4048 = vpack.c.b16 %v3995, %v3994
      %v4049 = vpack.c.b16 %v3997, %v3996
      %v4050 = vpack.c.b16 %v3999, %v3998
      %v4051 = vpack.c.b16 %v4001, %v4000
      %v4052 = vpack.c.b16 %v4003, %v4002
      %v4053 = vpack.c.b16 %v4005, %v4004
      %v4054 = vpack.c.b16 %v4007, %v4006
      %v4055 = vpack.c.b16 %v4009, %v4008
      %v4056 = vpack.c.b16 %v4011, %v4010
      %v4057 = vpack.c.b16 %v4013, %v4012
      %v4058 = vpack.c.b16 %v4015, %v4014
      %v4059 = vpack.c.b16 %v4017, %v4016
      %v4060 = vpack.c.b16 %v4019, %v4018
      %v4061 = vpack.c.b16 %v4021, %v4020
      %v4062 = vpack.c.b16 %v4023, %v4022
      %v4063 = vpack.c.b16 %v4025, %v4024
      %v4064 = vpack.c.b16 %v4027, %v4026
      %v4065 = vpack.c.b16 %v4029, %v4028
      %v4066 = vpack.c.b16 %v4031, %v4030
      %v4067 = vpack.c.b16 %v4033, %v4032
      %v4068 = vpack.c.b16 %v4035, %v4034
      %v4069 = vpack.c.b16 %v4037, %v4036
      %4102 = vmatprep.subr.bf16.mxu0 0
      %4103 = vmatpush1.bf16.msra.mxu0 %v4045
      %4104 = vmatprep.subr.bf16.mxu0 0
      %4105 = vmatpush1.bf16.msra.mxu0 %v4044
      %4106 = vmatprep.subr.bf16.mxu0 0
      %4107 = vmatpush1.bf16.msra.mxu0 %v4043
      %4108 = vmatprep.subr.bf16.mxu0 0
      %4109 = vmatpush1.bf16.msra.mxu0 %v4042
      %4110 = vmatprep.subr.bf16.mxu0 0
      %4111 = vmatpush1.bf16.msra.mxu0 %v4041
      %4112 = vmatprep.subr.bf16.mxu0 0
      %4113 = vmatpush1.bf16.msra.mxu0 %v4040
      %4114 = vmatprep.subr.bf16.mxu0 0
      %4115 = vmatpush1.bf16.msra.mxu0 %v4039
      %4116 = vmatprep.subr.bf16.mxu0 0
      %4117 = vmatpush1.bf16.msra.mxu0 %v4038
      %4118 = vmatprep.subr.bf16.mxu0 0
      %4119 = vmatpush2.bf16.msra.mxu0 %v4053
      %4120 = vmatprep.subr.bf16.mxu0 0
      %4121 = vmatpush2.bf16.msra.mxu0 %v4052
      %4122 = vmatprep.subr.bf16.mxu0 0
      %4123 = vmatpush2.bf16.msra.mxu0 %v4051
      %4124 = vmatprep.subr.bf16.mxu0 0
      %4125 = vmatpush2.bf16.msra.mxu0 %v4050
      %4126 = vmatprep.subr.bf16.mxu0 0
      %4127 = vmatpush2.bf16.msra.mxu0 %v4049
      %4128 = vmatprep.subr.bf16.mxu0 0
      %4129 = vmatpush2.bf16.msra.mxu0 %v4048
      %4130 = vmatprep.subr.bf16.mxu0 0
      %4131 = vmatpush2.bf16.msra.mxu0 %v4047
      %4132 = vmatprep.subr.bf16.mxu0 0
      %4133 = vmatpush2.bf16.msra.mxu0 %v4046
      %4134 = vmatprep.mubr.bf16.mxu0 %v3889
      %4135 = vmatmul.mubr.bf16.gmra.mxu0 %v3888
      %v4136 = vpop.f32.mrf.mxu0
      %v4137 = vadd.f32 %v3908, %v4136
      %v4138 = vpop.f32.mrf.mxu0
      %v4139 = vpop.f32.mrf.mxu0
      %v4140 = vadd.f32 %v3908, %v4139
      %v4141 = vpop.f32.mrf.mxu0
      %4142 = vmatprep.mubr.bf16.mxu0 %v3893
      %4143 = vmatmul.mubr.bf16.gmra.mxu0 %v3892
      %v4144 = vpop.f32.mrf.mxu0
      %v4145 = vadd.f32 %v3908, %v4144
      %v4146 = vpop.f32.mrf.mxu0
      %v4147 = vpop.f32.mrf.mxu0
      %v4148 = vadd.f32 %v3908, %v4147
      %v4149 = vpop.f32.mrf.mxu0
      %4150 = vmatprep.mubr.bf16.mxu0 %v3897
      %4151 = vmatmul.mubr.bf16.gmra.mxu0 %v3896
      %v4152 = vpop.f32.mrf.mxu0
      %v4153 = vadd.f32 %v3908, %v4152
      %v4154 = vpop.f32.mrf.mxu0
      %v4155 = vpop.f32.mrf.mxu0
      %v4156 = vadd.f32 %v3908, %v4155
      %v4157 = vpop.f32.mrf.mxu0
      %4158 = vmatprep.mubr.bf16.mxu0 %v3901
      %4159 = vmatmul.mubr.bf16.gmra.mxu0 %v3900
      %v4160 = vpop.f32.mrf.mxu0
      %v4161 = vadd.f32 %v3908, %v4160
      %v4162 = vpop.f32.mrf.mxu0
      %v4163 = vpop.f32.mrf.mxu0
      %v4164 = vpop.f32.mrf.mxu0
      %4165 = vdwg.mxu0
      %4166 = vmatprep.subr.bf16.mxu0 0
      %4167 = vmatpush1.bf16.msra.mxu0 %v4061
      %4168 = vmatprep.subr.bf16.mxu0 0
      %4169 = vmatpush1.bf16.msra.mxu0 %v4060
      %4170 = vmatprep.subr.bf16.mxu0 0
      %4171 = vmatpush1.bf16.msra.mxu0 %v4059
      %4172 = vmatprep.subr.bf16.mxu0 0
      %4173 = vmatpush1.bf16.msra.mxu0 %v4058
      %4174 = vmatprep.subr.bf16.mxu0 0
      %4175 = vmatpush1.bf16.msra.mxu0 %v4057
      %4176 = vmatprep.subr.bf16.mxu0 0
      %4177 = vmatpush1.bf16.msra.mxu0 %v4056
      %4178 = vmatprep.subr.bf16.mxu0 0
      %4179 = vmatpush1.bf16.msra.mxu0 %v4055
      %4180 = vmatprep.subr.bf16.mxu0 0
      %4181 = vmatpush1.bf16.msra.mxu0 %v4054
      %4182 = vmatprep.subr.bf16.mxu0 0
      %4183 = vmatpush2.bf16.msra.mxu0 %v4069
      %4184 = vmatprep.subr.bf16.mxu0 0
      %4185 = vmatpush2.bf16.msra.mxu0 %v4068
      %4186 = vmatprep.subr.bf16.mxu0 0
      %4187 = vmatpush2.bf16.msra.mxu0 %v4067
      %4188 = vmatprep.subr.bf16.mxu0 0
      %4189 = vmatpush2.bf16.msra.mxu0 %v4066
      %4190 = vmatprep.subr.bf16.mxu0 0
      %4191 = vmatpush2.bf16.msra.mxu0 %v4065
      %4192 = vmatprep.subr.bf16.mxu0 0
      %4193 = vmatpush2.bf16.msra.mxu0 %v4064
      %4194 = vmatprep.subr.bf16.mxu0 0
      %4195 = vmatpush2.bf16.msra.mxu0 %v4063
      %4196 = vmatprep.subr.bf16.mxu0 0
      %4197 = vmatpush2.bf16.msra.mxu0 %v4062
      %4198 = vmatprep.mubr.bf16.mxu0 %v3891
      %4199 = vmatmul.mubr.bf16.gmra.mxu0 %v3890
      %v4200 = vpop.f32.mrf.mxu0
      %v4201 = vadd.f32 %v4137, %v4200
      %v4202 = vpop.f32.mrf.mxu0
      %v4203 = vpop.f32.mrf.mxu0
      %v4204 = vadd.f32 %v4140, %v4203
      %v4205 = vpop.f32.mrf.mxu0
      %4206 = vmatprep.mubr.bf16.mxu0 %v3895
      %4207 = vmatmul.mubr.bf16.gmra.mxu0 %v3894
      %v4208 = vpop.f32.mrf.mxu0
      %v4209 = vadd.f32 %v4145, %v4208
      %v4210 = vpop.f32.mrf.mxu0
      %v4211 = vpop.f32.mrf.mxu0
      %v4212 = vadd.f32 %v4148, %v4211
      %v4213 = vpop.f32.mrf.mxu0
      %4214 = vmatprep.mubr.bf16.mxu0 %v3899
      %4215 = vmatmul.mubr.bf16.gmra.mxu0 %v3898
      %v4216 = vpop.f32.mrf.mxu0
      %v4217 = vadd.f32 %v4153, %v4216
      %v4218 = vpop.f32.mrf.mxu0
      %v4219 = vpop.f32.mrf.mxu0
      %v4220 = vadd.f32 %v4156, %v4219
      %v4221 = vpop.f32.mrf.mxu0
      %4222 = vmatprep.mubr.bf16.mxu0 %v3903
      %4223 = vmatmul.mubr.bf16.gmra.mxu0 %v3902
      %v4224 = vpop.f32.mrf.mxu0
      %v4225 = vadd.f32 %v4161, %v4224
      %v4226 = vpop.f32.mrf.mxu0
      %v4227 = vpop.f32.mrf.mxu0
      %v4228 = vpop.f32.mrf.mxu0
      %4229 = vdwg.mxu0
      %v4230 = vadd.f32 %v2721, %v4201
      %v4231 = vadd.f32 %v2722, %v4204
      %v4232 = vadd.f32 %v2723, %v4209
      %v4233 = vadd.f32 %v2724, %v4212
      %v4234 = vadd.f32 %v2725, %v4217
      %v4235 = vadd.f32 %v2726, %v4220
      %v4236 = vadd.f32 %v2727, %v4225
      %v4237 = vmul.u32 %v549, 9
      %vm4238 = vcmp.eq.s32.totalorder %v4237, %v557
      %v4239 = vsel %vm4238, 1, 0
      %v4240 = vcvt.s32.f32 %v4239
      %v4242 = vsel %vm1443, %v4240, 0
      %v4245 = vsel %vm950, %v4236, 0
      %4247 = vmatprep.subr.mxu0 0.0
      %4248 = vmatpush1.msra.mxu0 0.0
      %4249 = vmatprep.subr.mxu0 0.0
      %4250 = vmatpush1.msra.mxu0 0.0
      %4251 = vmatprep.subr.mxu0 0.0
      %4252 = vmatpush1.msra.mxu0 0.0
      %4253 = vmatprep.subr.mxu0 0.0
      %4254 = vmatpush1.msra.mxu0 0.0
      %4255 = vmatprep.subr.mxu0 0.0
      %4256 = vmatpush1.msra.mxu0 0.0
      %4257 = vmatprep.subr.mxu0 0.0
      %4258 = vmatpush1.msra.mxu0 0.0
      %4259 = vmatprep.subr.mxu0 0.0
      %4260 = vmatpush1.msra.mxu0 0.0
      %4261 = vmatprep.subr.mxu0 0.0
      %4262 = vmatpush1.msra.mxu0 0.0
      %4263 = vmatprep.subr.mxu0 0.0
      %4264 = vmatpush1.msra.mxu0 0.0
      %4265 = vmatprep.subr.mxu0 0.0
      %4266 = vmatpush1.msra.mxu0 %v4245
      %4267 = vmatprep.subr.mxu0 0.0
      %4268 = vmatpush1.msra.mxu0 %v4235
      %4269 = vmatprep.subr.mxu0 0.0
      %4270 = vmatpush1.msra.mxu0 %v4234
      %4271 = vmatprep.subr.mxu0 0.0
      %4272 = vmatpush1.msra.mxu0 %v4233
      %4273 = vmatprep.subr.mxu0 0.0
      %4274 = vmatpush1.msra.mxu0 %v4232
      %4275 = vmatprep.subr.mxu0 0.0
      %4276 = vmatpush1.msra.mxu0 %v4231
      %4277 = vmatprep.subr.mxu0 0.0
      %4278 = vmatpush1.msra.mxu0 %v4230
      %4279 = vmatprep.subr.mxu0 0.0
      %4280 = vmatpush2.msra.mxu0 0.0
      %4281 = vmatprep.subr.mxu0 0.0
      %4282 = vmatpush2.msra.mxu0 0.0
      %4283 = vmatprep.subr.mxu0 0.0
      %4284 = vmatpush2.msra.mxu0 0.0
      %4285 = vmatprep.subr.mxu0 0.0
      %4286 = vmatpush2.msra.mxu0 0.0
      %4287 = vmatprep.subr.mxu0 0.0
      %4288 = vmatpush2.msra.mxu0 0.0
      %4289 = vmatprep.subr.mxu0 0.0
      %4290 = vmatpush2.msra.mxu0 0.0
      %4291 = vmatprep.subr.mxu0 0.0
      %4292 = vmatpush2.msra.mxu0 0.0
      %4293 = vmatprep.subr.mxu0 0.0
      %4294 = vmatpush2.msra.mxu0 0.0
      %4295 = vmatprep.subr.mxu0 0.0
      %4296 = vmatpush2.msra.mxu0 0.0
      %4297 = vmatprep.subr.mxu0 0.0
      %4298 = vmatpush2.msra.mxu0 0.0
      %4299 = vmatprep.subr.mxu0 0.0
      %4300 = vmatpush2.msra.mxu0 0.0
      %4301 = vmatprep.subr.mxu0 0.0
      %4302 = vmatpush2.msra.mxu0 0.0
      %4303 = vmatprep.subr.mxu0 0.0
      %4304 = vmatpush2.msra.mxu0 0.0
      %4305 = vmatprep.subr.mxu0 0.0
      %4306 = vmatpush2.msra.mxu0 0.0
      %4307 = vmatprep.subr.mxu0 0.0
      %4308 = vmatpush2.msra.mxu0 0.0
      %4309 = vmatprep.subr.mxu0 0.0
      %4310 = vmatpush2.msra.mxu0 0.0
      %4311 = vmatprep.mubr.f32.mxu0 0.0
      %4312 = vmatmul.mubr.f32.gmra.mxu0 %v4242
      %v4313 = vpop.f32.mrf.mxu0
      %v4314 = vadd.f32 0.0, %v4313
      %v4315 = vpop.f32.mrf.mxu0
      %4316 = vdwg.mxu0
      %v4317 = vld [vmem:[%s13] sm:$0x1]
      %v4318 = vld [vmem:[%s14] sm:$0x1]
      %v4319 = vsel %vm950, %v4314, 0.0
      %4320 = vadd.xlane.f32.xlu0 %v4319
      %v4321 = vpop.xlane.xlu0 %4320
      %v4322 = vmul.f32 %v4321, %v954
      %v4323 = vsub.f32 %v4314, %v4322
      %v4324 = vmul.f32 %v4323, %v4323
      %v4325 = vsel %vm950, %v4324, 0.0
      %4326 = vadd.xlane.f32.xlu0 %v4325
      %v4327 = vpop.xlane.xlu0 %4326
      %v4328 = vmul.f32 %v4327, %v954
      %v4329 = vadd.f32 %v4328, 1e-05
      %v4330 = vrsqrt.pop %v4329
      %v4331 = vmul.f32 %v4323, %v4330
      %v4333 = vlaneseq
      %v4334 = vshrl.u32 %v4333, 7
      %v4335 = vsub.s32 0, %v4334
      %v4336 = vrot.slane %v4317, %v4335
      %v4338 = vmul.f32 %v4331, %v4336
      %v4340 = vlaneseq
      %v4341 = vshrl.u32 %v4340, 7
      %v4342 = vsub.s32 0, %v4341
      %v4343 = vrot.slane %v4318, %v4342
      %v4345 = vadd.f32 %v4338, %v4343
      %v4346 = vld [vmem:[%s15] sm:$0x3f]
      %v4347 = vmul.f32 %v4345, %v4346
      %v4348 = vld [vmem:[%s16] sm:$0x3f]
      %v4349 = vadd.f32 %v4347, %v4348
      %v4350 = vmul.f32 %v4349, 0.16666667
      %4351 = vst [vmem:[%s546] sm:$0x3f] %v4350
      %p4352 = scmp.lt.s32.totalorder %s28, 1
      %s4353 = scalar_select %p4352, %s28, 1
      %s4354 = smul.addr %s4353, 8
      %s4355 = scalar_lea.vmem %s17, %s4354
      // Predicated region
      $region89: #{keyre_id_forward.3} parent=87 // pred_check
        %p4356 = pneg %p408
      $region90: #{keyre_id_forward.3} parent=87 // pred_check_branch
        %4358 = sbr.rel (%p4356) target = $region92
      $region91: #{keyre_id_forward.3} parent=87 // pred_region
        _
      $region92: #{keyre_id_forward.3} parent=87 // pred_fallthru
        _
    $region88: #{keyre_id_forward.3} parent=5 // pred_fallthru
      _
    %p4359 = scmp.le.s32.totalorder 2, %s23
    // Predicated region
    $region93: #{keyre_id_forward.3} parent=5 // pred_check
      %p4360 = pneg %p4359
    $region94: #{keyre_id_forward.3} parent=5 // pred_check_branch
      %4362 = sbr.rel (%p4360) target = $region96
    $region95: #{keyre_id_forward.3} parent=5 // pred_region
      %s4363 = ssub.s32 %s23, 2
      // Predicated region
      $region97: #{keyre_id_forward.3} parent=95 // pred_check
        %p4364 = pneg %p414
      $region98: #{keyre_id_forward.3} parent=95 // pred_check_branch
        %4366 = sbr.rel (%p4364) target = $region100
      $region99: #{keyre_id_forward.3} parent=95 // pred_region
        %p4367 = scmp.lt.s32.totalorder %s29, 1
        %s4368 = scalar_select %p4367, %s29, 1
        %s4369 = smul.addr %s4368, 8
        %s4370 = scalar_lea.vmem %s17, %s4369
      $region100: #{keyre_id_forward.3} parent=95 // pred_fallthru
        _
    $region96: #{keyre_id_forward.3} parent=5 // pred_fallthru
      _
  $region6: #{keyre_id_forward.3} parent=0 // loop_footer
    %s27 = sadd.s32 1, %s23
  $region7: #{keyre_id_forward.3} parent=0 // loop_footer_branch
    %22 = sbr.rel target = $region3
  $region8: #{keyre_id_forward.3} parent=0 // loop_exit
    _

// kernel: keyre_id_forward.2
$region0: #{keyre_id_forward.2}
  #allocation0 [shape = 'u32[]', space=smem, size = 0x4, offset = 0x4, fixed_abs, tag = 'smem constant byte address 0x4 - core index']
  #allocation1 [shape = 'u32[144,128]{1,0:T(1,128)}', space=vmem, size = 0x12000, scoped, tag = 'internal scratch']
  #allocation2 [shape = 'f32[1,1]{1,0:T(1,128)S(1)}', space=vmem, size = 0x200, scoped, tag = 'scoped memory for keyre_id_forward.2']
  %s0 = inlined_call_operand.vmem [shape: bf16[2,36,48], index: 0, kind: input, shape index: {}]
  %s1 = inlined_call_operand.vmem [shape: f32[36,32], index: 1, kind: input, shape index: {}]
  %s2 = inlined_call_operand.vmem [shape: bf16[48,32], index: 2, kind: input, shape index: {}]
  %s3 = inlined_call_operand.vmem [shape: f32[2,1,32], index: 3, kind: input, shape index: {}, may-alias: {3,9}]
  %s4 = inlined_call_operand.vmem [shape: f32[2,1,32], index: 4, kind: input, shape index: {}, may-alias: {4,8,10,14}]
  %s5 = inlined_call_operand.vmem [shape: bf16[2,32,96], index: 5, kind: input, shape index: {}]
  %s6 = inlined_call_operand.vmem [shape: f32[2,1,96], index: 6, kind: input, shape index: {}]
  %s7 = inlined_call_operand.vmem [shape: bf16[2,32,32], index: 7, kind: input, shape index: {}]
  %s8 = inlined_call_operand.vmem [shape: f32[2,1,32], index: 8, kind: input, shape index: {}, may-alias: {4,8,10,14}]
  %s9 = inlined_call_operand.vmem [shape: f32[2,1,32], index: 9, kind: input, shape index: {}, may-alias: {3,9}]
  %s10 = inlined_call_operand.vmem [shape: f32[2,1,32], index: 10, kind: input, shape index: {}, may-alias: {4,8,10,14}]
  %s11 = inlined_call_operand.vmem [shape: bf16[2,32,128], index: 11, kind: input, shape index: {}]
  %s12 = inlined_call_operand.vmem [shape: f32[2,1,128], index: 12, kind: input, shape index: {}]
  %s13 = inlined_call_operand.vmem [shape: bf16[2,128,32], index: 13, kind: input, shape index: {}]
  %s14 = inlined_call_operand.vmem [shape: f32[2,1,32], index: 14, kind: input, shape index: {}, may-alias: {4,8,10,14}]
  %s15 = inlined_call_operand.vmem [shape: f32[1,32], index: 15, kind: input, shape index: {}]
  %s16 = inlined_call_operand.vmem [shape: f32[1,32], index: 16, kind: input, shape index: {}, may-alias: {16,22}]
  %s17 = inlined_call_operand.vmem [shape: f32[32,16], index: 17, kind: input, shape index: {}]
  %s18 = inlined_call_operand.vmem [shape: f32[1,16], index: 18, kind: input, shape index: {}]
  %s19 = inlined_call_operand.vmem [shape: f32[64,4], index: 19, kind: input, shape index: {}]
  %s20 = inlined_call_operand.<no memory space> [shape: f32[1,1], index: 20, kind: input, shape index: {}]
  %s21 = inlined_call_operand.vmem [shape: f32[1,32], index: 21, kind: input, shape index: {}]
  %s22 = inlined_call_operand.vmem [shape: f32[1,32], index: 22, kind: input, shape index: {}, may-alias: {16,22}]
  %s23 = inlined_call_operand.vmem [shape: f32[2,36,32], index: 23, kind: output, shape index: {0}]
  %s24 = inlined_call_operand.vmem [shape: f32[2,1,32], index: 24, kind: output, shape index: {1}]
  %25 = xla_tuple %s23, %s24
  %s26 = sld [smem:[#allocation0]]
  $region133: #{keyre_id_forward.2} parent=0
    _
  %s28 = ssub.s32 1, %s26
  %s29 = scalar_select 0, %s28, %s26
  %v30 = vstv %s20
  %31 = vst [vmem:[#allocation2] sm:$0x1] %v30
  loop: start=0, step=1, limit=4
  $region2: #{keyre_id_forward.2} parent=0 // loop_pre_header
    _
  $region3: #{keyre_id_forward.2} parent=0 // loop_header
    %s33 = sphi 0, %s37
    %p34 = scmp.ge.s32.totalorder %s33, 4
    %s43 = sphi 0, %s45
    %s46 = sphi 0, %s43
    %s47 = sphi 0, %s46
    %s63 = sphi 0, %s47
    %s67 = sphi 0, %s67
    %s69 = sphi 0, %s67
    %s70 = sphi 0, %s69
    %s84 = sphi 0, %s70
    %s88 = sphi 0, %s88
    %s90 = sphi 0, %s88
    %s91 = sphi 0, %s90
    %s105 = sphi 0, %s91
    %s109 = sphi 0, %s109
    %s111 = sphi 0, %s109
    %s112 = sphi 0, %s111
    %s126 = sphi 0, %s112
    %s130 = sphi 0, %s130
    %s132 = sphi 0, %s130
    %s133 = sphi 0, %s132
    %s147 = sphi 0, %s133
    %s151 = sphi 0, %s151
    %s153 = sphi 0, %s151
    %s154 = sphi 0, %s153
    %s168 = sphi 0, %s154
    %s172 = sphi 0, %s172
    %s174 = sphi 0, %s172
    %s175 = sphi 0, %s174
    %s189 = sphi 0, %s175
    %s193 = sphi 0, %s193
    %s195 = sphi 0, %s193
    %s196 = sphi 0, %s195
    %s210 = sphi 0, %s196
    %s214 = sphi 0, %s214
    %s216 = sphi 0, %s214
    %s217 = sphi 0, %s216
    %s231 = sphi 0, %s217
    %s235 = sphi 0, %s235
    %s237 = sphi 0, %s235
    %s238 = sphi 0, %s237
    %s252 = sphi 0, %s238
    %s256 = sphi 0, %s256
    %s258 = sphi 0, %s256
    %s259 = sphi 0, %s258
    %s273 = sphi 0, %s259
    %s277 = sphi 0, %s277
    %s279 = sphi 0, %s277
    %s280 = sphi 0, %s279
    %s294 = sphi 0, %s280
    %s298 = sphi 0, %s298
    %s300 = sphi 0, %s298
    %s301 = sphi 0, %s300
    %s315 = sphi 0, %s301
    %s319 = sphi 0, %s319
    %s321 = sphi 0, %s319
    %s322 = sphi 0, %s321
    %s336 = sphi 0, %s322
    %s340 = sphi 0, %s340
    %s342 = sphi 0, %s340
    %s343 = sphi 0, %s342
    %s357 = sphi 0, %s343
    %s361 = sphi 0, %s361
    %s363 = sphi 0, %s361
    %s364 = sphi 0, %s363
    %s378 = sphi 0, %s364
    %s382 = sphi 0, %s382
    %s384 = sphi 0, %s382
    %s385 = sphi 0, %s384
    %s399 = sphi 0, %s385
    %s403 = sphi 0, %s403
    %s405 = sphi 0, %s403
    %s406 = sphi 0, %s405
    %s420 = sphi 0, %s406
    %s424 = sphi 0, %s424
    %s426 = sphi 0, %s424
    %s427 = sphi 0, %s426
    %s441 = sphi 0, %s427
    %s445 = sphi 0, %s445
    %s447 = sphi 0, %s445
    %s448 = sphi 0, %s447
    %s462 = sphi 0, %s448
    %s466 = sphi 0, %s466
    %s468 = sphi 0, %s466
    %s469 = sphi 0, %s468
    %s483 = sphi 0, %s469
    %s487 = sphi 0, %s487
    %s489 = sphi 0, %s487
    %s490 = sphi 0, %s489
    %s504 = sphi 0, %s490
    %s508 = sphi 0, %s508
    %s510 = sphi 0, %s508
    %s511 = sphi 0, %s510
    %s525 = sphi 0, %s511
    %s531 = sphi 0, %s533
    %s534 = sphi 0, %s531
    %s535 = sphi 0, %s534
    %s551 = sphi 0, %s535
    %s557 = sphi 0, %s559
    %s560 = sphi 0, %s557
    %s561 = sphi 0, %s560
    %s577 = sphi 0, %s561
  $region4: #{keyre_id_forward.2} parent=0 // loop_header_branch
    %36 = sbr.rel (%p34) target = $region8
  $region5: #{keyre_id_forward.2} parent=0 // loop_body
    %s38 = ssub.s32 %s33, 1
    %s39 = ssub.s32 %s33, 2
    %s40 = sadd.s32 %s33, 1
    %s41 = ssub.s32 %s33, %s40
    %p42 = scmp.eq.s32.totalorder %s41, 0
    %s44 = sadd.s32 %s43, 1
    %s45 = scalar_select %p42, %s43, %s44
    %p48 = pneg %p42
    %p49 = scmp.eq.s32.totalorder %s33, 1
    %p50 = por %p48, %p49
    %p51 = scmp.ne.s32.totalorder %s43, %s46
    %p52 = scmp.eq.s32.totalorder %s33, 0
    %p53 = por %p51, %p52
    %p54 = scmp.ne.s32.totalorder %s43, %s46
    %p55 = scmp.eq.s32.totalorder %s38, 1
    %p56 = por %p54, %p55
    %p57 = scmp.ne.s32.totalorder %s46, %s47
    %p58 = scmp.eq.s32.totalorder %s38, 0
    %p59 = por %p57, %p58
    %p60 = scmp.ne.s32.totalorder %s46, %s47
    %p61 = scmp.eq.s32.totalorder %s39, 1
    %p62 = por %p60, %p61
    %p64 = scmp.ne.s32.totalorder %s47, %s63
    %p65 = scmp.eq.s32.totalorder %s39, 0
    %p66 = por %p64, %p65
    %s68 = sadd.s32 %s67, 1
    %p71 = scmp.eq.s32.totalorder %s33, 1
    %p72 = scmp.ne.s32.totalorder %s67, %s69
    %p73 = scmp.eq.s32.totalorder %s33, 0
    %p74 = por %p72, %p73
    %p75 = scmp.ne.s32.totalorder %s67, %s69
    %p76 = scmp.eq.s32.totalorder %s38, 1
    %p77 = por %p75, %p76
    %p78 = scmp.ne.s32.totalorder %s69, %s70
    %p79 = scmp.eq.s32.totalorder %s38, 0
    %p80 = por %p78, %p79
    %p81 = scmp.ne.s32.totalorder %s69, %s70
    %p82 = scmp.eq.s32.totalorder %s39, 1
    %p83 = por %p81, %p82
    %p85 = scmp.ne.s32.totalorder %s70, %s84
    %p86 = scmp.eq.s32.totalorder %s39, 0
    %p87 = por %p85, %p86
    %s89 = sadd.s32 %s88, 1
    %p92 = scmp.eq.s32.totalorder %s33, 1
    %p93 = scmp.ne.s32.totalorder %s88, %s90
    %p94 = scmp.eq.s32.totalorder %s33, 0
    %p95 = por %p93, %p94
    %p96 = scmp.ne.s32.totalorder %s88, %s90
    %p97 = scmp.eq.s32.totalorder %s38, 1
    %p98 = por %p96, %p97
    %p99 = scmp.ne.s32.totalorder %s90, %s91
    %p100 = scmp.eq.s32.totalorder %s38, 0
    %p101 = por %p99, %p100
    %p102 = scmp.ne.s32.totalorder %s90, %s91
    %p103 = scmp.eq.s32.totalorder %s39, 1
    %p104 = por %p102, %p103
    %p106 = scmp.ne.s32.totalorder %s91, %s105
    %p107 = scmp.eq.s32.totalorder %s39, 0
    %p108 = por %p106, %p107
    %s110 = sadd.s32 %s109, 1
    %p113 = scmp.eq.s32.totalorder %s33, 1
    %p114 = scmp.ne.s32.totalorder %s109, %s111
    %p115 = scmp.eq.s32.totalorder %s33, 0
    %p116 = por %p114, %p115
    %p117 = scmp.ne.s32.totalorder %s109, %s111
    %p118 = scmp.eq.s32.totalorder %s38, 1
    %p119 = por %p117, %p118
    %p120 = scmp.ne.s32.totalorder %s111, %s112
    %p121 = scmp.eq.s32.totalorder %s38, 0
    %p122 = por %p120, %p121
    %p123 = scmp.ne.s32.totalorder %s111, %s112
    %p124 = scmp.eq.s32.totalorder %s39, 1
    %p125 = por %p123, %p124
    %p127 = scmp.ne.s32.totalorder %s112, %s126
    %p128 = scmp.eq.s32.totalorder %s39, 0
    %p129 = por %p127, %p128
    %s131 = sadd.s32 %s130, 1
    %p134 = scmp.eq.s32.totalorder %s33, 1
    %p135 = scmp.ne.s32.totalorder %s130, %s132
    %p136 = scmp.eq.s32.totalorder %s33, 0
    %p137 = por %p135, %p136
    %p138 = scmp.ne.s32.totalorder %s130, %s132
    %p139 = scmp.eq.s32.totalorder %s38, 1
    %p140 = por %p138, %p139
    %p141 = scmp.ne.s32.totalorder %s132, %s133
    %p142 = scmp.eq.s32.totalorder %s38, 0
    %p143 = por %p141, %p142
    %p144 = scmp.ne.s32.totalorder %s132, %s133
    %p145 = scmp.eq.s32.totalorder %s39, 1
    %p146 = por %p144, %p145
    %p148 = scmp.ne.s32.totalorder %s133, %s147
    %p149 = scmp.eq.s32.totalorder %s39, 0
    %p150 = por %p148, %p149
    %s152 = sadd.s32 %s151, 1
    %p155 = scmp.eq.s32.totalorder %s33, 1
    %p156 = scmp.ne.s32.totalorder %s151, %s153
    %p157 = scmp.eq.s32.totalorder %s33, 0
    %p158 = por %p156, %p157
    %p159 = scmp.ne.s32.totalorder %s151, %s153
    %p160 = scmp.eq.s32.totalorder %s38, 1
    %p161 = por %p159, %p160
    %p162 = scmp.ne.s32.totalorder %s153, %s154
    %p163 = scmp.eq.s32.totalorder %s38, 0
    %p164 = por %p162, %p163
    %p165 = scmp.ne.s32.totalorder %s153, %s154
    %p166 = scmp.eq.s32.totalorder %s39, 1
    %p167 = por %p165, %p166
    %p169 = scmp.ne.s32.totalorder %s154, %s168
    %p170 = scmp.eq.s32.totalorder %s39, 0
    %p171 = por %p169, %p170
    %s173 = sadd.s32 %s172, 1
    %p176 = scmp.eq.s32.totalorder %s33, 1
    %p177 = scmp.ne.s32.totalorder %s172, %s174
    %p178 = scmp.eq.s32.totalorder %s33, 0
    %p179 = por %p177, %p178
    %p180 = scmp.ne.s32.totalorder %s172, %s174
    %p181 = scmp.eq.s32.totalorder %s38, 1
    %p182 = por %p180, %p181
    %p183 = scmp.ne.s32.totalorder %s174, %s175
    %p184 = scmp.eq.s32.totalorder %s38, 0
    %p185 = por %p183, %p184
    %p186 = scmp.ne.s32.totalorder %s174, %s175
    %p187 = scmp.eq.s32.totalorder %s39, 1
    %p188 = por %p186, %p187
    %p190 = scmp.ne.s32.totalorder %s175, %s189
    %p191 = scmp.eq.s32.totalorder %s39, 0
    %p192 = por %p190, %p191
    %s194 = sadd.s32 %s193, 1
    %p197 = scmp.eq.s32.totalorder %s33, 1
    %p198 = scmp.ne.s32.totalorder %s193, %s195
    %p199 = scmp.eq.s32.totalorder %s33, 0
    %p200 = por %p198, %p199
    %p201 = scmp.ne.s32.totalorder %s193, %s195
    %p202 = scmp.eq.s32.totalorder %s38, 1
    %p203 = por %p201, %p202
    %p204 = scmp.ne.s32.totalorder %s195, %s196
    %p205 = scmp.eq.s32.totalorder %s38, 0
    %p206 = por %p204, %p205
    %p207 = scmp.ne.s32.totalorder %s195, %s196
    %p208 = scmp.eq.s32.totalorder %s39, 1
    %p209 = por %p207, %p208
    %p211 = scmp.ne.s32.totalorder %s196, %s210
    %p212 = scmp.eq.s32.totalorder %s39, 0
    %p213 = por %p211, %p212
    %s215 = sadd.s32 %s214, 1
    %p218 = scmp.eq.s32.totalorder %s33, 1
    %p219 = scmp.ne.s32.totalorder %s214, %s216
    %p220 = scmp.eq.s32.totalorder %s33, 0
    %p221 = por %p219, %p220
    %p222 = scmp.ne.s32.totalorder %s214, %s216
    %p223 = scmp.eq.s32.totalorder %s38, 1
    %p224 = por %p222, %p223
    %p225 = scmp.ne.s32.totalorder %s216, %s217
    %p226 = scmp.eq.s32.totalorder %s38, 0
    %p227 = por %p225, %p226
    %p228 = scmp.ne.s32.totalorder %s216, %s217
    %p229 = scmp.eq.s32.totalorder %s39, 1
    %p230 = por %p228, %p229
    %p232 = scmp.ne.s32.totalorder %s217, %s231
    %p233 = scmp.eq.s32.totalorder %s39, 0
    %p234 = por %p232, %p233
    %s236 = sadd.s32 %s235, 1
    %p239 = scmp.eq.s32.totalorder %s33, 1
    %p240 = scmp.ne.s32.totalorder %s235, %s237
    %p241 = scmp.eq.s32.totalorder %s33, 0
    %p242 = por %p240, %p241
    %p243 = scmp.ne.s32.totalorder %s235, %s237
    %p244 = scmp.eq.s32.totalorder %s38, 1
    %p245 = por %p243, %p244
    %p246 = scmp.ne.s32.totalorder %s237, %s238
    %p247 = scmp.eq.s32.totalorder %s38, 0
    %p248 = por %p246, %p247
    %p249 = scmp.ne.s32.totalorder %s237, %s238
    %p250 = scmp.eq.s32.totalorder %s39, 1
    %p251 = por %p249, %p250
    %p253 = scmp.ne.s32.totalorder %s238, %s252
    %p254 = scmp.eq.s32.totalorder %s39, 0
    %p255 = por %p253, %p254
    %s257 = sadd.s32 %s256, 1
    %p260 = scmp.eq.s32.totalorder %s33, 1
    %p261 = scmp.ne.s32.totalorder %s256, %s258
    %p262 = scmp.eq.s32.totalorder %s33, 0
    %p263 = por %p261, %p262
    %p264 = scmp.ne.s32.totalorder %s256, %s258
    %p265 = scmp.eq.s32.totalorder %s38, 1
    %p266 = por %p264, %p265
    %p267 = scmp.ne.s32.totalorder %s258, %s259
    %p268 = scmp.eq.s32.totalorder %s38, 0
    %p269 = por %p267, %p268
    %p270 = scmp.ne.s32.totalorder %s258, %s259
    %p271 = scmp.eq.s32.totalorder %s39, 1
    %p272 = por %p270, %p271
    %p274 = scmp.ne.s32.totalorder %s259, %s273
    %p275 = scmp.eq.s32.totalorder %s39, 0
    %p276 = por %p274, %p275
    %s278 = sadd.s32 %s277, 1
    %p281 = scmp.eq.s32.totalorder %s33, 1
    %p282 = scmp.ne.s32.totalorder %s277, %s279
    %p283 = scmp.eq.s32.totalorder %s33, 0
    %p284 = por %p282, %p283
    %p285 = scmp.ne.s32.totalorder %s277, %s279
    %p286 = scmp.eq.s32.totalorder %s38, 1
    %p287 = por %p285, %p286
    %p288 = scmp.ne.s32.totalorder %s279, %s280
    %p289 = scmp.eq.s32.totalorder %s38, 0
    %p290 = por %p288, %p289
    %p291 = scmp.ne.s32.totalorder %s279, %s280
    %p292 = scmp.eq.s32.totalorder %s39, 1
    %p293 = por %p291, %p292
    %p295 = scmp.ne.s32.totalorder %s280, %s294
    %p296 = scmp.eq.s32.totalorder %s39, 0
    %p297 = por %p295, %p296
    %s299 = sadd.s32 %s298, 1
    %p302 = scmp.eq.s32.totalorder %s33, 1
    %p303 = scmp.ne.s32.totalorder %s298, %s300
    %p304 = scmp.eq.s32.totalorder %s33, 0
    %p305 = por %p303, %p304
    %p306 = scmp.ne.s32.totalorder %s298, %s300
    %p307 = scmp.eq.s32.totalorder %s38, 1
    %p308 = por %p306, %p307
    %p309 = scmp.ne.s32.totalorder %s300, %s301
    %p310 = scmp.eq.s32.totalorder %s38, 0
    %p311 = por %p309, %p310
    %p312 = scmp.ne.s32.totalorder %s300, %s301
    %p313 = scmp.eq.s32.totalorder %s39, 1
    %p314 = por %p312, %p313
    %p316 = scmp.ne.s32.totalorder %s301, %s315
    %p317 = scmp.eq.s32.totalorder %s39, 0
    %p318 = por %p316, %p317
    %s320 = sadd.s32 %s319, 1
    %p323 = scmp.eq.s32.totalorder %s33, 1
    %p324 = scmp.ne.s32.totalorder %s319, %s321
    %p325 = scmp.eq.s32.totalorder %s33, 0
    %p326 = por %p324, %p325
    %p327 = scmp.ne.s32.totalorder %s319, %s321
    %p328 = scmp.eq.s32.totalorder %s38, 1
    %p329 = por %p327, %p328
    %p330 = scmp.ne.s32.totalorder %s321, %s322
    %p331 = scmp.eq.s32.totalorder %s38, 0
    %p332 = por %p330, %p331
    %p333 = scmp.ne.s32.totalorder %s321, %s322
    %p334 = scmp.eq.s32.totalorder %s39, 1
    %p335 = por %p333, %p334
    %p337 = scmp.ne.s32.totalorder %s322, %s336
    %p338 = scmp.eq.s32.totalorder %s39, 0
    %p339 = por %p337, %p338
    %s341 = sadd.s32 %s340, 1
    %p344 = scmp.eq.s32.totalorder %s33, 1
    %p345 = scmp.ne.s32.totalorder %s340, %s342
    %p346 = scmp.eq.s32.totalorder %s33, 0
    %p347 = por %p345, %p346
    %p348 = scmp.ne.s32.totalorder %s340, %s342
    %p349 = scmp.eq.s32.totalorder %s38, 1
    %p350 = por %p348, %p349
    %p351 = scmp.ne.s32.totalorder %s342, %s343
    %p352 = scmp.eq.s32.totalorder %s38, 0
    %p353 = por %p351, %p352
    %p354 = scmp.ne.s32.totalorder %s342, %s343
    %p355 = scmp.eq.s32.totalorder %s39, 1
    %p356 = por %p354, %p355
    %p358 = scmp.ne.s32.totalorder %s343, %s357
    %p359 = scmp.eq.s32.totalorder %s39, 0
    %p360 = por %p358, %p359
    %s362 = sadd.s32 %s361, 1
    %p365 = scmp.eq.s32.totalorder %s33, 1
    %p366 = scmp.ne.s32.totalorder %s361, %s363
    %p367 = scmp.eq.s32.totalorder %s33, 0
    %p368 = por %p366, %p367
    %p369 = scmp.ne.s32.totalorder %s361, %s363
    %p370 = scmp.eq.s32.totalorder %s38, 1
    %p371 = por %p369, %p370
    %p372 = scmp.ne.s32.totalorder %s363, %s364
    %p373 = scmp.eq.s32.totalorder %s38, 0
    %p374 = por %p372, %p373
    %p375 = scmp.ne.s32.totalorder %s363, %s364
    %p376 = scmp.eq.s32.totalorder %s39, 1
    %p377 = por %p375, %p376
    %p379 = scmp.ne.s32.totalorder %s364, %s378
    %p380 = scmp.eq.s32.totalorder %s39, 0
    %p381 = por %p379, %p380
    %s383 = sadd.s32 %s382, 1
    %p386 = scmp.eq.s32.totalorder %s33, 1
    %p387 = scmp.ne.s32.totalorder %s382, %s384
    %p388 = scmp.eq.s32.totalorder %s33, 0
    %p389 = por %p387, %p388
    %p390 = scmp.ne.s32.totalorder %s382, %s384
    %p391 = scmp.eq.s32.totalorder %s38, 1
    %p392 = por %p390, %p391
    %p393 = scmp.ne.s32.totalorder %s384, %s385
    %p394 = scmp.eq.s32.totalorder %s38, 0
    %p395 = por %p393, %p394
    %p396 = scmp.ne.s32.totalorder %s384, %s385
    %p397 = scmp.eq.s32.totalorder %s39, 1
    %p398 = por %p396, %p397
    %p400 = scmp.ne.s32.totalorder %s385, %s399
    %p401 = scmp.eq.s32.totalorder %s39, 0
    %p402 = por %p400, %p401
    %s404 = sadd.s32 %s403, 1
    %p407 = scmp.eq.s32.totalorder %s33, 1
    %p408 = scmp.ne.s32.totalorder %s403, %s405
    %p409 = scmp.eq.s32.totalorder %s33, 0
    %p410 = por %p408, %p409
    %p411 = scmp.ne.s32.totalorder %s403, %s405
    %p412 = scmp.eq.s32.totalorder %s38, 1
    %p413 = por %p411, %p412
    %p414 = scmp.ne.s32.totalorder %s405, %s406
    %p415 = scmp.eq.s32.totalorder %s38, 0
    %p416 = por %p414, %p415
    %p417 = scmp.ne.s32.totalorder %s405, %s406
    %p418 = scmp.eq.s32.totalorder %s39, 1
    %p419 = por %p417, %p418
    %p421 = scmp.ne.s32.totalorder %s406, %s420
    %p422 = scmp.eq.s32.totalorder %s39, 0
    %p423 = por %p421, %p422
    %s425 = sadd.s32 %s424, 1
    %p428 = scmp.eq.s32.totalorder %s33, 1
    %p429 = scmp.ne.s32.totalorder %s424, %s426
    %p430 = scmp.eq.s32.totalorder %s33, 0
    %p431 = por %p429, %p430
    %p432 = scmp.ne.s32.totalorder %s424, %s426
    %p433 = scmp.eq.s32.totalorder %s38, 1
    %p434 = por %p432, %p433
    %p435 = scmp.ne.s32.totalorder %s426, %s427
    %p436 = scmp.eq.s32.totalorder %s38, 0
    %p437 = por %p435, %p436
    %p438 = scmp.ne.s32.totalorder %s426, %s427
    %p439 = scmp.eq.s32.totalorder %s39, 1
    %p440 = por %p438, %p439
    %p442 = scmp.ne.s32.totalorder %s427, %s441
    %p443 = scmp.eq.s32.totalorder %s39, 0
    %p444 = por %p442, %p443
    %s446 = sadd.s32 %s445, 1
    %p449 = scmp.eq.s32.totalorder %s33, 1
    %p450 = scmp.ne.s32.totalorder %s445, %s447
    %p451 = scmp.eq.s32.totalorder %s33, 0
    %p452 = por %p450, %p451
    %p453 = scmp.ne.s32.totalorder %s445, %s447
    %p454 = scmp.eq.s32.totalorder %s38, 1
    %p455 = por %p453, %p454
    %p456 = scmp.ne.s32.totalorder %s447, %s448
    %p457 = scmp.eq.s32.totalorder %s38, 0
    %p458 = por %p456, %p457
    %p459 = scmp.ne.s32.totalorder %s447, %s448
    %p460 = scmp.eq.s32.totalorder %s39, 1
    %p461 = por %p459, %p460
    %p463 = scmp.ne.s32.totalorder %s448, %s462
    %p464 = scmp.eq.s32.totalorder %s39, 0
    %p465 = por %p463, %p464
    %s467 = sadd.s32 %s466, 1
    %p470 = scmp.eq.s32.totalorder %s33, 1
    %p471 = scmp.ne.s32.totalorder %s466, %s468
    %p472 = scmp.eq.s32.totalorder %s33, 0
    %p473 = por %p471, %p472
    %p474 = scmp.ne.s32.totalorder %s466, %s468
    %p475 = scmp.eq.s32.totalorder %s38, 1
    %p476 = por %p474, %p475
    %p477 = scmp.ne.s32.totalorder %s468, %s469
    %p478 = scmp.eq.s32.totalorder %s38, 0
    %p479 = por %p477, %p478
    %p480 = scmp.ne.s32.totalorder %s468, %s469
    %p481 = scmp.eq.s32.totalorder %s39, 1
    %p482 = por %p480, %p481
    %p484 = scmp.ne.s32.totalorder %s469, %s483
    %p485 = scmp.eq.s32.totalorder %s39, 0
    %p486 = por %p484, %p485
    %s488 = sadd.s32 %s487, 1
    %p491 = scmp.eq.s32.totalorder %s33, 1
    %p492 = scmp.ne.s32.totalorder %s487, %s489
    %p493 = scmp.eq.s32.totalorder %s33, 0
    %p494 = por %p492, %p493
    %p495 = scmp.ne.s32.totalorder %s487, %s489
    %p496 = scmp.eq.s32.totalorder %s38, 1
    %p497 = por %p495, %p496
    %p498 = scmp.ne.s32.totalorder %s489, %s490
    %p499 = scmp.eq.s32.totalorder %s38, 0
    %p500 = por %p498, %p499
    %p501 = scmp.ne.s32.totalorder %s489, %s490
    %p502 = scmp.eq.s32.totalorder %s39, 1
    %p503 = por %p501, %p502
    %p505 = scmp.ne.s32.totalorder %s490, %s504
    %p506 = scmp.eq.s32.totalorder %s39, 0
    %p507 = por %p505, %p506
    %s509 = sadd.s32 %s508, 1
    %p512 = scmp.eq.s32.totalorder %s33, 1
    %p513 = scmp.ne.s32.totalorder %s508, %s510
    %p514 = scmp.eq.s32.totalorder %s33, 0
    %p515 = por %p513, %p514
    %p516 = scmp.ne.s32.totalorder %s508, %s510
    %p517 = scmp.eq.s32.totalorder %s38, 1
    %p518 = por %p516, %p517
    %p519 = scmp.ne.s32.totalorder %s510, %s511
    %p520 = scmp.eq.s32.totalorder %s38, 0
    %p521 = por %p519, %p520
    %p522 = scmp.ne.s32.totalorder %s510, %s511
    %p523 = scmp.eq.s32.totalorder %s39, 1
    %p524 = por %p522, %p523
    %p526 = scmp.ne.s32.totalorder %s511, %s525
    %p527 = scmp.eq.s32.totalorder %s39, 0
    %p528 = por %p526, %p527
    %s529 = ssub.s32 %s33, %s40
    %p530 = scmp.eq.s32.totalorder %s529, 0
    %s532 = sadd.s32 %s531, 1
    %s533 = scalar_select %p530, %s531, %s532
    %p536 = pneg %p530
    %p537 = scmp.eq.s32.totalorder %s33, 1
    %p538 = por %p536, %p537
    %p539 = scmp.ne.s32.totalorder %s531, %s534
    %p540 = scmp.eq.s32.totalorder %s33, 0
    %p541 = por %p539, %p540
    %p542 = scmp.ne.s32.totalorder %s531, %s534
    %p543 = scmp.eq.s32.totalorder %s38, 1
    %p544 = por %p542, %p543
    %p545 = scmp.ne.s32.totalorder %s534, %s535
    %p546 = scmp.eq.s32.totalorder %s38, 0
    %p547 = por %p545, %p546
    %p548 = scmp.ne.s32.totalorder %s534, %s535
    %p549 = scmp.eq.s32.totalorder %s39, 1
    %p550 = por %p548, %p549
    %p552 = scmp.ne.s32.totalorder %s535, %s551
    %p553 = scmp.eq.s32.totalorder %s39, 0
    %p554 = por %p552, %p553
    %s555 = ssub.s32 %s33, %s40
    %p556 = scmp.eq.s32.totalorder %s555, 0
    %s558 = sadd.s32 %s557, 1
    %s559 = scalar_select %p556, %s557, %s558
    %p562 = pneg %p556
    %p563 = scmp.eq.s32.totalorder %s33, 1
    %p564 = por %p562, %p563
    %p565 = scmp.ne.s32.totalorder %s557, %s560
    %p566 = scmp.eq.s32.totalorder %s33, 0
    %p567 = por %p565, %p566
    %p568 = scmp.ne.s32.totalorder %s557, %s560
    %p569 = scmp.eq.s32.totalorder %s38, 1
    %p570 = por %p568, %p569
    %p571 = scmp.ne.s32.totalorder %s560, %s561
    %p572 = scmp.eq.s32.totalorder %s38, 0
    %p573 = por %p571, %p572
    %p574 = scmp.ne.s32.totalorder %s560, %s561
    %p575 = scmp.eq.s32.totalorder %s39, 1
    %p576 = por %p574, %p575
    %p578 = scmp.ne.s32.totalorder %s561, %s577
    %p579 = scmp.eq.s32.totalorder %s39, 0
    %p580 = por %p578, %p579
    %p581 = scmp.le.s32.totalorder 1, %s33
    %p582 = scmp.lt.s32.totalorder %s33, 3
    %p583 = pnand %p581, %p582
    %p584 = pneg %p583
    // Predicated region
    $region9: #{keyre_id_forward.2} parent=5 // pred_check
      _
    $region10: #{keyre_id_forward.2} parent=5 // pred_check_branch
      %586 = sbr.rel (%p583) target = $region12
    $region11: #{keyre_id_forward.2} parent=5 // pred_region
      %s587 = ssub.s32 %s33, 1
      // Predicated region
      $region13: #{keyre_id_forward.2} parent=11 // pred_check
        %p588 = pneg %p80
      $region14: #{keyre_id_forward.2} parent=11 // pred_check_branch
        %590 = sbr.rel (%p588) target = $region16
      $region15: #{keyre_id_forward.2} parent=11 // pred_region
        _
      $region16: #{keyre_id_forward.2} parent=11 // pred_fallthru
        _
      // Predicated region
      $region17: #{keyre_id_forward.2} parent=11 // pred_check
        %p591 = pneg %p101
      $region18: #{keyre_id_forward.2} parent=11 // pred_check_branch
        %593 = sbr.rel (%p591) target = $region20
      $region19: #{keyre_id_forward.2} parent=11 // pred_region
        _
      $region20: #{keyre_id_forward.2} parent=11 // pred_fallthru
        _
      // Predicated region
      $region21: #{keyre_id_forward.2} parent=11 // pred_check
        %p594 = pneg %p122
      $region22: #{keyre_id_forward.2} parent=11 // pred_check_branch
        %596 = sbr.rel (%p594) target = $region24
      $region23: #{keyre_id_forward.2} parent=11 // pred_region
        _
      $region24: #{keyre_id_forward.2} parent=11 // pred_fallthru
        _
      // Predicated region
      $region25: #{keyre_id_forward.2} parent=11 // pred_check
        %p597 = pneg %p143
      $region26: #{keyre_id_forward.2} parent=11 // pred_check_branch
        %599 = sbr.rel (%p597) target = $region28
      $region27: #{keyre_id_forward.2} parent=11 // pred_region
        _
      $region28: #{keyre_id_forward.2} parent=11 // pred_fallthru
        _
      // Predicated region
      $region29: #{keyre_id_forward.2} parent=11 // pred_check
        %p600 = pneg %p164
      $region30: #{keyre_id_forward.2} parent=11 // pred_check_branch
        %602 = sbr.rel (%p600) target = $region32
      $region31: #{keyre_id_forward.2} parent=11 // pred_region
        _
      $region32: #{keyre_id_forward.2} parent=11 // pred_fallthru
        _
      // Predicated region
      $region33: #{keyre_id_forward.2} parent=11 // pred_check
        %p603 = pneg %p185
      $region34: #{keyre_id_forward.2} parent=11 // pred_check_branch
        %605 = sbr.rel (%p603) target = $region36
      $region35: #{keyre_id_forward.2} parent=11 // pred_region
        _
      $region36: #{keyre_id_forward.2} parent=11 // pred_fallthru
        _
      // Predicated region
      $region37: #{keyre_id_forward.2} parent=11 // pred_check
        %p606 = pneg %p206
      $region38: #{keyre_id_forward.2} parent=11 // pred_check_branch
        %608 = sbr.rel (%p606) target = $region40
      $region39: #{keyre_id_forward.2} parent=11 // pred_region
        _
      $region40: #{keyre_id_forward.2} parent=11 // pred_fallthru
        _
      // Predicated region
      $region41: #{keyre_id_forward.2} parent=11 // pred_check
        %p609 = pneg %p227
      $region42: #{keyre_id_forward.2} parent=11 // pred_check_branch
        %611 = sbr.rel (%p609) target = $region44
      $region43: #{keyre_id_forward.2} parent=11 // pred_region
        _
      $region44: #{keyre_id_forward.2} parent=11 // pred_fallthru
        _
      // Predicated region
      $region45: #{keyre_id_forward.2} parent=11 // pred_check
        %p612 = pneg %p248
      $region46: #{keyre_id_forward.2} parent=11 // pred_check_branch
        %614 = sbr.rel (%p612) target = $region48
      $region47: #{keyre_id_forward.2} parent=11 // pred_region
        _
      $region48: #{keyre_id_forward.2} parent=11 // pred_fallthru
        _
      // Predicated region
      $region49: #{keyre_id_forward.2} parent=11 // pred_check
        %p615 = pneg %p269
      $region50: #{keyre_id_forward.2} parent=11 // pred_check_branch
        %617 = sbr.rel (%p615) target = $region52
      $region51: #{keyre_id_forward.2} parent=11 // pred_region
        _
      $region52: #{keyre_id_forward.2} parent=11 // pred_fallthru
        _
      // Predicated region
      $region53: #{keyre_id_forward.2} parent=11 // pred_check
        %p618 = pneg %p290
      $region54: #{keyre_id_forward.2} parent=11 // pred_check_branch
        %620 = sbr.rel (%p618) target = $region56
      $region55: #{keyre_id_forward.2} parent=11 // pred_region
        _
      $region56: #{keyre_id_forward.2} parent=11 // pred_fallthru
        _
      // Predicated region
      $region57: #{keyre_id_forward.2} parent=11 // pred_check
        %p621 = pneg %p311
      $region58: #{keyre_id_forward.2} parent=11 // pred_check_branch
        %623 = sbr.rel (%p621) target = $region60
      $region59: #{keyre_id_forward.2} parent=11 // pred_region
        _
      $region60: #{keyre_id_forward.2} parent=11 // pred_fallthru
        _
      // Predicated region
      $region61: #{keyre_id_forward.2} parent=11 // pred_check
        %p624 = pneg %p332
      $region62: #{keyre_id_forward.2} parent=11 // pred_check_branch
        %626 = sbr.rel (%p624) target = $region64
      $region63: #{keyre_id_forward.2} parent=11 // pred_region
        _
      $region64: #{keyre_id_forward.2} parent=11 // pred_fallthru
        _
      // Predicated region
      $region65: #{keyre_id_forward.2} parent=11 // pred_check
        %p627 = pneg %p353
      $region66: #{keyre_id_forward.2} parent=11 // pred_check_branch
        %629 = sbr.rel (%p627) target = $region68
      $region67: #{keyre_id_forward.2} parent=11 // pred_region
        _
      $region68: #{keyre_id_forward.2} parent=11 // pred_fallthru
        _
      // Predicated region
      $region69: #{keyre_id_forward.2} parent=11 // pred_check
        %p630 = pneg %p374
      $region70: #{keyre_id_forward.2} parent=11 // pred_check_branch
        %632 = sbr.rel (%p630) target = $region72
      $region71: #{keyre_id_forward.2} parent=11 // pred_region
        _
      $region72: #{keyre_id_forward.2} parent=11 // pred_fallthru
        _
      // Predicated region
      $region73: #{keyre_id_forward.2} parent=11 // pred_check
        %p633 = pneg %p395
      $region74: #{keyre_id_forward.2} parent=11 // pred_check_branch
        %635 = sbr.rel (%p633) target = $region76
      $region75: #{keyre_id_forward.2} parent=11 // pred_region
        _
      $region76: #{keyre_id_forward.2} parent=11 // pred_fallthru
        _
      // Predicated region
      $region77: #{keyre_id_forward.2} parent=11 // pred_check
        %p636 = pneg %p416
      $region78: #{keyre_id_forward.2} parent=11 // pred_check_branch
        %638 = sbr.rel (%p636) target = $region80
      $region79: #{keyre_id_forward.2} parent=11 // pred_region
        _
      $region80: #{keyre_id_forward.2} parent=11 // pred_fallthru
        _
      // Predicated region
      $region81: #{keyre_id_forward.2} parent=11 // pred_check
        %p639 = pneg %p437
      $region82: #{keyre_id_forward.2} parent=11 // pred_check_branch
        %641 = sbr.rel (%p639) target = $region84
      $region83: #{keyre_id_forward.2} parent=11 // pred_region
        _
      $region84: #{keyre_id_forward.2} parent=11 // pred_fallthru
        _
      // Predicated region
      $region85: #{keyre_id_forward.2} parent=11 // pred_check
        %p642 = pneg %p458
      $region86: #{keyre_id_forward.2} parent=11 // pred_check_branch
        %644 = sbr.rel (%p642) target = $region88
      $region87: #{keyre_id_forward.2} parent=11 // pred_region
        _
      $region88: #{keyre_id_forward.2} parent=11 // pred_fallthru
        _
      // Predicated region
      $region89: #{keyre_id_forward.2} parent=11 // pred_check
        %p645 = pneg %p479
      $region90: #{keyre_id_forward.2} parent=11 // pred_check_branch
        %647 = sbr.rel (%p645) target = $region92
      $region91: #{keyre_id_forward.2} parent=11 // pred_region
        _
      $region92: #{keyre_id_forward.2} parent=11 // pred_fallthru
        _
      // Predicated region
      $region93: #{keyre_id_forward.2} parent=11 // pred_check
        %p648 = pneg %p500
      $region94: #{keyre_id_forward.2} parent=11 // pred_check_branch
        %650 = sbr.rel (%p648) target = $region96
      $region95: #{keyre_id_forward.2} parent=11 // pred_region
        _
      $region96: #{keyre_id_forward.2} parent=11 // pred_fallthru
        _
      // Predicated region
      $region97: #{keyre_id_forward.2} parent=11 // pred_check
        %p651 = pneg %p521
      $region98: #{keyre_id_forward.2} parent=11 // pred_check_branch
        %653 = sbr.rel (%p651) target = $region100
      $region99: #{keyre_id_forward.2} parent=11 // pred_region
        _
      $region100: #{keyre_id_forward.2} parent=11 // pred_fallthru
        _
    $region12: #{keyre_id_forward.2} parent=5 // pred_fallthru
      _
    %p654 = scmp.lt.s32.totalorder %s33, 2
    // Predicated region
    $region101: #{keyre_id_forward.2} parent=5 // pred_check
      %p655 = pneg %p654
    $region102: #{keyre_id_forward.2} parent=5 // pred_check_branch
      %657 = sbr.rel (%p655) target = $region104
    $region103: #{keyre_id_forward.2} parent=5 // pred_region
      // Predicated region
      $region105: #{keyre_id_forward.2} parent=103 // pred_check
        %p658 = pneg %p53
      $region106: #{keyre_id_forward.2} parent=103 // pred_check_branch
        %660 = sbr.rel (%p658) target = $region108
      $region107: #{keyre_id_forward.2} parent=103 // pred_region
        %p661 = scmp.lt.s32.totalorder %s33, 1
        %s662 = scalar_select %p661, %s33, 1
        %s663 = smul.addr %s662, 5
        %s664 = smul.addr %s663, 4
        %s665 = scalar_lea.vmem %s0, %s664
      $region108: #{keyre_id_forward.2} parent=103 // pred_fallthru
        _
    $region104: #{keyre_id_forward.2} parent=5 // pred_fallthru
      _
    %p666 = scmp.le.s32.totalorder 1, %s33
    %p667 = scmp.lt.s32.totalorder %s33, 3
    %p668 = pnand %p666, %p667
    %p669 = pneg %p668
    // Predicated region
    $region109: #{keyre_id_forward.2} parent=5 // pred_check
      _
    $region110: #{keyre_id_forward.2} parent=5 // pred_check_branch
      %671 = sbr.rel (%p668) target = $region112
    $region111: #{keyre_id_forward.2} parent=5 // pred_region
      %s672 = ssub.s32 %s33, 1
      %p673 = scmp.lt.s32.totalorder %s38, 1
      %s674 = scalar_select %p673, %s38, 1
      %s675 = smul.addr %s674, 5
      %s676 = smul.addr %s675, 4
      %s677 = scalar_lea.vmem %s0, %s676
      %p678 = pneg %p59
      %p679 = pneg %p56
      %p680 = pneg %p80
      %p681 = pneg %p77
      %p682 = pneg %p101
      %p683 = pneg %p98
      %p684 = pneg %p122
      %p685 = pneg %p119
      %p686 = pneg %p143
      %p687 = pneg %p140
      %p688 = pneg %p164
      %p689 = pneg %p161
      %p690 = pneg %p185
      %p691 = pneg %p182
      %p692 = pneg %p206
      %p693 = pneg %p203
      %p694 = pneg %p227
      %p695 = pneg %p224
      %p696 = pneg %p248
      %p697 = pneg %p245
      %p698 = pneg %p269
      %p699 = pneg %p266
      %p700 = pneg %p290
      %p701 = pneg %p287
      %p702 = pneg %p311
      %p703 = pneg %p308
      %p704 = pneg %p332
      %p705 = pneg %p329
      %p706 = pneg %p353
      %p707 = pneg %p350
      %p708 = pneg %p374
      %p709 = pneg %p371
      %p710 = pneg %p395
      %p711 = pneg %p392
      %p712 = pneg %p416
      %p713 = pneg %p413
      %p714 = pneg %p437
      %p715 = pneg %p434
      %p716 = pneg %p458
      %p717 = pneg %p455
      %p718 = pneg %p479
      %p719 = pneg %p476
      %p720 = pneg %p500
      %p721 = pneg %p497
      %p722 = pneg %p521
      %p723 = pneg %p518
      %p724 = pneg %p547
      %p725 = pneg %p544
      %p726 = scmp.lt.s32.totalorder %s38, 1
      %s727 = scalar_select %p726, %s38, 1
      %s728 = smul.addr %s727, 5
      %s729 = smul.addr %s728, 8
      %s730 = scalar_lea.vmem %s23, %s729
      %p731 = pneg %p573
      %p732 = pneg %p570
      %p733 = scmp.lt.s32.totalorder %s38, 1
      %s734 = scalar_select %p733, %s38, 1
      %s735 = scalar_lea.vmem %s24, %s734
      %p736 = scmp.lt.s32.totalorder %s38, 1
      %s737 = scalar_select %p736, %s38, 1
      %s738 = smul.addr %s737, 5
      %s739 = smul.addr %s738, 4
      %s740 = scalar_lea.vmem %s0, %s739
      %p741 = scmp.lt.s32.totalorder %s38, 1
      %s742 = scalar_select %p741, %s38, 1
      %s743 = smul.addr %s742, 5
      %s744 = smul.addr %s743, 8
      %s745 = scalar_lea.vmem %s23, %s744
      %p746 = scmp.lt.s32.totalorder %s38, 1
      %s747 = scalar_select %p746, %s38, 1
      %s748 = scalar_lea.vmem %s24, %s747
      %v750 = vld [vmem:[%s740] sm:$0xf]
      %v751 = vld [vmem:[%s740 + $0x4] sm:$0xf]
      %v752 = vld [vmem:[%s740 + $0x8] sm:$0xf]
      %v753 = vld [vmem:[%s740 + $0xc] sm:$0xf]
      %v754 = vld [vmem:[%s740 + $0x10] sm:$0x3]
      %v755 = vld [vmem:[%s2] sm:$0xf]
      %v756 = vld [vmem:[%s2 + $0x4] sm:$0xf]
      %v757 = vld [vmem:[%s2 + $0x8] sm:$0xf]
      %v758 = vld [vmem:[%s2 + $0xc] sm:$0xf]
      %v759 = vld [vmem:[%s2 + $0x10] sm:$0xf]
      %v760 = vld [vmem:[%s2 + $0x14] sm:$0xf]
      %v761 = vld [vmem:[%s1] sm:$0xff]
      %v762 = vld [vmem:[%s1 + $0x8] sm:$0xff]
      %v763 = vld [vmem:[%s1 + $0x10] sm:$0xff]
      %v764 = vld [vmem:[%s1 + $0x18] sm:$0xff]
      %v765 = vld [vmem:[%s1 + $0x20] sm:$0xf]
      %v771 = vunpack.c.l.b16 %v750
      %v772 = vunpack.c.l.b16 %v751
      %v773 = vunpack.c.l.b16 %v752
      %v774 = vunpack.c.l.b16 %v753
      %v775 = vunpack.c.l.b16 %v754
      %v776 = vpack.c.b16 %v772, %v771
      %v777 = vpack.c.b16 %v774, %v773
      %v778 = vpack.c.b16 %v775, %v775
      %v785 = vunpack.c.l.b16 %v755
      %v786 = vunpack.c.l.b16 %v756
      %v787 = vunpack.c.l.b16 %v757
      %v788 = vunpack.c.l.b16 %v758
      %v789 = vunpack.c.l.b16 %v759
      %v790 = vunpack.c.l.b16 %v760
      %v791 = vpack.c.b16 %v786, %v785
      %v792 = vpack.c.b16 %v788, %v787
      %v793 = vpack.c.b16 %v790, %v789
      %vm797 = vcmask 392192
      %v799 = vsel %vm797, %v776, 0
      %v802 = vsel %vm797, %v777, 0
      %v805 = vsel %vm797, %v778, 0
      %807 = vmatprep.subr.bf16.mxu0 0
      %808 = vmatpush1.bf16.msra.mxu0 0
      %809 = vmatprep.subr.bf16.mxu0 0
      %810 = vmatpush1.bf16.msra.mxu0 0
      %811 = vmatprep.subr.bf16.mxu0 0
      %812 = vmatpush1.bf16.msra.mxu0 0
      %813 = vmatprep.subr.bf16.mxu0 0
      %814 = vmatpush1.bf16.msra.mxu0 0
      %815 = vmatprep.subr.bf16.mxu0 0
      %816 = vmatpush1.bf16.msra.mxu0 0
      %817 = vmatprep.subr.bf16.mxu0 0
      %818 = vmatpush1.bf16.msra.mxu0 %v793
      %819 = vmatprep.subr.bf16.mxu0 0
      %820 = vmatpush1.bf16.msra.mxu0 %v792
      %821 = vmatprep.subr.bf16.mxu0 0
      %822 = vmatpush1.bf16.msra.mxu0 %v791
      %823 = vmatprep.subr.bf16.mxu0 0
      %824 = vmatpush2.bf16.msra.mxu0 0
      %825 = vmatprep.subr.bf16.mxu0 0
      %826 = vmatpush2.bf16.msra.mxu0 0
      %827 = vmatprep.subr.bf16.mxu0 0
      %828 = vmatpush2.bf16.msra.mxu0 0
      %829 = vmatprep.subr.bf16.mxu0 0
      %830 = vmatpush2.bf16.msra.mxu0 0
      %831 = vmatprep.subr.bf16.mxu0 0
      %832 = vmatpush2.bf16.msra.mxu0 0
      %833 = vmatprep.subr.bf16.mxu0 0
      %834 = vmatpush2.bf16.msra.mxu0 0
      %835 = vmatprep.subr.bf16.mxu0 0
      %836 = vmatpush2.bf16.msra.mxu0 0
      %837 = vmatprep.subr.bf16.mxu0 0
      %838 = vmatpush2.bf16.msra.mxu0 0
      %839 = vmatprep.mubr.bf16.mxu0 0
      %840 = vmatmul.mubr.bf16.gmra.mxu0 %v799
      %v841 = vpop.f32.mrf.mxu0
      %v842 = vadd.f32 %v761, %v841
      %v843 = vpop.f32.mrf.mxu0
      %v844 = vpop.f32.mrf.mxu0
      %v845 = vadd.f32 %v762, %v844
      %v846 = vpop.f32.mrf.mxu0
      %847 = vmatprep.mubr.bf16.mxu0 0
      %848 = vmatmul.mubr.bf16.gmra.mxu0 %v802
      %v849 = vpop.f32.mrf.mxu0
      %v850 = vadd.f32 %v763, %v849
      %v851 = vpop.f32.mrf.mxu0
      %v852 = vpop.f32.mrf.mxu0
      %v853 = vadd.f32 %v764, %v852
      %v854 = vpop.f32.mrf.mxu0
      %855 = vmatprep.mubr.bf16.mxu0 0
      %856 = vmatmul.mubr.bf16.gmra.mxu0 %v805
      %v857 = vpop.f32.mrf.mxu0
      %v858 = vadd.f32 %v765, %v857
      %v859 = vpop.f32.mrf.mxu0
      %v860 = vpop.f32.mrf.mxu0
      %v861 = vpop.f32.mrf.mxu0
      %862 = vdwg.mxu0
      %v863 = vlaneseq
      %v864 = vshrl.u32 %v863, 7
      %v865 = vadd.s32 %v864, 8
      %v866 = vadd.s32 %v864, 16
      %v867 = vadd.s32 %v864, 24
      %v868 = vadd.s32 %v864, 32
      %v869 = vlaneseq
      %v870 = vand.u32 %v869, 127
      %vm871 = vcmp.ge.s32.totalorder %v864, 0
      %vm872 = vcmp.ge.s32.totalorder %v865, 0
      %vm873 = vcmp.ge.s32.totalorder %v866, 0
      %vm874 = vcmp.ge.s32.totalorder %v867, 0
      %vm875 = vcmp.ge.s32.totalorder %v868, 0
      %vm876 = vcmp.lt.s32.totalorder %v864, 9
      %vm877 = vcmp.lt.s32.totalorder %v865, 9
      %vm878 = vcmp.lt.s32.totalorder %v866, 9
      %vm879 = vcmp.lt.s32.totalorder %v867, 9
      %vm880 = vcmp.lt.s32.totalorder %v868, 9
      %vm881 = vmand %vm871, %vm876
      %vm882 = vmand %vm872, %vm877
      %vm883 = vmand %vm873, %vm878
      %vm884 = vmand %vm874, %vm879
      %vm885 = vmand %vm875, %vm880
      %vm886 = vcmp.ge.s32.totalorder %v870, 0
      %vm887 = vcmp.lt.s32.totalorder %v870, 9
      %vm888 = vmand %vm886, %vm887
      %vm889 = vmand %vm881, %vm888
      %vm890 = vmand %vm882, %vm888
      %vm891 = vmand %vm883, %vm888
      %vm892 = vmand %vm884, %vm888
      %vm893 = vmand %vm885, %vm888
      %vm894 = vcmp.ge.s32.totalorder %v864, 9
      %vm895 = vcmp.ge.s32.totalorder %v865, 9
      %vm896 = vcmp.ge.s32.totalorder %v866, 9
      %vm897 = vcmp.ge.s32.totalorder %v867, 9
      %vm898 = vcmp.ge.s32.totalorder %v868, 9
      %vm899 = vcmp.lt.s32.totalorder %v864, 18
      %vm900 = vcmp.lt.s32.totalorder %v865, 18
      %vm901 = vcmp.lt.s32.totalorder %v866, 18
      %vm902 = vcmp.lt.s32.totalorder %v867, 18
      %vm903 = vcmp.lt.s32.totalorder %v868, 18
      %vm904 = vmand %vm894, %vm899
      %vm905 = vmand %vm895, %vm900
      %vm906 = vmand %vm896, %vm901
      %vm907 = vmand %vm897, %vm902
      %vm908 = vmand %vm898, %vm903
      %vm909 = vcmp.ge.s32.totalorder %v870, 9
      %vm910 = vcmp.lt.s32.totalorder %v870, 18
      %vm911 = vmand %vm909, %vm910
      %vm912 = vmand %vm904, %vm911
      %vm913 = vmand %vm905, %vm911
      %vm914 = vmand %vm906, %vm911
      %vm915 = vmand %vm907, %vm911
      %vm916 = vmand %vm908, %vm911
      %vm917 = vmor %vm889, %vm912
      %vm918 = vmor %vm890, %vm913
      %vm919 = vmor %vm891, %vm914
      %vm920 = vmor %vm892, %vm915
      %vm921 = vmor %vm893, %vm916
      %vm922 = vcmp.ge.s32.totalorder %v864, 18
      %vm923 = vcmp.ge.s32.totalorder %v865, 18
      %vm924 = vcmp.ge.s32.totalorder %v866, 18
      %vm925 = vcmp.ge.s32.totalorder %v867, 18
      %vm926 = vcmp.ge.s32.totalorder %v868, 18
      %vm927 = vcmp.lt.s32.totalorder %v864, 27
      %vm928 = vcmp.lt.s32.totalorder %v865, 27
      %vm929 = vcmp.lt.s32.totalorder %v866, 27
      %vm930 = vcmp.lt.s32.totalorder %v867, 27
      %vm931 = vcmp.lt.s32.totalorder %v868, 27
      %vm932 = vmand %vm922, %vm927
      %vm933 = vmand %vm923, %vm928
      %vm934 = vmand %vm924, %vm929
      %vm935 = vmand %vm925, %vm930
      %vm936 = vmand %vm926, %vm931
      %vm937 = vcmp.ge.s32.totalorder %v870, 18
      %vm938 = vcmp.lt.s32.totalorder %v870, 27
      %vm939 = vmand %vm937, %vm938
      %vm940 = vmand %vm932, %vm939
      %vm941 = vmand %vm933, %vm939
      %vm942 = vmand %vm934, %vm939
      %vm943 = vmand %vm935, %vm939
      %vm944 = vmand %vm936, %vm939
      %vm945 = vmor %vm917, %vm940
      %vm946 = vmor %vm918, %vm941
      %vm947 = vmor %vm919, %vm942
      %vm948 = vmor %vm920, %vm943
      %vm949 = vmor %vm921, %vm944
      %vm950 = vcmp.ge.s32.totalorder %v864, 27
      %vm951 = vcmp.ge.s32.totalorder %v865, 27
      %vm952 = vcmp.ge.s32.totalorder %v866, 27
      %vm953 = vcmp.ge.s32.totalorder %v867, 27
      %vm954 = vcmp.ge.s32.totalorder %v868, 27
      %vm955 = vcmp.lt.s32.totalorder %v864, 36
      %vm956 = vcmp.lt.s32.totalorder %v865, 36
      %vm957 = vcmp.lt.s32.totalorder %v866, 36
      %vm958 = vcmp.lt.s32.totalorder %v867, 36
      %vm959 = vcmp.lt.s32.totalorder %v868, 36
      %vm960 = vmand %vm950, %vm955
      %vm961 = vmand %vm951, %vm956
      %vm962 = vmand %vm952, %vm957
      %vm963 = vmand %vm953, %vm958
      %vm964 = vmand %vm954, %vm959
      %vm965 = vcmp.ge.s32.totalorder %v870, 27
      %vm966 = vcmp.lt.s32.totalorder %v870, 36
      %vm967 = vmand %vm965, %vm966
      %vm968 = vmand %vm960, %vm967
      %vm969 = vmand %vm961, %vm967
      %vm970 = vmand %vm962, %vm967
      %vm971 = vmand %vm963, %vm967
      %vm972 = vmand %vm964, %vm967
      %vm973 = vmor %vm945, %vm968
      %vm974 = vmor %vm946, %vm969
      %vm975 = vmor %vm947, %vm970
      %vm976 = vmor %vm948, %vm971
      %vm977 = vmor %vm949, %vm972
      %v978 = vld [vmem:[%s3] sm:$0x1]
      %v979 = vld [vmem:[%s4] sm:$0x1]
      %v980 = vld [vmem:[%s5] sm:$0xf]
      %v981 = vld [vmem:[%s5 + $0x4] sm:$0xf]
      %v982 = vld [vmem:[%s5 + $0x8] sm:$0xf]
      %v983 = vld [vmem:[%s5 + $0xc] sm:$0xf]
      %v984 = vld [vmem:[%s6] sm:$0x1]
      %v985 = vld [vmem:[%s7] sm:$0xf]
      %v986 = vld [vmem:[%s7 + $0x4] sm:$0xf]
      %v987 = vld [vmem:[%s7 + $0x8] sm:$0xf]
      %v988 = vld [vmem:[%s7 + $0xc] sm:$0xf]
      %v989 = vld [vmem:[%s8] sm:$0x1]
      %v990 = vld [vmem:[%s9] sm:$0x1]
      %v991 = vld [vmem:[%s10] sm:$0x1]
      %v992 = vld [vmem:[%s11] sm:$0xf]
      %v993 = vld [vmem:[%s11 + $0x4] sm:$0xf]
      %v994 = vld [vmem:[%s11 + $0x8] sm:$0xf]
      %v995 = vld [vmem:[%s11 + $0xc] sm:$0xf]
      %v996 = vld [vmem:[%s12] sm:$0x1]
      %v997 = vld [vmem:[%s13] sm:$0xf]
      %v998 = vld [vmem:[%s13 + $0x4] sm:$0xf]
      %v999 = vld [vmem:[%s13 + $0x8] sm:$0xf]
      %v1000 = vld [vmem:[%s13 + $0xc] sm:$0xf]
      %v1001 = vld [vmem:[%s13 + $0x10] sm:$0xf]
      %v1002 = vld [vmem:[%s13 + $0x14] sm:$0xf]
      %v1003 = vld [vmem:[%s13 + $0x18] sm:$0xf]
      %v1004 = vld [vmem:[%s13 + $0x1c] sm:$0xf]
      %v1005 = vld [vmem:[%s13 + $0x20] sm:$0xf]
      %v1006 = vld [vmem:[%s13 + $0x24] sm:$0xf]
      %v1007 = vld [vmem:[%s13 + $0x28] sm:$0xf]
      %v1008 = vld [vmem:[%s13 + $0x2c] sm:$0xf]
      %v1009 = vld [vmem:[%s13 + $0x30] sm:$0xf]
      %v1010 = vld [vmem:[%s13 + $0x34] sm:$0xf]
      %v1011 = vld [vmem:[%s13 + $0x38] sm:$0xf]
      %v1012 = vld [vmem:[%s13 + $0x3c] sm:$0xf]
      %v1013 = vld [vmem:[%s14] sm:$0x1]
      %vm1014 = vcmask 261120
      %v1015 = vsel %vm1014, %v842, 0.0
      %1016 = vadd.xlane.f32.xlu0 %v1015
      %v1017 = vpop.xlane.xlu0 %1016
      %v1018 = vsel %vm1014, %v845, 0.0
      %1019 = vadd.xlane.f32.xlu0 %v1018
      %v1020 = vpop.xlane.xlu0 %1019
      %v1021 = vsel %vm1014, %v850, 0.0
      %1022 = vadd.xlane.f32.xlu0 %v1021
      %v1023 = vpop.xlane.xlu0 %1022
      %v1024 = vsel %vm1014, %v853, 0.0
      %1025 = vadd.xlane.f32.xlu0 %v1024
      %v1026 = vpop.xlane.xlu0 %1025
      %vm1027 = vcmask 257024
      %v1028 = vsel %vm1027, %v858, 0.0
      %1029 = vadd.xlane.f32.xlu0 %v1028
      %v1030 = vpop.xlane.xlu0 %1029
      %v1031 = vrcp.pop 32.0
      %v1032 = vmul.f32 %v1017, %v1031
      %v1033 = vmul.f32 %v1020, %v1031
      %v1034 = vmul.f32 %v1023, %v1031
      %v1035 = vmul.f32 %v1026, %v1031
      %v1036 = vmul.f32 %v1030, %v1031
      %v1037 = vsub.f32 %v842, %v1032
      %v1038 = vsub.f32 %v845, %v1033
      %v1039 = vsub.f32 %v850, %v1034
      %v1040 = vsub.f32 %v853, %v1035
      %v1041 = vsub.f32 %v858, %v1036
      %v1042 = vmul.f32 %v1037, %v1037
      %v1043 = vmul.f32 %v1038, %v1038
      %v1044 = vmul.f32 %v1039, %v1039
      %v1045 = vmul.f32 %v1040, %v1040
      %v1046 = vmul.f32 %v1041, %v1041
      %v1047 = vsel %vm1014, %v1042, 0.0
      %1048 = vadd.xlane.f32.xlu0 %v1047
      %v1049 = vpop.xlane.xlu0 %1048
      %v1050 = vsel %vm1014, %v1043, 0.0
      %1051 = vadd.xlane.f32.xlu0 %v1050
      %v1052 = vpop.xlane.xlu0 %1051
      %v1053 = vsel %vm1014, %v1044, 0.0
      %1054 = vadd.xlane.f32.xlu0 %v1053
      %v1055 = vpop.xlane.xlu0 %1054
      %v1056 = vsel %vm1014, %v1045, 0.0
      %1057 = vadd.xlane.f32.xlu0 %v1056
      %v1058 = vpop.xlane.xlu0 %1057
      %v1059 = vsel %vm1027, %v1046, 0.0
      %1060 = vadd.xlane.f32.xlu0 %v1059
      %v1061 = vpop.xlane.xlu0 %1060
      %v1062 = vmul.f32 %v1049, %v1031
      %v1063 = vmul.f32 %v1052, %v1031
      %v1064 = vmul.f32 %v1055, %v1031
      %v1065 = vmul.f32 %v1058, %v1031
      %v1066 = vmul.f32 %v1061, %v1031
      %v1067 = vadd.f32 %v1062, 1e-06
      %v1068 = vadd.f32 %v1063, 1e-06
      %v1069 = vadd.f32 %v1064, 1e-06
      %v1070 = vadd.f32 %v1065, 1e-06
      %v1071 = vadd.f32 %v1066, 1e-06
      %v1072 = vrsqrt.pop %v1067
      %v1073 = vrsqrt.pop %v1068
      %v1074 = vrsqrt.pop %v1069
      %v1075 = vrsqrt.pop %v1070
      %v1076 = vrsqrt.pop %v1071
      %v1077 = vmul.f32 %v1037, %v1072
      %v1078 = vmul.f32 %v1038, %v1073
      %v1079 = vmul.f32 %v1039, %v1074
      %v1080 = vmul.f32 %v1040, %v1075
      %v1081 = vmul.f32 %v1041, %v1076
      %v1083 = vlaneseq
      %v1084 = vshrl.u32 %v1083, 7
      %v1085 = vsub.s32 0, %v1084
      %v1086 = vrot.slane %v978, %v1085
      %v1088 = vmul.f32 %v1077, %v1086
      %v1089 = vmul.f32 %v1078, %v1086
      %v1090 = vmul.f32 %v1079, %v1086
      %v1091 = vmul.f32 %v1080, %v1086
      %v1092 = vmul.f32 %v1081, %v1086
      %v1094 = vlaneseq
      %v1095 = vshrl.u32 %v1094, 7
      %v1096 = vsub.s32 0, %v1095
      %v1097 = vrot.slane %v979, %v1096
      %v1099 = vadd.f32 %v1088, %v1097
      %v1100 = vadd.f32 %v1089, %v1097
      %v1101 = vadd.f32 %v1090, %v1097
      %v1102 = vadd.f32 %v1091, %v1097
      %v1103 = vadd.f32 %v1092, %v1097
      %v1104 = vpack.c.bf16 %v1100, %v1099
      %v1105 = vpack.c.bf16 %v1102, %v1101
      %v1106 = vpack.c.bf16 %v1103, %v1103
      %v1108 = vlaneseq
      %v1109 = vshrl.u32 %v1108, 7
      %v1110 = vsub.s32 0, %v1109
      %v1111 = vrot.slane %v984, %v1110
      %v1117 = vunpack.c.l.b16 %v980
      %v1118 = vunpack.c.l.b16 %v981
      %v1119 = vunpack.c.l.b16 %v982
      %v1120 = vunpack.c.l.b16 %v983
      %v1121 = vpack.c.b16 %v1118, %v1117
      %v1122 = vpack.c.b16 %v1120, %v1119
      %v1126 = vsel %vm1014, %v1104, 0
      %v1129 = vsel %vm1014, %v1105, 0
      %v1132 = vsel %vm1014, %v1106, 0
      %1134 = vmatprep.subr.bf16.mxu0 0
      %1135 = vmatpush1.bf16.msra.mxu0 0
      %1136 = vmatprep.subr.bf16.mxu0 0
      %1137 = vmatpush1.bf16.msra.mxu0 0
      %1138 = vmatprep.subr.bf16.mxu0 0
      %1139 = vmatpush1.bf16.msra.mxu0 0
      %1140 = vmatprep.subr.bf16.mxu0 0
      %1141 = vmatpush1.bf16.msra.mxu0 0
      %1142 = vmatprep.subr.bf16.mxu0 0
      %1143 = vmatpush1.bf16.msra.mxu0 0
      %1144 = vmatprep.subr.bf16.mxu0 0
      %1145 = vmatpush1.bf16.msra.mxu0 0
      %1146 = vmatprep.subr.bf16.mxu0 0
      %1147 = vmatpush1.bf16.msra.mxu0 %v1122
      %1148 = vmatprep.subr.bf16.mxu0 0
      %1149 = vmatpush1.bf16.msra.mxu0 %v1121
      %1150 = vmatprep.subr.bf16.mxu0 0
      %1151 = vmatpush2.bf16.msra.mxu0 0
      %1152 = vmatprep.subr.bf16.mxu0 0
      %1153 = vmatpush2.bf16.msra.mxu0 0
      %1154 = vmatprep.subr.bf16.mxu0 0
      %1155 = vmatpush2.bf16.msra.mxu0 0
      %1156 = vmatprep.subr.bf16.mxu0 0
      %1157 = vmatpush2.bf16.msra.mxu0 0
      %1158 = vmatprep.subr.bf16.mxu0 0
      %1159 = vmatpush2.bf16.msra.mxu0 0
      %1160 = vmatprep.subr.bf16.mxu0 0
      %1161 = vmatpush2.bf16.msra.mxu0 0
      %1162 = vmatprep.subr.bf16.mxu0 0
      %1163 = vmatpush2.bf16.msra.mxu0 0
      %1164 = vmatprep.subr.bf16.mxu0 0
      %1165 = vmatpush2.bf16.msra.mxu0 0
      %1166 = vmatprep.mubr.bf16.mxu0 0
      %1167 = vmatmul.mubr.bf16.gmra.mxu0 %v1126
      %v1168 = vpop.f32.mrf.mxu0
      %v1169 = vadd.f32 %v1111, %v1168
      %v1170 = vpop.f32.mrf.mxu0
      %v1171 = vpop.f32.mrf.mxu0
      %v1172 = vadd.f32 %v1111, %v1171
      %v1173 = vpop.f32.mrf.mxu0
      %1174 = vmatprep.mubr.bf16.mxu0 0
      %1175 = vmatmul.mubr.bf16.gmra.mxu0 %v1129
      %v1176 = vpop.f32.mrf.mxu0
      %v1177 = vadd.f32 %v1111, %v1176
      %v1178 = vpop.f32.mrf.mxu0
      %v1179 = vpop.f32.mrf.mxu0
      %v1180 = vadd.f32 %v1111, %v1179
      %v1181 = vpop.f32.mrf.mxu0
      %1182 = vmatprep.mubr.bf16.mxu0 0
      %1183 = vmatmul.mubr.bf16.gmra.mxu0 %v1132
      %v1184 = vpop.f32.mrf.mxu0
      %v1185 = vadd.f32 %v1111, %v1184
      %v1186 = vpop.f32.mrf.mxu0
      %v1187 = vpop.f32.mrf.mxu0
      %v1188 = vpop.f32.mrf.mxu0
      %1189 = vdwg.mxu0
      %v1190 = vpack.c.bf16 %v1172, %v1169
      %v1191 = vpack.c.bf16 %v1180, %v1177
      %v1192 = vpack.c.bf16 %v1185, %v1185
      %1196 = vrot.lane.b32.xlu0 %v1190, 96
      %v1197 = vpop.permute.xlu0 %1196
      %1198 = vrot.lane.b32.xlu0 %v1191, 96
      %v1199 = vpop.permute.xlu0 %1198
      %1200 = vrot.lane.b32.xlu0 %v1192, 96
      %v1201 = vpop.permute.xlu0 %1200
      %vm1202 = vcmask 64512
      %v1204 = vsel %vm1202, %v1190, 0
      %v1207 = vsel %vm1202, %v1191, 0
      %v1210 = vsel %vm1202, %v1192, 0
      %v1213 = vsel %vm1202, %v1197, 0
      %v1216 = vsel %vm1202, %v1199, 0
      %v1219 = vsel %vm1202, %v1201, 0
      %1221 = vmatprep.subr.bf16.mxu0 0
      %1222 = vmatpush1.bf16.xpose.msra.mxu0 0
      %1223 = vmatprep.subr.bf16.mxu0 0
      %1224 = vmatpush1.bf16.xpose.msra.mxu0 0
      %1225 = vmatprep.subr.bf16.mxu0 0
      %1226 = vmatpush1.bf16.xpose.msra.mxu0 0
      %1227 = vmatprep.subr.bf16.mxu0 0
      %1228 = vmatpush1.bf16.xpose.msra.mxu0 0
      %1229 = vmatprep.subr.bf16.mxu0 0
      %1230 = vmatpush1.bf16.xpose.msra.mxu0 0
      %1231 = vmatprep.subr.bf16.mxu0 0
      %1232 = vmatpush1.bf16.xpose.msra.mxu0 %v1219
      %1233 = vmatprep.subr.bf16.mxu0 0
      %1234 = vmatpush1.bf16.xpose.msra.mxu0 %v1216
      %1235 = vmatprep.subr.bf16.mxu0 0
      %1236 = vmatpush1.bf16.xpose.msra.mxu0 %v1213
      %1237 = vmatprep.subr.bf16.mxu0 0
      %1238 = vmatpush2.bf16.xpose.msra.mxu0 0
      %1239 = vmatprep.subr.bf16.mxu0 0
      %1240 = vmatpush2.bf16.xpose.msra.mxu0 0
      %1241 = vmatprep.subr.bf16.mxu0 0
      %1242 = vmatpush2.bf16.xpose.msra.mxu0 0
      %1243 = vmatprep.subr.bf16.mxu0 0
      %1244 = vmatpush2.bf16.xpose.msra.mxu0 0
      %1245 = vmatprep.subr.bf16.mxu0 0
      %1246 = vmatpush2.bf16.xpose.msra.mxu0 0
      %1247 = vmatprep.subr.bf16.mxu0 0
      %1248 = vmatpush2.bf16.xpose.msra.mxu0 0
      %1249 = vmatprep.subr.bf16.mxu0 0
      %1250 = vmatpush2.bf16.xpose.msra.mxu0 0
      %1251 = vmatprep.subr.bf16.mxu0 0
      %1252 = vmatpush2.bf16.xpose.msra.mxu0 0
      %1253 = vmatprep.mubr.bf16.mxu0 0
      %1254 = vmatmul.mubr.bf16.gmra.mxu0 %v1204
      %v1255 = vpop.f32.mrf.mxu0
      %v1256 = vadd.f32 0.0, %v1255
      %v1257 = vpop.f32.mrf.mxu0
      %v1258 = vpop.f32.mrf.mxu0
      %v1259 = vadd.f32 0.0, %v1258
      %v1260 = vpop.f32.mrf.mxu0
      %1261 = vmatprep.mubr.bf16.mxu0 0
      %1262 = vmatmul.mubr.bf16.gmra.mxu0 %v1207
      %v1263 = vpop.f32.mrf.mxu0
      %v1264 = vadd.f32 0.0, %v1263
      %v1265 = vpop.f32.mrf.mxu0
      %v1266 = vpop.f32.mrf.mxu0
      %v1267 = vadd.f32 0.0, %v1266
      %v1268 = vpop.f32.mrf.mxu0
      %1269 = vmatprep.mubr.bf16.mxu0 0
      %1270 = vmatmul.mubr.bf16.gmra.mxu0 %v1210
      %v1271 = vpop.f32.mrf.mxu0
      %v1272 = vadd.f32 0.0, %v1271
      %v1273 = vpop.f32.mrf.mxu0
      %v1274 = vpop.f32.mrf.mxu0
      %v1275 = vpop.f32.mrf.mxu0
      %1276 = vdwg.mxu0
      %v1277 = vmul.f32 %v1256, 0.35355338
      %v1278 = vmul.f32 %v1259, 0.35355338
      %v1279 = vmul.f32 %v1264, 0.35355338
      %v1280 = vmul.f32 %v1267, 0.35355338
      %v1281 = vmul.f32 %v1272, 0.35355338
      %v1282 = vsel %vm973, %v1277, -1e+30
      %v1283 = vsel %vm974, %v1278, -1e+30
      %v1284 = vsel %vm975, %v1279, -1e+30
      %v1285 = vsel %vm976, %v1280, -1e+30
      %v1286 = vsel %vm977, %v1281, -1e+30
      %vm1287 = vcmask 293888
      %v1288 = vsel %vm1287, %v1282, -inf
      %1289 = vmax.xlane.f32.xlu0 %v1288
      %v1290 = vpop.xlane.xlu0 %1289
      %v1291 = vsel %vm1287, %v1283, -inf
      %1292 = vmax.xlane.f32.xlu0 %v1291
      %v1293 = vpop.xlane.xlu0 %1292
      %v1294 = vsel %vm1287, %v1284, -inf
      %1295 = vmax.xlane.f32.xlu0 %v1294
      %v1296 = vpop.xlane.xlu0 %1295
      %v1297 = vsel %vm1287, %v1285, -inf
      %1298 = vmax.xlane.f32.xlu0 %v1297
      %v1299 = vpop.xlane.xlu0 %1298
      %vm1300 = vcmask 289792
      %v1301 = vsel %vm1300, %v1286, -inf
      %1302 = vmax.xlane.f32.xlu0 %v1301
      %v1303 = vpop.xlane.xlu0 %1302
      %v1304 = vsub.f32 %v1282, %v1290
      %v1305 = vsub.f32 %v1283, %v1293
      %v1306 = vsub.f32 %v1284, %v1296
      %v1307 = vsub.f32 %v1285, %v1299
      %v1308 = vsub.f32 %v1286, %v1303
      %v1309 = vmul.f32 %v1304, 1.442695
      %v1310 = vpow.pop %v1309
      %v1311 = vmul.f32 %v1305, 1.442695
      %v1312 = vpow.pop %v1311
      %v1313 = vmul.f32 %v1306, 1.442695
      %v1314 = vpow.pop %v1313
      %v1315 = vmul.f32 %v1307, 1.442695
      %v1316 = vpow.pop %v1315
      %v1317 = vmul.f32 %v1308, 1.442695
      %v1318 = vpow.pop %v1317
      %v1319 = vsel %vm1287, %v1310, 0.0
      %1320 = vadd.xlane.f32.xlu0 %v1319
      %v1321 = vpop.xlane.xlu0 %1320
      %v1322 = vsel %vm1287, %v1312, 0.0
      %1323 = vadd.xlane.f32.xlu0 %v1322
      %v1324 = vpop.xlane.xlu0 %1323
      %v1325 = vsel %vm1287, %v1314, 0.0
      %1326 = vadd.xlane.f32.xlu0 %v1325
      %v1327 = vpop.xlane.xlu0 %1326
      %v1328 = vsel %vm1287, %v1316, 0.0
      %1329 = vadd.xlane.f32.xlu0 %v1328
      %v1330 = vpop.xlane.xlu0 %1329
      %v1331 = vsel %vm1300, %v1318, 0.0
      %1332 = vadd.xlane.f32.xlu0 %v1331
      %v1333 = vpop.xlane.xlu0 %1332
      %v1334 = vrcp.pop %v1321
      %v1335 = vrcp.pop %v1324
      %v1336 = vrcp.pop %v1327
      %v1337 = vrcp.pop %v1330
      %v1338 = vrcp.pop %v1333
      %v1339 = vmul.f32 %v1310, %v1334
      %v1340 = vmul.f32 %v1312, %v1335
      %v1341 = vmul.f32 %v1314, %v1336
      %v1342 = vmul.f32 %v1316, %v1337
      %v1343 = vmul.f32 %v1318, %v1338
      %v1344 = vpack.c.bf16 %v1340, %v1339
      %v1345 = vpack.c.bf16 %v1342, %v1341
      %v1346 = vpack.c.bf16 %v1343, %v1343
      %1347 = vrot.lane.b32.xlu0 %v1190, 64
      %v1348 = vpop.permute.xlu0 %1347
      %1349 = vrot.lane.b32.xlu0 %v1191, 64
      %v1350 = vpop.permute.xlu0 %1349
      %1351 = vrot.lane.b32.xlu0 %v1192, 64
      %v1352 = vpop.permute.xlu0 %1351
      %v1356 = vsel %vm1287, %v1344, 0
      %v1359 = vsel %vm1287, %v1345, 0
      %v1362 = vsel %vm1287, %v1346, 0
      %vm1364 = vcmask 1041408
      %v1366 = vsel %vm1364, %v1352, 0
      %1368 = vmatprep.subr.bf16.mxu0 0
      %1369 = vmatpush1.bf16.msra.mxu0 0
      %1370 = vmatprep.subr.bf16.mxu0 0
      %1371 = vmatpush1.bf16.msra.mxu0 0
      %1372 = vmatprep.subr.bf16.mxu0 0
      %1373 = vmatpush1.bf16.msra.mxu0 0
      %1374 = vmatprep.subr.bf16.mxu0 0
      %1375 = vmatpush1.bf16.msra.mxu0 0
      %1376 = vmatprep.subr.bf16.mxu0 0
      %1377 = vmatpush1.bf16.msra.mxu0 0
      %1378 = vmatprep.subr.bf16.mxu0 0
      %1379 = vmatpush1.bf16.msra.mxu0 %v1366
      %1380 = vmatprep.subr.bf16.mxu0 0
      %1381 = vmatpush1.bf16.msra.mxu0 %v1350
      %1382 = vmatprep.subr.bf16.mxu0 0
      %1383 = vmatpush1.bf16.msra.mxu0 %v1348
      %1384 = vmatprep.subr.bf16.mxu0 0
      %1385 = vmatpush2.bf16.msra.mxu0 0
      %1386 = vmatprep.subr.bf16.mxu0 0
      %1387 = vmatpush2.bf16.msra.mxu0 0
      %1388 = vmatprep.subr.bf16.mxu0 0
      %1389 = vmatpush2.bf16.msra.mxu0 0
      %1390 = vmatprep.subr.bf16.mxu0 0
      %1391 = vmatpush2.bf16.msra.mxu0 0
      %1392 = vmatprep.subr.bf16.mxu0 0
      %1393 = vmatpush2.bf16.msra.mxu0 0
      %1394 = vmatprep.subr.bf16.mxu0 0
      %1395 = vmatpush2.bf16.msra.mxu0 0
      %1396 = vmatprep.subr.bf16.mxu0 0
      %1397 = vmatpush2.bf16.msra.mxu0 0
      %1398 = vmatprep.subr.bf16.mxu0 0
      %1399 = vmatpush2.bf16.msra.mxu0 0
      %1400 = vmatprep.mubr.bf16.mxu0 0
      %1401 = vmatmul.mubr.bf16.gmra.mxu0 %v1356
      %v1402 = vpop.f32.mrf.mxu0
      %v1403 = vadd.f32 0.0, %v1402
      %v1404 = vpop.f32.mrf.mxu0
      %v1405 = vpop.f32.mrf.mxu0
      %v1406 = vadd.f32 0.0, %v1405
      %v1407 = vpop.f32.mrf.mxu0
      %1408 = vmatprep.mubr.bf16.mxu0 0
      %1409 = vmatmul.mubr.bf16.gmra.mxu0 %v1359
      %v1410 = vpop.f32.mrf.mxu0
      %v1411 = vadd.f32 0.0, %v1410
      %v1412 = vpop.f32.mrf.mxu0
      %v1413 = vpop.f32.mrf.mxu0
      %v1414 = vadd.f32 0.0, %v1413
      %v1415 = vpop.f32.mrf.mxu0
      %1416 = vmatprep.mubr.bf16.mxu0 0
      %1417 = vmatmul.mubr.bf16.gmra.mxu0 %v1362
      %v1418 = vpop.f32.mrf.mxu0
      %v1419 = vadd.f32 0.0, %v1418
      %v1420 = vpop.f32.mrf.mxu0
      %v1421 = vpop.f32.mrf.mxu0
      %v1422 = vpop.f32.mrf.mxu0
      %1423 = vdwg.mxu0
      %1424 = vrot.lane.b32.xlu0 %v1190, 120
      %v1425 = vpop.permute.xlu0 %1424
      %1426 = vrot.lane.b32.xlu0 %v1191, 120
      %v1427 = vpop.permute.xlu0 %1426
      %1428 = vrot.lane.b32.xlu0 %v1192, 120
      %v1429 = vpop.permute.xlu0 %1428
      %1430 = vrot.lane.b32.xlu0 %v1190, 88
      %v1431 = vpop.permute.xlu0 %1430
      %1432 = vrot.lane.b32.xlu0 %v1191, 88
      %v1433 = vpop.permute.xlu0 %1432
      %1434 = vrot.lane.b32.xlu0 %v1192, 88
      %v1435 = vpop.permute.xlu0 %1434
      %v1437 = vsel %vm1202, %v1425, 0
      %v1440 = vsel %vm1202, %v1427, 0
      %v1443 = vsel %vm1202, %v1429, 0
      %v1446 = vsel %vm1202, %v1431, 0
      %v1449 = vsel %vm1202, %v1433, 0
      %v1452 = vsel %vm1202, %v1435, 0
      %1454 = vmatprep.subr.bf16.mxu0 0
      %1455 = vmatpush1.bf16.xpose.msra.mxu0 0
      %1456 = vmatprep.subr.bf16.mxu0 0
      %1457 = vmatpush1.bf16.xpose.msra.mxu0 0
      %1458 = vmatprep.subr.bf16.mxu0 0
      %1459 = vmatpush1.bf16.xpose.msra.mxu0 0
      %1460 = vmatprep.subr.bf16.mxu0 0
      %1461 = vmatpush1.bf16.xpose.msra.mxu0 0
      %1462 = vmatprep.subr.bf16.mxu0 0
      %1463 = vmatpush1.bf16.xpose.msra.mxu0 0
      %1464 = vmatprep.subr.bf16.mxu0 0
      %1465 = vmatpush1.bf16.xpose.msra.mxu0 %v1452
      %1466 = vmatprep.subr.bf16.mxu0 0
      %1467 = vmatpush1.bf16.xpose.msra.mxu0 %v1449
      %1468 = vmatprep.subr.bf16.mxu0 0
      %1469 = vmatpush1.bf16.xpose.msra.mxu0 %v1446
      %1470 = vmatprep.subr.bf16.mxu0 0
      %1471 = vmatpush2.bf16.xpose.msra.mxu0 0
      %1472 = vmatprep.subr.bf16.mxu0 0
      %1473 = vmatpush2.bf16.xpose.msra.mxu0 0
      %1474 = vmatprep.subr.bf16.mxu0 0
      %1475 = vmatpush2.bf16.xpose.msra.mxu0 0
      %1476 = vmatprep.subr.bf16.mxu0 0
      %1477 = vmatpush2.bf16.xpose.msra.mxu0 0
      %1478 = vmatprep.subr.bf16.mxu0 0
      %1479 = vmatpush2.bf16.xpose.msra.mxu0 0
      %1480 = vmatprep.subr.bf16.mxu0 0
      %1481 = vmatpush2.bf16.xpose.msra.mxu0 0
      %1482 = vmatprep.subr.bf16.mxu0 0
      %1483 = vmatpush2.bf16.xpose.msra.mxu0 0
      %1484 = vmatprep.subr.bf16.mxu0 0
      %1485 = vmatpush2.bf16.xpose.msra.mxu0 0
      %1486 = vmatprep.mubr.bf16.mxu0 0
      %1487 = vmatmul.mubr.bf16.gmra.mxu0 %v1437
      %v1488 = vpop.f32.mrf.mxu0
      %v1489 = vadd.f32 0.0, %v1488
      %v1490 = vpop.f32.mrf.mxu0
      %v1491 = vpop.f32.mrf.mxu0
      %v1492 = vadd.f32 0.0, %v1491
      %v1493 = vpop.f32.mrf.mxu0
      %1494 = vmatprep.mubr.bf16.mxu0 0
      %1495 = vmatmul.mubr.bf16.gmra.mxu0 %v1440
      %v1496 = vpop.f32.mrf.mxu0
      %v1497 = vadd.f32 0.0, %v1496
      %v1498 = vpop.f32.mrf.mxu0
      %v1499 = vpop.f32.mrf.mxu0
      %v1500 = vadd.f32 0.0, %v1499
      %v1501 = vpop.f32.mrf.mxu0
      %1502 = vmatprep.mubr.bf16.mxu0 0
      %1503 = vmatmul.mubr.bf16.gmra.mxu0 %v1443
      %v1504 = vpop.f32.mrf.mxu0
      %v1505 = vadd.f32 0.0, %v1504
      %v1506 = vpop.f32.mrf.mxu0
      %v1507 = vpop.f32.mrf.mxu0
      %v1508 = vpop.f32.mrf.mxu0
      %1509 = vdwg.mxu0
      %v1510 = vmul.f32 %v1489, 0.35355338
      %v1511 = vmul.f32 %v1492, 0.35355338
      %v1512 = vmul.f32 %v1497, 0.35355338
      %v1513 = vmul.f32 %v1500, 0.35355338
      %v1514 = vmul.f32 %v1505, 0.35355338
      %v1515 = vsel %vm973, %v1510, -1e+30
      %v1516 = vsel %vm974, %v1511, -1e+30
      %v1517 = vsel %vm975, %v1512, -1e+30
      %v1518 = vsel %vm976, %v1513, -1e+30
      %v1519 = vsel %vm977, %v1514, -1e+30
      %v1520 = vsel %vm1287, %v1515, -inf
      %1521 = vmax.xlane.f32.xlu0 %v1520
      %v1522 = vpop.xlane.xlu0 %1521
      %v1523 = vsel %vm1287, %v1516, -inf
      %1524 = vmax.xlane.f32.xlu0 %v1523
      %v1525 = vpop.xlane.xlu0 %1524
      %v1526 = vsel %vm1287, %v1517, -inf
      %1527 = vmax.xlane.f32.xlu0 %v1526
      %v1528 = vpop.xlane.xlu0 %1527
      %v1529 = vsel %vm1287, %v1518, -inf
      %1530 = vmax.xlane.f32.xlu0 %v1529
      %v1531 = vpop.xlane.xlu0 %1530
      %v1532 = vsel %vm1300, %v1519, -inf
      %1533 = vmax.xlane.f32.xlu0 %v1532
      %v1534 = vpop.xlane.xlu0 %1533
      %v1535 = vsub.f32 %v1515, %v1522
      %v1536 = vsub.f32 %v1516, %v1525
      %v1537 = vsub.f32 %v1517, %v1528
      %v1538 = vsub.f32 %v1518, %v1531
      %v1539 = vsub.f32 %v1519, %v1534
      %v1540 = vmul.f32 %v1535, 1.442695
      %v1541 = vpow.pop %v1540
      %v1542 = vmul.f32 %v1536, 1.442695
      %v1543 = vpow.pop %v1542
      %v1544 = vmul.f32 %v1537, 1.442695
      %v1545 = vpow.pop %v1544
      %v1546 = vmul.f32 %v1538, 1.442695
      %v1547 = vpow.pop %v1546
      %v1548 = vmul.f32 %v1539, 1.442695
      %v1549 = vpow.pop %v1548
      %v1550 = vsel %vm1287, %v1541, 0.0
      %1551 = vadd.xlane.f32.xlu0 %v1550
      %v1552 = vpop.xlane.xlu0 %1551
      %v1553 = vsel %vm1287, %v1543, 0.0
      %1554 = vadd.xlane.f32.xlu0 %v1553
      %v1555 = vpop.xlane.xlu0 %1554
      %v1556 = vsel %vm1287, %v1545, 0.0
      %1557 = vadd.xlane.f32.xlu0 %v1556
      %v1558 = vpop.xlane.xlu0 %1557
      %v1559 = vsel %vm1287, %v1547, 0.0
      %1560 = vadd.xlane.f32.xlu0 %v1559
      %v1561 = vpop.xlane.xlu0 %1560
      %v1562 = vsel %vm1300, %v1549, 0.0
      %1563 = vadd.xlane.f32.xlu0 %v1562
      %v1564 = vpop.xlane.xlu0 %1563
      %v1565 = vrcp.pop %v1552
      %v1566 = vrcp.pop %v1555
      %v1567 = vrcp.pop %v1558
      %v1568 = vrcp.pop %v1561
      %v1569 = vrcp.pop %v1564
      %v1570 = vmul.f32 %v1541, %v1565
      %v1571 = vmul.f32 %v1543, %v1566
      %v1572 = vmul.f32 %v1545, %v1567
      %v1573 = vmul.f32 %v1547, %v1568
      %v1574 = vmul.f32 %v1549, %v1569
      %v1575 = vpack.c.bf16 %v1571, %v1570
      %v1576 = vpack.c.bf16 %v1573, %v1572
      %v1577 = vpack.c.bf16 %v1574, %v1574
      %1578 = vrot.lane.b32.xlu0 %v1190, 56
      %v1579 = vpop.permute.xlu0 %1578
      %1580 = vrot.lane.b32.xlu0 %v1191, 56
      %v1581 = vpop.permute.xlu0 %1580
      %1582 = vrot.lane.b32.xlu0 %v1192, 56
      %v1583 = vpop.permute.xlu0 %1582
      %v1587 = vsel %vm1287, %v1575, 0
      %v1590 = vsel %vm1287, %v1576, 0
      %v1593 = vsel %vm1287, %v1577, 0
      %v1596 = vsel %vm1364, %v1583, 0
      %1598 = vmatprep.subr.bf16.mxu0 0
      %1599 = vmatpush1.bf16.msra.mxu0 0
      %1600 = vmatprep.subr.bf16.mxu0 0
      %1601 = vmatpush1.bf16.msra.mxu0 0
      %1602 = vmatprep.subr.bf16.mxu0 0
      %1603 = vmatpush1.bf16.msra.mxu0 0
      %1604 = vmatprep.subr.bf16.mxu0 0
      %1605 = vmatpush1.bf16.msra.mxu0 0
      %1606 = vmatprep.subr.bf16.mxu0 0
      %1607 = vmatpush1.bf16.msra.mxu0 0
      %1608 = vmatprep.subr.bf16.mxu0 0
      %1609 = vmatpush1.bf16.msra.mxu0 %v1596
      %1610 = vmatprep.subr.bf16.mxu0 0
      %1611 = vmatpush1.bf16.msra.mxu0 %v1581
      %1612 = vmatprep.subr.bf16.mxu0 0
      %1613 = vmatpush1.bf16.msra.mxu0 %v1579
      %1614 = vmatprep.subr.bf16.mxu0 0
      %1615 = vmatpush2.bf16.msra.mxu0 0
      %1616 = vmatprep.subr.bf16.mxu0 0
      %1617 = vmatpush2.bf16.msra.mxu0 0
      %1618 = vmatprep.subr.bf16.mxu0 0
      %1619 = vmatpush2.bf16.msra.mxu0 0
      %1620 = vmatprep.subr.bf16.mxu0 0
      %1621 = vmatpush2.bf16.msra.mxu0 0
      %1622 = vmatprep.subr.bf16.mxu0 0
      %1623 = vmatpush2.bf16.msra.mxu0 0
      %1624 = vmatprep.subr.bf16.mxu0 0
      %1625 = vmatpush2.bf16.msra.mxu0 0
      %1626 = vmatprep.subr.bf16.mxu0 0
      %1627 = vmatpush2.bf16.msra.mxu0 0
      %1628 = vmatprep.subr.bf16.mxu0 0
      %1629 = vmatpush2.bf16.msra.mxu0 0
      %1630 = vmatprep.mubr.bf16.mxu0 0
      %1631 = vmatmul.mubr.bf16.gmra.mxu0 %v1587
      %v1632 = vpop.f32.mrf.mxu0
      %v1633 = vadd.f32 0.0, %v1632
      %v1634 = vpop.f32.mrf.mxu0
      %v1635 = vpop.f32.mrf.mxu0
      %v1636 = vadd.f32 0.0, %v1635
      %v1637 = vpop.f32.mrf.mxu0
      %1638 = vmatprep.mubr.bf16.mxu0 0
      %1639 = vmatmul.mubr.bf16.gmra.mxu0 %v1590
      %v1640 = vpop.f32.mrf.mxu0
      %v1641 = vadd.f32 0.0, %v1640
      %v1642 = vpop.f32.mrf.mxu0
      %v1643 = vpop.f32.mrf.mxu0
      %v1644 = vadd.f32 0.0, %v1643
      %v1645 = vpop.f32.mrf.mxu0
      %1646 = vmatprep.mubr.bf16.mxu0 0
      %1647 = vmatmul.mubr.bf16.gmra.mxu0 %v1593
      %v1648 = vpop.f32.mrf.mxu0
      %v1649 = vadd.f32 0.0, %v1648
      %v1650 = vpop.f32.mrf.mxu0
      %v1651 = vpop.f32.mrf.mxu0
      %v1652 = vpop.f32.mrf.mxu0
      %1653 = vdwg.mxu0
      %1654 = vrot.lane.b32.xlu0 %v1190, 112
      %v1655 = vpop.permute.xlu0 %1654
      %1656 = vrot.lane.b32.xlu0 %v1191, 112
      %v1657 = vpop.permute.xlu0 %1656
      %1658 = vrot.lane.b32.xlu0 %v1192, 112
      %v1659 = vpop.permute.xlu0 %1658
      %1660 = vrot.lane.b32.xlu0 %v1190, 80
      %v1661 = vpop.permute.xlu0 %1660
      %1662 = vrot.lane.b32.xlu0 %v1191, 80
      %v1663 = vpop.permute.xlu0 %1662
      %1664 = vrot.lane.b32.xlu0 %v1192, 80
      %v1665 = vpop.permute.xlu0 %1664
      %v1667 = vsel %vm1202, %v1655, 0
      %v1670 = vsel %vm1202, %v1657, 0
      %v1673 = vsel %vm1202, %v1659, 0
      %v1676 = vsel %vm1202, %v1661, 0
      %v1679 = vsel %vm1202, %v1663, 0
      %v1682 = vsel %vm1202, %v1665, 0
      %1684 = vmatprep.subr.bf16.mxu0 0
      %1685 = vmatpush1.bf16.xpose.msra.mxu0 0
      %1686 = vmatprep.subr.bf16.mxu0 0
      %1687 = vmatpush1.bf16.xpose.msra.mxu0 0
      %1688 = vmatprep.subr.bf16.mxu0 0
      %1689 = vmatpush1.bf16.xpose.msra.mxu0 0
      %1690 = vmatprep.subr.bf16.mxu0 0
      %1691 = vmatpush1.bf16.xpose.msra.mxu0 0
      %1692 = vmatprep.subr.bf16.mxu0 0
      %1693 = vmatpush1.bf16.xpose.msra.mxu0 0
      %1694 = vmatprep.subr.bf16.mxu0 0
      %1695 = vmatpush1.bf16.xpose.msra.mxu0 %v1682
      %1696 = vmatprep.subr.bf16.mxu0 0
      %1697 = vmatpush1.bf16.xpose.msra.mxu0 %v1679
      %1698 = vmatprep.subr.bf16.mxu0 0
      %1699 = vmatpush1.bf16.xpose.msra.mxu0 %v1676
      %1700 = vmatprep.subr.bf16.mxu0 0
      %1701 = vmatpush2.bf16.xpose.msra.mxu0 0
      %1702 = vmatprep.subr.bf16.mxu0 0
      %1703 = vmatpush2.bf16.xpose.msra.mxu0 0
      %1704 = vmatprep.subr.bf16.mxu0 0
      %1705 = vmatpush2.bf16.xpose.msra.mxu0 0
      %1706 = vmatprep.subr.bf16.mxu0 0
      %1707 = vmatpush2.bf16.xpose.msra.mxu0 0
      %1708 = vmatprep.subr.bf16.mxu0 0
      %1709 = vmatpush2.bf16.xpose.msra.mxu0 0
      %1710 = vmatprep.subr.bf16.mxu0 0
      %1711 = vmatpush2.bf16.xpose.msra.mxu0 0
      %1712 = vmatprep.subr.bf16.mxu0 0
      %1713 = vmatpush2.bf16.xpose.msra.mxu0 0
      %1714 = vmatprep.subr.bf16.mxu0 0
      %1715 = vmatpush2.bf16.xpose.msra.mxu0 0
      %1716 = vmatprep.mubr.bf16.mxu0 0
      %1717 = vmatmul.mubr.bf16.gmra.mxu0 %v1667
      %v1718 = vpop.f32.mrf.mxu0
      %v1719 = vadd.f32 0.0, %v1718
      %v1720 = vpop.f32.mrf.mxu0
      %v1721 = vpop.f32.mrf.mxu0
      %v1722 = vadd.f32 0.0, %v1721
      %v1723 = vpop.f32.mrf.mxu0
      %1724 = vmatprep.mubr.bf16.mxu0 0
      %1725 = vmatmul.mubr.bf16.gmra.mxu0 %v1670
      %v1726 = vpop.f32.mrf.mxu0
      %v1727 = vadd.f32 0.0, %v1726
      %v1728 = vpop.f32.mrf.mxu0
      %v1729 = vpop.f32.mrf.mxu0
      %v1730 = vadd.f32 0.0, %v1729
      %v1731 = vpop.f32.mrf.mxu0
      %1732 = vmatprep.mubr.bf16.mxu0 0
      %1733 = vmatmul.mubr.bf16.gmra.mxu0 %v1673
      %v1734 = vpop.f32.mrf.mxu0
      %v1735 = vadd.f32 0.0, %v1734
      %v1736 = vpop.f32.mrf.mxu0
      %v1737 = vpop.f32.mrf.mxu0
      %v1738 = vpop.f32.mrf.mxu0
      %1739 = vdwg.mxu0
      %v1740 = vmul.f32 %v1719, 0.35355338
      %v1741 = vmul.f32 %v1722, 0.35355338
      %v1742 = vmul.f32 %v1727, 0.35355338
      %v1743 = vmul.f32 %v1730, 0.35355338
      %v1744 = vmul.f32 %v1735, 0.35355338
      %v1745 = vsel %vm973, %v1740, -1e+30
      %v1746 = vsel %vm974, %v1741, -1e+30
      %v1747 = vsel %vm975, %v1742, -1e+30
      %v1748 = vsel %vm976, %v1743, -1e+30
      %v1749 = vsel %vm977, %v1744, -1e+30
      %v1750 = vsel %vm1287, %v1745, -inf
      %1751 = vmax.xlane.f32.xlu0 %v1750
      %v1752 = vpop.xlane.xlu0 %1751
      %v1753 = vsel %vm1287, %v1746, -inf
      %1754 = vmax.xlane.f32.xlu0 %v1753
      %v1755 = vpop.xlane.xlu0 %1754
      %v1756 = vsel %vm1287, %v1747, -inf
      %1757 = vmax.xlane.f32.xlu0 %v1756
      %v1758 = vpop.xlane.xlu0 %1757
      %v1759 = vsel %vm1287, %v1748, -inf
      %1760 = vmax.xlane.f32.xlu0 %v1759
      %v1761 = vpop.xlane.xlu0 %1760
      %v1762 = vsel %vm1300, %v1749, -inf
      %1763 = vmax.xlane.f32.xlu0 %v1762
      %v1764 = vpop.xlane.xlu0 %1763
      %v1765 = vsub.f32 %v1745, %v1752
      %v1766 = vsub.f32 %v1746, %v1755
      %v1767 = vsub.f32 %v1747, %v1758
      %v1768 = vsub.f32 %v1748, %v1761
      %v1769 = vsub.f32 %v1749, %v1764
      %v1770 = vmul.f32 %v1765, 1.442695
      %v1771 = vpow.pop %v1770
      %v1772 = vmul.f32 %v1766, 1.442695
      %v1773 = vpow.pop %v1772
      %v1774 = vmul.f32 %v1767, 1.442695
      %v1775 = vpow.pop %v1774
      %v1776 = vmul.f32 %v1768, 1.442695
      %v1777 = vpow.pop %v1776
      %v1778 = vmul.f32 %v1769, 1.442695
      %v1779 = vpow.pop %v1778
      %v1780 = vsel %vm1287, %v1771, 0.0
      %1781 = vadd.xlane.f32.xlu0 %v1780
      %v1782 = vpop.xlane.xlu0 %1781
      %v1783 = vsel %vm1287, %v1773, 0.0
      %1784 = vadd.xlane.f32.xlu0 %v1783
      %v1785 = vpop.xlane.xlu0 %1784
      %v1786 = vsel %vm1287, %v1775, 0.0
      %1787 = vadd.xlane.f32.xlu0 %v1786
      %v1788 = vpop.xlane.xlu0 %1787
      %v1789 = vsel %vm1287, %v1777, 0.0
      %1790 = vadd.xlane.f32.xlu0 %v1789
      %v1791 = vpop.xlane.xlu0 %1790
      %v1792 = vsel %vm1300, %v1779, 0.0
      %1793 = vadd.xlane.f32.xlu0 %v1792
      %v1794 = vpop.xlane.xlu0 %1793
      %v1795 = vrcp.pop %v1782
      %v1796 = vrcp.pop %v1785
      %v1797 = vrcp.pop %v1788
      %v1798 = vrcp.pop %v1791
      %v1799 = vrcp.pop %v1794
      %v1800 = vmul.f32 %v1771, %v1795
      %v1801 = vmul.f32 %v1773, %v1796
      %v1802 = vmul.f32 %v1775, %v1797
      %v1803 = vmul.f32 %v1777, %v1798
      %v1804 = vmul.f32 %v1779, %v1799
      %v1805 = vpack.c.bf16 %v1801, %v1800
      %v1806 = vpack.c.bf16 %v1803, %v1802
      %v1807 = vpack.c.bf16 %v1804, %v1804
      %1808 = vrot.lane.b32.xlu0 %v1190, 48
      %v1809 = vpop.permute.xlu0 %1808
      %1810 = vrot.lane.b32.xlu0 %v1191, 48
      %v1811 = vpop.permute.xlu0 %1810
      %1812 = vrot.lane.b32.xlu0 %v1192, 48
      %v1813 = vpop.permute.xlu0 %1812
      %v1817 = vsel %vm1287, %v1805, 0
      %v1820 = vsel %vm1287, %v1806, 0
      %v1823 = vsel %vm1287, %v1807, 0
      %v1826 = vsel %vm1364, %v1813, 0
      %1828 = vmatprep.subr.bf16.mxu0 0
      %1829 = vmatpush1.bf16.msra.mxu0 0
      %1830 = vmatprep.subr.bf16.mxu0 0
      %1831 = vmatpush1.bf16.msra.mxu0 0
      %1832 = vmatprep.subr.bf16.mxu0 0
      %1833 = vmatpush1.bf16.msra.mxu0 0
      %1834 = vmatprep.subr.bf16.mxu0 0
      %1835 = vmatpush1.bf16.msra.mxu0 0
      %1836 = vmatprep.subr.bf16.mxu0 0
      %1837 = vmatpush1.bf16.msra.mxu0 0
      %1838 = vmatprep.subr.bf16.mxu0 0
      %1839 = vmatpush1.bf16.msra.mxu0 %v1826
      %1840 = vmatprep.subr.bf16.mxu0 0
      %1841 = vmatpush1.bf16.msra.mxu0 %v1811
      %1842 = vmatprep.subr.bf16.mxu0 0
      %1843 = vmatpush1.bf16.msra.mxu0 %v1809
      %1844 = vmatprep.subr.bf16.mxu0 0
      %1845 = vmatpush2.bf16.msra.mxu0 0
      %1846 = vmatprep.subr.bf16.mxu0 0
      %1847 = vmatpush2.bf16.msra.mxu0 0
      %1848 = vmatprep.subr.bf16.mxu0 0
      %1849 = vmatpush2.bf16.msra.mxu0 0
      %1850 = vmatprep.subr.bf16.mxu0 0
      %1851 = vmatpush2.bf16.msra.mxu0 0
      %1852 = vmatprep.subr.bf16.mxu0 0
      %1853 = vmatpush2.bf16.msra.mxu0 0
      %1854 = vmatprep.subr.bf16.mxu0 0
      %1855 = vmatpush2.bf16.msra.mxu0 0
      %1856 = vmatprep.subr.bf16.mxu0 0
      %1857 = vmatpush2.bf16.msra.mxu0 0
      %1858 = vmatprep.subr.bf16.mxu0 0
      %1859 = vmatpush2.bf16.msra.mxu0 0
      %1860 = vmatprep.mubr.bf16.mxu0 0
      %1861 = vmatmul.mubr.bf16.gmra.mxu0 %v1817
      %v1862 = vpop.f32.mrf.mxu0
      %v1863 = vadd.f32 0.0, %v1862
      %v1864 = vpop.f32.mrf.mxu0
      %v1865 = vpop.f32.mrf.mxu0
      %v1866 = vadd.f32 0.0, %v1865
      %v1867 = vpop.f32.mrf.mxu0
      %1868 = vmatprep.mubr.bf16.mxu0 0
      %1869 = vmatmul.mubr.bf16.gmra.mxu0 %v1820
      %v1870 = vpop.f32.mrf.mxu0
      %v1871 = vadd.f32 0.0, %v1870
      %v1872 = vpop.f32.mrf.mxu0
      %v1873 = vpop.f32.mrf.mxu0
      %v1874 = vadd.f32 0.0, %v1873
      %v1875 = vpop.f32.mrf.mxu0
      %1876 = vmatprep.mubr.bf16.mxu0 0
      %1877 = vmatmul.mubr.bf16.gmra.mxu0 %v1823
      %v1878 = vpop.f32.mrf.mxu0
      %v1879 = vadd.f32 0.0, %v1878
      %v1880 = vpop.f32.mrf.mxu0
      %v1881 = vpop.f32.mrf.mxu0
      %v1882 = vpop.f32.mrf.mxu0
      %1883 = vdwg.mxu0
      %1884 = vrot.lane.b32.xlu0 %v1190, 104
      %v1885 = vpop.permute.xlu0 %1884
      %1886 = vrot.lane.b32.xlu0 %v1191, 104
      %v1887 = vpop.permute.xlu0 %1886
      %1888 = vrot.lane.b32.xlu0 %v1192, 104
      %v1889 = vpop.permute.xlu0 %1888
      %1890 = vrot.lane.b32.xlu0 %v1190, 72
      %v1891 = vpop.permute.xlu0 %1890
      %1892 = vrot.lane.b32.xlu0 %v1191, 72
      %v1893 = vpop.permute.xlu0 %1892
      %1894 = vrot.lane.b32.xlu0 %v1192, 72
      %v1895 = vpop.permute.xlu0 %1894
      %v1897 = vsel %vm1202, %v1885, 0
      %v1900 = vsel %vm1202, %v1887, 0
      %v1903 = vsel %vm1202, %v1889, 0
      %v1906 = vsel %vm1202, %v1891, 0
      %v1909 = vsel %vm1202, %v1893, 0
      %v1912 = vsel %vm1202, %v1895, 0
      %1914 = vmatprep.subr.bf16.mxu0 0
      %1915 = vmatpush1.bf16.xpose.msra.mxu0 0
      %1916 = vmatprep.subr.bf16.mxu0 0
      %1917 = vmatpush1.bf16.xpose.msra.mxu0 0
      %1918 = vmatprep.subr.bf16.mxu0 0
      %1919 = vmatpush1.bf16.xpose.msra.mxu0 0
      %1920 = vmatprep.subr.bf16.mxu0 0
      %1921 = vmatpush1.bf16.xpose.msra.mxu0 0
      %1922 = vmatprep.subr.bf16.mxu0 0
      %1923 = vmatpush1.bf16.xpose.msra.mxu0 0
      %1924 = vmatprep.subr.bf16.mxu0 0
      %1925 = vmatpush1.bf16.xpose.msra.mxu0 %v1912
      %1926 = vmatprep.subr.bf16.mxu0 0
      %1927 = vmatpush1.bf16.xpose.msra.mxu0 %v1909
      %1928 = vmatprep.subr.bf16.mxu0 0
      %1929 = vmatpush1.bf16.xpose.msra.mxu0 %v1906
      %1930 = vmatprep.subr.bf16.mxu0 0
      %1931 = vmatpush2.bf16.xpose.msra.mxu0 0
      %1932 = vmatprep.subr.bf16.mxu0 0
      %1933 = vmatpush2.bf16.xpose.msra.mxu0 0
      %1934 = vmatprep.subr.bf16.mxu0 0
      %1935 = vmatpush2.bf16.xpose.msra.mxu0 0
      %1936 = vmatprep.subr.bf16.mxu0 0
      %1937 = vmatpush2.bf16.xpose.msra.mxu0 0
      %1938 = vmatprep.subr.bf16.mxu0 0
      %1939 = vmatpush2.bf16.xpose.msra.mxu0 0
      %1940 = vmatprep.subr.bf16.mxu0 0
      %1941 = vmatpush2.bf16.xpose.msra.mxu0 0
      %1942 = vmatprep.subr.bf16.mxu0 0
      %1943 = vmatpush2.bf16.xpose.msra.mxu0 0
      %1944 = vmatprep.subr.bf16.mxu0 0
      %1945 = vmatpush2.bf16.xpose.msra.mxu0 0
      %1946 = vmatprep.mubr.bf16.mxu0 0
      %1947 = vmatmul.mubr.bf16.gmra.mxu0 %v1897
      %v1948 = vpop.f32.mrf.mxu0
      %v1949 = vadd.f32 0.0, %v1948
      %v1950 = vpop.f32.mrf.mxu0
      %v1951 = vpop.f32.mrf.mxu0
      %v1952 = vadd.f32 0.0, %v1951
      %v1953 = vpop.f32.mrf.mxu0
      %1954 = vmatprep.mubr.bf16.mxu0 0
      %1955 = vmatmul.mubr.bf16.gmra.mxu0 %v1900
      %v1956 = vpop.f32.mrf.mxu0
      %v1957 = vadd.f32 0.0, %v1956
      %v1958 = vpop.f32.mrf.mxu0
      %v1959 = vpop.f32.mrf.mxu0
      %v1960 = vadd.f32 0.0, %v1959
      %v1961 = vpop.f32.mrf.mxu0
      %1962 = vmatprep.mubr.bf16.mxu0 0
      %1963 = vmatmul.mubr.bf16.gmra.mxu0 %v1903
      %v1964 = vpop.f32.mrf.mxu0
      %v1965 = vadd.f32 0.0, %v1964
      %v1966 = vpop.f32.mrf.mxu0
      %v1967 = vpop.f32.mrf.mxu0
      %v1968 = vpop.f32.mrf.mxu0
      %1969 = vdwg.mxu0
      %v1970 = vmul.f32 %v1949, 0.35355338
      %v1971 = vmul.f32 %v1952, 0.35355338
      %v1972 = vmul.f32 %v1957, 0.35355338
      %v1973 = vmul.f32 %v1960, 0.35355338
      %v1974 = vmul.f32 %v1965, 0.35355338
      %v1975 = vsel %vm973, %v1970, -1e+30
      %v1976 = vsel %vm974, %v1971, -1e+30
      %v1977 = vsel %vm975, %v1972, -1e+30
      %v1978 = vsel %vm976, %v1973, -1e+30
      %v1979 = vsel %vm977, %v1974, -1e+30
      %v1980 = vsel %vm1287, %v1975, -inf
      %1981 = vmax.xlane.f32.xlu0 %v1980
      %v1982 = vpop.xlane.xlu0 %1981
      %v1983 = vsel %vm1287, %v1976, -inf
      %1984 = vmax.xlane.f32.xlu0 %v1983
      %v1985 = vpop.xlane.xlu0 %1984
      %v1986 = vsel %vm1287, %v1977, -inf
      %1987 = vmax.xlane.f32.xlu0 %v1986
      %v1988 = vpop.xlane.xlu0 %1987
      %v1989 = vsel %vm1287, %v1978, -inf
      %1990 = vmax.xlane.f32.xlu0 %v1989
      %v1991 = vpop.xlane.xlu0 %1990
      %v1992 = vsel %vm1300, %v1979, -inf
      %1993 = vmax.xlane.f32.xlu0 %v1992
      %v1994 = vpop.xlane.xlu0 %1993
      %v1995 = vsub.f32 %v1975, %v1982
      %v1996 = vsub.f32 %v1976, %v1985
      %v1997 = vsub.f32 %v1977, %v1988
      %v1998 = vsub.f32 %v1978, %v1991
      %v1999 = vsub.f32 %v1979, %v1994
      %v2000 = vmul.f32 %v1995, 1.442695
      %v2001 = vpow.pop %v2000
      %v2002 = vmul.f32 %v1996, 1.442695
      %v2003 = vpow.pop %v2002
      %v2004 = vmul.f32 %v1997, 1.442695
      %v2005 = vpow.pop %v2004
      %v2006 = vmul.f32 %v1998, 1.442695
      %v2007 = vpow.pop %v2006
      %v2008 = vmul.f32 %v1999, 1.442695
      %v2009 = vpow.pop %v2008
      %v2010 = vsel %vm1287, %v2001, 0.0
      %2011 = vadd.xlane.f32.xlu0 %v2010
      %v2012 = vpop.xlane.xlu0 %2011
      %v2013 = vsel %vm1287, %v2003, 0.0
      %2014 = vadd.xlane.f32.xlu0 %v2013
      %v2015 = vpop.xlane.xlu0 %2014
      %v2016 = vsel %vm1287, %v2005, 0.0
      %2017 = vadd.xlane.f32.xlu0 %v2016
      %v2018 = vpop.xlane.xlu0 %2017
      %v2019 = vsel %vm1287, %v2007, 0.0
      %2020 = vadd.xlane.f32.xlu0 %v2019
      %v2021 = vpop.xlane.xlu0 %2020
      %v2022 = vsel %vm1300, %v2009, 0.0
      %2023 = vadd.xlane.f32.xlu0 %v2022
      %v2024 = vpop.xlane.xlu0 %2023
      %v2025 = vrcp.pop %v2012
      %v2026 = vrcp.pop %v2015
      %v2027 = vrcp.pop %v2018
      %v2028 = vrcp.pop %v2021
      %v2029 = vrcp.pop %v2024
      %v2030 = vmul.f32 %v2001, %v2025
      %v2031 = vmul.f32 %v2003, %v2026
      %v2032 = vmul.f32 %v2005, %v2027
      %v2033 = vmul.f32 %v2007, %v2028
      %v2034 = vmul.f32 %v2009, %v2029
      %v2035 = vpack.c.bf16 %v2031, %v2030
      %v2036 = vpack.c.bf16 %v2033, %v2032
      %v2037 = vpack.c.bf16 %v2034, %v2034
      %2038 = vrot.lane.b32.xlu0 %v1190, 40
      %v2039 = vpop.permute.xlu0 %2038
      %2040 = vrot.lane.b32.xlu0 %v1191, 40
      %v2041 = vpop.permute.xlu0 %2040
      %2042 = vrot.lane.b32.xlu0 %v1192, 40
      %v2043 = vpop.permute.xlu0 %2042
      %v2047 = vsel %vm1287, %v2035, 0
      %v2050 = vsel %vm1287, %v2036, 0
      %v2053 = vsel %vm1287, %v2037, 0
      %v2056 = vsel %vm1364, %v2043, 0
      %2058 = vmatprep.subr.bf16.mxu0 0
      %2059 = vmatpush1.bf16.msra.mxu0 0
      %2060 = vmatprep.subr.bf16.mxu0 0
      %2061 = vmatpush1.bf16.msra.mxu0 0
      %2062 = vmatprep.subr.bf16.mxu0 0
      %2063 = vmatpush1.bf16.msra.mxu0 0
      %2064 = vmatprep.subr.bf16.mxu0 0
      %2065 = vmatpush1.bf16.msra.mxu0 0
      %2066 = vmatprep.subr.bf16.mxu0 0
      %2067 = vmatpush1.bf16.msra.mxu0 0
      %2068 = vmatprep.subr.bf16.mxu0 0
      %2069 = vmatpush1.bf16.msra.mxu0 %v2056
      %2070 = vmatprep.subr.bf16.mxu0 0
      %2071 = vmatpush1.bf16.msra.mxu0 %v2041
      %2072 = vmatprep.subr.bf16.mxu0 0
      %2073 = vmatpush1.bf16.msra.mxu0 %v2039
      %2074 = vmatprep.subr.bf16.mxu0 0
      %2075 = vmatpush2.bf16.msra.mxu0 0
      %2076 = vmatprep.subr.bf16.mxu0 0
      %2077 = vmatpush2.bf16.msra.mxu0 0
      %2078 = vmatprep.subr.bf16.mxu0 0
      %2079 = vmatpush2.bf16.msra.mxu0 0
      %2080 = vmatprep.subr.bf16.mxu0 0
      %2081 = vmatpush2.bf16.msra.mxu0 0
      %2082 = vmatprep.subr.bf16.mxu0 0
      %2083 = vmatpush2.bf16.msra.mxu0 0
      %2084 = vmatprep.subr.bf16.mxu0 0
      %2085 = vmatpush2.bf16.msra.mxu0 0
      %2086 = vmatprep.subr.bf16.mxu0 0
      %2087 = vmatpush2.bf16.msra.mxu0 0
      %2088 = vmatprep.subr.bf16.mxu0 0
      %2089 = vmatpush2.bf16.msra.mxu0 0
      %2090 = vmatprep.mubr.bf16.mxu0 0
      %2091 = vmatmul.mubr.bf16.gmra.mxu0 %v2047
      %v2092 = vpop.f32.mrf.mxu0
      %v2093 = vadd.f32 0.0, %v2092
      %v2094 = vpop.f32.mrf.mxu0
      %v2095 = vpop.f32.mrf.mxu0
      %v2096 = vadd.f32 0.0, %v2095
      %v2097 = vpop.f32.mrf.mxu0
      %2098 = vmatprep.mubr.bf16.mxu0 0
      %2099 = vmatmul.mubr.bf16.gmra.mxu0 %v2050
      %v2100 = vpop.f32.mrf.mxu0
      %v2101 = vadd.f32 0.0, %v2100
      %v2102 = vpop.f32.mrf.mxu0
      %v2103 = vpop.f32.mrf.mxu0
      %v2104 = vadd.f32 0.0, %v2103
      %v2105 = vpop.f32.mrf.mxu0
      %2106 = vmatprep.mubr.bf16.mxu0 0
      %2107 = vmatmul.mubr.bf16.gmra.mxu0 %v2053
      %v2108 = vpop.f32.mrf.mxu0
      %v2109 = vadd.f32 0.0, %v2108
      %v2110 = vpop.f32.mrf.mxu0
      %v2111 = vpop.f32.mrf.mxu0
      %v2112 = vpop.f32.mrf.mxu0
      %2113 = vdwg.mxu0
      %2119 = vrot.lane.b32.xlu0 %v1633, 8
      %v2120 = vpop.permute.xlu0 %2119
      %2121 = vrot.lane.b32.xlu0 %v1636, 8
      %v2122 = vpop.permute.xlu0 %2121
      %2123 = vrot.lane.b32.xlu0 %v1641, 8
      %v2124 = vpop.permute.xlu0 %2123
      %2125 = vrot.lane.b32.xlu0 %v1644, 8
      %v2126 = vpop.permute.xlu0 %2125
      %2127 = vrot.lane.b32.xlu0 %v1649, 8
      %v2128 = vpop.permute.xlu0 %2127
      %2139 = vrot.lane.b32.xlu0 %v1863, 16
      %v2140 = vpop.permute.xlu0 %2139
      %2141 = vrot.lane.b32.xlu0 %v1866, 16
      %v2142 = vpop.permute.xlu0 %2141
      %2143 = vrot.lane.b32.xlu0 %v1871, 16
      %v2144 = vpop.permute.xlu0 %2143
      %2145 = vrot.lane.b32.xlu0 %v1874, 16
      %v2146 = vpop.permute.xlu0 %2145
      %2147 = vrot.lane.b32.xlu0 %v1879, 16
      %v2148 = vpop.permute.xlu0 %2147
      %2159 = vrot.lane.b32.xlu0 %v2093, 24
      %v2160 = vpop.permute.xlu0 %2159
      %2161 = vrot.lane.b32.xlu0 %v2096, 24
      %v2162 = vpop.permute.xlu0 %2161
      %2163 = vrot.lane.b32.xlu0 %v2101, 24
      %v2164 = vpop.permute.xlu0 %2163
      %2165 = vrot.lane.b32.xlu0 %v2104, 24
      %v2166 = vpop.permute.xlu0 %2165
      %2167 = vrot.lane.b32.xlu0 %v2109, 24
      %v2168 = vpop.permute.xlu0 %2167
      %v2174 = vsel %vm1202, %v1403, %v2120
      %v2175 = vsel %vm1202, %v1406, %v2122
      %v2176 = vsel %vm1202, %v1411, %v2124
      %v2177 = vsel %vm1202, %v1414, %v2126
      %v2178 = vsel %vm1202, %v1419, %v2128
      %vm2179 = vcmask 130048
      %v2180 = vsel %vm2179, %v2174, %v2140
      %v2181 = vsel %vm2179, %v2175, %v2142
      %v2182 = vsel %vm2179, %v2176, %v2144
      %v2183 = vsel %vm2179, %v2177, %v2146
      %v2184 = vsel %vm2179, %v2178, %v2148
      %vm2185 = vcmask 195584
      %v2186 = vsel %vm2185, %v2180, %v2160
      %v2187 = vsel %vm2185, %v2181, %v2162
      %v2188 = vsel %vm2185, %v2182, %v2164
      %v2189 = vsel %vm2185, %v2183, %v2166
      %v2190 = vsel %vm2185, %v2184, %v2168
      %v2191 = vpack.c.bf16 %v2187, %v2186
      %v2192 = vpack.c.bf16 %v2189, %v2188
      %v2193 = vpack.c.bf16 %v2190, %v2190
      %v2198 = vunpack.c.l.b16 %v985
      %v2199 = vunpack.c.l.b16 %v986
      %v2200 = vunpack.c.l.b16 %v987
      %v2201 = vunpack.c.l.b16 %v988
      %v2202 = vpack.c.b16 %v2199, %v2198
      %v2203 = vpack.c.b16 %v2201, %v2200
      %v2207 = vsel %vm1014, %v2191, 0
      %v2210 = vsel %vm1014, %v2192, 0
      %v2213 = vsel %vm1014, %v2193, 0
      %2215 = vmatprep.subr.bf16.mxu0 0
      %2216 = vmatpush1.bf16.msra.mxu0 0
      %2217 = vmatprep.subr.bf16.mxu0 0
      %2218 = vmatpush1.bf16.msra.mxu0 0
      %2219 = vmatprep.subr.bf16.mxu0 0
      %2220 = vmatpush1.bf16.msra.mxu0 0
      %2221 = vmatprep.subr.bf16.mxu0 0
      %2222 = vmatpush1.bf16.msra.mxu0 0
      %2223 = vmatprep.subr.bf16.mxu0 0
      %2224 = vmatpush1.bf16.msra.mxu0 0
      %2225 = vmatprep.subr.bf16.mxu0 0
      %2226 = vmatpush1.bf16.msra.mxu0 0
      %2227 = vmatprep.subr.bf16.mxu0 0
      %2228 = vmatpush1.bf16.msra.mxu0 %v2203
      %2229 = vmatprep.subr.bf16.mxu0 0
      %2230 = vmatpush1.bf16.msra.mxu0 %v2202
      %2231 = vmatprep.subr.bf16.mxu0 0
      %2232 = vmatpush2.bf16.msra.mxu0 0
      %2233 = vmatprep.subr.bf16.mxu0 0
      %2234 = vmatpush2.bf16.msra.mxu0 0
      %2235 = vmatprep.subr.bf16.mxu0 0
      %2236 = vmatpush2.bf16.msra.mxu0 0
      %2237 = vmatprep.subr.bf16.mxu0 0
      %2238 = vmatpush2.bf16.msra.mxu0 0
      %2239 = vmatprep.subr.bf16.mxu0 0
      %2240 = vmatpush2.bf16.msra.mxu0 0
      %2241 = vmatprep.subr.bf16.mxu0 0
      %2242 = vmatpush2.bf16.msra.mxu0 0
      %2243 = vmatprep.subr.bf16.mxu0 0
      %2244 = vmatpush2.bf16.msra.mxu0 0
      %2245 = vmatprep.subr.bf16.mxu0 0
      %2246 = vmatpush2.bf16.msra.mxu0 0
      %2247 = vmatprep.mubr.bf16.mxu0 0
      %2248 = vmatmul.mubr.bf16.gmra.mxu0 %v2207
      %v2249 = vpop.f32.mrf.mxu0
      %v2250 = vadd.f32 0.0, %v2249
      %v2251 = vpop.f32.mrf.mxu0
      %v2252 = vpop.f32.mrf.mxu0
      %v2253 = vadd.f32 0.0, %v2252
      %v2254 = vpop.f32.mrf.mxu0
      %2255 = vmatprep.mubr.bf16.mxu0 0
      %2256 = vmatmul.mubr.bf16.gmra.mxu0 %v2210
      %v2257 = vpop.f32.mrf.mxu0
      %v2258 = vadd.f32 0.0, %v2257
      %v2259 = vpop.f32.mrf.mxu0
      %v2260 = vpop.f32.mrf.mxu0
      %v2261 = vadd.f32 0.0, %v2260
      %v2262 = vpop.f32.mrf.mxu0
      %2263 = vmatprep.mubr.bf16.mxu0 0
      %2264 = vmatmul.mubr.bf16.gmra.mxu0 %v2213
      %v2265 = vpop.f32.mrf.mxu0
      %v2266 = vadd.f32 0.0, %v2265
      %v2267 = vpop.f32.mrf.mxu0
      %v2268 = vpop.f32.mrf.mxu0
      %v2269 = vpop.f32.mrf.mxu0
      %2270 = vdwg.mxu0
      %v2271 = vadd.f32 %v842, %v2250
      %v2272 = vadd.f32 %v845, %v2253
      %v2273 = vadd.f32 %v850, %v2258
      %v2274 = vadd.f32 %v853, %v2261
      %v2275 = vadd.f32 %v858, %v2266
      %v2277 = vlaneseq
      %v2278 = vshrl.u32 %v2277, 7
      %v2279 = vsub.s32 0, %v2278
      %v2280 = vrot.slane %v989, %v2279
      %v2282 = vadd.f32 %v2271, %v2280
      %v2283 = vadd.f32 %v2272, %v2280
      %v2284 = vadd.f32 %v2273, %v2280
      %v2285 = vadd.f32 %v2274, %v2280
      %v2286 = vadd.f32 %v2275, %v2280
      %v2287 = vsel %vm1014, %v2282, 0.0
      %2288 = vadd.xlane.f32.xlu0 %v2287
      %v2289 = vpop.xlane.xlu0 %2288
      %v2290 = vsel %vm1014, %v2283, 0.0
      %2291 = vadd.xlane.f32.xlu0 %v2290
      %v2292 = vpop.xlane.xlu0 %2291
      %v2293 = vsel %vm1014, %v2284, 0.0
      %2294 = vadd.xlane.f32.xlu0 %v2293
      %v2295 = vpop.xlane.xlu0 %2294
      %v2296 = vsel %vm1014, %v2285, 0.0
      %2297 = vadd.xlane.f32.xlu0 %v2296
      %v2298 = vpop.xlane.xlu0 %2297
      %v2299 = vsel %vm1027, %v2286, 0.0
      %2300 = vadd.xlane.f32.xlu0 %v2299
      %v2301 = vpop.xlane.xlu0 %2300
      %v2302 = vmul.f32 %v2289, %v1031
      %v2303 = vmul.f32 %v2292, %v1031
      %v2304 = vmul.f32 %v2295, %v1031
      %v2305 = vmul.f32 %v2298, %v1031
      %v2306 = vmul.f32 %v2301, %v1031
      %v2307 = vsub.f32 %v2282, %v2302
      %v2308 = vsub.f32 %v2283, %v2303
      %v2309 = vsub.f32 %v2284, %v2304
      %v2310 = vsub.f32 %v2285, %v2305
      %v2311 = vsub.f32 %v2286, %v2306
      %v2312 = vmul.f32 %v2307, %v2307
      %v2313 = vmul.f32 %v2308, %v2308
      %v2314 = vmul.f32 %v2309, %v2309
      %v2315 = vmul.f32 %v2310, %v2310
      %v2316 = vmul.f32 %v2311, %v2311
      %v2317 = vsel %vm1014, %v2312, 0.0
      %2318 = vadd.xlane.f32.xlu0 %v2317
      %v2319 = vpop.xlane.xlu0 %2318
      %v2320 = vsel %vm1014, %v2313, 0.0
      %2321 = vadd.xlane.f32.xlu0 %v2320
      %v2322 = vpop.xlane.xlu0 %2321
      %v2323 = vsel %vm1014, %v2314, 0.0
      %2324 = vadd.xlane.f32.xlu0 %v2323
      %v2325 = vpop.xlane.xlu0 %2324
      %v2326 = vsel %vm1014, %v2315, 0.0
      %2327 = vadd.xlane.f32.xlu0 %v2326
      %v2328 = vpop.xlane.xlu0 %2327
      %v2329 = vsel %vm1027, %v2316, 0.0
      %2330 = vadd.xlane.f32.xlu0 %v2329
      %v2331 = vpop.xlane.xlu0 %2330
      %v2332 = vmul.f32 %v2319, %v1031
      %v2333 = vmul.f32 %v2322, %v1031
      %v2334 = vmul.f32 %v2325, %v1031
      %v2335 = vmul.f32 %v2328, %v1031
      %v2336 = vmul.f32 %v2331, %v1031
      %v2337 = vadd.f32 %v2332, 1e-06
      %v2338 = vadd.f32 %v2333, 1e-06
      %v2339 = vadd.f32 %v2334, 1e-06
      %v2340 = vadd.f32 %v2335, 1e-06
      %v2341 = vadd.f32 %v2336, 1e-06
      %v2342 = vrsqrt.pop %v2337
      %v2343 = vrsqrt.pop %v2338
      %v2344 = vrsqrt.pop %v2339
      %v2345 = vrsqrt.pop %v2340
      %v2346 = vrsqrt.pop %v2341
      %v2347 = vmul.f32 %v2307, %v2342
      %v2348 = vmul.f32 %v2308, %v2343
      %v2349 = vmul.f32 %v2309, %v2344
      %v2350 = vmul.f32 %v2310, %v2345
      %v2351 = vmul.f32 %v2311, %v2346
      %v2353 = vlaneseq
      %v2354 = vshrl.u32 %v2353, 7
      %v2355 = vsub.s32 0, %v2354
      %v2356 = vrot.slane %v990, %v2355
      %v2358 = vmul.f32 %v2347, %v2356
      %v2359 = vmul.f32 %v2348, %v2356
      %v2360 = vmul.f32 %v2349, %v2356
      %v2361 = vmul.f32 %v2350, %v2356
      %v2362 = vmul.f32 %v2351, %v2356
      %v2364 = vlaneseq
      %v2365 = vshrl.u32 %v2364, 7
      %v2366 = vsub.s32 0, %v2365
      %v2367 = vrot.slane %v991, %v2366
      %v2369 = vadd.f32 %v2358, %v2367
      %v2370 = vadd.f32 %v2359, %v2367
      %v2371 = vadd.f32 %v2360, %v2367
      %v2372 = vadd.f32 %v2361, %v2367
      %v2373 = vadd.f32 %v2362, %v2367
      %v2374 = vpack.c.bf16 %v2370, %v2369
      %v2375 = vpack.c.bf16 %v2372, %v2371
      %v2376 = vpack.c.bf16 %v2373, %v2373
      %v2378 = vlaneseq
      %v2379 = vshrl.u32 %v2378, 7
      %v2380 = vsub.s32 0, %v2379
      %v2381 = vrot.slane %v996, %v2380
      %v2387 = vunpack.c.l.b16 %v992
      %v2388 = vunpack.c.l.b16 %v993
      %v2389 = vunpack.c.l.b16 %v994
      %v2390 = vunpack.c.l.b16 %v995
      %v2391 = vpack.c.b16 %v2388, %v2387
      %v2392 = vpack.c.b16 %v2390, %v2389
      %v2396 = vsel %vm1014, %v2374, 0
      %v2399 = vsel %vm1014, %v2375, 0
      %v2402 = vsel %vm1014, %v2376, 0
      %2404 = vmatprep.subr.bf16.mxu0 0
      %2405 = vmatpush1.bf16.msra.mxu0 0
      %2406 = vmatprep.subr.bf16.mxu0 0
      %2407 = vmatpush1.bf16.msra.mxu0 0
      %2408 = vmatprep.subr.bf16.mxu0 0
      %2409 = vmatpush1.bf16.msra.mxu0 0
      %2410 = vmatprep.subr.bf16.mxu0 0
      %2411 = vmatpush1.bf16.msra.mxu0 0
      %2412 = vmatprep.subr.bf16.mxu0 0
      %2413 = vmatpush1.bf16.msra.mxu0 0
      %2414 = vmatprep.subr.bf16.mxu0 0
      %2415 = vmatpush1.bf16.msra.mxu0 0
      %2416 = vmatprep.subr.bf16.mxu0 0
      %2417 = vmatpush1.bf16.msra.mxu0 %v2392
      %2418 = vmatprep.subr.bf16.mxu0 0
      %2419 = vmatpush1.bf16.msra.mxu0 %v2391
      %2420 = vmatprep.subr.bf16.mxu0 0
      %2421 = vmatpush2.bf16.msra.mxu0 0
      %2422 = vmatprep.subr.bf16.mxu0 0
      %2423 = vmatpush2.bf16.msra.mxu0 0
      %2424 = vmatprep.subr.bf16.mxu0 0
      %2425 = vmatpush2.bf16.msra.mxu0 0
      %2426 = vmatprep.subr.bf16.mxu0 0
      %2427 = vmatpush2.bf16.msra.mxu0 0
      %2428 = vmatprep.subr.bf16.mxu0 0
      %2429 = vmatpush2.bf16.msra.mxu0 0
      %2430 = vmatprep.subr.bf16.mxu0 0
      %2431 = vmatpush2.bf16.msra.mxu0 0
      %2432 = vmatprep.subr.bf16.mxu0 0
      %2433 = vmatpush2.bf16.msra.mxu0 0
      %2434 = vmatprep.subr.bf16.mxu0 0
      %2435 = vmatpush2.bf16.msra.mxu0 0
      %2436 = vmatprep.mubr.bf16.mxu0 0
      %2437 = vmatmul.mubr.bf16.gmra.mxu0 %v2396
      %v2438 = vpop.f32.mrf.mxu0
      %v2439 = vadd.f32 %v2381, %v2438
      %v2440 = vpop.f32.mrf.mxu0
      %v2441 = vpop.f32.mrf.mxu0
      %v2442 = vadd.f32 %v2381, %v2441
      %v2443 = vpop.f32.mrf.mxu0
      %2444 = vmatprep.mubr.bf16.mxu0 0
      %2445 = vmatmul.mubr.bf16.gmra.mxu0 %v2399
      %v2446 = vpop.f32.mrf.mxu0
      %v2447 = vadd.f32 %v2381, %v2446
      %v2448 = vpop.f32.mrf.mxu0
      %v2449 = vpop.f32.mrf.mxu0
      %v2450 = vadd.f32 %v2381, %v2449
      %v2451 = vpop.f32.mrf.mxu0
      %2452 = vmatprep.mubr.bf16.mxu0 0
      %2453 = vmatmul.mubr.bf16.gmra.mxu0 %v2402
      %v2454 = vpop.f32.mrf.mxu0
      %v2455 = vadd.f32 %v2381, %v2454
      %v2456 = vpop.f32.mrf.mxu0
      %v2457 = vpop.f32.mrf.mxu0
      %v2458 = vpop.f32.mrf.mxu0
      %2459 = vdwg.mxu0
      %v2460 = vmul.f32 %v2439, 0.70710677
      %v2461 = vmul.f32 %v2442, 0.70710677
      %v2462 = vmul.f32 %v2447, 0.70710677
      %v2463 = vmul.f32 %v2450, 0.70710677
      %v2464 = vmul.f32 %v2455, 0.70710677
      %v2465 = vand.u32 2147483647, %v2460
      %v2466 = vand.u32 2147483647, %v2461
      %v2467 = vand.u32 2147483647, %v2462
      %v2468 = vand.u32 2147483647, %v2463
      %v2469 = vand.u32 2147483647, %v2464
      %v2470 = vmul.f32 %v2465, 0.3275911
      %v2471 = vmul.f32 %v2466, 0.3275911
      %v2472 = vmul.f32 %v2467, 0.3275911
      %v2473 = vmul.f32 %v2468, 0.3275911
      %v2474 = vmul.f32 %v2469, 0.3275911
      %v2475 = vadd.f32 %v2470, 1.0
      %v2476 = vadd.f32 %v2471, 1.0
      %v2477 = vadd.f32 %v2472, 1.0
      %v2478 = vadd.f32 %v2473, 1.0
      %v2479 = vadd.f32 %v2474, 1.0
      %v2480 = vrcp.pop %v2475
      %v2481 = vrcp.pop %v2476
      %v2482 = vrcp.pop %v2477
      %v2483 = vrcp.pop %v2478
      %v2484 = vrcp.pop %v2479
      %v2485 = vmul.f32 %v2480, 1.0614054
      %v2486 = vmul.f32 %v2481, 1.0614054
      %v2487 = vmul.f32 %v2482, 1.0614054
      %v2488 = vmul.f32 %v2483, 1.0614054
      %v2489 = vmul.f32 %v2484, 1.0614054
      %v2490 = vadd.f32 %v2485, -1.4531521
      %v2491 = vadd.f32 %v2486, -1.4531521
      %v2492 = vadd.f32 %v2487, -1.4531521
      %v2493 = vadd.f32 %v2488, -1.4531521
      %v2494 = vadd.f32 %v2489, -1.4531521
      %v2495 = vmul.f32 %v2490, %v2480
      %v2496 = vmul.f32 %v2491, %v2481
      %v2497 = vmul.f32 %v2492, %v2482
      %v2498 = vmul.f32 %v2493, %v2483
      %v2499 = vmul.f32 %v2494, %v2484
      %v2500 = vadd.f32 %v2495, 1.4214138
      %v2501 = vadd.f32 %v2496, 1.4214138
      %v2502 = vadd.f32 %v2497, 1.4214138
      %v2503 = vadd.f32 %v2498, 1.4214138
      %v2504 = vadd.f32 %v2499, 1.4214138
      %v2505 = vmul.f32 %v2500, %v2480
      %v2506 = vmul.f32 %v2501, %v2481
      %v2507 = vmul.f32 %v2502, %v2482
      %v2508 = vmul.f32 %v2503, %v2483
      %v2509 = vmul.f32 %v2504, %v2484
      %v2510 = vadd.f32 %v2505, -0.28449672
      %v2511 = vadd.f32 %v2506, -0.28449672
      %v2512 = vadd.f32 %v2507, -0.28449672
      %v2513 = vadd.f32 %v2508, -0.28449672
      %v2514 = vadd.f32 %v2509, -0.28449672
      %v2515 = vmul.f32 %v2510, %v2480
      %v2516 = vmul.f32 %v2511, %v2481
      %v2517 = vmul.f32 %v2512, %v2482
      %v2518 = vmul.f32 %v2513, %v2483
      %v2519 = vmul.f32 %v2514, %v2484
      %v2520 = vadd.f32 %v2515, 0.2548296
      %v2521 = vadd.f32 %v2516, 0.2548296
      %v2522 = vadd.f32 %v2517, 0.2548296
      %v2523 = vadd.f32 %v2518, 0.2548296
      %v2524 = vadd.f32 %v2519, 0.2548296
      %v2525 = vmul.f32 %v2520, %v2480
      %v2526 = vmul.f32 %v2521, %v2481
      %v2527 = vmul.f32 %v2522, %v2482
      %v2528 = vmul.f32 %v2523, %v2483
      %v2529 = vmul.f32 %v2524, %v2484
      %v2530 = vsub.f32 0.0, %v2465
      %v2531 = vsub.f32 0.0, %v2466
      %v2532 = vsub.f32 0.0, %v2467
      %v2533 = vsub.f32 0.0, %v2468
      %v2534 = vsub.f32 0.0, %v2469
      %v2535 = vmul.f32 %v2530, %v2465
      %v2536 = vmul.f32 %v2531, %v2466
      %v2537 = vmul.f32 %v2532, %v2467
      %v2538 = vmul.f32 %v2533, %v2468
      %v2539 = vmul.f32 %v2534, %v2469
      %v2540 = vmul.f32 %v2535, 1.442695
      %v2541 = vpow.pop %v2540
      %v2542 = vmul.f32 %v2536, 1.442695
      %v2543 = vpow.pop %v2542
      %v2544 = vmul.f32 %v2537, 1.442695
      %v2545 = vpow.pop %v2544
      %v2546 = vmul.f32 %v2538, 1.442695
      %v2547 = vpow.pop %v2546
      %v2548 = vmul.f32 %v2539, 1.442695
      %v2549 = vpow.pop %v2548
      %v2550 = vmul.f32 %v2525, %v2541
      %v2551 = vmul.f32 %v2526, %v2543
      %v2552 = vmul.f32 %v2527, %v2545
      %v2553 = vmul.f32 %v2528, %v2547
      %v2554 = vmul.f32 %v2529, %v2549
      %v2555 = vsub.f32 1.0, %v2550
      %v2556 = vsub.f32 1.0, %v2551
      %v2557 = vsub.f32 1.0, %v2552
      %v2558 = vsub.f32 1.0, %v2553
      %v2559 = vsub.f32 1.0, %v2554
      %vm2560 = vcmp.ge.f32.partialorder %v2460, 0.0
      %vm2561 = vcmp.ge.f32.partialorder %v2461, 0.0
      %vm2562 = vcmp.ge.f32.partialorder %v2462, 0.0
      %vm2563 = vcmp.ge.f32.partialorder %v2463, 0.0
      %vm2564 = vcmp.ge.f32.partialorder %v2464, 0.0
      %v2565 = vsub.f32 0.0, %v2555
      %v2566 = vsub.f32 0.0, %v2556
      %v2567 = vsub.f32 0.0, %v2557
      %v2568 = vsub.f32 0.0, %v2558
      %v2569 = vsub.f32 0.0, %v2559
      %v2570 = vsel %vm2560, %v2555, %v2565
      %v2571 = vsel %vm2561, %v2556, %v2566
      %v2572 = vsel %vm2562, %v2557, %v2567
      %v2573 = vsel %vm2563, %v2558, %v2568
      %v2574 = vsel %vm2564, %v2559, %v2569
      %v2575 = vmul.f32 %v2439, 0.5
      %v2576 = vmul.f32 %v2442, 0.5
      %v2577 = vmul.f32 %v2447, 0.5
      %v2578 = vmul.f32 %v2450, 0.5
      %v2579 = vmul.f32 %v2455, 0.5
      %v2580 = vadd.f32 %v2570, 1.0
      %v2581 = vadd.f32 %v2571, 1.0
      %v2582 = vadd.f32 %v2572, 1.0
      %v2583 = vadd.f32 %v2573, 1.0
      %v2584 = vadd.f32 %v2574, 1.0
      %v2585 = vmul.f32 %v2575, %v2580
      %v2586 = vmul.f32 %v2576, %v2581
      %v2587 = vmul.f32 %v2577, %v2582
      %v2588 = vmul.f32 %v2578, %v2583
      %v2589 = vmul.f32 %v2579, %v2584
      %v2590 = vpack.c.bf16 %v2586, %v2585
      %v2591 = vpack.c.bf16 %v2588, %v2587
      %v2592 = vpack.c.bf16 %v2589, %v2589
      %v2594 = vlaneseq
      %v2595 = vshrl.u32 %v2594, 7
      %v2596 = vsub.s32 0, %v2595
      %v2597 = vrot.slane %v1013, %v2596
      %v2615 = vunpack.c.l.b16 %v997
      %v2616 = vunpack.c.l.b16 %v998
      %v2617 = vunpack.c.l.b16 %v999
      %v2618 = vunpack.c.l.b16 %v1000
      %v2619 = vunpack.c.l.b16 %v1001
      %v2620 = vunpack.c.l.b16 %v1002
      %v2621 = vunpack.c.l.b16 %v1003
      %v2622 = vunpack.c.l.b16 %v1004
      %v2623 = vunpack.c.l.b16 %v1005
      %v2624 = vunpack.c.l.b16 %v1006
      %v2625 = vunpack.c.l.b16 %v1007
      %v2626 = vunpack.c.l.b16 %v1008
      %v2627 = vunpack.c.l.b16 %v1009
      %v2628 = vunpack.c.l.b16 %v1010
      %v2629 = vunpack.c.l.b16 %v1011
      %v2630 = vunpack.c.l.b16 %v1012
      %v2631 = vpack.c.b16 %v2616, %v2615
      %v2632 = vpack.c.b16 %v2618, %v2617
      %v2633 = vpack.c.b16 %v2620, %v2619
      %v2634 = vpack.c.b16 %v2622, %v2621
      %v2635 = vpack.c.b16 %v2624, %v2623
      %v2636 = vpack.c.b16 %v2626, %v2625
      %v2637 = vpack.c.b16 %v2628, %v2627
      %v2638 = vpack.c.b16 %v2630, %v2629
      %2647 = vmatprep.subr.bf16.mxu0 0
      %2648 = vmatpush1.bf16.msra.mxu0 %v2638
      %2649 = vmatprep.subr.bf16.mxu0 0
      %2650 = vmatpush1.bf16.msra.mxu0 %v2637
      %2651 = vmatprep.subr.bf16.mxu0 0
      %2652 = vmatpush1.bf16.msra.mxu0 %v2636
      %2653 = vmatprep.subr.bf16.mxu0 0
      %2654 = vmatpush1.bf16.msra.mxu0 %v2635
      %2655 = vmatprep.subr.bf16.mxu0 0
      %2656 = vmatpush1.bf16.msra.mxu0 %v2634
      %2657 = vmatprep.subr.bf16.mxu0 0
      %2658 = vmatpush1.bf16.msra.mxu0 %v2633
      %2659 = vmatprep.subr.bf16.mxu0 0
      %2660 = vmatpush1.bf16.msra.mxu0 %v2632
      %2661 = vmatprep.subr.bf16.mxu0 0
      %2662 = vmatpush1.bf16.msra.mxu0 %v2631
      %2663 = vmatprep.subr.bf16.mxu0 0
      %2664 = vmatpush2.bf16.msra.mxu0 0
      %2665 = vmatprep.subr.bf16.mxu0 0
      %2666 = vmatpush2.bf16.msra.mxu0 0
      %2667 = vmatprep.subr.bf16.mxu0 0
      %2668 = vmatpush2.bf16.msra.mxu0 0
      %2669 = vmatprep.subr.bf16.mxu0 0
      %2670 = vmatpush2.bf16.msra.mxu0 0
      %2671 = vmatprep.subr.bf16.mxu0 0
      %2672 = vmatpush2.bf16.msra.mxu0 0
      %2673 = vmatprep.subr.bf16.mxu0 0
      %2674 = vmatpush2.bf16.msra.mxu0 0
      %2675 = vmatprep.subr.bf16.mxu0 0
      %2676 = vmatpush2.bf16.msra.mxu0 0
      %2677 = vmatprep.subr.bf16.mxu0 0
      %2678 = vmatpush2.bf16.msra.mxu0 0
      %2679 = vmatprep.mubr.bf16.mxu0 0
      %2680 = vmatmul.mubr.bf16.gmra.mxu0 %v2590
      %v2681 = vpop.f32.mrf.mxu0
      %v2682 = vadd.f32 %v2597, %v2681
      %v2683 = vpop.f32.mrf.mxu0
      %v2684 = vpop.f32.mrf.mxu0
      %v2685 = vadd.f32 %v2597, %v2684
      %v2686 = vpop.f32.mrf.mxu0
      %2687 = vmatprep.mubr.bf16.mxu0 0
      %2688 = vmatmul.mubr.bf16.gmra.mxu0 %v2591
      %v2689 = vpop.f32.mrf.mxu0
      %v2690 = vadd.f32 %v2597, %v2689
      %v2691 = vpop.f32.mrf.mxu0
      %v2692 = vpop.f32.mrf.mxu0
      %v2693 = vadd.f32 %v2597, %v2692
      %v2694 = vpop.f32.mrf.mxu0
      %2695 = vmatprep.mubr.bf16.mxu0 0
      %2696 = vmatmul.mubr.bf16.gmra.mxu0 %v2592
      %v2697 = vpop.f32.mrf.mxu0
      %v2698 = vadd.f32 %v2597, %v2697
      %v2699 = vpop.f32.mrf.mxu0
      %v2700 = vpop.f32.mrf.mxu0
      %v2701 = vpop.f32.mrf.mxu0
      %2702 = vdwg.mxu0
      %v2703 = vadd.f32 %v2282, %v2682
      %v2704 = vadd.f32 %v2283, %v2685
      %v2705 = vadd.f32 %v2284, %v2690
      %v2706 = vadd.f32 %v2285, %v2693
      %v2707 = vadd.f32 %v2286, %v2698
      %2708 = vst.msk [vmem:[%s745] sm:$0xff] %vm1014, %v2703
      %2709 = vst.msk [vmem:[%s745 + $0x8] sm:$0xff] %vm1014, %v2704
      %2710 = vst.msk [vmem:[%s745 + $0x10] sm:$0xff] %vm1014, %v2705
      %2711 = vst.msk [vmem:[%s745 + $0x18] sm:$0xff] %vm1014, %v2706
      %2712 = vst.msk [vmem:[%s745 + $0x20] sm:$0xf] %vm1027, %v2707
      %s2713 = scalar_lea.vmem %s3, 1
      %v2714 = vld [vmem:[%s2713] sm:$0x1]
      %s2715 = scalar_lea.vmem %s4, 1
      %v2716 = vld [vmem:[%s2715] sm:$0x1]
      %s2717 = scalar_lea.vmem %s5, 16
      %v2718 = vld [vmem:[%s2717] sm:$0xf]
      %v2719 = vld [vmem:[%s2717 + $0x4] sm:$0xf]
      %v2720 = vld [vmem:[%s2717 + $0x8] sm:$0xf]
      %v2721 = vld [vmem:[%s2717 + $0xc] sm:$0xf]
      %s2722 = scalar_lea.vmem %s6, 1
      %v2723 = vld [vmem:[%s2722] sm:$0x1]
      %s2724 = scalar_lea.vmem %s7, 16
      %v2725 = vld [vmem:[%s2724] sm:$0xf]
      %v2726 = vld [vmem:[%s2724 + $0x4] sm:$0xf]
      %v2727 = vld [vmem:[%s2724 + $0x8] sm:$0xf]
      %v2728 = vld [vmem:[%s2724 + $0xc] sm:$0xf]
      %s2729 = scalar_lea.vmem %s8, 1
      %v2730 = vld [vmem:[%s2729] sm:$0x1]
      %s2731 = scalar_lea.vmem %s9, 1
      %v2732 = vld [vmem:[%s2731] sm:$0x1]
      %s2733 = scalar_lea.vmem %s10, 1
      %v2734 = vld [vmem:[%s2733] sm:$0x1]
      %s2735 = scalar_lea.vmem %s11, 16
      %v2736 = vld [vmem:[%s2735] sm:$0xf]
      %v2737 = vld [vmem:[%s2735 + $0x4] sm:$0xf]
      %v2738 = vld [vmem:[%s2735 + $0x8] sm:$0xf]
      %v2739 = vld [vmem:[%s2735 + $0xc] sm:$0xf]
      %s2740 = scalar_lea.vmem %s12, 1
      %v2741 = vld [vmem:[%s2740] sm:$0x1]
      %s2742 = scalar_lea.vmem %s13, 64
      %v2743 = vld [vmem:[%s2742] sm:$0xf]
      %v2744 = vld [vmem:[%s2742 + $0x4] sm:$0xf]
      %v2745 = vld [vmem:[%s2742 + $0x8] sm:$0xf]
      %v2746 = vld [vmem:[%s2742 + $0xc] sm:$0xf]
      %v2747 = vld [vmem:[%s2742 + $0x10] sm:$0xf]
      %v2748 = vld [vmem:[%s2742 + $0x14] sm:$0xf]
      %v2749 = vld [vmem:[%s2742 + $0x18] sm:$0xf]
      %v2750 = vld [vmem:[%s2742 + $0x1c] sm:$0xf]
      %v2751 = vld [vmem:[%s2742 + $0x20] sm:$0xf]
      %v2752 = vld [vmem:[%s2742 + $0x24] sm:$0xf]
      %v2753 = vld [vmem:[%s2742 + $0x28] sm:$0xf]
      %v2754 = vld [vmem:[%s2742 + $0x2c] sm:$0xf]
      %v2755 = vld [vmem:[%s2742 + $0x30] sm:$0xf]
      %v2756 = vld [vmem:[%s2742 + $0x34] sm:$0xf]
      %v2757 = vld [vmem:[%s2742 + $0x38] sm:$0xf]
      %v2758 = vld [vmem:[%s2742 + $0x3c] sm:$0xf]
      %s2759 = scalar_lea.vmem %s14, 1
      %v2760 = vld [vmem:[%s2759] sm:$0x1]
      %v2761 = vsel %vm1014, %v2703, 0.0
      %2762 = vadd.xlane.f32.xlu0 %v2761
      %v2763 = vpop.xlane.xlu0 %2762
      %v2764 = vsel %vm1014, %v2704, 0.0
      %2765 = vadd.xlane.f32.xlu0 %v2764
      %v2766 = vpop.xlane.xlu0 %2765
      %v2767 = vsel %vm1014, %v2705, 0.0
      %2768 = vadd.xlane.f32.xlu0 %v2767
      %v2769 = vpop.xlane.xlu0 %2768
      %v2770 = vsel %vm1014, %v2706, 0.0
      %2771 = vadd.xlane.f32.xlu0 %v2770
      %v2772 = vpop.xlane.xlu0 %2771
      %v2773 = vsel %vm1027, %v2707, 0.0
      %2774 = vadd.xlane.f32.xlu0 %v2773
      %v2775 = vpop.xlane.xlu0 %2774
      %v2776 = vmul.f32 %v2763, %v1031
      %v2777 = vmul.f32 %v2766, %v1031
      %v2778 = vmul.f32 %v2769, %v1031
      %v2779 = vmul.f32 %v2772, %v1031
      %v2780 = vmul.f32 %v2775, %v1031
      %v2781 = vsub.f32 %v2703, %v2776
      %v2782 = vsub.f32 %v2704, %v2777
      %v2783 = vsub.f32 %v2705, %v2778
      %v2784 = vsub.f32 %v2706, %v2779
      %v2785 = vsub.f32 %v2707, %v2780
      %v2786 = vmul.f32 %v2781, %v2781
      %v2787 = vmul.f32 %v2782, %v2782
      %v2788 = vmul.f32 %v2783, %v2783
      %v2789 = vmul.f32 %v2784, %v2784
      %v2790 = vmul.f32 %v2785, %v2785
      %v2791 = vsel %vm1014, %v2786, 0.0
      %2792 = vadd.xlane.f32.xlu0 %v2791
      %v2793 = vpop.xlane.xlu0 %2792
      %v2794 = vsel %vm1014, %v2787, 0.0
      %2795 = vadd.xlane.f32.xlu0 %v2794
      %v2796 = vpop.xlane.xlu0 %2795
      %v2797 = vsel %vm1014, %v2788, 0.0
      %2798 = vadd.xlane.f32.xlu0 %v2797
      %v2799 = vpop.xlane.xlu0 %2798
      %v2800 = vsel %vm1014, %v2789, 0.0
      %2801 = vadd.xlane.f32.xlu0 %v2800
      %v2802 = vpop.xlane.xlu0 %2801
      %v2803 = vsel %vm1027, %v2790, 0.0
      %2804 = vadd.xlane.f32.xlu0 %v2803
      %v2805 = vpop.xlane.xlu0 %2804
      %v2806 = vmul.f32 %v2793, %v1031
      %v2807 = vmul.f32 %v2796, %v1031
      %v2808 = vmul.f32 %v2799, %v1031
      %v2809 = vmul.f32 %v2802, %v1031
      %v2810 = vmul.f32 %v2805, %v1031
      %v2811 = vadd.f32 %v2806, 1e-06
      %v2812 = vadd.f32 %v2807, 1e-06
      %v2813 = vadd.f32 %v2808, 1e-06
      %v2814 = vadd.f32 %v2809, 1e-06
      %v2815 = vadd.f32 %v2810, 1e-06
      %v2816 = vrsqrt.pop %v2811
      %v2817 = vrsqrt.pop %v2812
      %v2818 = vrsqrt.pop %v2813
      %v2819 = vrsqrt.pop %v2814
      %v2820 = vrsqrt.pop %v2815
      %v2821 = vmul.f32 %v2781, %v2816
      %v2822 = vmul.f32 %v2782, %v2817
      %v2823 = vmul.f32 %v2783, %v2818
      %v2824 = vmul.f32 %v2784, %v2819
      %v2825 = vmul.f32 %v2785, %v2820
      %v2827 = vlaneseq
      %v2828 = vshrl.u32 %v2827, 7
      %v2829 = vsub.s32 0, %v2828
      %v2830 = vrot.slane %v2714, %v2829
      %v2832 = vmul.f32 %v2821, %v2830
      %v2833 = vmul.f32 %v2822, %v2830
      %v2834 = vmul.f32 %v2823, %v2830
      %v2835 = vmul.f32 %v2824, %v2830
      %v2836 = vmul.f32 %v2825, %v2830
      %v2838 = vlaneseq
      %v2839 = vshrl.u32 %v2838, 7
      %v2840 = vsub.s32 0, %v2839
      %v2841 = vrot.slane %v2716, %v2840
      %v2843 = vadd.f32 %v2832, %v2841
      %v2844 = vadd.f32 %v2833, %v2841
      %v2845 = vadd.f32 %v2834, %v2841
      %v2846 = vadd.f32 %v2835, %v2841
      %v2847 = vadd.f32 %v2836, %v2841
      %v2848 = vpack.c.bf16 %v2844, %v2843
      %v2849 = vpack.c.bf16 %v2846, %v2845
      %v2850 = vpack.c.bf16 %v2847, %v2847
      %v2852 = vlaneseq
      %v2853 = vshrl.u32 %v2852, 7
      %v2854 = vsub.s32 0, %v2853
      %v2855 = vrot.slane %v2723, %v2854
      %v2861 = vunpack.c.l.b16 %v2718
      %v2862 = vunpack.c.l.b16 %v2719
      %v2863 = vunpack.c.l.b16 %v2720
      %v2864 = vunpack.c.l.b16 %v2721
      %v2865 = vpack.c.b16 %v2862, %v2861
      %v2866 = vpack.c.b16 %v2864, %v2863
      %v2870 = vsel %vm1014, %v2848, 0
      %v2873 = vsel %vm1014, %v2849, 0
      %v2876 = vsel %vm1014, %v2850, 0
      %2878 = vmatprep.subr.bf16.mxu0 0
      %2879 = vmatpush1.bf16.msra.mxu0 0
      %2880 = vmatprep.subr.bf16.mxu0 0
      %2881 = vmatpush1.bf16.msra.mxu0 0
      %2882 = vmatprep.subr.bf16.mxu0 0
      %2883 = vmatpush1.bf16.msra.mxu0 0
      %2884 = vmatprep.subr.bf16.mxu0 0
      %2885 = vmatpush1.bf16.msra.mxu0 0
      %2886 = vmatprep.subr.bf16.mxu0 0
      %2887 = vmatpush1.bf16.msra.mxu0 0
      %2888 = vmatprep.subr.bf16.mxu0 0
      %2889 = vmatpush1.bf16.msra.mxu0 0
      %2890 = vmatprep.subr.bf16.mxu0 0
      %2891 = vmatpush1.bf16.msra.mxu0 %v2866
      %2892 = vmatprep.subr.bf16.mxu0 0
      %2893 = vmatpush1.bf16.msra.mxu0 %v2865
      %2894 = vmatprep.subr.bf16.mxu0 0
      %2895 = vmatpush2.bf16.msra.mxu0 0
      %2896 = vmatprep.subr.bf16.mxu0 0
      %2897 = vmatpush2.bf16.msra.mxu0 0
      %2898 = vmatprep.subr.bf16.mxu0 0
      %2899 = vmatpush2.bf16.msra.mxu0 0
      %2900 = vmatprep.subr.bf16.mxu0 0
      %2901 = vmatpush2.bf16.msra.mxu0 0
      %2902 = vmatprep.subr.bf16.mxu0 0
      %2903 = vmatpush2.bf16.msra.mxu0 0
      %2904 = vmatprep.subr.bf16.mxu0 0
      %2905 = vmatpush2.bf16.msra.mxu0 0
      %2906 = vmatprep.subr.bf16.mxu0 0
      %2907 = vmatpush2.bf16.msra.mxu0 0
      %2908 = vmatprep.subr.bf16.mxu0 0
      %2909 = vmatpush2.bf16.msra.mxu0 0
      %2910 = vmatprep.mubr.bf16.mxu0 0
      %2911 = vmatmul.mubr.bf16.gmra.mxu0 %v2870
      %v2912 = vpop.f32.mrf.mxu0
      %v2913 = vadd.f32 %v2855, %v2912
      %v2914 = vpop.f32.mrf.mxu0
      %v2915 = vpop.f32.mrf.mxu0
      %v2916 = vadd.f32 %v2855, %v2915
      %v2917 = vpop.f32.mrf.mxu0
      %2918 = vmatprep.mubr.bf16.mxu0 0
      %2919 = vmatmul.mubr.bf16.gmra.mxu0 %v2873
      %v2920 = vpop.f32.mrf.mxu0
      %v2921 = vadd.f32 %v2855, %v2920
      %v2922 = vpop.f32.mrf.mxu0
      %v2923 = vpop.f32.mrf.mxu0
      %v2924 = vadd.f32 %v2855, %v2923
      %v2925 = vpop.f32.mrf.mxu0
      %2926 = vmatprep.mubr.bf16.mxu0 0
      %2927 = vmatmul.mubr.bf16.gmra.mxu0 %v2876
      %v2928 = vpop.f32.mrf.mxu0
      %v2929 = vadd.f32 %v2855, %v2928
      %v2930 = vpop.f32.mrf.mxu0
      %v2931 = vpop.f32.mrf.mxu0
      %v2932 = vpop.f32.mrf.mxu0
      %2933 = vdwg.mxu0
      %v2934 = vpack.c.bf16 %v2916, %v2913
      %v2935 = vpack.c.bf16 %v2924, %v2921
      %v2936 = vpack.c.bf16 %v2929, %v2929
      %2940 = vrot.lane.b32.xlu0 %v2934, 96
      %v2941 = vpop.permute.xlu0 %2940
      %2942 = vrot.lane.b32.xlu0 %v2935, 96
      %v2943 = vpop.permute.xlu0 %2942
      %2944 = vrot.lane.b32.xlu0 %v2936, 96
      %v2945 = vpop.permute.xlu0 %2944
      %v2947 = vsel %vm1202, %v2934, 0
      %v2950 = vsel %vm1202, %v2935, 0
      %v2953 = vsel %vm1202, %v2936, 0
      %v2956 = vsel %vm1202, %v2941, 0
      %v2959 = vsel %vm1202, %v2943, 0
      %v2962 = vsel %vm1202, %v2945, 0
      %2964 = vmatprep.subr.bf16.mxu0 0
      %2965 = vmatpush1.bf16.xpose.msra.mxu0 0
      %2966 = vmatprep.subr.bf16.mxu0 0
      %2967 = vmatpush1.bf16.xpose.msra.mxu0 0
      %2968 = vmatprep.subr.bf16.mxu0 0
      %2969 = vmatpush1.bf16.xpose.msra.mxu0 0
      %2970 = vmatprep.subr.bf16.mxu0 0
      %2971 = vmatpush1.bf16.xpose.msra.mxu0 0
      %2972 = vmatprep.subr.bf16.mxu0 0
      %2973 = vmatpush1.bf16.xpose.msra.mxu0 0
      %2974 = vmatprep.subr.bf16.mxu0 0
      %2975 = vmatpush1.bf16.xpose.msra.mxu0 %v2962
      %2976 = vmatprep.subr.bf16.mxu0 0
      %2977 = vmatpush1.bf16.xpose.msra.mxu0 %v2959
      %2978 = vmatprep.subr.bf16.mxu0 0
      %2979 = vmatpush1.bf16.xpose.msra.mxu0 %v2956
      %2980 = vmatprep.subr.bf16.mxu0 0
      %2981 = vmatpush2.bf16.xpose.msra.mxu0 0
      %2982 = vmatprep.subr.bf16.mxu0 0
      %2983 = vmatpush2.bf16.xpose.msra.mxu0 0
      %2984 = vmatprep.subr.bf16.mxu0 0
      %2985 = vmatpush2.bf16.xpose.msra.mxu0 0
      %2986 = vmatprep.subr.bf16.mxu0 0
      %2987 = vmatpush2.bf16.xpose.msra.mxu0 0
      %2988 = vmatprep.subr.bf16.mxu0 0
      %2989 = vmatpush2.bf16.xpose.msra.mxu0 0
      %2990 = vmatprep.subr.bf16.mxu0 0
      %2991 = vmatpush2.bf16.xpose.msra.mxu0 0
      %2992 = vmatprep.subr.bf16.mxu0 0
      %2993 = vmatpush2.bf16.xpose.msra.mxu0 0
      %2994 = vmatprep.subr.bf16.mxu0 0
      %2995 = vmatpush2.bf16.xpose.msra.mxu0 0
      %2996 = vmatprep.mubr.bf16.mxu0 0
      %2997 = vmatmul.mubr.bf16.gmra.mxu0 %v2947
      %v2998 = vpop.f32.mrf.mxu0
      %v2999 = vadd.f32 0.0, %v2998
      %v3000 = vpop.f32.mrf.mxu0
      %v3001 = vpop.f32.mrf.mxu0
      %v3002 = vadd.f32 0.0, %v3001
      %v3003 = vpop.f32.mrf.mxu0
      %3004 = vmatprep.mubr.bf16.mxu0 0
      %3005 = vmatmul.mubr.bf16.gmra.mxu0 %v2950
      %v3006 = vpop.f32.mrf.mxu0
      %v3007 = vadd.f32 0.0, %v3006
      %v3008 = vpop.f32.mrf.mxu0
      %v3009 = vpop.f32.mrf.mxu0
      %v3010 = vadd.f32 0.0, %v3009
      %v3011 = vpop.f32.mrf.mxu0
      %3012 = vmatprep.mubr.bf16.mxu0 0
      %3013 = vmatmul.mubr.bf16.gmra.mxu0 %v2953
      %v3014 = vpop.f32.mrf.mxu0
      %v3015 = vadd.f32 0.0, %v3014
      %v3016 = vpop.f32.mrf.mxu0
      %v3017 = vpop.f32.mrf.mxu0
      %v3018 = vpop.f32.mrf.mxu0
      %3019 = vdwg.mxu0
      %v3020 = vmul.f32 %v2999, 0.35355338
      %v3021 = vmul.f32 %v3002, 0.35355338
      %v3022 = vmul.f32 %v3007, 0.35355338
      %v3023 = vmul.f32 %v3010, 0.35355338
      %v3024 = vmul.f32 %v3015, 0.35355338
      %v3025 = vsel %vm973, %v3020, -1e+30
      %v3026 = vsel %vm974, %v3021, -1e+30
      %v3027 = vsel %vm975, %v3022, -1e+30
      %v3028 = vsel %vm976, %v3023, -1e+30
      %v3029 = vsel %vm977, %v3024, -1e+30
      %v3030 = vsel %vm1287, %v3025, -inf
      %3031 = vmax.xlane.f32.xlu0 %v3030
      %v3032 = vpop.xlane.xlu0 %3031
      %v3033 = vsel %vm1287, %v3026, -inf
      %3034 = vmax.xlane.f32.xlu0 %v3033
      %v3035 = vpop.xlane.xlu0 %3034
      %v3036 = vsel %vm1287, %v3027, -inf
      %3037 = vmax.xlane.f32.xlu0 %v3036
      %v3038 = vpop.xlane.xlu0 %3037
      %v3039 = vsel %vm1287, %v3028, -inf
      %3040 = vmax.xlane.f32.xlu0 %v3039
      %v3041 = vpop.xlane.xlu0 %3040
      %v3042 = vsel %vm1300, %v3029, -inf
      %3043 = vmax.xlane.f32.xlu0 %v3042
      %v3044 = vpop.xlane.xlu0 %3043
      %v3045 = vsub.f32 %v3025, %v3032
      %v3046 = vsub.f32 %v3026, %v3035
      %v3047 = vsub.f32 %v3027, %v3038
      %v3048 = vsub.f32 %v3028, %v3041
      %v3049 = vsub.f32 %v3029, %v3044
      %v3050 = vmul.f32 %v3045, 1.442695
      %v3051 = vpow.pop %v3050
      %v3052 = vmul.f32 %v3046, 1.442695
      %v3053 = vpow.pop %v3052
      %v3054 = vmul.f32 %v3047, 1.442695
      %v3055 = vpow.pop %v3054
      %v3056 = vmul.f32 %v3048, 1.442695
      %v3057 = vpow.pop %v3056
      %v3058 = vmul.f32 %v3049, 1.442695
      %v3059 = vpow.pop %v3058
      %v3060 = vsel %vm1287, %v3051, 0.0
      %3061 = vadd.xlane.f32.xlu0 %v3060
      %v3062 = vpop.xlane.xlu0 %3061
      %v3063 = vsel %vm1287, %v3053, 0.0
      %3064 = vadd.xlane.f32.xlu0 %v3063
      %v3065 = vpop.xlane.xlu0 %3064
      %v3066 = vsel %vm1287, %v3055, 0.0
      %3067 = vadd.xlane.f32.xlu0 %v3066
      %v3068 = vpop.xlane.xlu0 %3067
      %v3069 = vsel %vm1287, %v3057, 0.0
      %3070 = vadd.xlane.f32.xlu0 %v3069
      %v3071 = vpop.xlane.xlu0 %3070
      %v3072 = vsel %vm1300, %v3059, 0.0
      %3073 = vadd.xlane.f32.xlu0 %v3072
      %v3074 = vpop.xlane.xlu0 %3073
      %v3075 = vrcp.pop %v3062
      %v3076 = vrcp.pop %v3065
      %v3077 = vrcp.pop %v3068
      %v3078 = vrcp.pop %v3071
      %v3079 = vrcp.pop %v3074
      %v3080 = vmul.f32 %v3051, %v3075
      %v3081 = vmul.f32 %v3053, %v3076
      %v3082 = vmul.f32 %v3055, %v3077
      %v3083 = vmul.f32 %v3057, %v3078
      %v3084 = vmul.f32 %v3059, %v3079
      %v3085 = vpack.c.bf16 %v3081, %v3080
      %v3086 = vpack.c.bf16 %v3083, %v3082
      %v3087 = vpack.c.bf16 %v3084, %v3084
      %3088 = vrot.lane.b32.xlu0 %v2934, 64
      %v3089 = vpop.permute.xlu0 %3088
      %3090 = vrot.lane.b32.xlu0 %v2935, 64
      %v3091 = vpop.permute.xlu0 %3090
      %3092 = vrot.lane.b32.xlu0 %v2936, 64
      %v3093 = vpop.permute.xlu0 %3092
      %v3097 = vsel %vm1287, %v3085, 0
      %v3100 = vsel %vm1287, %v3086, 0
      %v3103 = vsel %vm1287, %v3087, 0
      %v3106 = vsel %vm1364, %v3093, 0
      %3108 = vmatprep.subr.bf16.mxu0 0
      %3109 = vmatpush1.bf16.msra.mxu0 0
      %3110 = vmatprep.subr.bf16.mxu0 0
      %3111 = vmatpush1.bf16.msra.mxu0 0
      %3112 = vmatprep.subr.bf16.mxu0 0
      %3113 = vmatpush1.bf16.msra.mxu0 0
      %3114 = vmatprep.subr.bf16.mxu0 0
      %3115 = vmatpush1.bf16.msra.mxu0 0
      %3116 = vmatprep.subr.bf16.mxu0 0
      %3117 = vmatpush1.bf16.msra.mxu0 0
      %3118 = vmatprep.subr.bf16.mxu0 0
      %3119 = vmatpush1.bf16.msra.mxu0 %v3106
      %3120 = vmatprep.subr.bf16.mxu0 0
      %3121 = vmatpush1.bf16.msra.mxu0 %v3091
      %3122 = vmatprep.subr.bf16.mxu0 0
      %3123 = vmatpush1.bf16.msra.mxu0 %v3089
      %3124 = vmatprep.subr.bf16.mxu0 0
      %3125 = vmatpush2.bf16.msra.mxu0 0
      %3126 = vmatprep.subr.bf16.mxu0 0
      %3127 = vmatpush2.bf16.msra.mxu0 0
      %3128 = vmatprep.subr.bf16.mxu0 0
      %3129 = vmatpush2.bf16.msra.mxu0 0
      %3130 = vmatprep.subr.bf16.mxu0 0
      %3131 = vmatpush2.bf16.msra.mxu0 0
      %3132 = vmatprep.subr.bf16.mxu0 0
      %3133 = vmatpush2.bf16.msra.mxu0 0
      %3134 = vmatprep.subr.bf16.mxu0 0
      %3135 = vmatpush2.bf16.msra.mxu0 0
      %3136 = vmatprep.subr.bf16.mxu0 0
      %3137 = vmatpush2.bf16.msra.mxu0 0
      %3138 = vmatprep.subr.bf16.mxu0 0
      %3139 = vmatpush2.bf16.msra.mxu0 0
      %3140 = vmatprep.mubr.bf16.mxu0 0
      %3141 = vmatmul.mubr.bf16.gmra.mxu0 %v3097
      %v3142 = vpop.f32.mrf.mxu0
      %v3143 = vadd.f32 0.0, %v3142
      %v3144 = vpop.f32.mrf.mxu0
      %v3145 = vpop.f32.mrf.mxu0
      %v3146 = vadd.f32 0.0, %v3145
      %v3147 = vpop.f32.mrf.mxu0
      %3148 = vmatprep.mubr.bf16.mxu0 0
      %3149 = vmatmul.mubr.bf16.gmra.mxu0 %v3100
      %v3150 = vpop.f32.mrf.mxu0
      %v3151 = vadd.f32 0.0, %v3150
      %v3152 = vpop.f32.mrf.mxu0
      %v3153 = vpop.f32.mrf.mxu0
      %v3154 = vadd.f32 0.0, %v3153
      %v3155 = vpop.f32.mrf.mxu0
      %3156 = vmatprep.mubr.bf16.mxu0 0
      %3157 = vmatmul.mubr.bf16.gmra.mxu0 %v3103
      %v3158 = vpop.f32.mrf.mxu0
      %v3159 = vadd.f32 0.0, %v3158
      %v3160 = vpop.f32.mrf.mxu0
      %v3161 = vpop.f32.mrf.mxu0
      %v3162 = vpop.f32.mrf.mxu0
      %3163 = vdwg.mxu0
      %3164 = vrot.lane.b32.xlu0 %v2934, 120
      %v3165 = vpop.permute.xlu0 %3164
      %3166 = vrot.lane.b32.xlu0 %v2935, 120
      %v3167 = vpop.permute.xlu0 %3166
      %3168 = vrot.lane.b32.xlu0 %v2936, 120
      %v3169 = vpop.permute.xlu0 %3168
      %3170 = vrot.lane.b32.xlu0 %v2934, 88
      %v3171 = vpop.permute.xlu0 %3170
      %3172 = vrot.lane.b32.xlu0 %v2935, 88
      %v3173 = vpop.permute.xlu0 %3172
      %3174 = vrot.lane.b32.xlu0 %v2936, 88
      %v3175 = vpop.permute.xlu0 %3174
      %v3177 = vsel %vm1202, %v3165, 0
      %v3180 = vsel %vm1202, %v3167, 0
      %v3183 = vsel %vm1202, %v3169, 0
      %v3186 = vsel %vm1202, %v3171, 0
      %v3189 = vsel %vm1202, %v3173, 0
      %v3192 = vsel %vm1202, %v3175, 0
      %3194 = vmatprep.subr.bf16.mxu0 0
      %3195 = vmatpush1.bf16.xpose.msra.mxu0 0
      %3196 = vmatprep.subr.bf16.mxu0 0
      %3197 = vmatpush1.bf16.xpose.msra.mxu0 0
      %3198 = vmatprep.subr.bf16.mxu0 0
      %3199 = vmatpush1.bf16.xpose.msra.mxu0 0
      %3200 = vmatprep.subr.bf16.mxu0 0
      %3201 = vmatpush1.bf16.xpose.msra.mxu0 0
      %3202 = vmatprep.subr.bf16.mxu0 0
      %3203 = vmatpush1.bf16.xpose.msra.mxu0 0
      %3204 = vmatprep.subr.bf16.mxu0 0
      %3205 = vmatpush1.bf16.xpose.msra.mxu0 %v3192
      %3206 = vmatprep.subr.bf16.mxu0 0
      %3207 = vmatpush1.bf16.xpose.msra.mxu0 %v3189
      %3208 = vmatprep.subr.bf16.mxu0 0
      %3209 = vmatpush1.bf16.xpose.msra.mxu0 %v3186
      %3210 = vmatprep.subr.bf16.mxu0 0
      %3211 = vmatpush2.bf16.xpose.msra.mxu0 0
      %3212 = vmatprep.subr.bf16.mxu0 0
      %3213 = vmatpush2.bf16.xpose.msra.mxu0 0
      %3214 = vmatprep.subr.bf16.mxu0 0
      %3215 = vmatpush2.bf16.xpose.msra.mxu0 0
      %3216 = vmatprep.subr.bf16.mxu0 0
      %3217 = vmatpush2.bf16.xpose.msra.mxu0 0
      %3218 = vmatprep.subr.bf16.mxu0 0
      %3219 = vmatpush2.bf16.xpose.msra.mxu0 0
      %3220 = vmatprep.subr.bf16.mxu0 0
      %3221 = vmatpush2.bf16.xpose.msra.mxu0 0
      %3222 = vmatprep.subr.bf16.mxu0 0
      %3223 = vmatpush2.bf16.xpose.msra.mxu0 0
      %3224 = vmatprep.subr.bf16.mxu0 0
      %3225 = vmatpush2.bf16.xpose.msra.mxu0 0
      %3226 = vmatprep.mubr.bf16.mxu0 0
      %3227 = vmatmul.mubr.bf16.gmra.mxu0 %v3177
      %v3228 = vpop.f32.mrf.mxu0
      %v3229 = vadd.f32 0.0, %v3228
      %v3230 = vpop.f32.mrf.mxu0
      %v3231 = vpop.f32.mrf.mxu0
      %v3232 = vadd.f32 0.0, %v3231
      %v3233 = vpop.f32.mrf.mxu0
      %3234 = vmatprep.mubr.bf16.mxu0 0
      %3235 = vmatmul.mubr.bf16.gmra.mxu0 %v3180
      %v3236 = vpop.f32.mrf.mxu0
      %v3237 = vadd.f32 0.0, %v3236
      %v3238 = vpop.f32.mrf.mxu0
      %v3239 = vpop.f32.mrf.mxu0
      %v3240 = vadd.f32 0.0, %v3239
      %v3241 = vpop.f32.mrf.mxu0
      %3242 = vmatprep.mubr.bf16.mxu0 0
      %3243 = vmatmul.mubr.bf16.gmra.mxu0 %v3183
      %v3244 = vpop.f32.mrf.mxu0
      %v3245 = vadd.f32 0.0, %v3244
      %v3246 = vpop.f32.mrf.mxu0
      %v3247 = vpop.f32.mrf.mxu0
      %v3248 = vpop.f32.mrf.mxu0
      %3249 = vdwg.mxu0
      %v3250 = vmul.f32 %v3229, 0.35355338
      %v3251 = vmul.f32 %v3232, 0.35355338
      %v3252 = vmul.f32 %v3237, 0.35355338
      %v3253 = vmul.f32 %v3240, 0.35355338
      %v3254 = vmul.f32 %v3245, 0.35355338
      %v3255 = vsel %vm973, %v3250, -1e+30
      %v3256 = vsel %vm974, %v3251, -1e+30
      %v3257 = vsel %vm975, %v3252, -1e+30
      %v3258 = vsel %vm976, %v3253, -1e+30
      %v3259 = vsel %vm977, %v3254, -1e+30
      %v3260 = vsel %vm1287, %v3255, -inf
      %3261 = vmax.xlane.f32.xlu0 %v3260
      %v3262 = vpop.xlane.xlu0 %3261
      %v3263 = vsel %vm1287, %v3256, -inf
      %3264 = vmax.xlane.f32.xlu0 %v3263
      %v3265 = vpop.xlane.xlu0 %3264
      %v3266 = vsel %vm1287, %v3257, -inf
      %3267 = vmax.xlane.f32.xlu0 %v3266
      %v3268 = vpop.xlane.xlu0 %3267
      %v3269 = vsel %vm1287, %v3258, -inf
      %3270 = vmax.xlane.f32.xlu0 %v3269
      %v3271 = vpop.xlane.xlu0 %3270
      %v3272 = vsel %vm1300, %v3259, -inf
      %3273 = vmax.xlane.f32.xlu0 %v3272
      %v3274 = vpop.xlane.xlu0 %3273
      %v3275 = vsub.f32 %v3255, %v3262
      %v3276 = vsub.f32 %v3256, %v3265
      %v3277 = vsub.f32 %v3257, %v3268
      %v3278 = vsub.f32 %v3258, %v3271
      %v3279 = vsub.f32 %v3259, %v3274
      %v3280 = vmul.f32 %v3275, 1.442695
      %v3281 = vpow.pop %v3280
      %v3282 = vmul.f32 %v3276, 1.442695
      %v3283 = vpow.pop %v3282
      %v3284 = vmul.f32 %v3277, 1.442695
      %v3285 = vpow.pop %v3284
      %v3286 = vmul.f32 %v3278, 1.442695
      %v3287 = vpow.pop %v3286
      %v3288 = vmul.f32 %v3279, 1.442695
      %v3289 = vpow.pop %v3288
      %v3290 = vsel %vm1287, %v3281, 0.0
      %3291 = vadd.xlane.f32.xlu0 %v3290
      %v3292 = vpop.xlane.xlu0 %3291
      %v3293 = vsel %vm1287, %v3283, 0.0
      %3294 = vadd.xlane.f32.xlu0 %v3293
      %v3295 = vpop.xlane.xlu0 %3294
      %v3296 = vsel %vm1287, %v3285, 0.0
      %3297 = vadd.xlane.f32.xlu0 %v3296
      %v3298 = vpop.xlane.xlu0 %3297
      %v3299 = vsel %vm1287, %v3287, 0.0
      %3300 = vadd.xlane.f32.xlu0 %v3299
      %v3301 = vpop.xlane.xlu0 %3300
      %v3302 = vsel %vm1300, %v3289, 0.0
      %3303 = vadd.xlane.f32.xlu0 %v3302
      %v3304 = vpop.xlane.xlu0 %3303
      %v3305 = vrcp.pop %v3292
      %v3306 = vrcp.pop %v3295
      %v3307 = vrcp.pop %v3298
      %v3308 = vrcp.pop %v3301
      %v3309 = vrcp.pop %v3304
      %v3310 = vmul.f32 %v3281, %v3305
      %v3311 = vmul.f32 %v3283, %v3306
      %v3312 = vmul.f32 %v3285, %v3307
      %v3313 = vmul.f32 %v3287, %v3308
      %v3314 = vmul.f32 %v3289, %v3309
      %v3315 = vpack.c.bf16 %v3311, %v3310
      %v3316 = vpack.c.bf16 %v3313, %v3312
      %v3317 = vpack.c.bf16 %v3314, %v3314
      %3318 = vrot.lane.b32.xlu0 %v2934, 56
      %v3319 = vpop.permute.xlu0 %3318
      %3320 = vrot.lane.b32.xlu0 %v2935, 56
      %v3321 = vpop.permute.xlu0 %3320
      %3322 = vrot.lane.b32.xlu0 %v2936, 56
      %v3323 = vpop.permute.xlu0 %3322
      %v3327 = vsel %vm1287, %v3315, 0
      %v3330 = vsel %vm1287, %v3316, 0
      %v3333 = vsel %vm1287, %v3317, 0
      %v3336 = vsel %vm1364, %v3323, 0
      %3338 = vmatprep.subr.bf16.mxu0 0
      %3339 = vmatpush1.bf16.msra.mxu0 0
      %3340 = vmatprep.subr.bf16.mxu0 0
      %3341 = vmatpush1.bf16.msra.mxu0 0
      %3342 = vmatprep.subr.bf16.mxu0 0
      %3343 = vmatpush1.bf16.msra.mxu0 0
      %3344 = vmatprep.subr.bf16.mxu0 0
      %3345 = vmatpush1.bf16.msra.mxu0 0
      %3346 = vmatprep.subr.bf16.mxu0 0
      %3347 = vmatpush1.bf16.msra.mxu0 0
      %3348 = vmatprep.subr.bf16.mxu0 0
      %3349 = vmatpush1.bf16.msra.mxu0 %v3336
      %3350 = vmatprep.subr.bf16.mxu0 0
      %3351 = vmatpush1.bf16.msra.mxu0 %v3321
      %3352 = vmatprep.subr.bf16.mxu0 0
      %3353 = vmatpush1.bf16.msra.mxu0 %v3319
      %3354 = vmatprep.subr.bf16.mxu0 0
      %3355 = vmatpush2.bf16.msra.mxu0 0
      %3356 = vmatprep.subr.bf16.mxu0 0
      %3357 = vmatpush2.bf16.msra.mxu0 0
      %3358 = vmatprep.subr.bf16.mxu0 0
      %3359 = vmatpush2.bf16.msra.mxu0 0
      %3360 = vmatprep.subr.bf16.mxu0 0
      %3361 = vmatpush2.bf16.msra.mxu0 0
      %3362 = vmatprep.subr.bf16.mxu0 0
      %3363 = vmatpush2.bf16.msra.mxu0 0
      %3364 = vmatprep.subr.bf16.mxu0 0
      %3365 = vmatpush2.bf16.msra.mxu0 0
      %3366 = vmatprep.subr.bf16.mxu0 0
      %3367 = vmatpush2.bf16.msra.mxu0 0
      %3368 = vmatprep.subr.bf16.mxu0 0
      %3369 = vmatpush2.bf16.msra.mxu0 0
      %3370 = vmatprep.mubr.bf16.mxu0 0
      %3371 = vmatmul.mubr.bf16.gmra.mxu0 %v3327
      %v3372 = vpop.f32.mrf.mxu0
      %v3373 = vadd.f32 0.0, %v3372
      %v3374 = vpop.f32.mrf.mxu0
      %v3375 = vpop.f32.mrf.mxu0
      %v3376 = vadd.f32 0.0, %v3375
      %v3377 = vpop.f32.mrf.mxu0
      %3378 = vmatprep.mubr.bf16.mxu0 0
      %3379 = vmatmul.mubr.bf16.gmra.mxu0 %v3330
      %v3380 = vpop.f32.mrf.mxu0
      %v3381 = vadd.f32 0.0, %v3380
      %v3382 = vpop.f32.mrf.mxu0
      %v3383 = vpop.f32.mrf.mxu0
      %v3384 = vadd.f32 0.0, %v3383
      %v3385 = vpop.f32.mrf.mxu0
      %3386 = vmatprep.mubr.bf16.mxu0 0
      %3387 = vmatmul.mubr.bf16.gmra.mxu0 %v3333
      %v3388 = vpop.f32.mrf.mxu0
      %v3389 = vadd.f32 0.0, %v3388
      %v3390 = vpop.f32.mrf.mxu0
      %v3391 = vpop.f32.mrf.mxu0
      %v3392 = vpop.f32.mrf.mxu0
      %3393 = vdwg.mxu0
      %3394 = vrot.lane.b32.xlu0 %v2934, 112
      %v3395 = vpop.permute.xlu0 %3394
      %3396 = vrot.lane.b32.xlu0 %v2935, 112
      %v3397 = vpop.permute.xlu0 %3396
      %3398 = vrot.lane.b32.xlu0 %v2936, 112
      %v3399 = vpop.permute.xlu0 %3398
      %3400 = vrot.lane.b32.xlu0 %v2934, 80
      %v3401 = vpop.permute.xlu0 %3400
      %3402 = vrot.lane.b32.xlu0 %v2935, 80
      %v3403 = vpop.permute.xlu0 %3402
      %3404 = vrot.lane.b32.xlu0 %v2936, 80
      %v3405 = vpop.permute.xlu0 %3404
      %v3407 = vsel %vm1202, %v3395, 0
      %v3410 = vsel %vm1202, %v3397, 0
      %v3413 = vsel %vm1202, %v3399, 0
      %v3416 = vsel %vm1202, %v3401, 0
      %v3419 = vsel %vm1202, %v3403, 0
      %v3422 = vsel %vm1202, %v3405, 0
      %3424 = vmatprep.subr.bf16.mxu0 0
      %3425 = vmatpush1.bf16.xpose.msra.mxu0 0
      %3426 = vmatprep.subr.bf16.mxu0 0
      %3427 = vmatpush1.bf16.xpose.msra.mxu0 0
      %3428 = vmatprep.subr.bf16.mxu0 0
      %3429 = vmatpush1.bf16.xpose.msra.mxu0 0
      %3430 = vmatprep.subr.bf16.mxu0 0
      %3431 = vmatpush1.bf16.xpose.msra.mxu0 0
      %3432 = vmatprep.subr.bf16.mxu0 0
      %3433 = vmatpush1.bf16.xpose.msra.mxu0 0
      %3434 = vmatprep.subr.bf16.mxu0 0
      %3435 = vmatpush1.bf16.xpose.msra.mxu0 %v3422
      %3436 = vmatprep.subr.bf16.mxu0 0
      %3437 = vmatpush1.bf16.xpose.msra.mxu0 %v3419
      %3438 = vmatprep.subr.bf16.mxu0 0
      %3439 = vmatpush1.bf16.xpose.msra.mxu0 %v3416
      %3440 = vmatprep.subr.bf16.mxu0 0
      %3441 = vmatpush2.bf16.xpose.msra.mxu0 0
      %3442 = vmatprep.subr.bf16.mxu0 0
      %3443 = vmatpush2.bf16.xpose.msra.mxu0 0
      %3444 = vmatprep.subr.bf16.mxu0 0
      %3445 = vmatpush2.bf16.xpose.msra.mxu0 0
      %3446 = vmatprep.subr.bf16.mxu0 0
      %3447 = vmatpush2.bf16.xpose.msra.mxu0 0
      %3448 = vmatprep.subr.bf16.mxu0 0
      %3449 = vmatpush2.bf16.xpose.msra.mxu0 0
      %3450 = vmatprep.subr.bf16.mxu0 0
      %3451 = vmatpush2.bf16.xpose.msra.mxu0 0
      %3452 = vmatprep.subr.bf16.mxu0 0
      %3453 = vmatpush2.bf16.xpose.msra.mxu0 0
      %3454 = vmatprep.subr.bf16.mxu0 0
      %3455 = vmatpush2.bf16.xpose.msra.mxu0 0
      %3456 = vmatprep.mubr.bf16.mxu0 0
      %3457 = vmatmul.mubr.bf16.gmra.mxu0 %v3407
      %v3458 = vpop.f32.mrf.mxu0
      %v3459 = vadd.f32 0.0, %v3458
      %v3460 = vpop.f32.mrf.mxu0
      %v3461 = vpop.f32.mrf.mxu0
      %v3462 = vadd.f32 0.0, %v3461
      %v3463 = vpop.f32.mrf.mxu0
      %3464 = vmatprep.mubr.bf16.mxu0 0
      %3465 = vmatmul.mubr.bf16.gmra.mxu0 %v3410
      %v3466 = vpop.f32.mrf.mxu0
      %v3467 = vadd.f32 0.0, %v3466
      %v3468 = vpop.f32.mrf.mxu0
      %v3469 = vpop.f32.mrf.mxu0
      %v3470 = vadd.f32 0.0, %v3469
      %v3471 = vpop.f32.mrf.mxu0
      %3472 = vmatprep.mubr.bf16.mxu0 0
      %3473 = vmatmul.mubr.bf16.gmra.mxu0 %v3413
      %v3474 = vpop.f32.mrf.mxu0
      %v3475 = vadd.f32 0.0, %v3474
      %v3476 = vpop.f32.mrf.mxu0
      %v3477 = vpop.f32.mrf.mxu0
      %v3478 = vpop.f32.mrf.mxu0
      %3479 = vdwg.mxu0
      %v3480 = vmul.f32 %v3459, 0.35355338
      %v3481 = vmul.f32 %v3462, 0.35355338
      %v3482 = vmul.f32 %v3467, 0.35355338
      %v3483 = vmul.f32 %v3470, 0.35355338
      %v3484 = vmul.f32 %v3475, 0.35355338
      %v3485 = vsel %vm973, %v3480, -1e+30
      %v3486 = vsel %vm974, %v3481, -1e+30
      %v3487 = vsel %vm975, %v3482, -1e+30
      %v3488 = vsel %vm976, %v3483, -1e+30
      %v3489 = vsel %vm977, %v3484, -1e+30
      %v3490 = vsel %vm1287, %v3485, -inf
      %3491 = vmax.xlane.f32.xlu0 %v3490
      %v3492 = vpop.xlane.xlu0 %3491
      %v3493 = vsel %vm1287, %v3486, -inf
      %3494 = vmax.xlane.f32.xlu0 %v3493
      %v3495 = vpop.xlane.xlu0 %3494
      %v3496 = vsel %vm1287, %v3487, -inf
      %3497 = vmax.xlane.f32.xlu0 %v3496
      %v3498 = vpop.xlane.xlu0 %3497
      %v3499 = vsel %vm1287, %v3488, -inf
      %3500 = vmax.xlane.f32.xlu0 %v3499
      %v3501 = vpop.xlane.xlu0 %3500
      %v3502 = vsel %vm1300, %v3489, -inf
      %3503 = vmax.xlane.f32.xlu0 %v3502
      %v3504 = vpop.xlane.xlu0 %3503
      %v3505 = vsub.f32 %v3485, %v3492
      %v3506 = vsub.f32 %v3486, %v3495
      %v3507 = vsub.f32 %v3487, %v3498
      %v3508 = vsub.f32 %v3488, %v3501
      %v3509 = vsub.f32 %v3489, %v3504
      %v3510 = vmul.f32 %v3505, 1.442695
      %v3511 = vpow.pop %v3510
      %v3512 = vmul.f32 %v3506, 1.442695
      %v3513 = vpow.pop %v3512
      %v3514 = vmul.f32 %v3507, 1.442695
      %v3515 = vpow.pop %v3514
      %v3516 = vmul.f32 %v3508, 1.442695
      %v3517 = vpow.pop %v3516
      %v3518 = vmul.f32 %v3509, 1.442695
      %v3519 = vpow.pop %v3518
      %v3520 = vsel %vm1287, %v3511, 0.0
      %3521 = vadd.xlane.f32.xlu0 %v3520
      %v3522 = vpop.xlane.xlu0 %3521
      %v3523 = vsel %vm1287, %v3513, 0.0
      %3524 = vadd.xlane.f32.xlu0 %v3523
      %v3525 = vpop.xlane.xlu0 %3524
      %v3526 = vsel %vm1287, %v3515, 0.0
      %3527 = vadd.xlane.f32.xlu0 %v3526
      %v3528 = vpop.xlane.xlu0 %3527
      %v3529 = vsel %vm1287, %v3517, 0.0
      %3530 = vadd.xlane.f32.xlu0 %v3529
      %v3531 = vpop.xlane.xlu0 %3530
      %v3532 = vsel %vm1300, %v3519, 0.0
      %3533 = vadd.xlane.f32.xlu0 %v3532
      %v3534 = vpop.xlane.xlu0 %3533
      %v3535 = vrcp.pop %v3522
      %v3536 = vrcp.pop %v3525
      %v3537 = vrcp.pop %v3528
      %v3538 = vrcp.pop %v3531
      %v3539 = vrcp.pop %v3534
      %v3540 = vmul.f32 %v3511, %v3535
      %v3541 = vmul.f32 %v3513, %v3536
      %v3542 = vmul.f32 %v3515, %v3537
      %v3543 = vmul.f32 %v3517, %v3538
      %v3544 = vmul.f32 %v3519, %v3539
      %v3545 = vpack.c.bf16 %v3541, %v3540
      %v3546 = vpack.c.bf16 %v3543, %v3542
      %v3547 = vpack.c.bf16 %v3544, %v3544
      %3548 = vrot.lane.b32.xlu0 %v2934, 48
      %v3549 = vpop.permute.xlu0 %3548
      %3550 = vrot.lane.b32.xlu0 %v2935, 48
      %v3551 = vpop.permute.xlu0 %3550
      %3552 = vrot.lane.b32.xlu0 %v2936, 48
      %v3553 = vpop.permute.xlu0 %3552
      %v3557 = vsel %vm1287, %v3545, 0
      %v3560 = vsel %vm1287, %v3546, 0
      %v3563 = vsel %vm1287, %v3547, 0
      %v3566 = vsel %vm1364, %v3553, 0
      %3568 = vmatprep.subr.bf16.mxu0 0
      %3569 = vmatpush1.bf16.msra.mxu0 0
      %3570 = vmatprep.subr.bf16.mxu0 0
      %3571 = vmatpush1.bf16.msra.mxu0 0
      %3572 = vmatprep.subr.bf16.mxu0 0
      %3573 = vmatpush1.bf16.msra.mxu0 0
      %3574 = vmatprep.subr.bf16.mxu0 0
      %3575 = vmatpush1.bf16.msra.mxu0 0
      %3576 = vmatprep.subr.bf16.mxu0 0
      %3577 = vmatpush1.bf16.msra.mxu0 0
      %3578 = vmatprep.subr.bf16.mxu0 0
      %3579 = vmatpush1.bf16.msra.mxu0 %v3566
      %3580 = vmatprep.subr.bf16.mxu0 0
      %3581 = vmatpush1.bf16.msra.mxu0 %v3551
      %3582 = vmatprep.subr.bf16.mxu0 0
      %3583 = vmatpush1.bf16.msra.mxu0 %v3549
      %3584 = vmatprep.subr.bf16.mxu0 0
      %3585 = vmatpush2.bf16.msra.mxu0 0
      %3586 = vmatprep.subr.bf16.mxu0 0
      %3587 = vmatpush2.bf16.msra.mxu0 0
      %3588 = vmatprep.subr.bf16.mxu0 0
      %3589 = vmatpush2.bf16.msra.mxu0 0
      %3590 = vmatprep.subr.bf16.mxu0 0
      %3591 = vmatpush2.bf16.msra.mxu0 0
      %3592 = vmatprep.subr.bf16.mxu0 0
      %3593 = vmatpush2.bf16.msra.mxu0 0
      %3594 = vmatprep.subr.bf16.mxu0 0
      %3595 = vmatpush2.bf16.msra.mxu0 0
      %3596 = vmatprep.subr.bf16.mxu0 0
      %3597 = vmatpush2.bf16.msra.mxu0 0
      %3598 = vmatprep.subr.bf16.mxu0 0
      %3599 = vmatpush2.bf16.msra.mxu0 0
      %3600 = vmatprep.mubr.bf16.mxu0 0
      %3601 = vmatmul.mubr.bf16.gmra.mxu0 %v3557
      %v3602 = vpop.f32.mrf.mxu0
      %v3603 = vadd.f32 0.0, %v3602
      %v3604 = vpop.f32.mrf.mxu0
      %v3605 = vpop.f32.mrf.mxu0
      %v3606 = vadd.f32 0.0, %v3605
      %v3607 = vpop.f32.mrf.mxu0
      %3608 = vmatprep.mubr.bf16.mxu0 0
      %3609 = vmatmul.mubr.bf16.gmra.mxu0 %v3560
      %v3610 = vpop.f32.mrf.mxu0
      %v3611 = vadd.f32 0.0, %v3610
      %v3612 = vpop.f32.mrf.mxu0
      %v3613 = vpop.f32.mrf.mxu0
      %v3614 = vadd.f32 0.0, %v3613
      %v3615 = vpop.f32.mrf.mxu0
      %3616 = vmatprep.mubr.bf16.mxu0 0
      %3617 = vmatmul.mubr.bf16.gmra.mxu0 %v3563
      %v3618 = vpop.f32.mrf.mxu0
      %v3619 = vadd.f32 0.0, %v3618
      %v3620 = vpop.f32.mrf.mxu0
      %v3621 = vpop.f32.mrf.mxu0
      %v3622 = vpop.f32.mrf.mxu0
      %3623 = vdwg.mxu0
      %3624 = vrot.lane.b32.xlu0 %v2934, 104
      %v3625 = vpop.permute.xlu0 %3624
      %3626 = vrot.lane.b32.xlu0 %v2935, 104
      %v3627 = vpop.permute.xlu0 %3626
      %3628 = vrot.lane.b32.xlu0 %v2936, 104
      %v3629 = vpop.permute.xlu0 %3628
      %3630 = vrot.lane.b32.xlu0 %v2934, 72
      %v3631 = vpop.permute.xlu0 %3630
      %3632 = vrot.lane.b32.xlu0 %v2935, 72
      %v3633 = vpop.permute.xlu0 %3632
      %3634 = vrot.lane.b32.xlu0 %v2936, 72
      %v3635 = vpop.permute.xlu0 %3634
      %v3637 = vsel %vm1202, %v3625, 0
      %v3640 = vsel %vm1202, %v3627, 0
      %v3643 = vsel %vm1202, %v3629, 0
      %v3646 = vsel %vm1202, %v3631, 0
      %v3649 = vsel %vm1202, %v3633, 0
      %v3652 = vsel %vm1202, %v3635, 0
      %3654 = vmatprep.subr.bf16.mxu0 0
      %3655 = vmatpush1.bf16.xpose.msra.mxu0 0
      %3656 = vmatprep.subr.bf16.mxu0 0
      %3657 = vmatpush1.bf16.xpose.msra.mxu0 0
      %3658 = vmatprep.subr.bf16.mxu0 0
      %3659 = vmatpush1.bf16.xpose.msra.mxu0 0
      %3660 = vmatprep.subr.bf16.mxu0 0
      %3661 = vmatpush1.bf16.xpose.msra.mxu0 0
      %3662 = vmatprep.subr.bf16.mxu0 0
      %3663 = vmatpush1.bf16.xpose.msra.mxu0 0
      %3664 = vmatprep.subr.bf16.mxu0 0
      %3665 = vmatpush1.bf16.xpose.msra.mxu0 %v3652
      %3666 = vmatprep.subr.bf16.mxu0 0
      %3667 = vmatpush1.bf16.xpose.msra.mxu0 %v3649
      %3668 = vmatprep.subr.bf16.mxu0 0
      %3669 = vmatpush1.bf16.xpose.msra.mxu0 %v3646
      %3670 = vmatprep.subr.bf16.mxu0 0
      %3671 = vmatpush2.bf16.xpose.msra.mxu0 0
      %3672 = vmatprep.subr.bf16.mxu0 0
      %3673 = vmatpush2.bf16.xpose.msra.mxu0 0
      %3674 = vmatprep.subr.bf16.mxu0 0
      %3675 = vmatpush2.bf16.xpose.msra.mxu0 0
      %3676 = vmatprep.subr.bf16.mxu0 0
      %3677 = vmatpush2.bf16.xpose.msra.mxu0 0
      %3678 = vmatprep.subr.bf16.mxu0 0
      %3679 = vmatpush2.bf16.xpose.msra.mxu0 0
      %3680 = vmatprep.subr.bf16.mxu0 0
      %3681 = vmatpush2.bf16.xpose.msra.mxu0 0
      %3682 = vmatprep.subr.bf16.mxu0 0
      %3683 = vmatpush2.bf16.xpose.msra.mxu0 0
      %3684 = vmatprep.subr.bf16.mxu0 0
      %3685 = vmatpush2.bf16.xpose.msra.mxu0 0
      %3686 = vmatprep.mubr.bf16.mxu0 0
      %3687 = vmatmul.mubr.bf16.gmra.mxu0 %v3637
      %v3688 = vpop.f32.mrf.mxu0
      %v3689 = vadd.f32 0.0, %v3688
      %v3690 = vpop.f32.mrf.mxu0
      %v3691 = vpop.f32.mrf.mxu0
      %v3692 = vadd.f32 0.0, %v3691
      %v3693 = vpop.f32.mrf.mxu0
      %3694 = vmatprep.mubr.bf16.mxu0 0
      %3695 = vmatmul.mubr.bf16.gmra.mxu0 %v3640
      %v3696 = vpop.f32.mrf.mxu0
      %v3697 = vadd.f32 0.0, %v3696
      %v3698 = vpop.f32.mrf.mxu0
      %v3699 = vpop.f32.mrf.mxu0
      %v3700 = vadd.f32 0.0, %v3699
      %v3701 = vpop.f32.mrf.mxu0
      %3702 = vmatprep.mubr.bf16.mxu0 0
      %3703 = vmatmul.mubr.bf16.gmra.mxu0 %v3643
      %v3704 = vpop.f32.mrf.mxu0
      %v3705 = vadd.f32 0.0, %v3704
      %v3706 = vpop.f32.mrf.mxu0
      %v3707 = vpop.f32.mrf.mxu0
      %v3708 = vpop.f32.mrf.mxu0
      %3709 = vdwg.mxu0
      %v3710 = vmul.f32 %v3689, 0.35355338
      %v3711 = vmul.f32 %v3692, 0.35355338
      %v3712 = vmul.f32 %v3697, 0.35355338
      %v3713 = vmul.f32 %v3700, 0.35355338
      %v3714 = vmul.f32 %v3705, 0.35355338
      %v3715 = vsel %vm973, %v3710, -1e+30
      %v3716 = vsel %vm974, %v3711, -1e+30
      %v3717 = vsel %vm975, %v3712, -1e+30
      %v3718 = vsel %vm976, %v3713, -1e+30
      %v3719 = vsel %vm977, %v3714, -1e+30
      %v3720 = vsel %vm1287, %v3715, -inf
      %3721 = vmax.xlane.f32.xlu0 %v3720
      %v3722 = vpop.xlane.xlu0 %3721
      %v3723 = vsel %vm1287, %v3716, -inf
      %3724 = vmax.xlane.f32.xlu0 %v3723
      %v3725 = vpop.xlane.xlu0 %3724
      %v3726 = vsel %vm1287, %v3717, -inf
      %3727 = vmax.xlane.f32.xlu0 %v3726
      %v3728 = vpop.xlane.xlu0 %3727
      %v3729 = vsel %vm1287, %v3718, -inf
      %3730 = vmax.xlane.f32.xlu0 %v3729
      %v3731 = vpop.xlane.xlu0 %3730
      %v3732 = vsel %vm1300, %v3719, -inf
      %3733 = vmax.xlane.f32.xlu0 %v3732
      %v3734 = vpop.xlane.xlu0 %3733
      %v3735 = vsub.f32 %v3715, %v3722
      %v3736 = vsub.f32 %v3716, %v3725
      %v3737 = vsub.f32 %v3717, %v3728
      %v3738 = vsub.f32 %v3718, %v3731
      %v3739 = vsub.f32 %v3719, %v3734
      %v3740 = vmul.f32 %v3735, 1.442695
      %v3741 = vpow.pop %v3740
      %v3742 = vmul.f32 %v3736, 1.442695
      %v3743 = vpow.pop %v3742
      %v3744 = vmul.f32 %v3737, 1.442695
      %v3745 = vpow.pop %v3744
      %v3746 = vmul.f32 %v3738, 1.442695
      %v3747 = vpow.pop %v3746
      %v3748 = vmul.f32 %v3739, 1.442695
      %v3749 = vpow.pop %v3748
      %v3750 = vsel %vm1287, %v3741, 0.0
      %3751 = vadd.xlane.f32.xlu0 %v3750
      %v3752 = vpop.xlane.xlu0 %3751
      %v3753 = vsel %vm1287, %v3743, 0.0
      %3754 = vadd.xlane.f32.xlu0 %v3753
      %v3755 = vpop.xlane.xlu0 %3754
      %v3756 = vsel %vm1287, %v3745, 0.0
      %3757 = vadd.xlane.f32.xlu0 %v3756
      %v3758 = vpop.xlane.xlu0 %3757
      %v3759 = vsel %vm1287, %v3747, 0.0
      %3760 = vadd.xlane.f32.xlu0 %v3759
      %v3761 = vpop.xlane.xlu0 %3760
      %v3762 = vsel %vm1300, %v3749, 0.0
      %3763 = vadd.xlane.f32.xlu0 %v3762
      %v3764 = vpop.xlane.xlu0 %3763
      %v3765 = vrcp.pop %v3752
      %v3766 = vrcp.pop %v3755
      %v3767 = vrcp.pop %v3758
      %v3768 = vrcp.pop %v3761
      %v3769 = vrcp.pop %v3764
      %v3770 = vmul.f32 %v3741, %v3765
      %v3771 = vmul.f32 %v3743, %v3766
      %v3772 = vmul.f32 %v3745, %v3767
      %v3773 = vmul.f32 %v3747, %v3768
      %v3774 = vmul.f32 %v3749, %v3769
      %v3775 = vpack.c.bf16 %v3771, %v3770
      %v3776 = vpack.c.bf16 %v3773, %v3772
      %v3777 = vpack.c.bf16 %v3774, %v3774
      %3778 = vrot.lane.b32.xlu0 %v2934, 40
      %v3779 = vpop.permute.xlu0 %3778
      %3780 = vrot.lane.b32.xlu0 %v2935, 40
      %v3781 = vpop.permute.xlu0 %3780
      %3782 = vrot.lane.b32.xlu0 %v2936, 40
      %v3783 = vpop.permute.xlu0 %3782
      %v3787 = vsel %vm1287, %v3775, 0
      %v3790 = vsel %vm1287, %v3776, 0
      %v3793 = vsel %vm1287, %v3777, 0
      %v3796 = vsel %vm1364, %v3783, 0
      %3798 = vmatprep.subr.bf16.mxu0 0
      %3799 = vmatpush1.bf16.msra.mxu0 0
      %3800 = vmatprep.subr.bf16.mxu0 0
      %3801 = vmatpush1.bf16.msra.mxu0 0
      %3802 = vmatprep.subr.bf16.mxu0 0
      %3803 = vmatpush1.bf16.msra.mxu0 0
      %3804 = vmatprep.subr.bf16.mxu0 0
      %3805 = vmatpush1.bf16.msra.mxu0 0
      %3806 = vmatprep.subr.bf16.mxu0 0
      %3807 = vmatpush1.bf16.msra.mxu0 0
      %3808 = vmatprep.subr.bf16.mxu0 0
      %3809 = vmatpush1.bf16.msra.mxu0 %v3796
      %3810 = vmatprep.subr.bf16.mxu0 0
      %3811 = vmatpush1.bf16.msra.mxu0 %v3781
      %3812 = vmatprep.subr.bf16.mxu0 0
      %3813 = vmatpush1.bf16.msra.mxu0 %v3779
      %3814 = vmatprep.subr.bf16.mxu0 0
      %3815 = vmatpush2.bf16.msra.mxu0 0
      %3816 = vmatprep.subr.bf16.mxu0 0
      %3817 = vmatpush2.bf16.msra.mxu0 0
      %3818 = vmatprep.subr.bf16.mxu0 0
      %3819 = vmatpush2.bf16.msra.mxu0 0
      %3820 = vmatprep.subr.bf16.mxu0 0
      %3821 = vmatpush2.bf16.msra.mxu0 0
      %3822 = vmatprep.subr.bf16.mxu0 0
      %3823 = vmatpush2.bf16.msra.mxu0 0
      %3824 = vmatprep.subr.bf16.mxu0 0
      %3825 = vmatpush2.bf16.msra.mxu0 0
      %3826 = vmatprep.subr.bf16.mxu0 0
      %3827 = vmatpush2.bf16.msra.mxu0 0
      %3828 = vmatprep.subr.bf16.mxu0 0
      %3829 = vmatpush2.bf16.msra.mxu0 0
      %3830 = vmatprep.mubr.bf16.mxu0 0
      %3831 = vmatmul.mubr.bf16.gmra.mxu0 %v3787
      %v3832 = vpop.f32.mrf.mxu0
      %v3833 = vadd.f32 0.0, %v3832
      %v3834 = vpop.f32.mrf.mxu0
      %v3835 = vpop.f32.mrf.mxu0
      %v3836 = vadd.f32 0.0, %v3835
      %v3837 = vpop.f32.mrf.mxu0
      %3838 = vmatprep.mubr.bf16.mxu0 0
      %3839 = vmatmul.mubr.bf16.gmra.mxu0 %v3790
      %v3840 = vpop.f32.mrf.mxu0
      %v3841 = vadd.f32 0.0, %v3840
      %v3842 = vpop.f32.mrf.mxu0
      %v3843 = vpop.f32.mrf.mxu0
      %v3844 = vadd.f32 0.0, %v3843
      %v3845 = vpop.f32.mrf.mxu0
      %3846 = vmatprep.mubr.bf16.mxu0 0
      %3847 = vmatmul.mubr.bf16.gmra.mxu0 %v3793
      %v3848 = vpop.f32.mrf.mxu0
      %v3849 = vadd.f32 0.0, %v3848
      %v3850 = vpop.f32.mrf.mxu0
      %v3851 = vpop.f32.mrf.mxu0
      %v3852 = vpop.f32.mrf.mxu0
      %3853 = vdwg.mxu0
      %3859 = vrot.lane.b32.xlu0 %v3373, 8
      %v3860 = vpop.permute.xlu0 %3859
      %3861 = vrot.lane.b32.xlu0 %v3376, 8
      %v3862 = vpop.permute.xlu0 %3861
      %3863 = vrot.lane.b32.xlu0 %v3381, 8
      %v3864 = vpop.permute.xlu0 %3863
      %3865 = vrot.lane.b32.xlu0 %v3384, 8
      %v3866 = vpop.permute.xlu0 %3865
      %3867 = vrot.lane.b32.xlu0 %v3389, 8
      %v3868 = vpop.permute.xlu0 %3867
      %3879 = vrot.lane.b32.xlu0 %v3603, 16
      %v3880 = vpop.permute.xlu0 %3879
      %3881 = vrot.lane.b32.xlu0 %v3606, 16
      %v3882 = vpop.permute.xlu0 %3881
      %3883 = vrot.lane.b32.xlu0 %v3611, 16
      %v3884 = vpop.permute.xlu0 %3883
      %3885 = vrot.lane.b32.xlu0 %v3614, 16
      %v3886 = vpop.permute.xlu0 %3885
      %3887 = vrot.lane.b32.xlu0 %v3619, 16
      %v3888 = vpop.permute.xlu0 %3887
      %3899 = vrot.lane.b32.xlu0 %v3833, 24
      %v3900 = vpop.permute.xlu0 %3899
      %3901 = vrot.lane.b32.xlu0 %v3836, 24
      %v3902 = vpop.permute.xlu0 %3901
      %3903 = vrot.lane.b32.xlu0 %v3841, 24
      %v3904 = vpop.permute.xlu0 %3903
      %3905 = vrot.lane.b32.xlu0 %v3844, 24
      %v3906 = vpop.permute.xlu0 %3905
      %3907 = vrot.lane.b32.xlu0 %v3849, 24
      %v3908 = vpop.permute.xlu0 %3907
      %v3914 = vsel %vm1202, %v3143, %v3860
      %v3915 = vsel %vm1202, %v3146, %v3862
      %v3916 = vsel %vm1202, %v3151, %v3864
      %v3917 = vsel %vm1202, %v3154, %v3866
      %v3918 = vsel %vm1202, %v3159, %v3868
      %v3919 = vsel %vm2179, %v3914, %v3880
      %v3920 = vsel %vm2179, %v3915, %v3882
      %v3921 = vsel %vm2179, %v3916, %v3884
      %v3922 = vsel %vm2179, %v3917, %v3886
      %v3923 = vsel %vm2179, %v3918, %v3888
      %v3924 = vsel %vm2185, %v3919, %v3900
      %v3925 = vsel %vm2185, %v3920, %v3902
      %v3926 = vsel %vm2185, %v3921, %v3904
      %v3927 = vsel %vm2185, %v3922, %v3906
      %v3928 = vsel %vm2185, %v3923, %v3908
      %v3929 = vpack.c.bf16 %v3925, %v3924
      %v3930 = vpack.c.bf16 %v3927, %v3926
      %v3931 = vpack.c.bf16 %v3928, %v3928
      %v3936 = vunpack.c.l.b16 %v2725
      %v3937 = vunpack.c.l.b16 %v2726
      %v3938 = vunpack.c.l.b16 %v2727
      %v3939 = vunpack.c.l.b16 %v2728
      %v3940 = vpack.c.b16 %v3937, %v3936
      %v3941 = vpack.c.b16 %v3939, %v3938
      %v3945 = vsel %vm1014, %v3929, 0
      %v3948 = vsel %vm1014, %v3930, 0
      %v3951 = vsel %vm1014, %v3931, 0
      %3953 = vmatprep.subr.bf16.mxu0 0
      %3954 = vmatpush1.bf16.msra.mxu0 0
      %3955 = vmatprep.subr.bf16.mxu0 0
      %3956 = vmatpush1.bf16.msra.mxu0 0
      %3957 = vmatprep.subr.bf16.mxu0 0
      %3958 = vmatpush1.bf16.msra.mxu0 0
      %3959 = vmatprep.subr.bf16.mxu0 0
      %3960 = vmatpush1.bf16.msra.mxu0 0
      %3961 = vmatprep.subr.bf16.mxu0 0
      %3962 = vmatpush1.bf16.msra.mxu0 0
      %3963 = vmatprep.subr.bf16.mxu0 0
      %3964 = vmatpush1.bf16.msra.mxu0 0
      %3965 = vmatprep.subr.bf16.mxu0 0
      %3966 = vmatpush1.bf16.msra.mxu0 %v3941
      %3967 = vmatprep.subr.bf16.mxu0 0
      %3968 = vmatpush1.bf16.msra.mxu0 %v3940
      %3969 = vmatprep.subr.bf16.mxu0 0
      %3970 = vmatpush2.bf16.msra.mxu0 0
      %3971 = vmatprep.subr.bf16.mxu0 0
      %3972 = vmatpush2.bf16.msra.mxu0 0
      %3973 = vmatprep.subr.bf16.mxu0 0
      %3974 = vmatpush2.bf16.msra.mxu0 0
      %3975 = vmatprep.subr.bf16.mxu0 0
      %3976 = vmatpush2.bf16.msra.mxu0 0
      %3977 = vmatprep.subr.bf16.mxu0 0
      %3978 = vmatpush2.bf16.msra.mxu0 0
      %3979 = vmatprep.subr.bf16.mxu0 0
      %3980 = vmatpush2.bf16.msra.mxu0 0
      %3981 = vmatprep.subr.bf16.mxu0 0
      %3982 = vmatpush2.bf16.msra.mxu0 0
      %3983 = vmatprep.subr.bf16.mxu0 0
      %3984 = vmatpush2.bf16.msra.mxu0 0
      %3985 = vmatprep.mubr.bf16.mxu0 0
      %3986 = vmatmul.mubr.bf16.gmra.mxu0 %v3945
      %v3987 = vpop.f32.mrf.mxu0
      %v3988 = vadd.f32 0.0, %v3987
      %v3989 = vpop.f32.mrf.mxu0
      %v3990 = vpop.f32.mrf.mxu0
      %v3991 = vadd.f32 0.0, %v3990
      %v3992 = vpop.f32.mrf.mxu0
      %3993 = vmatprep.mubr.bf16.mxu0 0
      %3994 = vmatmul.mubr.bf16.gmra.mxu0 %v3948
      %v3995 = vpop.f32.mrf.mxu0
      %v3996 = vadd.f32 0.0, %v3995
      %v3997 = vpop.f32.mrf.mxu0
      %v3998 = vpop.f32.mrf.mxu0
      %v3999 = vadd.f32 0.0, %v3998
      %v4000 = vpop.f32.mrf.mxu0
      %4001 = vmatprep.mubr.bf16.mxu0 0
      %4002 = vmatmul.mubr.bf16.gmra.mxu0 %v3951
      %v4003 = vpop.f32.mrf.mxu0
      %v4004 = vadd.f32 0.0, %v4003
      %v4005 = vpop.f32.mrf.mxu0
      %v4006 = vpop.f32.mrf.mxu0
      %v4007 = vpop.f32.mrf.mxu0
      %4008 = vdwg.mxu0
      %v4009 = vadd.f32 %v2703, %v3988
      %v4010 = vadd.f32 %v2704, %v3991
      %v4011 = vadd.f32 %v2705, %v3996
      %v4012 = vadd.f32 %v2706, %v3999
      %v4013 = vadd.f32 %v2707, %v4004
      %v4015 = vlaneseq
      %v4016 = vshrl.u32 %v4015, 7
      %v4017 = vsub.s32 0, %v4016
      %v4018 = vrot.slane %v2730, %v4017
      %v4020 = vadd.f32 %v4009, %v4018
      %v4021 = vadd.f32 %v4010, %v4018
      %v4022 = vadd.f32 %v4011, %v4018
      %v4023 = vadd.f32 %v4012, %v4018
      %v4024 = vadd.f32 %v4013, %v4018
      %v4025 = vsel %vm1014, %v4020, 0.0
      %4026 = vadd.xlane.f32.xlu0 %v4025
      %v4027 = vpop.xlane.xlu0 %4026
      %v4028 = vsel %vm1014, %v4021, 0.0
      %4029 = vadd.xlane.f32.xlu0 %v4028
      %v4030 = vpop.xlane.xlu0 %4029
      %v4031 = vsel %vm1014, %v4022, 0.0
      %4032 = vadd.xlane.f32.xlu0 %v4031
      %v4033 = vpop.xlane.xlu0 %4032
      %v4034 = vsel %vm1014, %v4023, 0.0
      %4035 = vadd.xlane.f32.xlu0 %v4034
      %v4036 = vpop.xlane.xlu0 %4035
      %v4037 = vsel %vm1027, %v4024, 0.0
      %4038 = vadd.xlane.f32.xlu0 %v4037
      %v4039 = vpop.xlane.xlu0 %4038
      %v4040 = vmul.f32 %v4027, %v1031
      %v4041 = vmul.f32 %v4030, %v1031
      %v4042 = vmul.f32 %v4033, %v1031
      %v4043 = vmul.f32 %v4036, %v1031
      %v4044 = vmul.f32 %v4039, %v1031
      %v4045 = vsub.f32 %v4020, %v4040
      %v4046 = vsub.f32 %v4021, %v4041
      %v4047 = vsub.f32 %v4022, %v4042
      %v4048 = vsub.f32 %v4023, %v4043
      %v4049 = vsub.f32 %v4024, %v4044
      %v4050 = vmul.f32 %v4045, %v4045
      %v4051 = vmul.f32 %v4046, %v4046
      %v4052 = vmul.f32 %v4047, %v4047
      %v4053 = vmul.f32 %v4048, %v4048
      %v4054 = vmul.f32 %v4049, %v4049
      %v4055 = vsel %vm1014, %v4050, 0.0
      %4056 = vadd.xlane.f32.xlu0 %v4055
      %v4057 = vpop.xlane.xlu0 %4056
      %v4058 = vsel %vm1014, %v4051, 0.0
      %4059 = vadd.xlane.f32.xlu0 %v4058
      %v4060 = vpop.xlane.xlu0 %4059
      %v4061 = vsel %vm1014, %v4052, 0.0
      %4062 = vadd.xlane.f32.xlu0 %v4061
      %v4063 = vpop.xlane.xlu0 %4062
      %v4064 = vsel %vm1014, %v4053, 0.0
      %4065 = vadd.xlane.f32.xlu0 %v4064
      %v4066 = vpop.xlane.xlu0 %4065
      %v4067 = vsel %vm1027, %v4054, 0.0
      %4068 = vadd.xlane.f32.xlu0 %v4067
      %v4069 = vpop.xlane.xlu0 %4068
      %v4070 = vmul.f32 %v4057, %v1031
      %v4071 = vmul.f32 %v4060, %v1031
      %v4072 = vmul.f32 %v4063, %v1031
      %v4073 = vmul.f32 %v4066, %v1031
      %v4074 = vmul.f32 %v4069, %v1031
      %v4075 = vadd.f32 %v4070, 1e-06
      %v4076 = vadd.f32 %v4071, 1e-06
      %v4077 = vadd.f32 %v4072, 1e-06
      %v4078 = vadd.f32 %v4073, 1e-06
      %v4079 = vadd.f32 %v4074, 1e-06
      %v4080 = vrsqrt.pop %v4075
      %v4081 = vrsqrt.pop %v4076
      %v4082 = vrsqrt.pop %v4077
      %v4083 = vrsqrt.pop %v4078
      %v4084 = vrsqrt.pop %v4079
      %v4085 = vmul.f32 %v4045, %v4080
      %v4086 = vmul.f32 %v4046, %v4081
      %v4087 = vmul.f32 %v4047, %v4082
      %v4088 = vmul.f32 %v4048, %v4083
      %v4089 = vmul.f32 %v4049, %v4084
      %v4091 = vlaneseq
      %v4092 = vshrl.u32 %v4091, 7
      %v4093 = vsub.s32 0, %v4092
      %v4094 = vrot.slane %v2732, %v4093
      %v4096 = vmul.f32 %v4085, %v4094
      %v4097 = vmul.f32 %v4086, %v4094
      %v4098 = vmul.f32 %v4087, %v4094
      %v4099 = vmul.f32 %v4088, %v4094
      %v4100 = vmul.f32 %v4089, %v4094
      %v4102 = vlaneseq
      %v4103 = vshrl.u32 %v4102, 7
      %v4104 = vsub.s32 0, %v4103
      %v4105 = vrot.slane %v2734, %v4104
      %v4107 = vadd.f32 %v4096, %v4105
      %v4108 = vadd.f32 %v4097, %v4105
      %v4109 = vadd.f32 %v4098, %v4105
      %v4110 = vadd.f32 %v4099, %v4105
      %v4111 = vadd.f32 %v4100, %v4105
      %v4112 = vpack.c.bf16 %v4108, %v4107
      %v4113 = vpack.c.bf16 %v4110, %v4109
      %v4114 = vpack.c.bf16 %v4111, %v4111
      %v4116 = vlaneseq
      %v4117 = vshrl.u32 %v4116, 7
      %v4118 = vsub.s32 0, %v4117
      %v4119 = vrot.slane %v2741, %v4118
      %v4125 = vunpack.c.l.b16 %v2736
      %v4126 = vunpack.c.l.b16 %v2737
      %v4127 = vunpack.c.l.b16 %v2738
      %v4128 = vunpack.c.l.b16 %v2739
      %v4129 = vpack.c.b16 %v4126, %v4125
      %v4130 = vpack.c.b16 %v4128, %v4127
      %v4134 = vsel %vm1014, %v4112, 0
      %v4137 = vsel %vm1014, %v4113, 0
      %v4140 = vsel %vm1014, %v4114, 0
      %4142 = vmatprep.subr.bf16.mxu0 0
      %4143 = vmatpush1.bf16.msra.mxu0 0
      %4144 = vmatprep.subr.bf16.mxu0 0
      %4145 = vmatpush1.bf16.msra.mxu0 0
      %4146 = vmatprep.subr.bf16.mxu0 0
      %4147 = vmatpush1.bf16.msra.mxu0 0
      %4148 = vmatprep.subr.bf16.mxu0 0
      %4149 = vmatpush1.bf16.msra.mxu0 0
      %4150 = vmatprep.subr.bf16.mxu0 0
      %4151 = vmatpush1.bf16.msra.mxu0 0
      %4152 = vmatprep.subr.bf16.mxu0 0
      %4153 = vmatpush1.bf16.msra.mxu0 0
      %4154 = vmatprep.subr.bf16.mxu0 0
      %4155 = vmatpush1.bf16.msra.mxu0 %v4130
      %4156 = vmatprep.subr.bf16.mxu0 0
      %4157 = vmatpush1.bf16.msra.mxu0 %v4129
      %4158 = vmatprep.subr.bf16.mxu0 0
      %4159 = vmatpush2.bf16.msra.mxu0 0
      %4160 = vmatprep.subr.bf16.mxu0 0
      %4161 = vmatpush2.bf16.msra.mxu0 0
      %4162 = vmatprep.subr.bf16.mxu0 0
      %4163 = vmatpush2.bf16.msra.mxu0 0
      %4164 = vmatprep.subr.bf16.mxu0 0
      %4165 = vmatpush2.bf16.msra.mxu0 0
      %4166 = vmatprep.subr.bf16.mxu0 0
      %4167 = vmatpush2.bf16.msra.mxu0 0
      %4168 = vmatprep.subr.bf16.mxu0 0
      %4169 = vmatpush2.bf16.msra.mxu0 0
      %4170 = vmatprep.subr.bf16.mxu0 0
      %4171 = vmatpush2.bf16.msra.mxu0 0
      %4172 = vmatprep.subr.bf16.mxu0 0
      %4173 = vmatpush2.bf16.msra.mxu0 0
      %4174 = vmatprep.mubr.bf16.mxu0 0
      %4175 = vmatmul.mubr.bf16.gmra.mxu0 %v4134
      %v4176 = vpop.f32.mrf.mxu0
      %v4177 = vadd.f32 %v4119, %v4176
      %v4178 = vpop.f32.mrf.mxu0
      %v4179 = vpop.f32.mrf.mxu0
      %v4180 = vadd.f32 %v4119, %v4179
      %v4181 = vpop.f32.mrf.mxu0
      %4182 = vmatprep.mubr.bf16.mxu0 0
      %4183 = vmatmul.mubr.bf16.gmra.mxu0 %v4137
      %v4184 = vpop.f32.mrf.mxu0
      %v4185 = vadd.f32 %v4119, %v4184
      %v4186 = vpop.f32.mrf.mxu0
      %v4187 = vpop.f32.mrf.mxu0
      %v4188 = vadd.f32 %v4119, %v4187
      %v4189 = vpop.f32.mrf.mxu0
      %4190 = vmatprep.mubr.bf16.mxu0 0
      %4191 = vmatmul.mubr.bf16.gmra.mxu0 %v4140
      %v4192 = vpop.f32.mrf.mxu0
      %v4193 = vadd.f32 %v4119, %v4192
      %v4194 = vpop.f32.mrf.mxu0
      %v4195 = vpop.f32.mrf.mxu0
      %v4196 = vpop.f32.mrf.mxu0
      %4197 = vdwg.mxu0
      %v4198 = vmul.f32 %v4177, 0.70710677
      %v4199 = vmul.f32 %v4180, 0.70710677
      %v4200 = vmul.f32 %v4185, 0.70710677
      %v4201 = vmul.f32 %v4188, 0.70710677
      %v4202 = vmul.f32 %v4193, 0.70710677
      %v4203 = vand.u32 2147483647, %v4198
      %v4204 = vand.u32 2147483647, %v4199
      %v4205 = vand.u32 2147483647, %v4200
      %v4206 = vand.u32 2147483647, %v4201
      %v4207 = vand.u32 2147483647, %v4202
      %v4208 = vmul.f32 %v4203, 0.3275911
      %v4209 = vmul.f32 %v4204, 0.3275911
      %v4210 = vmul.f32 %v4205, 0.3275911
      %v4211 = vmul.f32 %v4206, 0.3275911
      %v4212 = vmul.f32 %v4207, 0.3275911
      %v4213 = vadd.f32 %v4208, 1.0
      %v4214 = vadd.f32 %v4209, 1.0
      %v4215 = vadd.f32 %v4210, 1.0
      %v4216 = vadd.f32 %v4211, 1.0
      %v4217 = vadd.f32 %v4212, 1.0
      %v4218 = vrcp.pop %v4213
      %v4219 = vrcp.pop %v4214
      %v4220 = vrcp.pop %v4215
      %v4221 = vrcp.pop %v4216
      %v4222 = vrcp.pop %v4217
      %v4223 = vmul.f32 %v4218, 1.0614054
      %v4224 = vmul.f32 %v4219, 1.0614054
      %v4225 = vmul.f32 %v4220, 1.0614054
      %v4226 = vmul.f32 %v4221, 1.0614054
      %v4227 = vmul.f32 %v4222, 1.0614054
      %v4228 = vadd.f32 %v4223, -1.4531521
      %v4229 = vadd.f32 %v4224, -1.4531521
      %v4230 = vadd.f32 %v4225, -1.4531521
      %v4231 = vadd.f32 %v4226, -1.4531521
      %v4232 = vadd.f32 %v4227, -1.4531521
      %v4233 = vmul.f32 %v4228, %v4218
      %v4234 = vmul.f32 %v4229, %v4219
      %v4235 = vmul.f32 %v4230, %v4220
      %v4236 = vmul.f32 %v4231, %v4221
      %v4237 = vmul.f32 %v4232, %v4222
      %v4238 = vadd.f32 %v4233, 1.4214138
      %v4239 = vadd.f32 %v4234, 1.4214138
      %v4240 = vadd.f32 %v4235, 1.4214138
      %v4241 = vadd.f32 %v4236, 1.4214138
      %v4242 = vadd.f32 %v4237, 1.4214138
      %v4243 = vmul.f32 %v4238, %v4218
      %v4244 = vmul.f32 %v4239, %v4219
      %v4245 = vmul.f32 %v4240, %v4220
      %v4246 = vmul.f32 %v4241, %v4221
      %v4247 = vmul.f32 %v4242, %v4222
      %v4248 = vadd.f32 %v4243, -0.28449672
      %v4249 = vadd.f32 %v4244, -0.28449672
      %v4250 = vadd.f32 %v4245, -0.28449672
      %v4251 = vadd.f32 %v4246, -0.28449672
      %v4252 = vadd.f32 %v4247, -0.28449672
      %v4253 = vmul.f32 %v4248, %v4218
      %v4254 = vmul.f32 %v4249, %v4219
      %v4255 = vmul.f32 %v4250, %v4220
      %v4256 = vmul.f32 %v4251, %v4221
      %v4257 = vmul.f32 %v4252, %v4222
      %v4258 = vadd.f32 %v4253, 0.2548296
      %v4259 = vadd.f32 %v4254, 0.2548296
      %v4260 = vadd.f32 %v4255, 0.2548296
      %v4261 = vadd.f32 %v4256, 0.2548296
      %v4262 = vadd.f32 %v4257, 0.2548296
      %v4263 = vmul.f32 %v4258, %v4218
      %v4264 = vmul.f32 %v4259, %v4219
      %v4265 = vmul.f32 %v4260, %v4220
      %v4266 = vmul.f32 %v4261, %v4221
      %v4267 = vmul.f32 %v4262, %v4222
      %v4268 = vsub.f32 0.0, %v4203
      %v4269 = vsub.f32 0.0, %v4204
      %v4270 = vsub.f32 0.0, %v4205
      %v4271 = vsub.f32 0.0, %v4206
      %v4272 = vsub.f32 0.0, %v4207
      %v4273 = vmul.f32 %v4268, %v4203
      %v4274 = vmul.f32 %v4269, %v4204
      %v4275 = vmul.f32 %v4270, %v4205
      %v4276 = vmul.f32 %v4271, %v4206
      %v4277 = vmul.f32 %v4272, %v4207
      %v4278 = vmul.f32 %v4273, 1.442695
      %v4279 = vpow.pop %v4278
      %v4280 = vmul.f32 %v4274, 1.442695
      %v4281 = vpow.pop %v4280
      %v4282 = vmul.f32 %v4275, 1.442695
      %v4283 = vpow.pop %v4282
      %v4284 = vmul.f32 %v4276, 1.442695
      %v4285 = vpow.pop %v4284
      %v4286 = vmul.f32 %v4277, 1.442695
      %v4287 = vpow.pop %v4286
      %v4288 = vmul.f32 %v4263, %v4279
      %v4289 = vmul.f32 %v4264, %v4281
      %v4290 = vmul.f32 %v4265, %v4283
      %v4291 = vmul.f32 %v4266, %v4285
      %v4292 = vmul.f32 %v4267, %v4287
      %v4293 = vsub.f32 1.0, %v4288
      %v4294 = vsub.f32 1.0, %v4289
      %v4295 = vsub.f32 1.0, %v4290
      %v4296 = vsub.f32 1.0, %v4291
      %v4297 = vsub.f32 1.0, %v4292
      %vm4298 = vcmp.ge.f32.partialorder %v4198, 0.0
      %vm4299 = vcmp.ge.f32.partialorder %v4199, 0.0
      %vm4300 = vcmp.ge.f32.partialorder %v4200, 0.0
      %vm4301 = vcmp.ge.f32.partialorder %v4201, 0.0
      %vm4302 = vcmp.ge.f32.partialorder %v4202, 0.0
      %v4303 = vsub.f32 0.0, %v4293
      %v4304 = vsub.f32 0.0, %v4294
      %v4305 = vsub.f32 0.0, %v4295
      %v4306 = vsub.f32 0.0, %v4296
      %v4307 = vsub.f32 0.0, %v4297
      %v4308 = vsel %vm4298, %v4293, %v4303
      %v4309 = vsel %vm4299, %v4294, %v4304
      %v4310 = vsel %vm4300, %v4295, %v4305
      %v4311 = vsel %vm4301, %v4296, %v4306
      %v4312 = vsel %vm4302, %v4297, %v4307
      %v4313 = vmul.f32 %v4177, 0.5
      %v4314 = vmul.f32 %v4180, 0.5
      %v4315 = vmul.f32 %v4185, 0.5
      %v4316 = vmul.f32 %v4188, 0.5
      %v4317 = vmul.f32 %v4193, 0.5
      %v4318 = vadd.f32 %v4308, 1.0
      %v4319 = vadd.f32 %v4309, 1.0
      %v4320 = vadd.f32 %v4310, 1.0
      %v4321 = vadd.f32 %v4311, 1.0
      %v4322 = vadd.f32 %v4312, 1.0
      %v4323 = vmul.f32 %v4313, %v4318
      %v4324 = vmul.f32 %v4314, %v4319
      %v4325 = vmul.f32 %v4315, %v4320
      %v4326 = vmul.f32 %v4316, %v4321
      %v4327 = vmul.f32 %v4317, %v4322
      %v4328 = vpack.c.bf16 %v4324, %v4323
      %v4329 = vpack.c.bf16 %v4326, %v4325
      %v4330 = vpack.c.bf16 %v4327, %v4327
      %v4332 = vlaneseq
      %v4333 = vshrl.u32 %v4332, 7
      %v4334 = vsub.s32 0, %v4333
      %v4335 = vrot.slane %v2760, %v4334
      %v4353 = vunpack.c.l.b16 %v2743
      %v4354 = vunpack.c.l.b16 %v2744
      %v4355 = vunpack.c.l.b16 %v2745
      %v4356 = vunpack.c.l.b16 %v2746
      %v4357 = vunpack.c.l.b16 %v2747
      %v4358 = vunpack.c.l.b16 %v2748
      %v4359 = vunpack.c.l.b16 %v2749
      %v4360 = vunpack.c.l.b16 %v2750
      %v4361 = vunpack.c.l.b16 %v2751
      %v4362 = vunpack.c.l.b16 %v2752
      %v4363 = vunpack.c.l.b16 %v2753
      %v4364 = vunpack.c.l.b16 %v2754
      %v4365 = vunpack.c.l.b16 %v2755
      %v4366 = vunpack.c.l.b16 %v2756
      %v4367 = vunpack.c.l.b16 %v2757
      %v4368 = vunpack.c.l.b16 %v2758
      %v4369 = vpack.c.b16 %v4354, %v4353
      %v4370 = vpack.c.b16 %v4356, %v4355
      %v4371 = vpack.c.b16 %v4358, %v4357
      %v4372 = vpack.c.b16 %v4360, %v4359
      %v4373 = vpack.c.b16 %v4362, %v4361
      %v4374 = vpack.c.b16 %v4364, %v4363
      %v4375 = vpack.c.b16 %v4366, %v4365
      %v4376 = vpack.c.b16 %v4368, %v4367
      %4385 = vmatprep.subr.bf16.mxu0 0
      %4386 = vmatpush1.bf16.msra.mxu0 %v4376
      %4387 = vmatprep.subr.bf16.mxu0 0
      %4388 = vmatpush1.bf16.msra.mxu0 %v4375
      %4389 = vmatprep.subr.bf16.mxu0 0
      %4390 = vmatpush1.bf16.msra.mxu0 %v4374
      %4391 = vmatprep.subr.bf16.mxu0 0
      %4392 = vmatpush1.bf16.msra.mxu0 %v4373
      %4393 = vmatprep.subr.bf16.mxu0 0
      %4394 = vmatpush1.bf16.msra.mxu0 %v4372
      %4395 = vmatprep.subr.bf16.mxu0 0
      %4396 = vmatpush1.bf16.msra.mxu0 %v4371
      %4397 = vmatprep.subr.bf16.mxu0 0
      %4398 = vmatpush1.bf16.msra.mxu0 %v4370
      %4399 = vmatprep.subr.bf16.mxu0 0
      %4400 = vmatpush1.bf16.msra.mxu0 %v4369
      %4401 = vmatprep.subr.bf16.mxu0 0
      %4402 = vmatpush2.bf16.msra.mxu0 0
      %4403 = vmatprep.subr.bf16.mxu0 0
      %4404 = vmatpush2.bf16.msra.mxu0 0
      %4405 = vmatprep.subr.bf16.mxu0 0
      %4406 = vmatpush2.bf16.msra.mxu0 0
      %4407 = vmatprep.subr.bf16.mxu0 0
      %4408 = vmatpush2.bf16.msra.mxu0 0
      %4409 = vmatprep.subr.bf16.mxu0 0
      %4410 = vmatpush2.bf16.msra.mxu0 0
      %4411 = vmatprep.subr.bf16.mxu0 0
      %4412 = vmatpush2.bf16.msra.mxu0 0
      %4413 = vmatprep.subr.bf16.mxu0 0
      %4414 = vmatpush2.bf16.msra.mxu0 0
      %4415 = vmatprep.subr.bf16.mxu0 0
      %4416 = vmatpush2.bf16.msra.mxu0 0
      %4417 = vmatprep.mubr.bf16.mxu0 0
      %4418 = vmatmul.mubr.bf16.gmra.mxu0 %v4328
      %v4419 = vpop.f32.mrf.mxu0
      %v4420 = vadd.f32 %v4335, %v4419
      %v4421 = vpop.f32.mrf.mxu0
      %v4422 = vpop.f32.mrf.mxu0
      %v4423 = vadd.f32 %v4335, %v4422
      %v4424 = vpop.f32.mrf.mxu0
      %4425 = vmatprep.mubr.bf16.mxu0 0
      %4426 = vmatmul.mubr.bf16.gmra.mxu0 %v4329
      %v4427 = vpop.f32.mrf.mxu0
      %v4428 = vadd.f32 %v4335, %v4427
      %v4429 = vpop.f32.mrf.mxu0
      %v4430 = vpop.f32.mrf.mxu0
      %v4431 = vadd.f32 %v4335, %v4430
      %v4432 = vpop.f32.mrf.mxu0
      %4433 = vmatprep.mubr.bf16.mxu0 0
      %4434 = vmatmul.mubr.bf16.gmra.mxu0 %v4330
      %v4435 = vpop.f32.mrf.mxu0
      %v4436 = vadd.f32 %v4335, %v4435
      %v4437 = vpop.f32.mrf.mxu0
      %v4438 = vpop.f32.mrf.mxu0
      %v4439 = vpop.f32.mrf.mxu0
      %4440 = vdwg.mxu0
      %v4441 = vadd.f32 %v4020, %v4420
      %v4442 = vadd.f32 %v4021, %v4423
      %v4443 = vadd.f32 %v4022, %v4428
      %v4444 = vadd.f32 %v4023, %v4431
      %v4445 = vadd.f32 %v4024, %v4436
      %v4446 = vmul.u32 %v864, 9
      %vm4447 = vcmp.eq.s32.totalorder %v4446, %v870
      %v4448 = vsel %vm4447, 1, 0
      %v4449 = vcvt.s32.f32 %v4448
      %v4451 = vsel %vm1287, %v4449, 0
      %vm4453 = vcmask 1043456
      %v4455 = vsel %vm4453, %v4445, 0
      %4457 = vmatprep.subr.mxu0 0.0
      %4458 = vmatpush1.msra.mxu0 0.0
      %4459 = vmatprep.subr.mxu0 0.0
      %4460 = vmatpush1.msra.mxu0 0.0
      %4461 = vmatprep.subr.mxu0 0.0
      %4462 = vmatpush1.msra.mxu0 0.0
      %4463 = vmatprep.subr.mxu0 0.0
      %4464 = vmatpush1.msra.mxu0 0.0
      %4465 = vmatprep.subr.mxu0 0.0
      %4466 = vmatpush1.msra.mxu0 0.0
      %4467 = vmatprep.subr.mxu0 0.0
      %4468 = vmatpush1.msra.mxu0 0.0
      %4469 = vmatprep.subr.mxu0 0.0
      %4470 = vmatpush1.msra.mxu0 0.0
      %4471 = vmatprep.subr.mxu0 0.0
      %4472 = vmatpush1.msra.mxu0 0.0
      %4473 = vmatprep.subr.mxu0 0.0
      %4474 = vmatpush1.msra.mxu0 0.0
      %4475 = vmatprep.subr.mxu0 0.0
      %4476 = vmatpush1.msra.mxu0 0.0
      %4477 = vmatprep.subr.mxu0 0.0
      %4478 = vmatpush1.msra.mxu0 0.0
      %4479 = vmatprep.subr.mxu0 0.0
      %4480 = vmatpush1.msra.mxu0 %v4455
      %4481 = vmatprep.subr.mxu0 0.0
      %4482 = vmatpush1.msra.mxu0 %v4444
      %4483 = vmatprep.subr.mxu0 0.0
      %4484 = vmatpush1.msra.mxu0 %v4443
      %4485 = vmatprep.subr.mxu0 0.0
      %4486 = vmatpush1.msra.mxu0 %v4442
      %4487 = vmatprep.subr.mxu0 0.0
      %4488 = vmatpush1.msra.mxu0 %v4441
      %4489 = vmatprep.subr.mxu0 0.0
      %4490 = vmatpush2.msra.mxu0 0.0
      %4491 = vmatprep.subr.mxu0 0.0
      %4492 = vmatpush2.msra.mxu0 0.0
      %4493 = vmatprep.subr.mxu0 0.0
      %4494 = vmatpush2.msra.mxu0 0.0
      %4495 = vmatprep.subr.mxu0 0.0
      %4496 = vmatpush2.msra.mxu0 0.0
      %4497 = vmatprep.subr.mxu0 0.0
      %4498 = vmatpush2.msra.mxu0 0.0
      %4499 = vmatprep.subr.mxu0 0.0
      %4500 = vmatpush2.msra.mxu0 0.0
      %4501 = vmatprep.subr.mxu0 0.0
      %4502 = vmatpush2.msra.mxu0 0.0
      %4503 = vmatprep.subr.mxu0 0.0
      %4504 = vmatpush2.msra.mxu0 0.0
      %4505 = vmatprep.subr.mxu0 0.0
      %4506 = vmatpush2.msra.mxu0 0.0
      %4507 = vmatprep.subr.mxu0 0.0
      %4508 = vmatpush2.msra.mxu0 0.0
      %4509 = vmatprep.subr.mxu0 0.0
      %4510 = vmatpush2.msra.mxu0 0.0
      %4511 = vmatprep.subr.mxu0 0.0
      %4512 = vmatpush2.msra.mxu0 0.0
      %4513 = vmatprep.subr.mxu0 0.0
      %4514 = vmatpush2.msra.mxu0 0.0
      %4515 = vmatprep.subr.mxu0 0.0
      %4516 = vmatpush2.msra.mxu0 0.0
      %4517 = vmatprep.subr.mxu0 0.0
      %4518 = vmatpush2.msra.mxu0 0.0
      %4519 = vmatprep.subr.mxu0 0.0
      %4520 = vmatpush2.msra.mxu0 0.0
      %4521 = vmatprep.mubr.f32.mxu0 0.0
      %4522 = vmatmul.mubr.f32.gmra.mxu0 %v4451
      %v4523 = vpop.f32.mrf.mxu0
      %v4524 = vadd.f32 0.0, %v4523
      %v4525 = vpop.f32.mrf.mxu0
      %4526 = vdwg.mxu0
      %v4527 = vld [vmem:[%s15] sm:$0x1]
      %v4528 = vld [vmem:[%s16] sm:$0x1]
      %v4529 = vsel %vm1027, %v4524, 0.0
      %4530 = vadd.xlane.f32.xlu0 %v4529
      %v4531 = vpop.xlane.xlu0 %4530
      %v4532 = vmul.f32 %v4531, %v1031
      %v4533 = vsub.f32 %v4524, %v4532
      %v4534 = vmul.f32 %v4533, %v4533
      %v4535 = vsel %vm1027, %v4534, 0.0
      %4536 = vadd.xlane.f32.xlu0 %v4535
      %v4537 = vpop.xlane.xlu0 %4536
      %v4538 = vmul.f32 %v4537, %v1031
      %v4539 = vadd.f32 %v4538, 1e-06
      %v4540 = vrsqrt.pop %v4539
      %v4541 = vmul.f32 %v4533, %v4540
      %v4543 = vlaneseq
      %v4544 = vshrl.u32 %v4543, 7
      %v4545 = vsub.s32 0, %v4544
      %v4546 = vrot.slane %v4527, %v4545
      %v4548 = vmul.f32 %v4541, %v4546
      %v4550 = vlaneseq
      %v4551 = vshrl.u32 %v4550, 7
      %v4552 = vsub.s32 0, %v4551
      %v4553 = vrot.slane %v4528, %v4552
      %v4555 = vadd.f32 %v4548, %v4553
      %v4556 = vld [vmem:[%s17] sm:$0xff]
      %v4557 = vld [vmem:[%s17 + $0x8] sm:$0xff]
      %v4558 = vld [vmem:[%s17 + $0x10] sm:$0xff]
      %v4559 = vld [vmem:[%s17 + $0x18] sm:$0xff]
      %v4560 = vld [vmem:[%s18] sm:$0x1]
      %v4562 = vlaneseq
      %v4563 = vshrl.u32 %v4562, 7
      %v4564 = vsub.s32 0, %v4563
      %v4565 = vrot.slane %v4560, %v4564
      %v4568 = vsel %vm1014, %v4555, 0
      %4570 = vmatprep.subr.mxu0 0.0
      %4571 = vmatpush1.msra.mxu0 0.0
      %4572 = vmatprep.subr.mxu0 0.0
      %4573 = vmatpush1.msra.mxu0 0.0
      %4574 = vmatprep.subr.mxu0 0.0
      %4575 = vmatpush1.msra.mxu0 0.0
      %4576 = vmatprep.subr.mxu0 0.0
      %4577 = vmatpush1.msra.mxu0 0.0
      %4578 = vmatprep.subr.mxu0 0.0
      %4579 = vmatpush1.msra.mxu0 0.0
      %4580 = vmatprep.subr.mxu0 0.0
      %4581 = vmatpush1.msra.mxu0 0.0
      %4582 = vmatprep.subr.mxu0 0.0
      %4583 = vmatpush1.msra.mxu0 0.0
      %4584 = vmatprep.subr.mxu0 0.0
      %4585 = vmatpush1.msra.mxu0 0.0
      %4586 = vmatprep.subr.mxu0 0.0
      %4587 = vmatpush1.msra.mxu0 0.0
      %4588 = vmatprep.subr.mxu0 0.0
      %4589 = vmatpush1.msra.mxu0 0.0
      %4590 = vmatprep.subr.mxu0 0.0
      %4591 = vmatpush1.msra.mxu0 0.0
      %4592 = vmatprep.subr.mxu0 0.0
      %4593 = vmatpush1.msra.mxu0 0.0
      %4594 = vmatprep.subr.mxu0 0.0
      %4595 = vmatpush1.msra.mxu0 %v4559
      %4596 = vmatprep.subr.mxu0 0.0
      %4597 = vmatpush1.msra.mxu0 %v4558
      %4598 = vmatprep.subr.mxu0 0.0
      %4599 = vmatpush1.msra.mxu0 %v4557
      %4600 = vmatprep.subr.mxu0 0.0
      %4601 = vmatpush1.msra.mxu0 %v4556
      %4602 = vmatprep.subr.mxu0 0.0
      %4603 = vmatpush2.msra.mxu0 0.0
      %4604 = vmatprep.subr.mxu0 0.0
      %4605 = vmatpush2.msra.mxu0 0.0
      %4606 = vmatprep.subr.mxu0 0.0
      %4607 = vmatpush2.msra.mxu0 0.0
      %4608 = vmatprep.subr.mxu0 0.0
      %4609 = vmatpush2.msra.mxu0 0.0
      %4610 = vmatprep.subr.mxu0 0.0
      %4611 = vmatpush2.msra.mxu0 0.0
      %4612 = vmatprep.subr.mxu0 0.0
      %4613 = vmatpush2.msra.mxu0 0.0
      %4614 = vmatprep.subr.mxu0 0.0
      %4615 = vmatpush2.msra.mxu0 0.0
      %4616 = vmatprep.subr.mxu0 0.0
      %4617 = vmatpush2.msra.mxu0 0.0
      %4618 = vmatprep.subr.mxu0 0.0
      %4619 = vmatpush2.msra.mxu0 0.0
      %4620 = vmatprep.subr.mxu0 0.0
      %4621 = vmatpush2.msra.mxu0 0.0
      %4622 = vmatprep.subr.mxu0 0.0
      %4623 = vmatpush2.msra.mxu0 0.0
      %4624 = vmatprep.subr.mxu0 0.0
      %4625 = vmatpush2.msra.mxu0 0.0
      %4626 = vmatprep.subr.mxu0 0.0
      %4627 = vmatpush2.msra.mxu0 0.0
      %4628 = vmatprep.subr.mxu0 0.0
      %4629 = vmatpush2.msra.mxu0 0.0
      %4630 = vmatprep.subr.mxu0 0.0
      %4631 = vmatpush2.msra.mxu0 0.0
      %4632 = vmatprep.subr.mxu0 0.0
      %4633 = vmatpush2.msra.mxu0 0.0
      %4634 = vmatprep.mubr.f32.mxu0 0.0
      %4635 = vmatmul.mubr.f32.gmra.mxu0 %v4568
      %v4636 = vpop.f32.mrf.mxu0
      %v4637 = vadd.f32 %v4565, %v4636
      %v4638 = vpop.f32.mrf.mxu0
      %4639 = vdwg.mxu0
      %v4640 = vmax.f32 %v4637, 0.0
      %v4642 = vrot.slane %v4640, 1
      %4643 = vrot.lane.b32.xlu0 %v4642, 16
      %v4644 = vpop.permute.xlu0 %4643
      %v4646 = vrot.slane %v4640, 2
      %4647 = vrot.lane.b32.xlu0 %v4646, 32
      %v4648 = vpop.permute.xlu0 %4647
      %v4650 = vrot.slane %v4640, 3
      %4651 = vrot.lane.b32.xlu0 %v4650, 48
      %v4652 = vpop.permute.xlu0 %4651
      %v4654 = vsel %vm2179, %v4640, %v4644
      %v4655 = vsel %vm1014, %v4654, %v4648
      %v4656 = vsel %vm797, %v4655, %v4652
      %v4657 = vld [vmem:[%s19] sm:$0xff]
      %v4658 = vld [vmem:[%s19 + $0x8] sm:$0xff]
      %v4659 = vld [vmem:[%s19 + $0x10] sm:$0xff]
      %v4660 = vld [vmem:[%s19 + $0x18] sm:$0xff]
      %v4661 = vld [vmem:[%s19 + $0x20] sm:$0xff]
      %v4662 = vld [vmem:[%s19 + $0x28] sm:$0xff]
      %v4663 = vld [vmem:[%s19 + $0x30] sm:$0xff]
      %v4664 = vld [vmem:[%s19 + $0x38] sm:$0xff]
      %v4665 = vld [vmem:[#allocation2] sm:$0x1]
      %4667 = vset.pattern.permute.xlu0 0
      %4668 = vperm.xlu0 %4667, %v4665
      %v4669 = vpop.permute.xlu0 %4668
      %v4671 = vlaneseq
      %v4672 = vshrl.u32 %v4671, 7
      %v4673 = vsub.s32 0, %v4672
      %v4674 = vrot.slane %v4669, %v4673
      %vm4675 = vcmask 523264
      %v4677 = vsel %vm4675, %v4656, 0
      %4679 = vmatprep.subr.mxu0 0.0
      %4680 = vmatpush1.msra.mxu0 0.0
      %4681 = vmatprep.subr.mxu0 0.0
      %4682 = vmatpush1.msra.mxu0 0.0
      %4683 = vmatprep.subr.mxu0 0.0
      %4684 = vmatpush1.msra.mxu0 0.0
      %4685 = vmatprep.subr.mxu0 0.0
      %4686 = vmatpush1.msra.mxu0 0.0
      %4687 = vmatprep.subr.mxu0 0.0
      %4688 = vmatpush1.msra.mxu0 0.0
      %4689 = vmatprep.subr.mxu0 0.0
      %4690 = vmatpush1.msra.mxu0 0.0
      %4691 = vmatprep.subr.mxu0 0.0
      %4692 = vmatpush1.msra.mxu0 0.0
      %4693 = vmatprep.subr.mxu0 0.0
      %4694 = vmatpush1.msra.mxu0 0.0
      %4695 = vmatprep.subr.mxu0 0.0
      %4696 = vmatpush1.msra.mxu0 %v4664
      %4697 = vmatprep.subr.mxu0 0.0
      %4698 = vmatpush1.msra.mxu0 %v4663
      %4699 = vmatprep.subr.mxu0 0.0
      %4700 = vmatpush1.msra.mxu0 %v4662
      %4701 = vmatprep.subr.mxu0 0.0
      %4702 = vmatpush1.msra.mxu0 %v4661
      %4703 = vmatprep.subr.mxu0 0.0
      %4704 = vmatpush1.msra.mxu0 %v4660
      %4705 = vmatprep.subr.mxu0 0.0
      %4706 = vmatpush1.msra.mxu0 %v4659
      %4707 = vmatprep.subr.mxu0 0.0
      %4708 = vmatpush1.msra.mxu0 %v4658
      %4709 = vmatprep.subr.mxu0 0.0
      %4710 = vmatpush1.msra.mxu0 %v4657
      %4711 = vmatprep.subr.mxu0 0.0
      %4712 = vmatpush2.msra.mxu0 0.0
      %4713 = vmatprep.subr.mxu0 0.0
      %4714 = vmatpush2.msra.mxu0 0.0
      %4715 = vmatprep.subr.mxu0 0.0
      %4716 = vmatpush2.msra.mxu0 0.0
      %4717 = vmatprep.subr.mxu0 0.0
      %4718 = vmatpush2.msra.mxu0 0.0
      %4719 = vmatprep.subr.mxu0 0.0
      %4720 = vmatpush2.msra.mxu0 0.0
      %4721 = vmatprep.subr.mxu0 0.0
      %4722 = vmatpush2.msra.mxu0 0.0
      %4723 = vmatprep.subr.mxu0 0.0
      %4724 = vmatpush2.msra.mxu0 0.0
      %4725 = vmatprep.subr.mxu0 0.0
      %4726 = vmatpush2.msra.mxu0 0.0
      %4727 = vmatprep.subr.mxu0 0.0
      %4728 = vmatpush2.msra.mxu0 0.0
      %4729 = vmatprep.subr.mxu0 0.0
      %4730 = vmatpush2.msra.mxu0 0.0
      %4731 = vmatprep.subr.mxu0 0.0
      %4732 = vmatpush2.msra.mxu0 0.0
      %4733 = vmatprep.subr.mxu0 0.0
      %4734 = vmatpush2.msra.mxu0 0.0
      %4735 = vmatprep.subr.mxu0 0.0
      %4736 = vmatpush2.msra.mxu0 0.0
      %4737 = vmatprep.subr.mxu0 0.0
      %4738 = vmatpush2.msra.mxu0 0.0
      %4739 = vmatprep.subr.mxu0 0.0
      %4740 = vmatpush2.msra.mxu0 0.0
      %4741 = vmatprep.subr.mxu0 0.0
      %4742 = vmatpush2.msra.mxu0 0.0
      %4743 = vmatprep.mubr.f32.mxu0 0.0
      %4744 = vmatmul.mubr.f32.gmra.mxu0 %v4677
      %v4745 = vpop.f32.mrf.mxu0
      %v4746 = vadd.f32 %v4674, %v4745
      %v4747 = vpop.f32.mrf.mxu0
      %4748 = vdwg.mxu0
      %v4749 = vmax.f32 %v4746, 0.0
      %vm4750 = vcmask 24576
      %v4751 = vsel %vm4750, %v4749, -inf
      %4752 = vmax.xlane.f32.xlu0 %v4751
      %v4753 = vpop.xlane.xlu0 %4752
      %v4754 = vsub.f32 %v4749, %v4753
      %v4755 = vmul.f32 %v4754, 1.442695
      %v4756 = vpow.pop %v4755
      %v4757 = vsel %vm4750, %v4756, 0.0
      %4758 = vadd.xlane.f32.xlu0 %v4757
      %v4759 = vpop.xlane.xlu0 %4758
      %v4760 = vrcp.pop %v4759
      %v4761 = vmul.f32 %v4756, %v4760
      %vm4762 = vcmask 31744
      %v4764 = vsel %vm4762, %v4761, 0
      %v4766 = vsel %vm4453, %v4555, 0
      %4768 = vmatprep.subr.mxu0 0.0
      %4769 = vmatpush1.msra.mxu0 0.0
      %4770 = vmatprep.subr.mxu0 0.0
      %4771 = vmatpush1.msra.mxu0 0.0
      %4772 = vmatprep.subr.mxu0 0.0
      %4773 = vmatpush1.msra.mxu0 0.0
      %4774 = vmatprep.subr.mxu0 0.0
      %4775 = vmatpush1.msra.mxu0 0.0
      %4776 = vmatprep.subr.mxu0 0.0
      %4777 = vmatpush1.msra.mxu0 0.0
      %4778 = vmatprep.subr.mxu0 0.0
      %4779 = vmatpush1.msra.mxu0 0.0
      %4780 = vmatprep.subr.mxu0 0.0
      %4781 = vmatpush1.msra.mxu0 0.0
      %4782 = vmatprep.subr.mxu0 0.0
      %4783 = vmatpush1.msra.mxu0 0.0
      %4784 = vmatprep.subr.mxu0 0.0
      %4785 = vmatpush1.msra.mxu0 0.0
      %4786 = vmatprep.subr.mxu0 0.0
      %4787 = vmatpush1.msra.mxu0 0.0
      %4788 = vmatprep.subr.mxu0 0.0
      %4789 = vmatpush1.msra.mxu0 0.0
      %4790 = vmatprep.subr.mxu0 0.0
      %4791 = vmatpush1.msra.mxu0 0.0
      %4792 = vmatprep.subr.mxu0 0.0
      %4793 = vmatpush1.msra.mxu0 0.0
      %4794 = vmatprep.subr.mxu0 0.0
      %4795 = vmatpush1.msra.mxu0 0.0
      %4796 = vmatprep.subr.mxu0 0.0
      %4797 = vmatpush1.msra.mxu0 0.0
      %4798 = vmatprep.subr.mxu0 0.0
      %4799 = vmatpush1.msra.mxu0 %v4766
      %4800 = vmatprep.subr.mxu0 0.0
      %4801 = vmatpush2.msra.mxu0 0.0
      %4802 = vmatprep.subr.mxu0 0.0
      %4803 = vmatpush2.msra.mxu0 0.0
      %4804 = vmatprep.subr.mxu0 0.0
      %4805 = vmatpush2.msra.mxu0 0.0
      %4806 = vmatprep.subr.mxu0 0.0
      %4807 = vmatpush2.msra.mxu0 0.0
      %4808 = vmatprep.subr.mxu0 0.0
      %4809 = vmatpush2.msra.mxu0 0.0
      %4810 = vmatprep.subr.mxu0 0.0
      %4811 = vmatpush2.msra.mxu0 0.0
      %4812 = vmatprep.subr.mxu0 0.0
      %4813 = vmatpush2.msra.mxu0 0.0
      %4814 = vmatprep.subr.mxu0 0.0
      %4815 = vmatpush2.msra.mxu0 0.0
      %4816 = vmatprep.subr.mxu0 0.0
      %4817 = vmatpush2.msra.mxu0 0.0
      %4818 = vmatprep.subr.mxu0 0.0
      %4819 = vmatpush2.msra.mxu0 0.0
      %4820 = vmatprep.subr.mxu0 0.0
      %4821 = vmatpush2.msra.mxu0 0.0
      %4822 = vmatprep.subr.mxu0 0.0
      %4823 = vmatpush2.msra.mxu0 0.0
      %4824 = vmatprep.subr.mxu0 0.0
      %4825 = vmatpush2.msra.mxu0 0.0
      %4826 = vmatprep.subr.mxu0 0.0
      %4827 = vmatpush2.msra.mxu0 0.0
      %4828 = vmatprep.subr.mxu0 0.0
      %4829 = vmatpush2.msra.mxu0 0.0
      %4830 = vmatprep.subr.mxu0 0.0
      %4831 = vmatpush2.msra.mxu0 0.0
      %4832 = vmatprep.mubr.f32.mxu0 0.0
      %4833 = vmatmul.mubr.f32.gmra.mxu0 %v4764
      %v4834 = vpop.f32.mrf.mxu0
      %v4835 = vadd.f32 0.0, %v4834
      %v4836 = vpop.f32.mrf.mxu0
      %4837 = vdwg.mxu0
      %v4838 = vld [vmem:[%s21] sm:$0x1]
      %v4839 = vmul.f32 %v4835, %v4838
      %v4840 = vld [vmem:[%s22] sm:$0x1]
      %v4841 = vadd.f32 %v4839, %v4840
      %vm4842 = vcmask 253952
      %4843 = vst.msk [vmem:[%s748] sm:$0x1] %vm4842, %v4841
      %p4844 = scmp.lt.s32.totalorder %s38, 1
      %s4845 = scalar_select %p4844, %s38, 1
      %s4846 = smul.addr %s4845, 5
      %s4847 = smul.addr %s4846, 8
      %s4848 = scalar_lea.vmem %s23, %s4847
      %p4849 = scmp.lt.s32.totalorder %s38, 1
      %s4850 = scalar_select %p4849, %s38, 1
      %s4851 = scalar_lea.vmem %s24, %s4850
      // Predicated region
      $region113: #{keyre_id_forward.2} parent=111 // pred_check
        %p4852 = pneg %p544
      $region114: #{keyre_id_forward.2} parent=111 // pred_check_branch
        %4854 = sbr.rel (%p4852) target = $region116
      $region115: #{keyre_id_forward.2} parent=111 // pred_region
        _
      $region116: #{keyre_id_forward.2} parent=111 // pred_fallthru
        _
      // Predicated region
      $region117: #{keyre_id_forward.2} parent=111 // pred_check
        %p4855 = pneg %p570
      $region118: #{keyre_id_forward.2} parent=111 // pred_check_branch
        %4857 = sbr.rel (%p4855) target = $region120
      $region119: #{keyre_id_forward.2} parent=111 // pred_region
        _
      $region120: #{keyre_id_forward.2} parent=111 // pred_fallthru
        _
    $region112: #{keyre_id_forward.2} parent=5 // pred_fallthru
      _
    %p4858 = scmp.le.s32.totalorder 2, %s33
    // Predicated region
    $region121: #{keyre_id_forward.2} parent=5 // pred_check
      %p4859 = pneg %p4858
    $region122: #{keyre_id_forward.2} parent=5 // pred_check_branch
      %4861 = sbr.rel (%p4859) target = $region124
    $region123: #{keyre_id_forward.2} parent=5 // pred_region
      %s4862 = ssub.s32 %s33, 2
      // Predicated region
      $region125: #{keyre_id_forward.2} parent=123 // pred_check
        %p4863 = pneg %p550
      $region126: #{keyre_id_forward.2} parent=123 // pred_check_branch
        %4865 = sbr.rel (%p4863) target = $region128
      $region127: #{keyre_id_forward.2} parent=123 // pred_region
        %p4866 = scmp.lt.s32.totalorder %s39, 1
        %s4867 = scalar_select %p4866, %s39, 1
        %s4868 = smul.addr %s4867, 5
        %s4869 = smul.addr %s4868, 8
        %s4870 = scalar_lea.vmem %s23, %s4869
      $region128: #{keyre_id_forward.2} parent=123 // pred_fallthru
        _
      // Predicated region
      $region129: #{keyre_id_forward.2} parent=123 // pred_check
        %p4871 = pneg %p576
      $region130: #{keyre_id_forward.2} parent=123 // pred_check_branch
        %4873 = sbr.rel (%p4871) target = $region132
      $region131: #{keyre_id_forward.2} parent=123 // pred_region
        %p4874 = scmp.lt.s32.totalorder %s39, 1
        %s4875 = scalar_select %p4874, %s39, 1
        %s4876 = scalar_lea.vmem %s24, %s4875
      $region132: #{keyre_id_forward.2} parent=123 // pred_fallthru
        _
    $region124: #{keyre_id_forward.2} parent=5 // pred_fallthru
      _
  $region6: #{keyre_id_forward.2} parent=0 // loop_footer
    %s37 = sadd.s32 1, %s33
  $region7: #{keyre_id_forward.2} parent=0 // loop_footer_branch
    %32 = sbr.rel target = $region3
  $region8: #{keyre_id_forward.2} parent=0 // loop_exit
    _

</llo_original>
